<compile_context>
chip_gen: v5e
topology: v5e:2x2
jax: 0.10.0
libtpu: 0.0.40
codegen_flags: <defaults>
</compile_context>

<pallas_src>
import functools

import jax
import jax.numpy as jnp
import numpy as np
from jax.experimental import pallas as pl
from jax.experimental.pallas import tpu as pltpu


# ----------------------------------------------------------------------------- kernel
def mlp_encoder_kernel(idx_ref, emb_ref, w1_ref, b1_ref, w2_ref, b2_ref,
                       out_ref, a_ref, *, counts_dtype):
    j = pl.program_id(1)  # vocab (N) tile index -- inner grid axis

    # Compute the post-bottleneck activation once per batch tile; reuse for all
    # N tiles of the output Linear (a_ref is persistent VMEM scratch).
    @pl.when(j == 0)
    def _():
        idx = idx_ref[...]                              # (TB, S) int32
        tb, seq = idx.shape
        n_toks = emb_ref.shape[0]

        # Bag-of-tokens counts: S tiny 2-D compares, accumulated on the VPU.
        tok_iota = jax.lax.broadcasted_iota(jnp.int32, (tb, n_toks), 1)  # hoisted
        counts = jnp.zeros((tb, n_toks), counts_dtype)
        for s in range(seq):                            # S is small and static
            counts = counts + (idx[:, s:s + 1] == tok_iota).astype(counts_dtype)

        # pooled embedding: counts @ emb (BN1 scale folded into emb columns).
        # padding_idx=0 handled because emb row 0 is zero (stays zero after fold).
        pooled = jnp.dot(counts.astype(jnp.bfloat16), emb_ref[...],
                         preferred_element_type=jnp.float32)            # (TB, emb_dim)
        h = jnp.maximum(pooled, 0.0)                    # ReLU (BN1 folded)

        # bottleneck Linear (BN2 scale folded into w1 columns / b1).
        z = jnp.dot(h.astype(jnp.bfloat16), w1_ref[...],
                    preferred_element_type=jnp.float32) + b1_ref[...]   # (TB, hidden)
        a_ref[...] = jnp.maximum(z, 0.0).astype(jnp.bfloat16)           # ReLU (BN2 folded)

    # Output Linear, one lane-dense vocab tile per grid step
    # (all BN shifts + bias_offset folded into b2).
    out_ref[...] = (jnp.dot(a_ref[...], w2_ref[...],
                            preferred_element_type=jnp.float32)
                    + b2_ref[...]).astype(out_ref.dtype)                # (TB, TN)


# ----------------------------------------------------------------------------- wrapper
def _round_up(x, m):
    return ((x + m - 1) // m) * m


def _counts_dtype(seq_len):
    """bf16 counts on bf16-VALU chips (v6e/v7x); f32 elsewhere.  Exact while counts <= 256."""
    if seq_len > 256:
        return jnp.float32
    try:
        kind = jax.devices()[0].device_kind.lower()
    except Exception:  # pragma: no cover
        return jnp.float32
    if any(t in kind for t in ("v2", "v3", "v4", "v5")):
        return jnp.float32          # no bf16 VALU: f32 compare/accumulate is the fast path
    return jnp.bfloat16             # v6e/v7x: halves the (TB, n_toks) accumulator footprint


def mlp_encoder(x, kp, *, block_b=None, block_n=None, out_dtype=jnp.float32,
                core_parallel=False, single_buffer_weights=True):
    """x: (B, S) int32 token ids.  kp: folded/pre-cast kernel params (see fold_params)."""
    B, S = x.shape
    n_toks, emb_dim = kp["emb"].shape
    hidden = kp["w1"].shape[1]

    # ---- batch tile: single grid step for small B (v5e/v6e: 1 TC, extra steps are
    # pure pipeline overhead); 128-row tiles for large B / v7x VMEM budget.
    if block_b is None:
        tb = _round_up(B, 8) if B <= 256 else 128
    else:
        tb = block_b
    tb = max(8, _round_up(min(tb, _round_up(B, 8)), 8))
    pb = _round_up(B, tb)

    # ---- vocab (output-N) tile: lane-dense multiples of 128; full vocab if small.
    if block_n is None:
        tn = _round_up(n_toks, 128)
        if tn > 2048:
            tn = 512
    else:
        tn = _round_up(block_n, 128)
    pn = _round_up(n_toks, tn)

    # ---- pad batch (token 0 -> zero embedding row) and vocab (zero w2 cols / b2).
    x_p = x if pb == B else jnp.pad(x, ((0, pb - B), (0, 0)))
    w2 = kp["w2"] if pn == n_toks else jnp.pad(kp["w2"], ((0, 0), (0, pn - n_toks)))
    b2 = kp["b2"] if pn == n_toks else jnp.pad(kp["b2"], ((0, 0), (0, pn - n_toks)))

    counts_dtype = _counts_dtype(S)
    out_itemsize = jnp.dtype(out_dtype).itemsize

    # v7x has 2 TensorCores: CORE_PARALLEL on the batch axis gives a real split.
    # Default False so the kernel also runs on single-TC chips (v5e/v6e).
    batch_sem = pltpu.CORE_PARALLEL if core_parallel else "parallel"

    cost = pl.CostEstimate(
        flops=int(2 * pb * (n_toks * emb_dim + emb_dim * hidden + hidden * pn)),
        transcendentals=0,
        bytes_accessed=int(pb * S * 4 + 2 * (n_toks * emb_dim + emb_dim * hidden + hidden * pn)
                           + 4 * (hidden + pn) + pb * pn * out_itemsize),
    )

    def _build_and_call(single_buffer):
        wbuf = 1 if single_buffer else 2
        # Explicit scoped-VMEM budget: resident weights + streamed tiles + scratch
        # + in-kernel temporaries, with 2x headroom (clamped to [32 MiB, 60 MiB]).
        need = (2 * (n_toks * emb_dim + emb_dim * hidden) * wbuf + 4 * hidden * wbuf
                + 2 * (2 * hidden * tn + 4 * tn + 4 * tb * S + tb * tn * out_itemsize)
                + 2 * tb * hidden
                + tb * n_toks * jnp.dtype(counts_dtype).itemsize
                + 4 * tb * (n_toks + emb_dim + hidden))
        vmem_limit = int(min(max(2 * need + (4 << 20), 32 << 20), 60 << 20))

        def resident_spec(shape):
            # Constant index_map -> fetched once; single-buffer to halve VMEM use.
            if single_buffer:
                return pl.BlockSpec(shape, lambda i, j: (0, 0),
                                    pipeline_mode=pl.Buffered(1))
            return pl.BlockSpec(shape, lambda i, j: (0, 0))

        return pl.pallas_call(
            functools.partial(mlp_encoder_kernel, counts_dtype=counts_dtype),
            out_shape=jax.ShapeDtypeStruct((pb, pn), out_dtype),
            grid_spec=pltpu.PrefetchScalarGridSpec(
                num_scalar_prefetch=0,
                grid=(pb // tb, pn // tn),
                in_specs=[
                    pl.BlockSpec((tb, S), lambda i, j: (i, 0)),        # idx: per batch tile
                    resident_spec((n_toks, emb_dim)),                  # emb: VMEM-resident
                    resident_spec((emb_dim, hidden)),                  # w1:  VMEM-resident
                    resident_spec((1, hidden)),                        # b1:  VMEM-resident
                    pl.BlockSpec((hidden, tn), lambda i, j: (0, j)),   # w2: streamed per N tile
                    pl.BlockSpec((1, tn), lambda i, j: (0, j)),        # b2: streamed per N tile
                ],
                out_specs=pl.BlockSpec((tb, tn), lambda i, j: (i, j)),  # lane-dense out tile
                scratch_shapes=[pltpu.VMEM((tb, hidden), jnp.bfloat16)],  # cached activation
            ),
            compiler_params=pltpu.CompilerParams(
                dimension_semantics=(batch_sem, "arbitrary"),
                vmem_limit_bytes=vmem_limit,
            ),
            cost_estimate=cost,
        )(x_p, kp["emb"], kp["w1"], kp["b1"], w2, b2)

    try:
        out = _build_and_call(single_buffer_weights)
    except Exception:
        if not single_buffer_weights:
            raise
        # Fallback: some backend versions reject single-buffered (Buffered(1)) inputs.
        out = _build_and_call(False)

    return out[:B, :n_toks]


# ----------------------------------------------------------------------------- params
def init_raw_params(key, n_toks, emb_dim, hidden_dim, bias_offset):
    """Raw parameters mirroring the PyTorch module right after __init__ (eval mode)."""
    k_emb, k_w1, k_w2 = jax.random.split(key, 3)

    emb = 0.01 * jax.random.normal(k_emb, (n_toks, emb_dim), jnp.float32)
    emb = emb.at[0].set(0.0)                                    # padding_idx=0

    lim1 = 1.0 / np.sqrt(emb_dim)
    w1 = jax.random.uniform(k_w1, (hidden_dim, emb_dim), jnp.float32, -lim1, lim1)
    b1 = jnp.zeros((hidden_dim,), jnp.float32)
    lim2 = 1.0 / np.sqrt(hidden_dim)
    w2 = jax.random.uniform(k_w2, (n_toks, hidden_dim), jnp.float32, -lim2, lim2)
    b2 = jnp.full((n_toks,), bias_offset, jnp.float32)

    return {
        "emb": emb,
        "w1_t": w1.T, "b1": b1,                   # (emb_dim, hidden)
        "w2_t": w2.T, "b2": b2,                   # (hidden, n_toks)
        # BatchNorm1d at init (eval): gamma=1, beta=0, running_mean=0, running_var=1
        "gamma1": jnp.ones((emb_dim,), jnp.float32), "beta1": jnp.zeros((emb_dim,), jnp.float32),
        "rm1": jnp.zeros((emb_dim,), jnp.float32), "rv1": jnp.ones((emb_dim,), jnp.float32),
        "gamma2": jnp.ones((hidden_dim,), jnp.float32), "beta2": jnp.zeros((hidden_dim,), jnp.float32),
        "rm2": jnp.zeros((hidden_dim,), jnp.float32), "rv2": jnp.ones((hidden_dim,), jnp.float32),
    }


def fold_params(raw, eps=1e-5):
    """Fold both eval-mode BatchNorms into the surrounding weights and pre-cast for the MXU.

    Valid only when s1, s2 = gamma / sqrt(var+eps) > 0 (ReLU(x)*s == ReLU(x*s)).
    """
    s1 = raw["gamma1"] / jnp.sqrt(raw["rv1"] + eps)
    s2 = raw["gamma2"] / jnp.sqrt(raw["rv2"] + eps)
    # Trained BN gammas can be negative, which silently breaks the fold -> guard.
    assert bool(np.all(np.asarray(s1) > 0)) and bool(np.all(np.asarray(s2) > 0)), (
        "BN fold requires positive gamma/sqrt(var+eps); keep BN as an explicit "
        "post-ReLU scale instead of folding.")
    t1 = raw["beta1"] - raw["rm1"] * s1
    t2 = raw["beta2"] - raw["rm2"] * s2

    emb_f = raw["emb"] * s1[None, :]                        # BN1 scale -> emb columns (row 0 stays 0)
    w1_f = raw["w1_t"] * s2[None, :]                        # BN2 scale -> w1 output features
    b1_f = (raw["b1"] + t1 @ raw["w1_t"]) * s2              # BN1 shift through Linear1, then BN2 scale
    w2_f = raw["w2_t"]
    b2_f = raw["b2"] + t2 @ raw["w2_t"]                     # BN2 shift through Linear2 (+ bias_offset)

    return {
        "emb": emb_f.astype(jnp.bfloat16),
        "w1": w1_f.astype(jnp.bfloat16),
        "b1": b1_f.reshape(1, -1).astype(jnp.float32),
        "w2": w2_f.astype(jnp.bfloat16),
        "b2": b2_f.reshape(1, -1).astype(jnp.float32),
    }


# ----------------------------------------------------------------------------- reference
def ref_forward(x, raw, eps=1e-5):
    """Pure-JAX f32 reference mirroring the PyTorch forward (eval mode, un-folded BN)."""
    pooled = jnp.take(raw["emb"], x, axis=0).sum(axis=1)
    h = jnp.maximum(pooled, 0.0)
    h = (h - raw["rm1"]) / jnp.sqrt(raw["rv1"] + eps) * raw["gamma1"] + raw["beta1"]
    z = h @ raw["w1_t"] + raw["b1"]
    z = jnp.maximum(z, 0.0)
    z = (z - raw["rm2"]) / jnp.sqrt(raw["rv2"] + eps) * raw["gamma2"] + raw["beta2"]
    return z @ raw["w2_t"] + raw["b2"]


# ----------------------------------------------------------------------------- main
if __name__ == "__main__":
    n_toks, emb_dim, hidden_dim = 256, 128, 128
    dropout, bias_offset = 0.1, -3.5
    B, S = 256, 8

    key = jax.random.PRNGKey(0)
    kx, kparam = jax.random.split(key)
    x = jax.random.randint(kx, (B, S), 0, n_toks, jnp.int32)
    x = x.at[:, -2:].set(0)                        # some padding tokens (idx 0)

    raw = init_raw_params(kparam, n_toks, emb_dim, hidden_dim, bias_offset)
    kernel_params = fold_params(raw)
    ref = ref_forward(x, raw)

    # 1) Default tiling: single grid step (best for single-TC v5e/v6e at this B).
    out1 = jax.block_until_ready(mlp_encoder(x, kernel_params))
    # 2) Explicit multi-tile config: exercises batch + vocab (N) tiling and the
    #    pl.when(j==0) activation-caching path (what production vocab / v7x uses).
    out2 = jax.block_until_ready(mlp_encoder(x, kernel_params, block_b=128, block_n=128))

    for out in (out1, out2):
        assert out.shape == (B, n_toks) and out.dtype == jnp.float32
        # bf16 MXU operands with f32 accumulation -> relaxed tolerance vs f32 reference.
        np.testing.assert_allclose(np.asarray(out), np.asarray(ref), rtol=2e-2, atol=2e-2)

    print("KERNEL_OK")
</pallas_src>

<mosaic_0001>
module attributes {stable_mosaic.version = 11 : i64} {
  func.func @mlp_encoder_kernel(%arg0: i32, %arg1: i32, %arg2: memref<256x8xi32, #tpu.memory_space<vmem>>, %arg3: memref<256x128xbf16, #tpu.memory_space<vmem>>, %arg4: memref<128x128xbf16, #tpu.memory_space<vmem>>, %arg5: memref<1x128xf32, #tpu.memory_space<vmem>>, %arg6: memref<128x256xbf16, #tpu.memory_space<vmem>>, %arg7: memref<1x256xf32, #tpu.memory_space<vmem>>, %arg8: memref<256x256xf32, #tpu.memory_space<vmem>>, %arg9: memref<256x128xbf16, #tpu.memory_space<vmem>>) attributes {dimension_semantics = [#tpu.dimension_semantics<parallel>, #tpu.dimension_semantics<arbitrary>], iteration_bounds = array<i64: 1, 1>, scalar_prefetch = 0 : i64, scratch_operands = 1 : i64, tpu.core_type = #tpu.core_type<tc>, window_params = [{transform_indices = @transform_0, window_bounds = array<i64: 256, 8>}, {pipeline_mode = #tpu.pipeline_mode<synchronous>, transform_indices = @transform_1, window_bounds = array<i64: 256, 128>}, {pipeline_mode = #tpu.pipeline_mode<synchronous>, transform_indices = @transform_2, window_bounds = array<i64: 128, 128>}, {pipeline_mode = #tpu.pipeline_mode<synchronous>, transform_indices = @transform_3, window_bounds = array<i64: 1, 128>}, {transform_indices = @transform_4, window_bounds = array<i64: 128, 256>}, {transform_indices = @transform_5, window_bounds = array<i64: 1, 256>}, {transform_indices = @transform_6, window_bounds = array<i64: 256, 256>}]} {
    %c0_i32 = arith.constant 0 : i32
    %0 = arith.cmpi eq, %arg1, %c0_i32 : i32
    %1 = arith.extui %0 : i1 to i32
    %c0_i32_0 = arith.constant 0 : i32
    %2 = arith.cmpi ne, %1, %c0_i32_0 : i32
    scf.if %2 {
      %c0_8 = arith.constant 0 : index
      %c0_9 = arith.constant 0 : index
      %10 = vector.load %arg2[%c0_8, %c0_9] : memref<256x8xi32, #tpu.memory_space<vmem>>, vector<256x8xi32>
      %11 = tpu.iota {dimensions = array<i32: 1>} : vector<256x256xi32>
      %cst_10 = arith.constant 0.000000e+00 : bf16
      %12 = vector.broadcast %cst_10 : bf16 to vector<256x256xbf16>
      %13 = vector.extract_strided_slice %10 {offsets = [0, 0], sizes = [256, 1], strides = [1, 1]} : vector<256x8xi32> to vector<256x1xi32>
      %14 = vector.broadcast %13 : vector<256x1xi32> to vector<256x256xi32>
      %15 = arith.cmpi eq, %14, %11 : vector<256x256xi32>
      %16 = arith.extui %15 : vector<256x256xi1> to vector<256x256xi32>
      %17 = arith.sitofp %16 : vector<256x256xi32> to vector<256x256xf32>
      %18 = arith.truncf %17 : vector<256x256xf32> to vector<256x256xbf16>
      %19 = arith.addf %12, %18 : vector<256x256xbf16>
      %20 = vector.extract_strided_slice %10 {offsets = [0, 1], sizes = [256, 1], strides = [1, 1]} : vector<256x8xi32> to vector<256x1xi32>
      %21 = vector.broadcast %20 : vector<256x1xi32> to vector<256x256xi32>
      %22 = arith.cmpi eq, %21, %11 : vector<256x256xi32>
      %23 = arith.extui %22 : vector<256x256xi1> to vector<256x256xi32>
      %24 = arith.sitofp %23 : vector<256x256xi32> to vector<256x256xf32>
      %25 = arith.truncf %24 : vector<256x256xf32> to vector<256x256xbf16>
      %26 = arith.addf %19, %25 : vector<256x256xbf16>
      %27 = vector.extract_strided_slice %10 {offsets = [0, 2], sizes = [256, 1], strides = [1, 1]} : vector<256x8xi32> to vector<256x1xi32>
      %28 = vector.broadcast %27 : vector<256x1xi32> to vector<256x256xi32>
      %29 = arith.cmpi eq, %28, %11 : vector<256x256xi32>
      %30 = arith.extui %29 : vector<256x256xi1> to vector<256x256xi32>
      %31 = arith.sitofp %30 : vector<256x256xi32> to vector<256x256xf32>
      %32 = arith.truncf %31 : vector<256x256xf32> to vector<256x256xbf16>
      %33 = arith.addf %26, %32 : vector<256x256xbf16>
      %34 = vector.extract_strided_slice %10 {offsets = [0, 3], sizes = [256, 1], strides = [1, 1]} : vector<256x8xi32> to vector<256x1xi32>
      %35 = vector.broadcast %34 : vector<256x1xi32> to vector<256x256xi32>
      %36 = arith.cmpi eq, %35, %11 : vector<256x256xi32>
      %37 = arith.extui %36 : vector<256x256xi1> to vector<256x256xi32>
      %38 = arith.sitofp %37 : vector<256x256xi32> to vector<256x256xf32>
      %39 = arith.truncf %38 : vector<256x256xf32> to vector<256x256xbf16>
      %40 = arith.addf %33, %39 : vector<256x256xbf16>
      %41 = vector.extract_strided_slice %10 {offsets = [0, 4], sizes = [256, 1], strides = [1, 1]} : vector<256x8xi32> to vector<256x1xi32>
      %42 = vector.broadcast %41 : vector<256x1xi32> to vector<256x256xi32>
      %43 = arith.cmpi eq, %42, %11 : vector<256x256xi32>
      %44 = arith.extui %43 : vector<256x256xi1> to vector<256x256xi32>
      %45 = arith.sitofp %44 : vector<256x256xi32> to vector<256x256xf32>
      %46 = arith.truncf %45 : vector<256x256xf32> to vector<256x256xbf16>
      %47 = arith.addf %40, %46 : vector<256x256xbf16>
      %48 = vector.extract_strided_slice %10 {offsets = [0, 5], sizes = [256, 1], strides = [1, 1]} : vector<256x8xi32> to vector<256x1xi32>
      %49 = vector.broadcast %48 : vector<256x1xi32> to vector<256x256xi32>
      %50 = arith.cmpi eq, %49, %11 : vector<256x256xi32>
      %51 = arith.extui %50 : vector<256x256xi1> to vector<256x256xi32>
      %52 = arith.sitofp %51 : vector<256x256xi32> to vector<256x256xf32>
      %53 = arith.truncf %52 : vector<256x256xf32> to vector<256x256xbf16>
      %54 = arith.addf %47, %53 : vector<256x256xbf16>
      %55 = vector.extract_strided_slice %10 {offsets = [0, 6], sizes = [256, 1], strides = [1, 1]} : vector<256x8xi32> to vector<256x1xi32>
      %56 = vector.broadcast %55 : vector<256x1xi32> to vector<256x256xi32>
      %57 = arith.cmpi eq, %56, %11 : vector<256x256xi32>
      %58 = arith.extui %57 : vector<256x256xi1> to vector<256x256xi32>
      %59 = arith.sitofp %58 : vector<256x256xi32> to vector<256x256xf32>
      %60 = arith.truncf %59 : vector<256x256xf32> to vector<256x256xbf16>
      %61 = arith.addf %54, %60 : vector<256x256xbf16>
      %62 = vector.extract_strided_slice %10 {offsets = [0, 7], sizes = [256, 1], strides = [1, 1]} : vector<256x8xi32> to vector<256x1xi32>
      %63 = vector.broadcast %62 : vector<256x1xi32> to vector<256x256xi32>
      %64 = arith.cmpi eq, %63, %11 : vector<256x256xi32>
      %65 = arith.extui %64 : vector<256x256xi1> to vector<256x256xi32>
      %66 = arith.sitofp %65 : vector<256x256xi32> to vector<256x256xf32>
      %67 = arith.truncf %66 : vector<256x256xf32> to vector<256x256xbf16>
      %68 = arith.addf %61, %67 : vector<256x256xbf16>
      %c0_11 = arith.constant 0 : index
      %c0_12 = arith.constant 0 : index
      %69 = vector.load %arg3[%c0_11, %c0_12] : memref<256x128xbf16, #tpu.memory_space<vmem>>, vector<256x128xbf16>
      %cst_13 = arith.constant dense<0.000000e+00> : vector<256x128xf32>
      %70 = tpu.matmul %68, %69, %cst_13 {dimension_numbers = #tpu.dot_dimension_numbers<[1], [0], [0], [1], [0, 0, 1, 1], [], []>} : vector<256x256xbf16>, vector<256x128xbf16>, vector<256x128xf32> -> vector<256x128xf32>
      %cst_14 = arith.constant 0.000000e+00 : f32
      %71 = vector.broadcast %cst_14 : f32 to vector<256x128xf32>
      %72 = arith.maximumf %70, %71 : vector<256x128xf32>
      %73 = arith.truncf %72 : vector<256x128xf32> to vector<256x128xbf16>
      %c0_15 = arith.constant 0 : index
      %c0_16 = arith.constant 0 : index
      %74 = vector.load %arg4[%c0_15, %c0_16] : memref<128x128xbf16, #tpu.memory_space<vmem>>, vector<128x128xbf16>
      %cst_17 = arith.constant dense<0.000000e+00> : vector<256x128xf32>
      %75 = tpu.matmul %73, %74, %cst_17 {dimension_numbers = #tpu.dot_dimension_numbers<[1], [0], [0], [1], [0, 0, 1, 1], [], []>} : vector<256x128xbf16>, vector<128x128xbf16>, vector<256x128xf32> -> vector<256x128xf32>
      %c0_18 = arith.constant 0 : index
      %c0_19 = arith.constant 0 : index
      %76 = vector.load %arg5[%c0_18, %c0_19] : memref<1x128xf32, #tpu.memory_space<vmem>>, vector<1x128xf32>
      %77 = vector.broadcast %76 : vector<1x128xf32> to vector<256x128xf32>
      %78 = arith.addf %75, %77 : vector<256x128xf32>
      %cst_20 = arith.constant 0.000000e+00 : f32
      %79 = vector.broadcast %cst_20 : f32 to vector<256x128xf32>
      %80 = arith.maximumf %78, %79 : vector<256x128xf32>
      %81 = arith.truncf %80 : vector<256x128xf32> to vector<256x128xbf16>
      %c0_21 = arith.constant 0 : index
      %c0_22 = arith.constant 0 : index
      %82 = vector.load %arg9[%c0_21, %c0_22] : memref<256x128xbf16, #tpu.memory_space<vmem>>, vector<256x128xbf16>
      tpu.vector_store %arg9[%c0_21, %c0_22], %81 {strides = array<i32>} : memref<256x128xbf16, #tpu.memory_space<vmem>>, vector<256x128xbf16>,
    } else {
    }
    %c0 = arith.constant 0 : index
    %c0_1 = arith.constant 0 : index
    %3 = vector.load %arg9[%c0, %c0_1] : memref<256x128xbf16, #tpu.memory_space<vmem>>, vector<256x128xbf16>
    %c0_2 = arith.constant 0 : index
    %c0_3 = arith.constant 0 : index
    %4 = vector.load %arg6[%c0_2, %c0_3] : memref<128x256xbf16, #tpu.memory_space<vmem>>, vector<128x256xbf16>
    %cst = arith.constant dense<0.000000e+00> : vector<256x256xf32>
    %5 = tpu.matmul %3, %4, %cst {dimension_numbers = #tpu.dot_dimension_numbers<[1], [0], [0], [1], [0, 0, 1, 1], [], []>} : vector<256x128xbf16>, vector<128x256xbf16>, vector<256x256xf32> -> vector<256x256xf32>
    %c0_4 = arith.constant 0 : index
    %c0_5 = arith.constant 0 : index
    %6 = vector.load %arg7[%c0_4, %c0_5] : memref<1x256xf32, #tpu.memory_space<vmem>>, vector<1x256xf32>
    %7 = vector.broadcast %6 : vector<1x256xf32> to vector<256x256xf32>
    %8 = arith.addf %5, %7 : vector<256x256xf32>
    %c0_6 = arith.constant 0 : index
    %c0_7 = arith.constant 0 : index
    %9 = vector.load %arg8[%c0_6, %c0_7] : memref<256x256xf32, #tpu.memory_space<vmem>>, vector<256x256xf32>
    tpu.vector_store %arg8[%c0_6, %c0_7], %8 {strides = array<i32>} : memref<256x256xf32, #tpu.memory_space<vmem>>, vector<256x256xf32>,
    return
  }
  func.func @transform_0(%arg0: i32, %arg1: i32) -> (i32, i32) {
    %c0_i32 = arith.constant 0 : i32
    %c0_i32_0 = arith.constant 0 : i32
    return %arg0, %c0_i32 : i32, i32
  }
  func.func @transform_1(%arg0: i32, %arg1: i32) -> (i32, i32) {
    %c0_i32 = arith.constant 0 : i32
    %c0_i32_0 = arith.constant 0 : i32
    %c0_i32_1 = arith.constant 0 : i32
    return %c0_i32, %c0_i32_0 : i32, i32
  }
  func.func @transform_2(%arg0: i32, %arg1: i32) -> (i32, i32) {
    %c0_i32 = arith.constant 0 : i32
    %c0_i32_0 = arith.constant 0 : i32
    %c0_i32_1 = arith.constant 0 : i32
    return %c0_i32, %c0_i32_0 : i32, i32
  }
  func.func @transform_3(%arg0: i32, %arg1: i32) -> (i32, i32) {
    %c0_i32 = arith.constant 0 : i32
    %c0_i32_0 = arith.constant 0 : i32
    %c0_i32_1 = arith.constant 0 : i32
    return %c0_i32, %c0_i32_0 : i32, i32
  }
  func.func @transform_4(%arg0: i32, %arg1: i32) -> (i32, i32) {
    %c0_i32 = arith.constant 0 : i32
    %c0_i32_0 = arith.constant 0 : i32
    return %c0_i32, %arg1 : i32, i32
  }
  func.func @transform_5(%arg0: i32, %arg1: i32) -> (i32, i32) {
    %c0_i32 = arith.constant 0 : i32
    %c0_i32_0 = arith.constant 0 : i32
    return %c0_i32, %arg1 : i32, i32
  }
  func.func @transform_6(%arg0: i32, %arg1: i32) -> (i32, i32) {
    %c0_i32 = arith.constant 0 : i32
    return %arg0, %arg1 : i32, i32
  }
}

module attributes {stable_mosaic.version = 11 : i64} {
  func.func @mlp_encoder_kernel(%arg0: i32, %arg1: i32, %arg2: memref<256x8xi32, #tpu.memory_space<vmem>>, %arg3: memref<256x128xbf16, #tpu.memory_space<vmem>>, %arg4: memref<128x128xbf16, #tpu.memory_space<vmem>>, %arg5: memref<1x128xf32, #tpu.memory_space<vmem>>, %arg6: memref<128x256xbf16, #tpu.memory_space<vmem>>, %arg7: memref<1x256xf32, #tpu.memory_space<vmem>>, %arg8: memref<256x256xf32, #tpu.memory_space<vmem>>, %arg9: memref<256x128xbf16, #tpu.memory_space<vmem>>) attributes {dimension_semantics = [#tpu.dimension_semantics<parallel>, #tpu.dimension_semantics<arbitrary>], iteration_bounds = array<i64: 1, 1>, scalar_prefetch = 0 : i64, scratch_operands = 1 : i64, tpu.core_type = #tpu.core_type<tc>, window_params = [{transform_indices = @transform_0, window_bounds = array<i64: 256, 8>}, {pipeline_mode = #tpu.pipeline_mode<synchronous>, transform_indices = @transform_1, window_bounds = array<i64: 256, 128>}, {pipeline_mode = #tpu.pipeline_mode<synchronous>, transform_indices = @transform_2, window_bounds = array<i64: 128, 128>}, {pipeline_mode = #tpu.pipeline_mode<synchronous>, transform_indices = @transform_3, window_bounds = array<i64: 1, 128>}, {transform_indices = @transform_4, window_bounds = array<i64: 128, 256>}, {transform_indices = @transform_5, window_bounds = array<i64: 1, 256>}, {transform_indices = @transform_6, window_bounds = array<i64: 256, 256>}]} {
    %c0_i32 = arith.constant 0 : i32
    %0 = arith.cmpi eq, %arg1, %c0_i32 : i32
    %1 = arith.extui %0 : i1 to i32
    %c0_i32_0 = arith.constant 0 : i32
    %2 = arith.cmpi ne, %1, %c0_i32_0 : i32
    scf.if %2 {
      %c0_8 = arith.constant 0 : index
      %c0_9 = arith.constant 0 : index
      %10 = vector.load %arg2[%c0_8, %c0_9] : memref<256x8xi32, #tpu.memory_space<vmem>>, vector<256x8xi32>
      %11 = tpu.iota {dimensions = array<i32: 1>} : vector<256x256xi32>
      %cst_10 = arith.constant 0.000000e+00 : bf16
      %12 = vector.broadcast %cst_10 : bf16 to vector<256x256xbf16>
      %13 = vector.extract_strided_slice %10 {offsets = [0, 0], sizes = [256, 1], strides = [1, 1]} : vector<256x8xi32> to vector<256x1xi32>
      %14 = vector.broadcast %13 : vector<256x1xi32> to vector<256x256xi32>
      %15 = arith.cmpi eq, %14, %11 : vector<256x256xi32>
      %16 = arith.extui %15 : vector<256x256xi1> to vector<256x256xi32>
      %17 = arith.sitofp %16 : vector<256x256xi32> to vector<256x256xf32>
      %18 = arith.truncf %17 : vector<256x256xf32> to vector<256x256xbf16>
      %19 = arith.addf %12, %18 : vector<256x256xbf16>
      %20 = vector.extract_strided_slice %10 {offsets = [0, 1], sizes = [256, 1], strides = [1, 1]} : vector<256x8xi32> to vector<256x1xi32>
      %21 = vector.broadcast %20 : vector<256x1xi32> to vector<256x256xi32>
      %22 = arith.cmpi eq, %21, %11 : vector<256x256xi32>
      %23 = arith.extui %22 : vector<256x256xi1> to vector<256x256xi32>
      %24 = arith.sitofp %23 : vector<256x256xi32> to vector<256x256xf32>
      %25 = arith.truncf %24 : vector<256x256xf32> to vector<256x256xbf16>
      %26 = arith.addf %19, %25 : vector<256x256xbf16>
      %27 = vector.extract_strided_slice %10 {offsets = [0, 2], sizes = [256, 1], strides = [1, 1]} : vector<256x8xi32> to vector<256x1xi32>
      %28 = vector.broadcast %27 : vector<256x1xi32> to vector<256x256xi32>
      %29 = arith.cmpi eq, %28, %11 : vector<256x256xi32>
      %30 = arith.extui %29 : vector<256x256xi1> to vector<256x256xi32>
      %31 = arith.sitofp %30 : vector<256x256xi32> to vector<256x256xf32>
      %32 = arith.truncf %31 : vector<256x256xf32> to vector<256x256xbf16>
      %33 = arith.addf %26, %32 : vector<256x256xbf16>
      %34 = vector.extract_strided_slice %10 {offsets = [0, 3], sizes = [256, 1], strides = [1, 1]} : vector<256x8xi32> to vector<256x1xi32>
      %35 = vector.broadcast %34 : vector<256x1xi32> to vector<256x256xi32>
      %36 = arith.cmpi eq, %35, %11 : vector<256x256xi32>
      %37 = arith.extui %36 : vector<256x256xi1> to vector<256x256xi32>
      %38 = arith.sitofp %37 : vector<256x256xi32> to vector<256x256xf32>
      %39 = arith.truncf %38 : vector<256x256xf32> to vector<256x256xbf16>
      %40 = arith.addf %33, %39 : vector<256x256xbf16>
      %41 = vector.extract_strided_slice %10 {offsets = [0, 4], sizes = [256, 1], strides = [1, 1]} : vector<256x8xi32> to vector<256x1xi32>
      %42 = vector.broadcast %41 : vector<256x1xi32> to vector<256x256xi32>
      %43 = arith.cmpi eq, %42, %11 : vector<256x256xi32>
      %44 = arith.extui %43 : vector<256x256xi1> to vector<256x256xi32>
      %45 = arith.sitofp %44 : vector<256x256xi32> to vector<256x256xf32>
      %46 = arith.truncf %45 : vector<256x256xf32> to vector<256x256xbf16>
      %47 = arith.addf %40, %46 : vector<256x256xbf16>
      %48 = vector.extract_strided_slice %10 {offsets = [0, 5], sizes = [256, 1], strides = [1, 1]} : vector<256x8xi32> to vector<256x1xi32>
      %49 = vector.broadcast %48 : vector<256x1xi32> to vector<256x256xi32>
      %50 = arith.cmpi eq, %49, %11 : vector<256x256xi32>
      %51 = arith.extui %50 : vector<256x256xi1> to vector<256x256xi32>
      %52 = arith.sitofp %51 : vector<256x256xi32> to vector<256x256xf32>
      %53 = arith.truncf %52 : vector<256x256xf32> to vector<256x256xbf16>
      %54 = arith.addf %47, %53 : vector<256x256xbf16>
      %55 = vector.extract_strided_slice %10 {offsets = [0, 6], sizes = [256, 1], strides = [1, 1]} : vector<256x8xi32> to vector<256x1xi32>
      %56 = vector.broadcast %55 : vector<256x1xi32> to vector<256x256xi32>
      %57 = arith.cmpi eq, %56, %11 : vector<256x256xi32>
      %58 = arith.extui %57 : vector<256x256xi1> to vector<256x256xi32>
      %59 = arith.sitofp %58 : vector<256x256xi32> to vector<256x256xf32>
      %60 = arith.truncf %59 : vector<256x256xf32> to vector<256x256xbf16>
      %61 = arith.addf %54, %60 : vector<256x256xbf16>
      %62 = vector.extract_strided_slice %10 {offsets = [0, 7], sizes = [256, 1], strides = [1, 1]} : vector<256x8xi32> to vector<256x1xi32>
      %63 = vector.broadcast %62 : vector<256x1xi32> to vector<256x256xi32>
      %64 = arith.cmpi eq, %63, %11 : vector<256x256xi32>
      %65 = arith.extui %64 : vector<256x256xi1> to vector<256x256xi32>
      %66 = arith.sitofp %65 : vector<256x256xi32> to vector<256x256xf32>
      %67 = arith.truncf %66 : vector<256x256xf32> to vector<256x256xbf16>
      %68 = arith.addf %61, %67 : vector<256x256xbf16>
      %c0_11 = arith.constant 0 : index
      %c0_12 = arith.constant 0 : index
      %69 = vector.load %arg3[%c0_11, %c0_12] : memref<256x128xbf16, #tpu.memory_space<vmem>>, vector<256x128xbf16>
      %cst_13 = arith.constant dense<0.000000e+00> : vector<256x128xf32>
      %70 = tpu.matmul %68, %69, %cst_13 {dimension_numbers = #tpu.dot_dimension_numbers<[1], [0], [0], [1], [0, 0, 1, 1], [], []>} : vector<256x256xbf16>, vector<256x128xbf16>, vector<256x128xf32> -> vector<256x128xf32>
      %cst_14 = arith.constant 0.000000e+00 : f32
      %71 = vector.broadcast %cst_14 : f32 to vector<256x128xf32>
      %72 = arith.maximumf %70, %71 : vector<256x128xf32>
      %73 = arith.truncf %72 : vector<256x128xf32> to vector<256x128xbf16>
      %c0_15 = arith.constant 0 : index
      %c0_16 = arith.constant 0 : index
      %74 = vector.load %arg4[%c0_15, %c0_16] : memref<128x128xbf16, #tpu.memory_space<vmem>>, vector<128x128xbf16>
      %cst_17 = arith.constant dense<0.000000e+00> : vector<256x128xf32>
      %75 = tpu.matmul %73, %74, %cst_17 {dimension_numbers = #tpu.dot_dimension_numbers<[1], [0], [0], [1], [0, 0, 1, 1], [], []>} : vector<256x128xbf16>, vector<128x128xbf16>, vector<256x128xf32> -> vector<256x128xf32>
      %c0_18 = arith.constant 0 : index
      %c0_19 = arith.constant 0 : index
      %76 = vector.load %arg5[%c0_18, %c0_19] : memref<1x128xf32, #tpu.memory_space<vmem>>, vector<1x128xf32>
      %77 = vector.broadcast %76 : vector<1x128xf32> to vector<256x128xf32>
      %78 = arith.addf %75, %77 : vector<256x128xf32>
      %cst_20 = arith.constant 0.000000e+00 : f32
      %79 = vector.broadcast %cst_20 : f32 to vector<256x128xf32>
      %80 = arith.maximumf %78, %79 : vector<256x128xf32>
      %81 = arith.truncf %80 : vector<256x128xf32> to vector<256x128xbf16>
      %c0_21 = arith.constant 0 : index
      %c0_22 = arith.constant 0 : index
      %82 = vector.load %arg9[%c0_21, %c0_22] : memref<256x128xbf16, #tpu.memory_space<vmem>>, vector<256x128xbf16>
      tpu.vector_store %arg9[%c0_21, %c0_22], %81 {strides = array<i32>} : memref<256x128xbf16, #tpu.memory_space<vmem>>, vector<256x128xbf16>,
    } else {
    }
    %c0 = arith.constant 0 : index
    %c0_1 = arith.constant 0 : index
    %3 = vector.load %arg9[%c0, %c0_1] : memref<256x128xbf16, #tpu.memory_space<vmem>>, vector<256x128xbf16>
    %c0_2 = arith.constant 0 : index
    %c0_3 = arith.constant 0 : index
    %4 = vector.load %arg6[%c0_2, %c0_3] : memref<128x256xbf16, #tpu.memory_space<vmem>>, vector<128x256xbf16>
    %cst = arith.constant dense<0.000000e+00> : vector<256x256xf32>
    %5 = tpu.matmul %3, %4, %cst {dimension_numbers = #tpu.dot_dimension_numbers<[1], [0], [0], [1], [0, 0, 1, 1], [], []>} : vector<256x128xbf16>, vector<128x256xbf16>, vector<256x256xf32> -> vector<256x256xf32>
    %c0_4 = arith.constant 0 : index
    %c0_5 = arith.constant 0 : index
    %6 = vector.load %arg7[%c0_4, %c0_5] : memref<1x256xf32, #tpu.memory_space<vmem>>, vector<1x256xf32>
    %7 = vector.broadcast %6 : vector<1x256xf32> to vector<256x256xf32>
    %8 = arith.addf %5, %7 : vector<256x256xf32>
    %c0_6 = arith.constant 0 : index
    %c0_7 = arith.constant 0 : index
    %9 = vector.load %arg8[%c0_6, %c0_7] : memref<256x256xf32, #tpu.memory_space<vmem>>, vector<256x256xf32>
    tpu.vector_store %arg8[%c0_6, %c0_7], %8 {strides = array<i32>} : memref<256x256xf32, #tpu.memory_space<vmem>>, vector<256x256xf32>,
    return
  }
  func.func @transform_0(%arg0: i32, %arg1: i32) -> (i32, i32) {
    %c0_i32 = arith.constant 0 : i32
    %c0_i32_0 = arith.constant 0 : i32
    return %arg0, %c0_i32 : i32, i32
  }
  func.func @transform_1(%arg0: i32, %arg1: i32) -> (i32, i32) {
    %c0_i32 = arith.constant 0 : i32
    %c0_i32_0 = arith.constant 0 : i32
    %c0_i32_1 = arith.constant 0 : i32
    return %c0_i32, %c0_i32_0 : i32, i32
  }
  func.func @transform_2(%arg0: i32, %arg1: i32) -> (i32, i32) {
    %c0_i32 = arith.constant 0 : i32
    %c0_i32_0 = arith.constant 0 : i32
    %c0_i32_1 = arith.constant 0 : i32
    return %c0_i32, %c0_i32_0 : i32, i32
  }
  func.func @transform_3(%arg0: i32, %arg1: i32) -> (i32, i32) {
    %c0_i32 = arith.constant 0 : i32
    %c0_i32_0 = arith.constant 0 : i32
    %c0_i32_1 = arith.constant 0 : i32
    return %c0_i32, %c0_i32_0 : i32, i32
  }
  func.func @transform_4(%arg0: i32, %arg1: i32) -> (i32, i32) {
    %c0_i32 = arith.constant 0 : i32
    %c0_i32_0 = arith.constant 0 : i32
    return %c0_i32, %arg1 : i32, i32
  }
  func.func @transform_5(%arg0: i32, %arg1: i32) -> (i32, i32) {
    %c0_i32 = arith.constant 0 : i32
    %c0_i32_0 = arith.constant 0 : i32
    return %c0_i32, %arg1 : i32, i32
  }
  func.func @transform_6(%arg0: i32, %arg1: i32) -> (i32, i32) {
    %c0_i32 = arith.constant 0 : i32
    return %arg0, %arg1 : i32, i32
  }
}

</mosaic_0001>

<llo_original>
// kernel: tpu_custom_call.1
$region0: #{tpu_custom_call.1}
  #allocation0 [shape = 'u32[]', space=smem, size = 0x4, offset = 0x4, fixed_abs, tag = 'smem constant byte address 0x4 - core index']
  #allocation1 [shape = 'u32[72,128]{1,0:T(1,128)}', space=vmem, size = 0x9000, scoped, tag = 'internal scratch']
  #allocation2 [shape = 'bf16[256,128]{1,0:T(8,128)(2,1)}', space=vmem, size = 0x10000, scoped, tag = 'scratch operand']
  %s0 = inlined_call_operand.vmem [shape: s32[256,8], index: 0, kind: input, shape index: {}]
  %s1 = inlined_call_operand.vmem [shape: bf16[256,128], index: 1, kind: input, shape index: {}]
  %s2 = inlined_call_operand.hbm [shape: bf16[128,128], index: 2, kind: input, shape index: {}]
  %s3 = inlined_call_operand.vmem [shape: f32[1,128], index: 3, kind: input, shape index: {}]
  %s4 = inlined_call_operand.vmem [shape: bf16[128,256], index: 4, kind: input, shape index: {}]
  %s5 = inlined_call_operand.vmem [shape: f32[1,256], index: 5, kind: input, shape index: {}]
  %s6 = inlined_call_operand.hbm [shape: f32[256,256], index: 6, kind: output, shape index: {}]
  %s7 = sld [smem:[#allocation0]]
  $region42: #{tpu_custom_call.1} parent=0
    _
  %s9 = ssub.s32 1, %s7
  %s10 = scalar_select 0, %s9, %s7
  $region1: #{tpu_custom_call.1} parent=0
    #allocation3 [shape = 'u8[32768]{0}', space=vmem, size = 0x8000, scoped, tag = 'input window, operand 2, single buffered']
    #allocation4 [shape = 's32[1]{0}', space=sflag, size = 0x4, scoped, tag = 'scoped memory for tpu_custom_call.1']
    #allocation5 [shape = 's32[1]{0}', space=sflag, size = 0x4, scoped, tag = 'scoped memory for tpu_custom_call.1']
    #allocation6 [shape = 'u8[262144]{0}', space=vmem, size = 0x40000, scoped, tag = 'output window, operand 0, single buffered']
    %11 = vsyncpa [#allocation4], 0
    %12 = vsyncpa [#allocation5], 0
    // Predicated region
    $region2: #{tpu_custom_call.1} parent=1 // pred_check
      _
    $region3: #{tpu_custom_call.1} parent=1 // pred_check_branch
      %14 = sbr.rel (0) target = $region5
    $region4: #{tpu_custom_call.1} parent=1 // pred_region
      _
    $region5: #{tpu_custom_call.1} parent=1 // pred_fallthru
      _
    // Predicated region
    $region6: #{tpu_custom_call.1} parent=1 // pred_check
      _
    $region7: #{tpu_custom_call.1} parent=1 // pred_check_branch
      %16 = sbr.rel (0) target = $region9
    $region8: #{tpu_custom_call.1} parent=1 // pred_region
      _
    $region9: #{tpu_custom_call.1} parent=1 // pred_fallthru
      _
    // Predicated region
    $region10: #{tpu_custom_call.1} parent=1 // pred_check
      _
    $region11: #{tpu_custom_call.1} parent=1 // pred_check_branch
      %18 = sbr.rel (0) target = $region13
    $region12: #{tpu_custom_call.1} parent=1 // pred_region
      %20 = vsyncadd [#allocation4], 0
      %s21 = sshll.u32 %s2, 4
      %s22 = int_to_ptr.hbm [resolvable:$true] %s21
      %s23 = sshll.u32 [#allocation3], 4
      %s24 = int_to_ptr.vmem [resolvable:$true] %s23
      %29 = dma.hbm_to_vmem [thread:$0]  %s22, 1024, %s24, [#allocation4], 64, 64, 4
    $region13: #{tpu_custom_call.1} parent=1 // pred_fallthru
      _
    // Predicated region
    $region14: #{tpu_custom_call.1} parent=1 // pred_check
      _
    $region15: #{tpu_custom_call.1} parent=1 // pred_check_branch
      %31 = sbr.rel (0) target = $region17
    $region16: #{tpu_custom_call.1} parent=1 // pred_region
      _
    $region17: #{tpu_custom_call.1} parent=1 // pred_fallthru
      _
    // Predicated region
    $region18: #{tpu_custom_call.1} parent=1 // pred_check
      _
    $region19: #{tpu_custom_call.1} parent=1 // pred_check_branch
      %33 = sbr.rel (0) target = $region21
    $region20: #{tpu_custom_call.1} parent=1 // pred_region
      _
    $region21: #{tpu_custom_call.1} parent=1 // pred_fallthru
      _
    // Predicated region
    $region22: #{tpu_custom_call.1} parent=1 // pred_check
      _
    $region23: #{tpu_custom_call.1} parent=1 // pred_check_branch
      %35 = sbr.rel (0) target = $region25
    $region24: #{tpu_custom_call.1} parent=1 // pred_region
      _
    $region25: #{tpu_custom_call.1} parent=1 // pred_fallthru
      _
    // Predicated region
    $region26: #{tpu_custom_call.1} parent=1 // pred_check
      _
    $region27: #{tpu_custom_call.1} parent=1 // pred_check_branch
      %37 = sbr.rel (0) target = $region29
    $region28: #{tpu_custom_call.1} parent=1 // pred_region
      %39 = dma.done [#allocation4], 1024
    $region29: #{tpu_custom_call.1} parent=1 // pred_fallthru
      _
    %p40 = scmp.eq.s32.totalorder 0, 0
    // Predicated region
    $region30: #{tpu_custom_call.1} parent=1 // pred_check
      %p41 = pneg %p40
    $region31: #{tpu_custom_call.1} parent=1 // pred_check_branch
      %43 = sbr.rel (%p41) target = $region33
    $region32: #{tpu_custom_call.1} parent=1 // pred_region
      %v44 = vld [vmem:[%s0] sm:$0xff]
      %v45 = vld [vmem:[%s0 + $0x8] sm:$0xff]
      %v46 = vld [vmem:[%s0 + $0x10] sm:$0xff]
      %v47 = vld [vmem:[%s0 + $0x18] sm:$0xff]
      %v48 = vld [vmem:[%s0 + $0x20] sm:$0xff]
      %v49 = vld [vmem:[%s0 + $0x28] sm:$0xff]
      %v50 = vld [vmem:[%s0 + $0x30] sm:$0xff]
      %v51 = vld [vmem:[%s0 + $0x38] sm:$0xff]
      %v52 = vld [vmem:[%s0 + $0x40] sm:$0xff]
      %v53 = vld [vmem:[%s0 + $0x48] sm:$0xff]
      %v54 = vld [vmem:[%s0 + $0x50] sm:$0xff]
      %v55 = vld [vmem:[%s0 + $0x58] sm:$0xff]
      %v56 = vld [vmem:[%s0 + $0x60] sm:$0xff]
      %v57 = vld [vmem:[%s0 + $0x68] sm:$0xff]
      %v58 = vld [vmem:[%s0 + $0x70] sm:$0xff]
      %v59 = vld [vmem:[%s0 + $0x78] sm:$0xff]
      %v60 = vld [vmem:[%s0 + $0x80] sm:$0xff]
      %v61 = vld [vmem:[%s0 + $0x88] sm:$0xff]
      %v62 = vld [vmem:[%s0 + $0x90] sm:$0xff]
      %v63 = vld [vmem:[%s0 + $0x98] sm:$0xff]
      %v64 = vld [vmem:[%s0 + $0xa0] sm:$0xff]
      %v65 = vld [vmem:[%s0 + $0xa8] sm:$0xff]
      %v66 = vld [vmem:[%s0 + $0xb0] sm:$0xff]
      %v67 = vld [vmem:[%s0 + $0xb8] sm:$0xff]
      %v68 = vld [vmem:[%s0 + $0xc0] sm:$0xff]
      %v69 = vld [vmem:[%s0 + $0xc8] sm:$0xff]
      %v70 = vld [vmem:[%s0 + $0xd0] sm:$0xff]
      %v71 = vld [vmem:[%s0 + $0xd8] sm:$0xff]
      %v72 = vld [vmem:[%s0 + $0xe0] sm:$0xff]
      %v73 = vld [vmem:[%s0 + $0xe8] sm:$0xff]
      %v74 = vld [vmem:[%s0 + $0xf0] sm:$0xff]
      %v75 = vld [vmem:[%s0 + $0xf8] sm:$0xff]
      %v76 = vlaneseq
      %v77 = vand.u32 %v76, 127
      %v78 = vadd.s32 %v77, 128
      %79 = vset.pattern.permute.xlu0 0
      %80 = vperm.xlu0 %79, %v44
      %v81 = vpop.permute.xlu0 %80
      %82 = vset.pattern.permute.xlu0 0
      %83 = vperm.xlu0 %82, %v45
      %v84 = vpop.permute.xlu0 %83
      %85 = vset.pattern.permute.xlu0 0
      %86 = vperm.xlu0 %85, %v46
      %v87 = vpop.permute.xlu0 %86
      %88 = vset.pattern.permute.xlu0 0
      %89 = vperm.xlu0 %88, %v47
      %v90 = vpop.permute.xlu0 %89
      %91 = vset.pattern.permute.xlu0 0
      %92 = vperm.xlu0 %91, %v48
      %v93 = vpop.permute.xlu0 %92
      %94 = vset.pattern.permute.xlu0 0
      %95 = vperm.xlu0 %94, %v49
      %v96 = vpop.permute.xlu0 %95
      %97 = vset.pattern.permute.xlu0 0
      %98 = vperm.xlu0 %97, %v50
      %v99 = vpop.permute.xlu0 %98
      %100 = vset.pattern.permute.xlu0 0
      %101 = vperm.xlu0 %100, %v51
      %v102 = vpop.permute.xlu0 %101
      %103 = vset.pattern.permute.xlu0 0
      %104 = vperm.xlu0 %103, %v52
      %v105 = vpop.permute.xlu0 %104
      %106 = vset.pattern.permute.xlu0 0
      %107 = vperm.xlu0 %106, %v53
      %v108 = vpop.permute.xlu0 %107
      %109 = vset.pattern.permute.xlu0 0
      %110 = vperm.xlu0 %109, %v54
      %v111 = vpop.permute.xlu0 %110
      %112 = vset.pattern.permute.xlu0 0
      %113 = vperm.xlu0 %112, %v55
      %v114 = vpop.permute.xlu0 %113
      %115 = vset.pattern.permute.xlu0 0
      %116 = vperm.xlu0 %115, %v56
      %v117 = vpop.permute.xlu0 %116
      %118 = vset.pattern.permute.xlu0 0
      %119 = vperm.xlu0 %118, %v57
      %v120 = vpop.permute.xlu0 %119
      %121 = vset.pattern.permute.xlu0 0
      %122 = vperm.xlu0 %121, %v58
      %v123 = vpop.permute.xlu0 %122
      %124 = vset.pattern.permute.xlu0 0
      %125 = vperm.xlu0 %124, %v59
      %v126 = vpop.permute.xlu0 %125
      %127 = vset.pattern.permute.xlu0 0
      %128 = vperm.xlu0 %127, %v60
      %v129 = vpop.permute.xlu0 %128
      %130 = vset.pattern.permute.xlu0 0
      %131 = vperm.xlu0 %130, %v61
      %v132 = vpop.permute.xlu0 %131
      %133 = vset.pattern.permute.xlu0 0
      %134 = vperm.xlu0 %133, %v62
      %v135 = vpop.permute.xlu0 %134
      %136 = vset.pattern.permute.xlu0 0
      %137 = vperm.xlu0 %136, %v63
      %v138 = vpop.permute.xlu0 %137
      %139 = vset.pattern.permute.xlu0 0
      %140 = vperm.xlu0 %139, %v64
      %v141 = vpop.permute.xlu0 %140
      %142 = vset.pattern.permute.xlu0 0
      %143 = vperm.xlu0 %142, %v65
      %v144 = vpop.permute.xlu0 %143
      %145 = vset.pattern.permute.xlu0 0
      %146 = vperm.xlu0 %145, %v66
      %v147 = vpop.permute.xlu0 %146
      %148 = vset.pattern.permute.xlu0 0
      %149 = vperm.xlu0 %148, %v67
      %v150 = vpop.permute.xlu0 %149
      %151 = vset.pattern.permute.xlu0 0
      %152 = vperm.xlu0 %151, %v68
      %v153 = vpop.permute.xlu0 %152
      %154 = vset.pattern.permute.xlu0 0
      %155 = vperm.xlu0 %154, %v69
      %v156 = vpop.permute.xlu0 %155
      %157 = vset.pattern.permute.xlu0 0
      %158 = vperm.xlu0 %157, %v70
      %v159 = vpop.permute.xlu0 %158
      %160 = vset.pattern.permute.xlu0 0
      %161 = vperm.xlu0 %160, %v71
      %v162 = vpop.permute.xlu0 %161
      %163 = vset.pattern.permute.xlu0 0
      %164 = vperm.xlu0 %163, %v72
      %v165 = vpop.permute.xlu0 %164
      %166 = vset.pattern.permute.xlu0 0
      %167 = vperm.xlu0 %166, %v73
      %v168 = vpop.permute.xlu0 %167
      %169 = vset.pattern.permute.xlu0 0
      %170 = vperm.xlu0 %169, %v74
      %v171 = vpop.permute.xlu0 %170
      %172 = vset.pattern.permute.xlu0 0
      %173 = vperm.xlu0 %172, %v75
      %v174 = vpop.permute.xlu0 %173
      %vm175 = vcmp.eq.s32.totalorder %v81, %v77
      %vm176 = vcmp.eq.s32.totalorder %v81, %v78
      %vm177 = vcmp.eq.s32.totalorder %v84, %v77
      %vm178 = vcmp.eq.s32.totalorder %v84, %v78
      %vm179 = vcmp.eq.s32.totalorder %v87, %v77
      %vm180 = vcmp.eq.s32.totalorder %v87, %v78
      %vm181 = vcmp.eq.s32.totalorder %v90, %v77
      %vm182 = vcmp.eq.s32.totalorder %v90, %v78
      %vm183 = vcmp.eq.s32.totalorder %v93, %v77
      %vm184 = vcmp.eq.s32.totalorder %v93, %v78
      %vm185 = vcmp.eq.s32.totalorder %v96, %v77
      %vm186 = vcmp.eq.s32.totalorder %v96, %v78
      %vm187 = vcmp.eq.s32.totalorder %v99, %v77
      %vm188 = vcmp.eq.s32.totalorder %v99, %v78
      %vm189 = vcmp.eq.s32.totalorder %v102, %v77
      %vm190 = vcmp.eq.s32.totalorder %v102, %v78
      %vm191 = vcmp.eq.s32.totalorder %v105, %v77
      %vm192 = vcmp.eq.s32.totalorder %v105, %v78
      %vm193 = vcmp.eq.s32.totalorder %v108, %v77
      %vm194 = vcmp.eq.s32.totalorder %v108, %v78
      %vm195 = vcmp.eq.s32.totalorder %v111, %v77
      %vm196 = vcmp.eq.s32.totalorder %v111, %v78
      %vm197 = vcmp.eq.s32.totalorder %v114, %v77
      %vm198 = vcmp.eq.s32.totalorder %v114, %v78
      %vm199 = vcmp.eq.s32.totalorder %v117, %v77
      %vm200 = vcmp.eq.s32.totalorder %v117, %v78
      %vm201 = vcmp.eq.s32.totalorder %v120, %v77
      %vm202 = vcmp.eq.s32.totalorder %v120, %v78
      %vm203 = vcmp.eq.s32.totalorder %v123, %v77
      %vm204 = vcmp.eq.s32.totalorder %v123, %v78
      %vm205 = vcmp.eq.s32.totalorder %v126, %v77
      %vm206 = vcmp.eq.s32.totalorder %v126, %v78
      %vm207 = vcmp.eq.s32.totalorder %v129, %v77
      %vm208 = vcmp.eq.s32.totalorder %v129, %v78
      %vm209 = vcmp.eq.s32.totalorder %v132, %v77
      %vm210 = vcmp.eq.s32.totalorder %v132, %v78
      %vm211 = vcmp.eq.s32.totalorder %v135, %v77
      %vm212 = vcmp.eq.s32.totalorder %v135, %v78
      %vm213 = vcmp.eq.s32.totalorder %v138, %v77
      %vm214 = vcmp.eq.s32.totalorder %v138, %v78
      %vm215 = vcmp.eq.s32.totalorder %v141, %v77
      %vm216 = vcmp.eq.s32.totalorder %v141, %v78
      %vm217 = vcmp.eq.s32.totalorder %v144, %v77
      %vm218 = vcmp.eq.s32.totalorder %v144, %v78
      %vm219 = vcmp.eq.s32.totalorder %v147, %v77
      %vm220 = vcmp.eq.s32.totalorder %v147, %v78
      %vm221 = vcmp.eq.s32.totalorder %v150, %v77
      %vm222 = vcmp.eq.s32.totalorder %v150, %v78
      %vm223 = vcmp.eq.s32.totalorder %v153, %v77
      %vm224 = vcmp.eq.s32.totalorder %v153, %v78
      %vm225 = vcmp.eq.s32.totalorder %v156, %v77
      %vm226 = vcmp.eq.s32.totalorder %v156, %v78
      %vm227 = vcmp.eq.s32.totalorder %v159, %v77
      %vm228 = vcmp.eq.s32.totalorder %v159, %v78
      %vm229 = vcmp.eq.s32.totalorder %v162, %v77
      %vm230 = vcmp.eq.s32.totalorder %v162, %v78
      %vm231 = vcmp.eq.s32.totalorder %v165, %v77
      %vm232 = vcmp.eq.s32.totalorder %v165, %v78
      %vm233 = vcmp.eq.s32.totalorder %v168, %v77
      %vm234 = vcmp.eq.s32.totalorder %v168, %v78
      %vm235 = vcmp.eq.s32.totalorder %v171, %v77
      %vm236 = vcmp.eq.s32.totalorder %v171, %v78
      %vm237 = vcmp.eq.s32.totalorder %v174, %v77
      %vm238 = vcmp.eq.s32.totalorder %v174, %v78
      %v239 = vsel %vm175, 1, 0
      %v240 = vsel %vm176, 1, 0
      %v241 = vsel %vm177, 1, 0
      %v242 = vsel %vm178, 1, 0
      %v243 = vsel %vm179, 1, 0
      %v244 = vsel %vm180, 1, 0
      %v245 = vsel %vm181, 1, 0
      %v246 = vsel %vm182, 1, 0
      %v247 = vsel %vm183, 1, 0
      %v248 = vsel %vm184, 1, 0
      %v249 = vsel %vm185, 1, 0
      %v250 = vsel %vm186, 1, 0
      %v251 = vsel %vm187, 1, 0
      %v252 = vsel %vm188, 1, 0
      %v253 = vsel %vm189, 1, 0
      %v254 = vsel %vm190, 1, 0
      %v255 = vsel %vm191, 1, 0
      %v256 = vsel %vm192, 1, 0
      %v257 = vsel %vm193, 1, 0
      %v258 = vsel %vm194, 1, 0
      %v259 = vsel %vm195, 1, 0
      %v260 = vsel %vm196, 1, 0
      %v261 = vsel %vm197, 1, 0
      %v262 = vsel %vm198, 1, 0
      %v263 = vsel %vm199, 1, 0
      %v264 = vsel %vm200, 1, 0
      %v265 = vsel %vm201, 1, 0
      %v266 = vsel %vm202, 1, 0
      %v267 = vsel %vm203, 1, 0
      %v268 = vsel %vm204, 1, 0
      %v269 = vsel %vm205, 1, 0
      %v270 = vsel %vm206, 1, 0
      %v271 = vsel %vm207, 1, 0
      %v272 = vsel %vm208, 1, 0
      %v273 = vsel %vm209, 1, 0
      %v274 = vsel %vm210, 1, 0
      %v275 = vsel %vm211, 1, 0
      %v276 = vsel %vm212, 1, 0
      %v277 = vsel %vm213, 1, 0
      %v278 = vsel %vm214, 1, 0
      %v279 = vsel %vm215, 1, 0
      %v280 = vsel %vm216, 1, 0
      %v281 = vsel %vm217, 1, 0
      %v282 = vsel %vm218, 1, 0
      %v283 = vsel %vm219, 1, 0
      %v284 = vsel %vm220, 1, 0
      %v285 = vsel %vm221, 1, 0
      %v286 = vsel %vm222, 1, 0
      %v287 = vsel %vm223, 1, 0
      %v288 = vsel %vm224, 1, 0
      %v289 = vsel %vm225, 1, 0
      %v290 = vsel %vm226, 1, 0
      %v291 = vsel %vm227, 1, 0
      %v292 = vsel %vm228, 1, 0
      %v293 = vsel %vm229, 1, 0
      %v294 = vsel %vm230, 1, 0
      %v295 = vsel %vm231, 1, 0
      %v296 = vsel %vm232, 1, 0
      %v297 = vsel %vm233, 1, 0
      %v298 = vsel %vm234, 1, 0
      %v299 = vsel %vm235, 1, 0
      %v300 = vsel %vm236, 1, 0
      %v301 = vsel %vm237, 1, 0
      %v302 = vsel %vm238, 1, 0
      %v303 = vcvt.s32.f32 %v239
      %v304 = vcvt.s32.f32 %v240
      %v305 = vcvt.s32.f32 %v241
      %v306 = vcvt.s32.f32 %v242
      %v307 = vcvt.s32.f32 %v243
      %v308 = vcvt.s32.f32 %v244
      %v309 = vcvt.s32.f32 %v245
      %v310 = vcvt.s32.f32 %v246
      %v311 = vcvt.s32.f32 %v247
      %v312 = vcvt.s32.f32 %v248
      %v313 = vcvt.s32.f32 %v249
      %v314 = vcvt.s32.f32 %v250
      %v315 = vcvt.s32.f32 %v251
      %v316 = vcvt.s32.f32 %v252
      %v317 = vcvt.s32.f32 %v253
      %v318 = vcvt.s32.f32 %v254
      %v319 = vcvt.s32.f32 %v255
      %v320 = vcvt.s32.f32 %v256
      %v321 = vcvt.s32.f32 %v257
      %v322 = vcvt.s32.f32 %v258
      %v323 = vcvt.s32.f32 %v259
      %v324 = vcvt.s32.f32 %v260
      %v325 = vcvt.s32.f32 %v261
      %v326 = vcvt.s32.f32 %v262
      %v327 = vcvt.s32.f32 %v263
      %v328 = vcvt.s32.f32 %v264
      %v329 = vcvt.s32.f32 %v265
      %v330 = vcvt.s32.f32 %v266
      %v331 = vcvt.s32.f32 %v267
      %v332 = vcvt.s32.f32 %v268
      %v333 = vcvt.s32.f32 %v269
      %v334 = vcvt.s32.f32 %v270
      %v335 = vcvt.s32.f32 %v271
      %v336 = vcvt.s32.f32 %v272
      %v337 = vcvt.s32.f32 %v273
      %v338 = vcvt.s32.f32 %v274
      %v339 = vcvt.s32.f32 %v275
      %v340 = vcvt.s32.f32 %v276
      %v341 = vcvt.s32.f32 %v277
      %v342 = vcvt.s32.f32 %v278
      %v343 = vcvt.s32.f32 %v279
      %v344 = vcvt.s32.f32 %v280
      %v345 = vcvt.s32.f32 %v281
      %v346 = vcvt.s32.f32 %v282
      %v347 = vcvt.s32.f32 %v283
      %v348 = vcvt.s32.f32 %v284
      %v349 = vcvt.s32.f32 %v285
      %v350 = vcvt.s32.f32 %v286
      %v351 = vcvt.s32.f32 %v287
      %v352 = vcvt.s32.f32 %v288
      %v353 = vcvt.s32.f32 %v289
      %v354 = vcvt.s32.f32 %v290
      %v355 = vcvt.s32.f32 %v291
      %v356 = vcvt.s32.f32 %v292
      %v357 = vcvt.s32.f32 %v293
      %v358 = vcvt.s32.f32 %v294
      %v359 = vcvt.s32.f32 %v295
      %v360 = vcvt.s32.f32 %v296
      %v361 = vcvt.s32.f32 %v297
      %v362 = vcvt.s32.f32 %v298
      %v363 = vcvt.s32.f32 %v299
      %v364 = vcvt.s32.f32 %v300
      %v365 = vcvt.s32.f32 %v301
      %v366 = vcvt.s32.f32 %v302
      %v367 = vpack.c.bf16 %v304, %v303
      %v368 = vpack.c.bf16 %v306, %v305
      %v369 = vpack.c.bf16 %v308, %v307
      %v370 = vpack.c.bf16 %v310, %v309
      %v371 = vpack.c.bf16 %v312, %v311
      %v372 = vpack.c.bf16 %v314, %v313
      %v373 = vpack.c.bf16 %v316, %v315
      %v374 = vpack.c.bf16 %v318, %v317
      %v375 = vpack.c.bf16 %v320, %v319
      %v376 = vpack.c.bf16 %v322, %v321
      %v377 = vpack.c.bf16 %v324, %v323
      %v378 = vpack.c.bf16 %v326, %v325
      %v379 = vpack.c.bf16 %v328, %v327
      %v380 = vpack.c.bf16 %v330, %v329
      %v381 = vpack.c.bf16 %v332, %v331
      %v382 = vpack.c.bf16 %v334, %v333
      %v383 = vpack.c.bf16 %v336, %v335
      %v384 = vpack.c.bf16 %v338, %v337
      %v385 = vpack.c.bf16 %v340, %v339
      %v386 = vpack.c.bf16 %v342, %v341
      %v387 = vpack.c.bf16 %v344, %v343
      %v388 = vpack.c.bf16 %v346, %v345
      %v389 = vpack.c.bf16 %v348, %v347
      %v390 = vpack.c.bf16 %v350, %v349
      %v391 = vpack.c.bf16 %v352, %v351
      %v392 = vpack.c.bf16 %v354, %v353
      %v393 = vpack.c.bf16 %v356, %v355
      %v394 = vpack.c.bf16 %v358, %v357
      %v395 = vpack.c.bf16 %v360, %v359
      %v396 = vpack.c.bf16 %v362, %v361
      %v397 = vpack.c.bf16 %v364, %v363
      %v398 = vpack.c.bf16 %v366, %v365
      %v399 = vunpack.c.l.bf16 %v367
      %v400 = vunpack.c.h.bf16 %v367
      %v401 = vunpack.c.l.bf16 %v368
      %v402 = vunpack.c.h.bf16 %v368
      %v403 = vunpack.c.l.bf16 %v369
      %v404 = vunpack.c.h.bf16 %v369
      %v405 = vunpack.c.l.bf16 %v370
      %v406 = vunpack.c.h.bf16 %v370
      %v407 = vunpack.c.l.bf16 %v371
      %v408 = vunpack.c.h.bf16 %v371
      %v409 = vunpack.c.l.bf16 %v372
      %v410 = vunpack.c.h.bf16 %v372
      %v411 = vunpack.c.l.bf16 %v373
      %v412 = vunpack.c.h.bf16 %v373
      %v413 = vunpack.c.l.bf16 %v374
      %v414 = vunpack.c.h.bf16 %v374
      %v415 = vunpack.c.l.bf16 %v375
      %v416 = vunpack.c.h.bf16 %v375
      %v417 = vunpack.c.l.bf16 %v376
      %v418 = vunpack.c.h.bf16 %v376
      %v419 = vunpack.c.l.bf16 %v377
      %v420 = vunpack.c.h.bf16 %v377
      %v421 = vunpack.c.l.bf16 %v378
      %v422 = vunpack.c.h.bf16 %v378
      %v423 = vunpack.c.l.bf16 %v379
      %v424 = vunpack.c.h.bf16 %v379
      %v425 = vunpack.c.l.bf16 %v380
      %v426 = vunpack.c.h.bf16 %v380
      %v427 = vunpack.c.l.bf16 %v381
      %v428 = vunpack.c.h.bf16 %v381
      %v429 = vunpack.c.l.bf16 %v382
      %v430 = vunpack.c.h.bf16 %v382
      %v431 = vunpack.c.l.bf16 %v383
      %v432 = vunpack.c.h.bf16 %v383
      %v433 = vunpack.c.l.bf16 %v384
      %v434 = vunpack.c.h.bf16 %v384
      %v435 = vunpack.c.l.bf16 %v385
      %v436 = vunpack.c.h.bf16 %v385
      %v437 = vunpack.c.l.bf16 %v386
      %v438 = vunpack.c.h.bf16 %v386
      %v439 = vunpack.c.l.bf16 %v387
      %v440 = vunpack.c.h.bf16 %v387
      %v441 = vunpack.c.l.bf16 %v388
      %v442 = vunpack.c.h.bf16 %v388
      %v443 = vunpack.c.l.bf16 %v389
      %v444 = vunpack.c.h.bf16 %v389
      %v445 = vunpack.c.l.bf16 %v390
      %v446 = vunpack.c.h.bf16 %v390
      %v447 = vunpack.c.l.bf16 %v391
      %v448 = vunpack.c.h.bf16 %v391
      %v449 = vunpack.c.l.bf16 %v392
      %v450 = vunpack.c.h.bf16 %v392
      %v451 = vunpack.c.l.bf16 %v393
      %v452 = vunpack.c.h.bf16 %v393
      %v453 = vunpack.c.l.bf16 %v394
      %v454 = vunpack.c.h.bf16 %v394
      %v455 = vunpack.c.l.bf16 %v395
      %v456 = vunpack.c.h.bf16 %v395
      %v457 = vunpack.c.l.bf16 %v396
      %v458 = vunpack.c.h.bf16 %v396
      %v459 = vunpack.c.l.bf16 %v397
      %v460 = vunpack.c.h.bf16 %v397
      %v461 = vunpack.c.l.bf16 %v398
      %v462 = vunpack.c.h.bf16 %v398
      %v463 = vadd.f32 %v399, 0.0
      %v464 = vadd.f32 %v400, 0.0
      %v465 = vadd.f32 %v401, 0.0
      %v466 = vadd.f32 %v402, 0.0
      %v467 = vadd.f32 %v403, 0.0
      %v468 = vadd.f32 %v404, 0.0
      %v469 = vadd.f32 %v405, 0.0
      %v470 = vadd.f32 %v406, 0.0
      %v471 = vadd.f32 %v407, 0.0
      %v472 = vadd.f32 %v408, 0.0
      %v473 = vadd.f32 %v409, 0.0
      %v474 = vadd.f32 %v410, 0.0
      %v475 = vadd.f32 %v411, 0.0
      %v476 = vadd.f32 %v412, 0.0
      %v477 = vadd.f32 %v413, 0.0
      %v478 = vadd.f32 %v414, 0.0
      %v479 = vadd.f32 %v415, 0.0
      %v480 = vadd.f32 %v416, 0.0
      %v481 = vadd.f32 %v417, 0.0
      %v482 = vadd.f32 %v418, 0.0
      %v483 = vadd.f32 %v419, 0.0
      %v484 = vadd.f32 %v420, 0.0
      %v485 = vadd.f32 %v421, 0.0
      %v486 = vadd.f32 %v422, 0.0
      %v487 = vadd.f32 %v423, 0.0
      %v488 = vadd.f32 %v424, 0.0
      %v489 = vadd.f32 %v425, 0.0
      %v490 = vadd.f32 %v426, 0.0
      %v491 = vadd.f32 %v427, 0.0
      %v492 = vadd.f32 %v428, 0.0
      %v493 = vadd.f32 %v429, 0.0
      %v494 = vadd.f32 %v430, 0.0
      %v495 = vadd.f32 %v431, 0.0
      %v496 = vadd.f32 %v432, 0.0
      %v497 = vadd.f32 %v433, 0.0
      %v498 = vadd.f32 %v434, 0.0
      %v499 = vadd.f32 %v435, 0.0
      %v500 = vadd.f32 %v436, 0.0
      %v501 = vadd.f32 %v437, 0.0
      %v502 = vadd.f32 %v438, 0.0
      %v503 = vadd.f32 %v439, 0.0
      %v504 = vadd.f32 %v440, 0.0
      %v505 = vadd.f32 %v441, 0.0
      %v506 = vadd.f32 %v442, 0.0
      %v507 = vadd.f32 %v443, 0.0
      %v508 = vadd.f32 %v444, 0.0
      %v509 = vadd.f32 %v445, 0.0
      %v510 = vadd.f32 %v446, 0.0
      %v511 = vadd.f32 %v447, 0.0
      %v512 = vadd.f32 %v448, 0.0
      %v513 = vadd.f32 %v449, 0.0
      %v514 = vadd.f32 %v450, 0.0
      %v515 = vadd.f32 %v451, 0.0
      %v516 = vadd.f32 %v452, 0.0
      %v517 = vadd.f32 %v453, 0.0
      %v518 = vadd.f32 %v454, 0.0
      %v519 = vadd.f32 %v455, 0.0
      %v520 = vadd.f32 %v456, 0.0
      %v521 = vadd.f32 %v457, 0.0
      %v522 = vadd.f32 %v458, 0.0
      %v523 = vadd.f32 %v459, 0.0
      %v524 = vadd.f32 %v460, 0.0
      %v525 = vadd.f32 %v461, 0.0
      %v526 = vadd.f32 %v462, 0.0
      %v527 = vpack.c.bf16 %v464, %v463
      %v528 = vpack.c.bf16 %v466, %v465
      %v529 = vpack.c.bf16 %v468, %v467
      %v530 = vpack.c.bf16 %v470, %v469
      %v531 = vpack.c.bf16 %v472, %v471
      %v532 = vpack.c.bf16 %v474, %v473
      %v533 = vpack.c.bf16 %v476, %v475
      %v534 = vpack.c.bf16 %v478, %v477
      %v535 = vpack.c.bf16 %v480, %v479
      %v536 = vpack.c.bf16 %v482, %v481
      %v537 = vpack.c.bf16 %v484, %v483
      %v538 = vpack.c.bf16 %v486, %v485
      %v539 = vpack.c.bf16 %v488, %v487
      %v540 = vpack.c.bf16 %v490, %v489
      %v541 = vpack.c.bf16 %v492, %v491
      %v542 = vpack.c.bf16 %v494, %v493
      %v543 = vpack.c.bf16 %v496, %v495
      %v544 = vpack.c.bf16 %v498, %v497
      %v545 = vpack.c.bf16 %v500, %v499
      %v546 = vpack.c.bf16 %v502, %v501
      %v547 = vpack.c.bf16 %v504, %v503
      %v548 = vpack.c.bf16 %v506, %v505
      %v549 = vpack.c.bf16 %v508, %v507
      %v550 = vpack.c.bf16 %v510, %v509
      %v551 = vpack.c.bf16 %v512, %v511
      %v552 = vpack.c.bf16 %v514, %v513
      %v553 = vpack.c.bf16 %v516, %v515
      %v554 = vpack.c.bf16 %v518, %v517
      %v555 = vpack.c.bf16 %v520, %v519
      %v556 = vpack.c.bf16 %v522, %v521
      %v557 = vpack.c.bf16 %v524, %v523
      %v558 = vpack.c.bf16 %v526, %v525
      %559 = vset.pattern.permute.xlu0 1
      %560 = vperm.xlu0 %559, %v44
      %v561 = vpop.permute.xlu0 %560
      %562 = vset.pattern.permute.xlu0 1
      %563 = vperm.xlu0 %562, %v45
      %v564 = vpop.permute.xlu0 %563
      %565 = vset.pattern.permute.xlu0 1
      %566 = vperm.xlu0 %565, %v46
      %v567 = vpop.permute.xlu0 %566
      %568 = vset.pattern.permute.xlu0 1
      %569 = vperm.xlu0 %568, %v47
      %v570 = vpop.permute.xlu0 %569
      %571 = vset.pattern.permute.xlu0 1
      %572 = vperm.xlu0 %571, %v48
      %v573 = vpop.permute.xlu0 %572
      %574 = vset.pattern.permute.xlu0 1
      %575 = vperm.xlu0 %574, %v49
      %v576 = vpop.permute.xlu0 %575
      %577 = vset.pattern.permute.xlu0 1
      %578 = vperm.xlu0 %577, %v50
      %v579 = vpop.permute.xlu0 %578
      %580 = vset.pattern.permute.xlu0 1
      %581 = vperm.xlu0 %580, %v51
      %v582 = vpop.permute.xlu0 %581
      %583 = vset.pattern.permute.xlu0 1
      %584 = vperm.xlu0 %583, %v52
      %v585 = vpop.permute.xlu0 %584
      %586 = vset.pattern.permute.xlu0 1
      %587 = vperm.xlu0 %586, %v53
      %v588 = vpop.permute.xlu0 %587
      %589 = vset.pattern.permute.xlu0 1
      %590 = vperm.xlu0 %589, %v54
      %v591 = vpop.permute.xlu0 %590
      %592 = vset.pattern.permute.xlu0 1
      %593 = vperm.xlu0 %592, %v55
      %v594 = vpop.permute.xlu0 %593
      %595 = vset.pattern.permute.xlu0 1
      %596 = vperm.xlu0 %595, %v56
      %v597 = vpop.permute.xlu0 %596
      %598 = vset.pattern.permute.xlu0 1
      %599 = vperm.xlu0 %598, %v57
      %v600 = vpop.permute.xlu0 %599
      %601 = vset.pattern.permute.xlu0 1
      %602 = vperm.xlu0 %601, %v58
      %v603 = vpop.permute.xlu0 %602
      %604 = vset.pattern.permute.xlu0 1
      %605 = vperm.xlu0 %604, %v59
      %v606 = vpop.permute.xlu0 %605
      %607 = vset.pattern.permute.xlu0 1
      %608 = vperm.xlu0 %607, %v60
      %v609 = vpop.permute.xlu0 %608
      %610 = vset.pattern.permute.xlu0 1
      %611 = vperm.xlu0 %610, %v61
      %v612 = vpop.permute.xlu0 %611
      %613 = vset.pattern.permute.xlu0 1
      %614 = vperm.xlu0 %613, %v62
      %v615 = vpop.permute.xlu0 %614
      %616 = vset.pattern.permute.xlu0 1
      %617 = vperm.xlu0 %616, %v63
      %v618 = vpop.permute.xlu0 %617
      %619 = vset.pattern.permute.xlu0 1
      %620 = vperm.xlu0 %619, %v64
      %v621 = vpop.permute.xlu0 %620
      %622 = vset.pattern.permute.xlu0 1
      %623 = vperm.xlu0 %622, %v65
      %v624 = vpop.permute.xlu0 %623
      %625 = vset.pattern.permute.xlu0 1
      %626 = vperm.xlu0 %625, %v66
      %v627 = vpop.permute.xlu0 %626
      %628 = vset.pattern.permute.xlu0 1
      %629 = vperm.xlu0 %628, %v67
      %v630 = vpop.permute.xlu0 %629
      %631 = vset.pattern.permute.xlu0 1
      %632 = vperm.xlu0 %631, %v68
      %v633 = vpop.permute.xlu0 %632
      %634 = vset.pattern.permute.xlu0 1
      %635 = vperm.xlu0 %634, %v69
      %v636 = vpop.permute.xlu0 %635
      %637 = vset.pattern.permute.xlu0 1
      %638 = vperm.xlu0 %637, %v70
      %v639 = vpop.permute.xlu0 %638
      %640 = vset.pattern.permute.xlu0 1
      %641 = vperm.xlu0 %640, %v71
      %v642 = vpop.permute.xlu0 %641
      %643 = vset.pattern.permute.xlu0 1
      %644 = vperm.xlu0 %643, %v72
      %v645 = vpop.permute.xlu0 %644
      %646 = vset.pattern.permute.xlu0 1
      %647 = vperm.xlu0 %646, %v73
      %v648 = vpop.permute.xlu0 %647
      %649 = vset.pattern.permute.xlu0 1
      %650 = vperm.xlu0 %649, %v74
      %v651 = vpop.permute.xlu0 %650
      %652 = vset.pattern.permute.xlu0 1
      %653 = vperm.xlu0 %652, %v75
      %v654 = vpop.permute.xlu0 %653
      %vm655 = vcmp.eq.s32.totalorder %v561, %v77
      %vm656 = vcmp.eq.s32.totalorder %v561, %v78
      %vm657 = vcmp.eq.s32.totalorder %v564, %v77
      %vm658 = vcmp.eq.s32.totalorder %v564, %v78
      %vm659 = vcmp.eq.s32.totalorder %v567, %v77
      %vm660 = vcmp.eq.s32.totalorder %v567, %v78
      %vm661 = vcmp.eq.s32.totalorder %v570, %v77
      %vm662 = vcmp.eq.s32.totalorder %v570, %v78
      %vm663 = vcmp.eq.s32.totalorder %v573, %v77
      %vm664 = vcmp.eq.s32.totalorder %v573, %v78
      %vm665 = vcmp.eq.s32.totalorder %v576, %v77
      %vm666 = vcmp.eq.s32.totalorder %v576, %v78
      %vm667 = vcmp.eq.s32.totalorder %v579, %v77
      %vm668 = vcmp.eq.s32.totalorder %v579, %v78
      %vm669 = vcmp.eq.s32.totalorder %v582, %v77
      %vm670 = vcmp.eq.s32.totalorder %v582, %v78
      %vm671 = vcmp.eq.s32.totalorder %v585, %v77
      %vm672 = vcmp.eq.s32.totalorder %v585, %v78
      %vm673 = vcmp.eq.s32.totalorder %v588, %v77
      %vm674 = vcmp.eq.s32.totalorder %v588, %v78
      %vm675 = vcmp.eq.s32.totalorder %v591, %v77
      %vm676 = vcmp.eq.s32.totalorder %v591, %v78
      %vm677 = vcmp.eq.s32.totalorder %v594, %v77
      %vm678 = vcmp.eq.s32.totalorder %v594, %v78
      %vm679 = vcmp.eq.s32.totalorder %v597, %v77
      %vm680 = vcmp.eq.s32.totalorder %v597, %v78
      %vm681 = vcmp.eq.s32.totalorder %v600, %v77
      %vm682 = vcmp.eq.s32.totalorder %v600, %v78
      %vm683 = vcmp.eq.s32.totalorder %v603, %v77
      %vm684 = vcmp.eq.s32.totalorder %v603, %v78
      %vm685 = vcmp.eq.s32.totalorder %v606, %v77
      %vm686 = vcmp.eq.s32.totalorder %v606, %v78
      %vm687 = vcmp.eq.s32.totalorder %v609, %v77
      %vm688 = vcmp.eq.s32.totalorder %v609, %v78
      %vm689 = vcmp.eq.s32.totalorder %v612, %v77
      %vm690 = vcmp.eq.s32.totalorder %v612, %v78
      %vm691 = vcmp.eq.s32.totalorder %v615, %v77
      %vm692 = vcmp.eq.s32.totalorder %v615, %v78
      %vm693 = vcmp.eq.s32.totalorder %v618, %v77
      %vm694 = vcmp.eq.s32.totalorder %v618, %v78
      %vm695 = vcmp.eq.s32.totalorder %v621, %v77
      %vm696 = vcmp.eq.s32.totalorder %v621, %v78
      %vm697 = vcmp.eq.s32.totalorder %v624, %v77
      %vm698 = vcmp.eq.s32.totalorder %v624, %v78
      %vm699 = vcmp.eq.s32.totalorder %v627, %v77
      %vm700 = vcmp.eq.s32.totalorder %v627, %v78
      %vm701 = vcmp.eq.s32.totalorder %v630, %v77
      %vm702 = vcmp.eq.s32.totalorder %v630, %v78
      %vm703 = vcmp.eq.s32.totalorder %v633, %v77
      %vm704 = vcmp.eq.s32.totalorder %v633, %v78
      %vm705 = vcmp.eq.s32.totalorder %v636, %v77
      %vm706 = vcmp.eq.s32.totalorder %v636, %v78
      %vm707 = vcmp.eq.s32.totalorder %v639, %v77
      %vm708 = vcmp.eq.s32.totalorder %v639, %v78
      %vm709 = vcmp.eq.s32.totalorder %v642, %v77
      %vm710 = vcmp.eq.s32.totalorder %v642, %v78
      %vm711 = vcmp.eq.s32.totalorder %v645, %v77
      %vm712 = vcmp.eq.s32.totalorder %v645, %v78
      %vm713 = vcmp.eq.s32.totalorder %v648, %v77
      %vm714 = vcmp.eq.s32.totalorder %v648, %v78
      %vm715 = vcmp.eq.s32.totalorder %v651, %v77
      %vm716 = vcmp.eq.s32.totalorder %v651, %v78
      %vm717 = vcmp.eq.s32.totalorder %v654, %v77
      %vm718 = vcmp.eq.s32.totalorder %v654, %v78
      %v719 = vsel %vm655, 1, 0
      %v720 = vsel %vm656, 1, 0
      %v721 = vsel %vm657, 1, 0
      %v722 = vsel %vm658, 1, 0
      %v723 = vsel %vm659, 1, 0
      %v724 = vsel %vm660, 1, 0
      %v725 = vsel %vm661, 1, 0
      %v726 = vsel %vm662, 1, 0
      %v727 = vsel %vm663, 1, 0
      %v728 = vsel %vm664, 1, 0
      %v729 = vsel %vm665, 1, 0
      %v730 = vsel %vm666, 1, 0
      %v731 = vsel %vm667, 1, 0
      %v732 = vsel %vm668, 1, 0
      %v733 = vsel %vm669, 1, 0
      %v734 = vsel %vm670, 1, 0
      %v735 = vsel %vm671, 1, 0
      %v736 = vsel %vm672, 1, 0
      %v737 = vsel %vm673, 1, 0
      %v738 = vsel %vm674, 1, 0
      %v739 = vsel %vm675, 1, 0
      %v740 = vsel %vm676, 1, 0
      %v741 = vsel %vm677, 1, 0
      %v742 = vsel %vm678, 1, 0
      %v743 = vsel %vm679, 1, 0
      %v744 = vsel %vm680, 1, 0
      %v745 = vsel %vm681, 1, 0
      %v746 = vsel %vm682, 1, 0
      %v747 = vsel %vm683, 1, 0
      %v748 = vsel %vm684, 1, 0
      %v749 = vsel %vm685, 1, 0
      %v750 = vsel %vm686, 1, 0
      %v751 = vsel %vm687, 1, 0
      %v752 = vsel %vm688, 1, 0
      %v753 = vsel %vm689, 1, 0
      %v754 = vsel %vm690, 1, 0
      %v755 = vsel %vm691, 1, 0
      %v756 = vsel %vm692, 1, 0
      %v757 = vsel %vm693, 1, 0
      %v758 = vsel %vm694, 1, 0
      %v759 = vsel %vm695, 1, 0
      %v760 = vsel %vm696, 1, 0
      %v761 = vsel %vm697, 1, 0
      %v762 = vsel %vm698, 1, 0
      %v763 = vsel %vm699, 1, 0
      %v764 = vsel %vm700, 1, 0
      %v765 = vsel %vm701, 1, 0
      %v766 = vsel %vm702, 1, 0
      %v767 = vsel %vm703, 1, 0
      %v768 = vsel %vm704, 1, 0
      %v769 = vsel %vm705, 1, 0
      %v770 = vsel %vm706, 1, 0
      %v771 = vsel %vm707, 1, 0
      %v772 = vsel %vm708, 1, 0
      %v773 = vsel %vm709, 1, 0
      %v774 = vsel %vm710, 1, 0
      %v775 = vsel %vm711, 1, 0
      %v776 = vsel %vm712, 1, 0
      %v777 = vsel %vm713, 1, 0
      %v778 = vsel %vm714, 1, 0
      %v779 = vsel %vm715, 1, 0
      %v780 = vsel %vm716, 1, 0
      %v781 = vsel %vm717, 1, 0
      %v782 = vsel %vm718, 1, 0
      %v783 = vcvt.s32.f32 %v719
      %v784 = vcvt.s32.f32 %v720
      %v785 = vcvt.s32.f32 %v721
      %v786 = vcvt.s32.f32 %v722
      %v787 = vcvt.s32.f32 %v723
      %v788 = vcvt.s32.f32 %v724
      %v789 = vcvt.s32.f32 %v725
      %v790 = vcvt.s32.f32 %v726
      %v791 = vcvt.s32.f32 %v727
      %v792 = vcvt.s32.f32 %v728
      %v793 = vcvt.s32.f32 %v729
      %v794 = vcvt.s32.f32 %v730
      %v795 = vcvt.s32.f32 %v731
      %v796 = vcvt.s32.f32 %v732
      %v797 = vcvt.s32.f32 %v733
      %v798 = vcvt.s32.f32 %v734
      %v799 = vcvt.s32.f32 %v735
      %v800 = vcvt.s32.f32 %v736
      %v801 = vcvt.s32.f32 %v737
      %v802 = vcvt.s32.f32 %v738
      %v803 = vcvt.s32.f32 %v739
      %v804 = vcvt.s32.f32 %v740
      %v805 = vcvt.s32.f32 %v741
      %v806 = vcvt.s32.f32 %v742
      %v807 = vcvt.s32.f32 %v743
      %v808 = vcvt.s32.f32 %v744
      %v809 = vcvt.s32.f32 %v745
      %v810 = vcvt.s32.f32 %v746
      %v811 = vcvt.s32.f32 %v747
      %v812 = vcvt.s32.f32 %v748
      %v813 = vcvt.s32.f32 %v749
      %v814 = vcvt.s32.f32 %v750
      %v815 = vcvt.s32.f32 %v751
      %v816 = vcvt.s32.f32 %v752
      %v817 = vcvt.s32.f32 %v753
      %v818 = vcvt.s32.f32 %v754
      %v819 = vcvt.s32.f32 %v755
      %v820 = vcvt.s32.f32 %v756
      %v821 = vcvt.s32.f32 %v757
      %v822 = vcvt.s32.f32 %v758
      %v823 = vcvt.s32.f32 %v759
      %v824 = vcvt.s32.f32 %v760
      %v825 = vcvt.s32.f32 %v761
      %v826 = vcvt.s32.f32 %v762
      %v827 = vcvt.s32.f32 %v763
      %v828 = vcvt.s32.f32 %v764
      %v829 = vcvt.s32.f32 %v765
      %v830 = vcvt.s32.f32 %v766
      %v831 = vcvt.s32.f32 %v767
      %v832 = vcvt.s32.f32 %v768
      %v833 = vcvt.s32.f32 %v769
      %v834 = vcvt.s32.f32 %v770
      %v835 = vcvt.s32.f32 %v771
      %v836 = vcvt.s32.f32 %v772
      %v837 = vcvt.s32.f32 %v773
      %v838 = vcvt.s32.f32 %v774
      %v839 = vcvt.s32.f32 %v775
      %v840 = vcvt.s32.f32 %v776
      %v841 = vcvt.s32.f32 %v777
      %v842 = vcvt.s32.f32 %v778
      %v843 = vcvt.s32.f32 %v779
      %v844 = vcvt.s32.f32 %v780
      %v845 = vcvt.s32.f32 %v781
      %v846 = vcvt.s32.f32 %v782
      %v847 = vpack.c.bf16 %v784, %v783
      %v848 = vpack.c.bf16 %v786, %v785
      %v849 = vpack.c.bf16 %v788, %v787
      %v850 = vpack.c.bf16 %v790, %v789
      %v851 = vpack.c.bf16 %v792, %v791
      %v852 = vpack.c.bf16 %v794, %v793
      %v853 = vpack.c.bf16 %v796, %v795
      %v854 = vpack.c.bf16 %v798, %v797
      %v855 = vpack.c.bf16 %v800, %v799
      %v856 = vpack.c.bf16 %v802, %v801
      %v857 = vpack.c.bf16 %v804, %v803
      %v858 = vpack.c.bf16 %v806, %v805
      %v859 = vpack.c.bf16 %v808, %v807
      %v860 = vpack.c.bf16 %v810, %v809
      %v861 = vpack.c.bf16 %v812, %v811
      %v862 = vpack.c.bf16 %v814, %v813
      %v863 = vpack.c.bf16 %v816, %v815
      %v864 = vpack.c.bf16 %v818, %v817
      %v865 = vpack.c.bf16 %v820, %v819
      %v866 = vpack.c.bf16 %v822, %v821
      %v867 = vpack.c.bf16 %v824, %v823
      %v868 = vpack.c.bf16 %v826, %v825
      %v869 = vpack.c.bf16 %v828, %v827
      %v870 = vpack.c.bf16 %v830, %v829
      %v871 = vpack.c.bf16 %v832, %v831
      %v872 = vpack.c.bf16 %v834, %v833
      %v873 = vpack.c.bf16 %v836, %v835
      %v874 = vpack.c.bf16 %v838, %v837
      %v875 = vpack.c.bf16 %v840, %v839
      %v876 = vpack.c.bf16 %v842, %v841
      %v877 = vpack.c.bf16 %v844, %v843
      %v878 = vpack.c.bf16 %v846, %v845
      %v879 = vunpack.c.l.bf16 %v527
      %v880 = vunpack.c.h.bf16 %v527
      %v881 = vunpack.c.l.bf16 %v528
      %v882 = vunpack.c.h.bf16 %v528
      %v883 = vunpack.c.l.bf16 %v529
      %v884 = vunpack.c.h.bf16 %v529
      %v885 = vunpack.c.l.bf16 %v530
      %v886 = vunpack.c.h.bf16 %v530
      %v887 = vunpack.c.l.bf16 %v531
      %v888 = vunpack.c.h.bf16 %v531
      %v889 = vunpack.c.l.bf16 %v532
      %v890 = vunpack.c.h.bf16 %v532
      %v891 = vunpack.c.l.bf16 %v533
      %v892 = vunpack.c.h.bf16 %v533
      %v893 = vunpack.c.l.bf16 %v534
      %v894 = vunpack.c.h.bf16 %v534
      %v895 = vunpack.c.l.bf16 %v535
      %v896 = vunpack.c.h.bf16 %v535
      %v897 = vunpack.c.l.bf16 %v536
      %v898 = vunpack.c.h.bf16 %v536
      %v899 = vunpack.c.l.bf16 %v537
      %v900 = vunpack.c.h.bf16 %v537
      %v901 = vunpack.c.l.bf16 %v538
      %v902 = vunpack.c.h.bf16 %v538
      %v903 = vunpack.c.l.bf16 %v539
      %v904 = vunpack.c.h.bf16 %v539
      %v905 = vunpack.c.l.bf16 %v540
      %v906 = vunpack.c.h.bf16 %v540
      %v907 = vunpack.c.l.bf16 %v541
      %v908 = vunpack.c.h.bf16 %v541
      %v909 = vunpack.c.l.bf16 %v542
      %v910 = vunpack.c.h.bf16 %v542
      %v911 = vunpack.c.l.bf16 %v543
      %v912 = vunpack.c.h.bf16 %v543
      %v913 = vunpack.c.l.bf16 %v544
      %v914 = vunpack.c.h.bf16 %v544
      %v915 = vunpack.c.l.bf16 %v545
      %v916 = vunpack.c.h.bf16 %v545
      %v917 = vunpack.c.l.bf16 %v546
      %v918 = vunpack.c.h.bf16 %v546
      %v919 = vunpack.c.l.bf16 %v547
      %v920 = vunpack.c.h.bf16 %v547
      %v921 = vunpack.c.l.bf16 %v548
      %v922 = vunpack.c.h.bf16 %v548
      %v923 = vunpack.c.l.bf16 %v549
      %v924 = vunpack.c.h.bf16 %v549
      %v925 = vunpack.c.l.bf16 %v550
      %v926 = vunpack.c.h.bf16 %v550
      %v927 = vunpack.c.l.bf16 %v551
      %v928 = vunpack.c.h.bf16 %v551
      %v929 = vunpack.c.l.bf16 %v552
      %v930 = vunpack.c.h.bf16 %v552
      %v931 = vunpack.c.l.bf16 %v553
      %v932 = vunpack.c.h.bf16 %v553
      %v933 = vunpack.c.l.bf16 %v554
      %v934 = vunpack.c.h.bf16 %v554
      %v935 = vunpack.c.l.bf16 %v555
      %v936 = vunpack.c.h.bf16 %v555
      %v937 = vunpack.c.l.bf16 %v556
      %v938 = vunpack.c.h.bf16 %v556
      %v939 = vunpack.c.l.bf16 %v557
      %v940 = vunpack.c.h.bf16 %v557
      %v941 = vunpack.c.l.bf16 %v558
      %v942 = vunpack.c.h.bf16 %v558
      %v943 = vunpack.c.l.bf16 %v847
      %v944 = vunpack.c.h.bf16 %v847
      %v945 = vunpack.c.l.bf16 %v848
      %v946 = vunpack.c.h.bf16 %v848
      %v947 = vunpack.c.l.bf16 %v849
      %v948 = vunpack.c.h.bf16 %v849
      %v949 = vunpack.c.l.bf16 %v850
      %v950 = vunpack.c.h.bf16 %v850
      %v951 = vunpack.c.l.bf16 %v851
      %v952 = vunpack.c.h.bf16 %v851
      %v953 = vunpack.c.l.bf16 %v852
      %v954 = vunpack.c.h.bf16 %v852
      %v955 = vunpack.c.l.bf16 %v853
      %v956 = vunpack.c.h.bf16 %v853
      %v957 = vunpack.c.l.bf16 %v854
      %v958 = vunpack.c.h.bf16 %v854
      %v959 = vunpack.c.l.bf16 %v855
      %v960 = vunpack.c.h.bf16 %v855
      %v961 = vunpack.c.l.bf16 %v856
      %v962 = vunpack.c.h.bf16 %v856
      %v963 = vunpack.c.l.bf16 %v857
      %v964 = vunpack.c.h.bf16 %v857
      %v965 = vunpack.c.l.bf16 %v858
      %v966 = vunpack.c.h.bf16 %v858
      %v967 = vunpack.c.l.bf16 %v859
      %v968 = vunpack.c.h.bf16 %v859
      %v969 = vunpack.c.l.bf16 %v860
      %v970 = vunpack.c.h.bf16 %v860
      %v971 = vunpack.c.l.bf16 %v861
      %v972 = vunpack.c.h.bf16 %v861
      %v973 = vunpack.c.l.bf16 %v862
      %v974 = vunpack.c.h.bf16 %v862
      %v975 = vunpack.c.l.bf16 %v863
      %v976 = vunpack.c.h.bf16 %v863
      %v977 = vunpack.c.l.bf16 %v864
      %v978 = vunpack.c.h.bf16 %v864
      %v979 = vunpack.c.l.bf16 %v865
      %v980 = vunpack.c.h.bf16 %v865
      %v981 = vunpack.c.l.bf16 %v866
      %v982 = vunpack.c.h.bf16 %v866
      %v983 = vunpack.c.l.bf16 %v867
      %v984 = vunpack.c.h.bf16 %v867
      %v985 = vunpack.c.l.bf16 %v868
      %v986 = vunpack.c.h.bf16 %v868
      %v987 = vunpack.c.l.bf16 %v869
      %v988 = vunpack.c.h.bf16 %v869
      %v989 = vunpack.c.l.bf16 %v870
      %v990 = vunpack.c.h.bf16 %v870
      %v991 = vunpack.c.l.bf16 %v871
      %v992 = vunpack.c.h.bf16 %v871
      %v993 = vunpack.c.l.bf16 %v872
      %v994 = vunpack.c.h.bf16 %v872
      %v995 = vunpack.c.l.bf16 %v873
      %v996 = vunpack.c.h.bf16 %v873
      %v997 = vunpack.c.l.bf16 %v874
      %v998 = vunpack.c.h.bf16 %v874
      %v999 = vunpack.c.l.bf16 %v875
      %v1000 = vunpack.c.h.bf16 %v875
      %v1001 = vunpack.c.l.bf16 %v876
      %v1002 = vunpack.c.h.bf16 %v876
      %v1003 = vunpack.c.l.bf16 %v877
      %v1004 = vunpack.c.h.bf16 %v877
      %v1005 = vunpack.c.l.bf16 %v878
      %v1006 = vunpack.c.h.bf16 %v878
      %v1007 = vadd.f32 %v879, %v943
      %v1008 = vadd.f32 %v880, %v944
      %v1009 = vadd.f32 %v881, %v945
      %v1010 = vadd.f32 %v882, %v946
      %v1011 = vadd.f32 %v883, %v947
      %v1012 = vadd.f32 %v884, %v948
      %v1013 = vadd.f32 %v885, %v949
      %v1014 = vadd.f32 %v886, %v950
      %v1015 = vadd.f32 %v887, %v951
      %v1016 = vadd.f32 %v888, %v952
      %v1017 = vadd.f32 %v889, %v953
      %v1018 = vadd.f32 %v890, %v954
      %v1019 = vadd.f32 %v891, %v955
      %v1020 = vadd.f32 %v892, %v956
      %v1021 = vadd.f32 %v893, %v957
      %v1022 = vadd.f32 %v894, %v958
      %v1023 = vadd.f32 %v895, %v959
      %v1024 = vadd.f32 %v896, %v960
      %v1025 = vadd.f32 %v897, %v961
      %v1026 = vadd.f32 %v898, %v962
      %v1027 = vadd.f32 %v899, %v963
      %v1028 = vadd.f32 %v900, %v964
      %v1029 = vadd.f32 %v901, %v965
      %v1030 = vadd.f32 %v902, %v966
      %v1031 = vadd.f32 %v903, %v967
      %v1032 = vadd.f32 %v904, %v968
      %v1033 = vadd.f32 %v905, %v969
      %v1034 = vadd.f32 %v906, %v970
      %v1035 = vadd.f32 %v907, %v971
      %v1036 = vadd.f32 %v908, %v972
      %v1037 = vadd.f32 %v909, %v973
      %v1038 = vadd.f32 %v910, %v974
      %v1039 = vadd.f32 %v911, %v975
      %v1040 = vadd.f32 %v912, %v976
      %v1041 = vadd.f32 %v913, %v977
      %v1042 = vadd.f32 %v914, %v978
      %v1043 = vadd.f32 %v915, %v979
      %v1044 = vadd.f32 %v916, %v980
      %v1045 = vadd.f32 %v917, %v981
      %v1046 = vadd.f32 %v918, %v982
      %v1047 = vadd.f32 %v919, %v983
      %v1048 = vadd.f32 %v920, %v984
      %v1049 = vadd.f32 %v921, %v985
      %v1050 = vadd.f32 %v922, %v986
      %v1051 = vadd.f32 %v923, %v987
      %v1052 = vadd.f32 %v924, %v988
      %v1053 = vadd.f32 %v925, %v989
      %v1054 = vadd.f32 %v926, %v990
      %v1055 = vadd.f32 %v927, %v991
      %v1056 = vadd.f32 %v928, %v992
      %v1057 = vadd.f32 %v929, %v993
      %v1058 = vadd.f32 %v930, %v994
      %v1059 = vadd.f32 %v931, %v995
      %v1060 = vadd.f32 %v932, %v996
      %v1061 = vadd.f32 %v933, %v997
      %v1062 = vadd.f32 %v934, %v998
      %v1063 = vadd.f32 %v935, %v999
      %v1064 = vadd.f32 %v936, %v1000
      %v1065 = vadd.f32 %v937, %v1001
      %v1066 = vadd.f32 %v938, %v1002
      %v1067 = vadd.f32 %v939, %v1003
      %v1068 = vadd.f32 %v940, %v1004
      %v1069 = vadd.f32 %v941, %v1005
      %v1070 = vadd.f32 %v942, %v1006
      %v1071 = vpack.c.bf16 %v1008, %v1007
      %v1072 = vpack.c.bf16 %v1010, %v1009
      %v1073 = vpack.c.bf16 %v1012, %v1011
      %v1074 = vpack.c.bf16 %v1014, %v1013
      %v1075 = vpack.c.bf16 %v1016, %v1015
      %v1076 = vpack.c.bf16 %v1018, %v1017
      %v1077 = vpack.c.bf16 %v1020, %v1019
      %v1078 = vpack.c.bf16 %v1022, %v1021
      %v1079 = vpack.c.bf16 %v1024, %v1023
      %v1080 = vpack.c.bf16 %v1026, %v1025
      %v1081 = vpack.c.bf16 %v1028, %v1027
      %v1082 = vpack.c.bf16 %v1030, %v1029
      %v1083 = vpack.c.bf16 %v1032, %v1031
      %v1084 = vpack.c.bf16 %v1034, %v1033
      %v1085 = vpack.c.bf16 %v1036, %v1035
      %v1086 = vpack.c.bf16 %v1038, %v1037
      %v1087 = vpack.c.bf16 %v1040, %v1039
      %v1088 = vpack.c.bf16 %v1042, %v1041
      %v1089 = vpack.c.bf16 %v1044, %v1043
      %v1090 = vpack.c.bf16 %v1046, %v1045
      %v1091 = vpack.c.bf16 %v1048, %v1047
      %v1092 = vpack.c.bf16 %v1050, %v1049
      %v1093 = vpack.c.bf16 %v1052, %v1051
      %v1094 = vpack.c.bf16 %v1054, %v1053
      %v1095 = vpack.c.bf16 %v1056, %v1055
      %v1096 = vpack.c.bf16 %v1058, %v1057
      %v1097 = vpack.c.bf16 %v1060, %v1059
      %v1098 = vpack.c.bf16 %v1062, %v1061
      %v1099 = vpack.c.bf16 %v1064, %v1063
      %v1100 = vpack.c.bf16 %v1066, %v1065
      %v1101 = vpack.c.bf16 %v1068, %v1067
      %v1102 = vpack.c.bf16 %v1070, %v1069
      %1103 = vset.pattern.permute.xlu0 2
      %1104 = vperm.xlu0 %1103, %v44
      %v1105 = vpop.permute.xlu0 %1104
      %1106 = vset.pattern.permute.xlu0 2
      %1107 = vperm.xlu0 %1106, %v45
      %v1108 = vpop.permute.xlu0 %1107
      %1109 = vset.pattern.permute.xlu0 2
      %1110 = vperm.xlu0 %1109, %v46
      %v1111 = vpop.permute.xlu0 %1110
      %1112 = vset.pattern.permute.xlu0 2
      %1113 = vperm.xlu0 %1112, %v47
      %v1114 = vpop.permute.xlu0 %1113
      %1115 = vset.pattern.permute.xlu0 2
      %1116 = vperm.xlu0 %1115, %v48
      %v1117 = vpop.permute.xlu0 %1116
      %1118 = vset.pattern.permute.xlu0 2
      %1119 = vperm.xlu0 %1118, %v49
      %v1120 = vpop.permute.xlu0 %1119
      %1121 = vset.pattern.permute.xlu0 2
      %1122 = vperm.xlu0 %1121, %v50
      %v1123 = vpop.permute.xlu0 %1122
      %1124 = vset.pattern.permute.xlu0 2
      %1125 = vperm.xlu0 %1124, %v51
      %v1126 = vpop.permute.xlu0 %1125
      %1127 = vset.pattern.permute.xlu0 2
      %1128 = vperm.xlu0 %1127, %v52
      %v1129 = vpop.permute.xlu0 %1128
      %1130 = vset.pattern.permute.xlu0 2
      %1131 = vperm.xlu0 %1130, %v53
      %v1132 = vpop.permute.xlu0 %1131
      %1133 = vset.pattern.permute.xlu0 2
      %1134 = vperm.xlu0 %1133, %v54
      %v1135 = vpop.permute.xlu0 %1134
      %1136 = vset.pattern.permute.xlu0 2
      %1137 = vperm.xlu0 %1136, %v55
      %v1138 = vpop.permute.xlu0 %1137
      %1139 = vset.pattern.permute.xlu0 2
      %1140 = vperm.xlu0 %1139, %v56
      %v1141 = vpop.permute.xlu0 %1140
      %1142 = vset.pattern.permute.xlu0 2
      %1143 = vperm.xlu0 %1142, %v57
      %v1144 = vpop.permute.xlu0 %1143
      %1145 = vset.pattern.permute.xlu0 2
      %1146 = vperm.xlu0 %1145, %v58
      %v1147 = vpop.permute.xlu0 %1146
      %1148 = vset.pattern.permute.xlu0 2
      %1149 = vperm.xlu0 %1148, %v59
      %v1150 = vpop.permute.xlu0 %1149
      %1151 = vset.pattern.permute.xlu0 2
      %1152 = vperm.xlu0 %1151, %v60
      %v1153 = vpop.permute.xlu0 %1152
      %1154 = vset.pattern.permute.xlu0 2
      %1155 = vperm.xlu0 %1154, %v61
      %v1156 = vpop.permute.xlu0 %1155
      %1157 = vset.pattern.permute.xlu0 2
      %1158 = vperm.xlu0 %1157, %v62
      %v1159 = vpop.permute.xlu0 %1158
      %1160 = vset.pattern.permute.xlu0 2
      %1161 = vperm.xlu0 %1160, %v63
      %v1162 = vpop.permute.xlu0 %1161
      %1163 = vset.pattern.permute.xlu0 2
      %1164 = vperm.xlu0 %1163, %v64
      %v1165 = vpop.permute.xlu0 %1164
      %1166 = vset.pattern.permute.xlu0 2
      %1167 = vperm.xlu0 %1166, %v65
      %v1168 = vpop.permute.xlu0 %1167
      %1169 = vset.pattern.permute.xlu0 2
      %1170 = vperm.xlu0 %1169, %v66
      %v1171 = vpop.permute.xlu0 %1170
      %1172 = vset.pattern.permute.xlu0 2
      %1173 = vperm.xlu0 %1172, %v67
      %v1174 = vpop.permute.xlu0 %1173
      %1175 = vset.pattern.permute.xlu0 2
      %1176 = vperm.xlu0 %1175, %v68
      %v1177 = vpop.permute.xlu0 %1176
      %1178 = vset.pattern.permute.xlu0 2
      %1179 = vperm.xlu0 %1178, %v69
      %v1180 = vpop.permute.xlu0 %1179
      %1181 = vset.pattern.permute.xlu0 2
      %1182 = vperm.xlu0 %1181, %v70
      %v1183 = vpop.permute.xlu0 %1182
      %1184 = vset.pattern.permute.xlu0 2
      %1185 = vperm.xlu0 %1184, %v71
      %v1186 = vpop.permute.xlu0 %1185
      %1187 = vset.pattern.permute.xlu0 2
      %1188 = vperm.xlu0 %1187, %v72
      %v1189 = vpop.permute.xlu0 %1188
      %1190 = vset.pattern.permute.xlu0 2
      %1191 = vperm.xlu0 %1190, %v73
      %v1192 = vpop.permute.xlu0 %1191
      %1193 = vset.pattern.permute.xlu0 2
      %1194 = vperm.xlu0 %1193, %v74
      %v1195 = vpop.permute.xlu0 %1194
      %1196 = vset.pattern.permute.xlu0 2
      %1197 = vperm.xlu0 %1196, %v75
      %v1198 = vpop.permute.xlu0 %1197
      %vm1199 = vcmp.eq.s32.totalorder %v1105, %v77
      %vm1200 = vcmp.eq.s32.totalorder %v1105, %v78
      %vm1201 = vcmp.eq.s32.totalorder %v1108, %v77
      %vm1202 = vcmp.eq.s32.totalorder %v1108, %v78
      %vm1203 = vcmp.eq.s32.totalorder %v1111, %v77
      %vm1204 = vcmp.eq.s32.totalorder %v1111, %v78
      %vm1205 = vcmp.eq.s32.totalorder %v1114, %v77
      %vm1206 = vcmp.eq.s32.totalorder %v1114, %v78
      %vm1207 = vcmp.eq.s32.totalorder %v1117, %v77
      %vm1208 = vcmp.eq.s32.totalorder %v1117, %v78
      %vm1209 = vcmp.eq.s32.totalorder %v1120, %v77
      %vm1210 = vcmp.eq.s32.totalorder %v1120, %v78
      %vm1211 = vcmp.eq.s32.totalorder %v1123, %v77
      %vm1212 = vcmp.eq.s32.totalorder %v1123, %v78
      %vm1213 = vcmp.eq.s32.totalorder %v1126, %v77
      %vm1214 = vcmp.eq.s32.totalorder %v1126, %v78
      %vm1215 = vcmp.eq.s32.totalorder %v1129, %v77
      %vm1216 = vcmp.eq.s32.totalorder %v1129, %v78
      %vm1217 = vcmp.eq.s32.totalorder %v1132, %v77
      %vm1218 = vcmp.eq.s32.totalorder %v1132, %v78
      %vm1219 = vcmp.eq.s32.totalorder %v1135, %v77
      %vm1220 = vcmp.eq.s32.totalorder %v1135, %v78
      %vm1221 = vcmp.eq.s32.totalorder %v1138, %v77
      %vm1222 = vcmp.eq.s32.totalorder %v1138, %v78
      %vm1223 = vcmp.eq.s32.totalorder %v1141, %v77
      %vm1224 = vcmp.eq.s32.totalorder %v1141, %v78
      %vm1225 = vcmp.eq.s32.totalorder %v1144, %v77
      %vm1226 = vcmp.eq.s32.totalorder %v1144, %v78
      %vm1227 = vcmp.eq.s32.totalorder %v1147, %v77
      %vm1228 = vcmp.eq.s32.totalorder %v1147, %v78
      %vm1229 = vcmp.eq.s32.totalorder %v1150, %v77
      %vm1230 = vcmp.eq.s32.totalorder %v1150, %v78
      %vm1231 = vcmp.eq.s32.totalorder %v1153, %v77
      %vm1232 = vcmp.eq.s32.totalorder %v1153, %v78
      %vm1233 = vcmp.eq.s32.totalorder %v1156, %v77
      %vm1234 = vcmp.eq.s32.totalorder %v1156, %v78
      %vm1235 = vcmp.eq.s32.totalorder %v1159, %v77
      %vm1236 = vcmp.eq.s32.totalorder %v1159, %v78
      %vm1237 = vcmp.eq.s32.totalorder %v1162, %v77
      %vm1238 = vcmp.eq.s32.totalorder %v1162, %v78
      %vm1239 = vcmp.eq.s32.totalorder %v1165, %v77
      %vm1240 = vcmp.eq.s32.totalorder %v1165, %v78
      %vm1241 = vcmp.eq.s32.totalorder %v1168, %v77
      %vm1242 = vcmp.eq.s32.totalorder %v1168, %v78
      %vm1243 = vcmp.eq.s32.totalorder %v1171, %v77
      %vm1244 = vcmp.eq.s32.totalorder %v1171, %v78
      %vm1245 = vcmp.eq.s32.totalorder %v1174, %v77
      %vm1246 = vcmp.eq.s32.totalorder %v1174, %v78
      %vm1247 = vcmp.eq.s32.totalorder %v1177, %v77
      %vm1248 = vcmp.eq.s32.totalorder %v1177, %v78
      %vm1249 = vcmp.eq.s32.totalorder %v1180, %v77
      %vm1250 = vcmp.eq.s32.totalorder %v1180, %v78
      %vm1251 = vcmp.eq.s32.totalorder %v1183, %v77
      %vm1252 = vcmp.eq.s32.totalorder %v1183, %v78
      %vm1253 = vcmp.eq.s32.totalorder %v1186, %v77
      %vm1254 = vcmp.eq.s32.totalorder %v1186, %v78
      %vm1255 = vcmp.eq.s32.totalorder %v1189, %v77
      %vm1256 = vcmp.eq.s32.totalorder %v1189, %v78
      %vm1257 = vcmp.eq.s32.totalorder %v1192, %v77
      %vm1258 = vcmp.eq.s32.totalorder %v1192, %v78
      %vm1259 = vcmp.eq.s32.totalorder %v1195, %v77
      %vm1260 = vcmp.eq.s32.totalorder %v1195, %v78
      %vm1261 = vcmp.eq.s32.totalorder %v1198, %v77
      %vm1262 = vcmp.eq.s32.totalorder %v1198, %v78
      %v1263 = vsel %vm1199, 1, 0
      %v1264 = vsel %vm1200, 1, 0
      %v1265 = vsel %vm1201, 1, 0
      %v1266 = vsel %vm1202, 1, 0
      %v1267 = vsel %vm1203, 1, 0
      %v1268 = vsel %vm1204, 1, 0
      %v1269 = vsel %vm1205, 1, 0
      %v1270 = vsel %vm1206, 1, 0
      %v1271 = vsel %vm1207, 1, 0
      %v1272 = vsel %vm1208, 1, 0
      %v1273 = vsel %vm1209, 1, 0
      %v1274 = vsel %vm1210, 1, 0
      %v1275 = vsel %vm1211, 1, 0
      %v1276 = vsel %vm1212, 1, 0
      %v1277 = vsel %vm1213, 1, 0
      %v1278 = vsel %vm1214, 1, 0
      %v1279 = vsel %vm1215, 1, 0
      %v1280 = vsel %vm1216, 1, 0
      %v1281 = vsel %vm1217, 1, 0
      %v1282 = vsel %vm1218, 1, 0
      %v1283 = vsel %vm1219, 1, 0
      %v1284 = vsel %vm1220, 1, 0
      %v1285 = vsel %vm1221, 1, 0
      %v1286 = vsel %vm1222, 1, 0
      %v1287 = vsel %vm1223, 1, 0
      %v1288 = vsel %vm1224, 1, 0
      %v1289 = vsel %vm1225, 1, 0
      %v1290 = vsel %vm1226, 1, 0
      %v1291 = vsel %vm1227, 1, 0
      %v1292 = vsel %vm1228, 1, 0
      %v1293 = vsel %vm1229, 1, 0
      %v1294 = vsel %vm1230, 1, 0
      %v1295 = vsel %vm1231, 1, 0
      %v1296 = vsel %vm1232, 1, 0
      %v1297 = vsel %vm1233, 1, 0
      %v1298 = vsel %vm1234, 1, 0
      %v1299 = vsel %vm1235, 1, 0
      %v1300 = vsel %vm1236, 1, 0
      %v1301 = vsel %vm1237, 1, 0
      %v1302 = vsel %vm1238, 1, 0
      %v1303 = vsel %vm1239, 1, 0
      %v1304 = vsel %vm1240, 1, 0
      %v1305 = vsel %vm1241, 1, 0
      %v1306 = vsel %vm1242, 1, 0
      %v1307 = vsel %vm1243, 1, 0
      %v1308 = vsel %vm1244, 1, 0
      %v1309 = vsel %vm1245, 1, 0
      %v1310 = vsel %vm1246, 1, 0
      %v1311 = vsel %vm1247, 1, 0
      %v1312 = vsel %vm1248, 1, 0
      %v1313 = vsel %vm1249, 1, 0
      %v1314 = vsel %vm1250, 1, 0
      %v1315 = vsel %vm1251, 1, 0
      %v1316 = vsel %vm1252, 1, 0
      %v1317 = vsel %vm1253, 1, 0
      %v1318 = vsel %vm1254, 1, 0
      %v1319 = vsel %vm1255, 1, 0
      %v1320 = vsel %vm1256, 1, 0
      %v1321 = vsel %vm1257, 1, 0
      %v1322 = vsel %vm1258, 1, 0
      %v1323 = vsel %vm1259, 1, 0
      %v1324 = vsel %vm1260, 1, 0
      %v1325 = vsel %vm1261, 1, 0
      %v1326 = vsel %vm1262, 1, 0
      %v1327 = vcvt.s32.f32 %v1263
      %v1328 = vcvt.s32.f32 %v1264
      %v1329 = vcvt.s32.f32 %v1265
      %v1330 = vcvt.s32.f32 %v1266
      %v1331 = vcvt.s32.f32 %v1267
      %v1332 = vcvt.s32.f32 %v1268
      %v1333 = vcvt.s32.f32 %v1269
      %v1334 = vcvt.s32.f32 %v1270
      %v1335 = vcvt.s32.f32 %v1271
      %v1336 = vcvt.s32.f32 %v1272
      %v1337 = vcvt.s32.f32 %v1273
      %v1338 = vcvt.s32.f32 %v1274
      %v1339 = vcvt.s32.f32 %v1275
      %v1340 = vcvt.s32.f32 %v1276
      %v1341 = vcvt.s32.f32 %v1277
      %v1342 = vcvt.s32.f32 %v1278
      %v1343 = vcvt.s32.f32 %v1279
      %v1344 = vcvt.s32.f32 %v1280
      %v1345 = vcvt.s32.f32 %v1281
      %v1346 = vcvt.s32.f32 %v1282
      %v1347 = vcvt.s32.f32 %v1283
      %v1348 = vcvt.s32.f32 %v1284
      %v1349 = vcvt.s32.f32 %v1285
      %v1350 = vcvt.s32.f32 %v1286
      %v1351 = vcvt.s32.f32 %v1287
      %v1352 = vcvt.s32.f32 %v1288
      %v1353 = vcvt.s32.f32 %v1289
      %v1354 = vcvt.s32.f32 %v1290
      %v1355 = vcvt.s32.f32 %v1291
      %v1356 = vcvt.s32.f32 %v1292
      %v1357 = vcvt.s32.f32 %v1293
      %v1358 = vcvt.s32.f32 %v1294
      %v1359 = vcvt.s32.f32 %v1295
      %v1360 = vcvt.s32.f32 %v1296
      %v1361 = vcvt.s32.f32 %v1297
      %v1362 = vcvt.s32.f32 %v1298
      %v1363 = vcvt.s32.f32 %v1299
      %v1364 = vcvt.s32.f32 %v1300
      %v1365 = vcvt.s32.f32 %v1301
      %v1366 = vcvt.s32.f32 %v1302
      %v1367 = vcvt.s32.f32 %v1303
      %v1368 = vcvt.s32.f32 %v1304
      %v1369 = vcvt.s32.f32 %v1305
      %v1370 = vcvt.s32.f32 %v1306
      %v1371 = vcvt.s32.f32 %v1307
      %v1372 = vcvt.s32.f32 %v1308
      %v1373 = vcvt.s32.f32 %v1309
      %v1374 = vcvt.s32.f32 %v1310
      %v1375 = vcvt.s32.f32 %v1311
      %v1376 = vcvt.s32.f32 %v1312
      %v1377 = vcvt.s32.f32 %v1313
      %v1378 = vcvt.s32.f32 %v1314
      %v1379 = vcvt.s32.f32 %v1315
      %v1380 = vcvt.s32.f32 %v1316
      %v1381 = vcvt.s32.f32 %v1317
      %v1382 = vcvt.s32.f32 %v1318
      %v1383 = vcvt.s32.f32 %v1319
      %v1384 = vcvt.s32.f32 %v1320
      %v1385 = vcvt.s32.f32 %v1321
      %v1386 = vcvt.s32.f32 %v1322
      %v1387 = vcvt.s32.f32 %v1323
      %v1388 = vcvt.s32.f32 %v1324
      %v1389 = vcvt.s32.f32 %v1325
      %v1390 = vcvt.s32.f32 %v1326
      %v1391 = vpack.c.bf16 %v1328, %v1327
      %v1392 = vpack.c.bf16 %v1330, %v1329
      %v1393 = vpack.c.bf16 %v1332, %v1331
      %v1394 = vpack.c.bf16 %v1334, %v1333
      %v1395 = vpack.c.bf16 %v1336, %v1335
      %v1396 = vpack.c.bf16 %v1338, %v1337
      %v1397 = vpack.c.bf16 %v1340, %v1339
      %v1398 = vpack.c.bf16 %v1342, %v1341
      %v1399 = vpack.c.bf16 %v1344, %v1343
      %v1400 = vpack.c.bf16 %v1346, %v1345
      %v1401 = vpack.c.bf16 %v1348, %v1347
      %v1402 = vpack.c.bf16 %v1350, %v1349
      %v1403 = vpack.c.bf16 %v1352, %v1351
      %v1404 = vpack.c.bf16 %v1354, %v1353
      %v1405 = vpack.c.bf16 %v1356, %v1355
      %v1406 = vpack.c.bf16 %v1358, %v1357
      %v1407 = vpack.c.bf16 %v1360, %v1359
      %v1408 = vpack.c.bf16 %v1362, %v1361
      %v1409 = vpack.c.bf16 %v1364, %v1363
      %v1410 = vpack.c.bf16 %v1366, %v1365
      %v1411 = vpack.c.bf16 %v1368, %v1367
      %v1412 = vpack.c.bf16 %v1370, %v1369
      %v1413 = vpack.c.bf16 %v1372, %v1371
      %v1414 = vpack.c.bf16 %v1374, %v1373
      %v1415 = vpack.c.bf16 %v1376, %v1375
      %v1416 = vpack.c.bf16 %v1378, %v1377
      %v1417 = vpack.c.bf16 %v1380, %v1379
      %v1418 = vpack.c.bf16 %v1382, %v1381
      %v1419 = vpack.c.bf16 %v1384, %v1383
      %v1420 = vpack.c.bf16 %v1386, %v1385
      %v1421 = vpack.c.bf16 %v1388, %v1387
      %v1422 = vpack.c.bf16 %v1390, %v1389
      %v1423 = vunpack.c.l.bf16 %v1071
      %v1424 = vunpack.c.h.bf16 %v1071
      %v1425 = vunpack.c.l.bf16 %v1072
      %v1426 = vunpack.c.h.bf16 %v1072
      %v1427 = vunpack.c.l.bf16 %v1073
      %v1428 = vunpack.c.h.bf16 %v1073
      %v1429 = vunpack.c.l.bf16 %v1074
      %v1430 = vunpack.c.h.bf16 %v1074
      %v1431 = vunpack.c.l.bf16 %v1075
      %v1432 = vunpack.c.h.bf16 %v1075
      %v1433 = vunpack.c.l.bf16 %v1076
      %v1434 = vunpack.c.h.bf16 %v1076
      %v1435 = vunpack.c.l.bf16 %v1077
      %v1436 = vunpack.c.h.bf16 %v1077
      %v1437 = vunpack.c.l.bf16 %v1078
      %v1438 = vunpack.c.h.bf16 %v1078
      %v1439 = vunpack.c.l.bf16 %v1079
      %v1440 = vunpack.c.h.bf16 %v1079
      %v1441 = vunpack.c.l.bf16 %v1080
      %v1442 = vunpack.c.h.bf16 %v1080
      %v1443 = vunpack.c.l.bf16 %v1081
      %v1444 = vunpack.c.h.bf16 %v1081
      %v1445 = vunpack.c.l.bf16 %v1082
      %v1446 = vunpack.c.h.bf16 %v1082
      %v1447 = vunpack.c.l.bf16 %v1083
      %v1448 = vunpack.c.h.bf16 %v1083
      %v1449 = vunpack.c.l.bf16 %v1084
      %v1450 = vunpack.c.h.bf16 %v1084
      %v1451 = vunpack.c.l.bf16 %v1085
      %v1452 = vunpack.c.h.bf16 %v1085
      %v1453 = vunpack.c.l.bf16 %v1086
      %v1454 = vunpack.c.h.bf16 %v1086
      %v1455 = vunpack.c.l.bf16 %v1087
      %v1456 = vunpack.c.h.bf16 %v1087
      %v1457 = vunpack.c.l.bf16 %v1088
      %v1458 = vunpack.c.h.bf16 %v1088
      %v1459 = vunpack.c.l.bf16 %v1089
      %v1460 = vunpack.c.h.bf16 %v1089
      %v1461 = vunpack.c.l.bf16 %v1090
      %v1462 = vunpack.c.h.bf16 %v1090
      %v1463 = vunpack.c.l.bf16 %v1091
      %v1464 = vunpack.c.h.bf16 %v1091
      %v1465 = vunpack.c.l.bf16 %v1092
      %v1466 = vunpack.c.h.bf16 %v1092
      %v1467 = vunpack.c.l.bf16 %v1093
      %v1468 = vunpack.c.h.bf16 %v1093
      %v1469 = vunpack.c.l.bf16 %v1094
      %v1470 = vunpack.c.h.bf16 %v1094
      %v1471 = vunpack.c.l.bf16 %v1095
      %v1472 = vunpack.c.h.bf16 %v1095
      %v1473 = vunpack.c.l.bf16 %v1096
      %v1474 = vunpack.c.h.bf16 %v1096
      %v1475 = vunpack.c.l.bf16 %v1097
      %v1476 = vunpack.c.h.bf16 %v1097
      %v1477 = vunpack.c.l.bf16 %v1098
      %v1478 = vunpack.c.h.bf16 %v1098
      %v1479 = vunpack.c.l.bf16 %v1099
      %v1480 = vunpack.c.h.bf16 %v1099
      %v1481 = vunpack.c.l.bf16 %v1100
      %v1482 = vunpack.c.h.bf16 %v1100
      %v1483 = vunpack.c.l.bf16 %v1101
      %v1484 = vunpack.c.h.bf16 %v1101
      %v1485 = vunpack.c.l.bf16 %v1102
      %v1486 = vunpack.c.h.bf16 %v1102
      %v1487 = vunpack.c.l.bf16 %v1391
      %v1488 = vunpack.c.h.bf16 %v1391
      %v1489 = vunpack.c.l.bf16 %v1392
      %v1490 = vunpack.c.h.bf16 %v1392
      %v1491 = vunpack.c.l.bf16 %v1393
      %v1492 = vunpack.c.h.bf16 %v1393
      %v1493 = vunpack.c.l.bf16 %v1394
      %v1494 = vunpack.c.h.bf16 %v1394
      %v1495 = vunpack.c.l.bf16 %v1395
      %v1496 = vunpack.c.h.bf16 %v1395
      %v1497 = vunpack.c.l.bf16 %v1396
      %v1498 = vunpack.c.h.bf16 %v1396
      %v1499 = vunpack.c.l.bf16 %v1397
      %v1500 = vunpack.c.h.bf16 %v1397
      %v1501 = vunpack.c.l.bf16 %v1398
      %v1502 = vunpack.c.h.bf16 %v1398
      %v1503 = vunpack.c.l.bf16 %v1399
      %v1504 = vunpack.c.h.bf16 %v1399
      %v1505 = vunpack.c.l.bf16 %v1400
      %v1506 = vunpack.c.h.bf16 %v1400
      %v1507 = vunpack.c.l.bf16 %v1401
      %v1508 = vunpack.c.h.bf16 %v1401
      %v1509 = vunpack.c.l.bf16 %v1402
      %v1510 = vunpack.c.h.bf16 %v1402
      %v1511 = vunpack.c.l.bf16 %v1403
      %v1512 = vunpack.c.h.bf16 %v1403
      %v1513 = vunpack.c.l.bf16 %v1404
      %v1514 = vunpack.c.h.bf16 %v1404
      %v1515 = vunpack.c.l.bf16 %v1405
      %v1516 = vunpack.c.h.bf16 %v1405
      %v1517 = vunpack.c.l.bf16 %v1406
      %v1518 = vunpack.c.h.bf16 %v1406
      %v1519 = vunpack.c.l.bf16 %v1407
      %v1520 = vunpack.c.h.bf16 %v1407
      %v1521 = vunpack.c.l.bf16 %v1408
      %v1522 = vunpack.c.h.bf16 %v1408
      %v1523 = vunpack.c.l.bf16 %v1409
      %v1524 = vunpack.c.h.bf16 %v1409
      %v1525 = vunpack.c.l.bf16 %v1410
      %v1526 = vunpack.c.h.bf16 %v1410
      %v1527 = vunpack.c.l.bf16 %v1411
      %v1528 = vunpack.c.h.bf16 %v1411
      %v1529 = vunpack.c.l.bf16 %v1412
      %v1530 = vunpack.c.h.bf16 %v1412
      %v1531 = vunpack.c.l.bf16 %v1413
      %v1532 = vunpack.c.h.bf16 %v1413
      %v1533 = vunpack.c.l.bf16 %v1414
      %v1534 = vunpack.c.h.bf16 %v1414
      %v1535 = vunpack.c.l.bf16 %v1415
      %v1536 = vunpack.c.h.bf16 %v1415
      %v1537 = vunpack.c.l.bf16 %v1416
      %v1538 = vunpack.c.h.bf16 %v1416
      %v1539 = vunpack.c.l.bf16 %v1417
      %v1540 = vunpack.c.h.bf16 %v1417
      %v1541 = vunpack.c.l.bf16 %v1418
      %v1542 = vunpack.c.h.bf16 %v1418
      %v1543 = vunpack.c.l.bf16 %v1419
      %v1544 = vunpack.c.h.bf16 %v1419
      %v1545 = vunpack.c.l.bf16 %v1420
      %v1546 = vunpack.c.h.bf16 %v1420
      %v1547 = vunpack.c.l.bf16 %v1421
      %v1548 = vunpack.c.h.bf16 %v1421
      %v1549 = vunpack.c.l.bf16 %v1422
      %v1550 = vunpack.c.h.bf16 %v1422
      %v1551 = vadd.f32 %v1423, %v1487
      %v1552 = vadd.f32 %v1424, %v1488
      %v1553 = vadd.f32 %v1425, %v1489
      %v1554 = vadd.f32 %v1426, %v1490
      %v1555 = vadd.f32 %v1427, %v1491
      %v1556 = vadd.f32 %v1428, %v1492
      %v1557 = vadd.f32 %v1429, %v1493
      %v1558 = vadd.f32 %v1430, %v1494
      %v1559 = vadd.f32 %v1431, %v1495
      %v1560 = vadd.f32 %v1432, %v1496
      %v1561 = vadd.f32 %v1433, %v1497
      %v1562 = vadd.f32 %v1434, %v1498
      %v1563 = vadd.f32 %v1435, %v1499
      %v1564 = vadd.f32 %v1436, %v1500
      %v1565 = vadd.f32 %v1437, %v1501
      %v1566 = vadd.f32 %v1438, %v1502
      %v1567 = vadd.f32 %v1439, %v1503
      %v1568 = vadd.f32 %v1440, %v1504
      %v1569 = vadd.f32 %v1441, %v1505
      %v1570 = vadd.f32 %v1442, %v1506
      %v1571 = vadd.f32 %v1443, %v1507
      %v1572 = vadd.f32 %v1444, %v1508
      %v1573 = vadd.f32 %v1445, %v1509
      %v1574 = vadd.f32 %v1446, %v1510
      %v1575 = vadd.f32 %v1447, %v1511
      %v1576 = vadd.f32 %v1448, %v1512
      %v1577 = vadd.f32 %v1449, %v1513
      %v1578 = vadd.f32 %v1450, %v1514
      %v1579 = vadd.f32 %v1451, %v1515
      %v1580 = vadd.f32 %v1452, %v1516
      %v1581 = vadd.f32 %v1453, %v1517
      %v1582 = vadd.f32 %v1454, %v1518
      %v1583 = vadd.f32 %v1455, %v1519
      %v1584 = vadd.f32 %v1456, %v1520
      %v1585 = vadd.f32 %v1457, %v1521
      %v1586 = vadd.f32 %v1458, %v1522
      %v1587 = vadd.f32 %v1459, %v1523
      %v1588 = vadd.f32 %v1460, %v1524
      %v1589 = vadd.f32 %v1461, %v1525
      %v1590 = vadd.f32 %v1462, %v1526
      %v1591 = vadd.f32 %v1463, %v1527
      %v1592 = vadd.f32 %v1464, %v1528
      %v1593 = vadd.f32 %v1465, %v1529
      %v1594 = vadd.f32 %v1466, %v1530
      %v1595 = vadd.f32 %v1467, %v1531
      %v1596 = vadd.f32 %v1468, %v1532
      %v1597 = vadd.f32 %v1469, %v1533
      %v1598 = vadd.f32 %v1470, %v1534
      %v1599 = vadd.f32 %v1471, %v1535
      %v1600 = vadd.f32 %v1472, %v1536
      %v1601 = vadd.f32 %v1473, %v1537
      %v1602 = vadd.f32 %v1474, %v1538
      %v1603 = vadd.f32 %v1475, %v1539
      %v1604 = vadd.f32 %v1476, %v1540
      %v1605 = vadd.f32 %v1477, %v1541
      %v1606 = vadd.f32 %v1478, %v1542
      %v1607 = vadd.f32 %v1479, %v1543
      %v1608 = vadd.f32 %v1480, %v1544
      %v1609 = vadd.f32 %v1481, %v1545
      %v1610 = vadd.f32 %v1482, %v1546
      %v1611 = vadd.f32 %v1483, %v1547
      %v1612 = vadd.f32 %v1484, %v1548
      %v1613 = vadd.f32 %v1485, %v1549
      %v1614 = vadd.f32 %v1486, %v1550
      %v1615 = vpack.c.bf16 %v1552, %v1551
      %v1616 = vpack.c.bf16 %v1554, %v1553
      %v1617 = vpack.c.bf16 %v1556, %v1555
      %v1618 = vpack.c.bf16 %v1558, %v1557
      %v1619 = vpack.c.bf16 %v1560, %v1559
      %v1620 = vpack.c.bf16 %v1562, %v1561
      %v1621 = vpack.c.bf16 %v1564, %v1563
      %v1622 = vpack.c.bf16 %v1566, %v1565
      %v1623 = vpack.c.bf16 %v1568, %v1567
      %v1624 = vpack.c.bf16 %v1570, %v1569
      %v1625 = vpack.c.bf16 %v1572, %v1571
      %v1626 = vpack.c.bf16 %v1574, %v1573
      %v1627 = vpack.c.bf16 %v1576, %v1575
      %v1628 = vpack.c.bf16 %v1578, %v1577
      %v1629 = vpack.c.bf16 %v1580, %v1579
      %v1630 = vpack.c.bf16 %v1582, %v1581
      %v1631 = vpack.c.bf16 %v1584, %v1583
      %v1632 = vpack.c.bf16 %v1586, %v1585
      %v1633 = vpack.c.bf16 %v1588, %v1587
      %v1634 = vpack.c.bf16 %v1590, %v1589
      %v1635 = vpack.c.bf16 %v1592, %v1591
      %v1636 = vpack.c.bf16 %v1594, %v1593
      %v1637 = vpack.c.bf16 %v1596, %v1595
      %v1638 = vpack.c.bf16 %v1598, %v1597
      %v1639 = vpack.c.bf16 %v1600, %v1599
      %v1640 = vpack.c.bf16 %v1602, %v1601
      %v1641 = vpack.c.bf16 %v1604, %v1603
      %v1642 = vpack.c.bf16 %v1606, %v1605
      %v1643 = vpack.c.bf16 %v1608, %v1607
      %v1644 = vpack.c.bf16 %v1610, %v1609
      %v1645 = vpack.c.bf16 %v1612, %v1611
      %v1646 = vpack.c.bf16 %v1614, %v1613
      %1647 = vset.pattern.permute.xlu0 3
      %1648 = vperm.xlu0 %1647, %v44
      %v1649 = vpop.permute.xlu0 %1648
      %1650 = vset.pattern.permute.xlu0 3
      %1651 = vperm.xlu0 %1650, %v45
      %v1652 = vpop.permute.xlu0 %1651
      %1653 = vset.pattern.permute.xlu0 3
      %1654 = vperm.xlu0 %1653, %v46
      %v1655 = vpop.permute.xlu0 %1654
      %1656 = vset.pattern.permute.xlu0 3
      %1657 = vperm.xlu0 %1656, %v47
      %v1658 = vpop.permute.xlu0 %1657
      %1659 = vset.pattern.permute.xlu0 3
      %1660 = vperm.xlu0 %1659, %v48
      %v1661 = vpop.permute.xlu0 %1660
      %1662 = vset.pattern.permute.xlu0 3
      %1663 = vperm.xlu0 %1662, %v49
      %v1664 = vpop.permute.xlu0 %1663
      %1665 = vset.pattern.permute.xlu0 3
      %1666 = vperm.xlu0 %1665, %v50
      %v1667 = vpop.permute.xlu0 %1666
      %1668 = vset.pattern.permute.xlu0 3
      %1669 = vperm.xlu0 %1668, %v51
      %v1670 = vpop.permute.xlu0 %1669
      %1671 = vset.pattern.permute.xlu0 3
      %1672 = vperm.xlu0 %1671, %v52
      %v1673 = vpop.permute.xlu0 %1672
      %1674 = vset.pattern.permute.xlu0 3
      %1675 = vperm.xlu0 %1674, %v53
      %v1676 = vpop.permute.xlu0 %1675
      %1677 = vset.pattern.permute.xlu0 3
      %1678 = vperm.xlu0 %1677, %v54
      %v1679 = vpop.permute.xlu0 %1678
      %1680 = vset.pattern.permute.xlu0 3
      %1681 = vperm.xlu0 %1680, %v55
      %v1682 = vpop.permute.xlu0 %1681
      %1683 = vset.pattern.permute.xlu0 3
      %1684 = vperm.xlu0 %1683, %v56
      %v1685 = vpop.permute.xlu0 %1684
      %1686 = vset.pattern.permute.xlu0 3
      %1687 = vperm.xlu0 %1686, %v57
      %v1688 = vpop.permute.xlu0 %1687
      %1689 = vset.pattern.permute.xlu0 3
      %1690 = vperm.xlu0 %1689, %v58
      %v1691 = vpop.permute.xlu0 %1690
      %1692 = vset.pattern.permute.xlu0 3
      %1693 = vperm.xlu0 %1692, %v59
      %v1694 = vpop.permute.xlu0 %1693
      %1695 = vset.pattern.permute.xlu0 3
      %1696 = vperm.xlu0 %1695, %v60
      %v1697 = vpop.permute.xlu0 %1696
      %1698 = vset.pattern.permute.xlu0 3
      %1699 = vperm.xlu0 %1698, %v61
      %v1700 = vpop.permute.xlu0 %1699
      %1701 = vset.pattern.permute.xlu0 3
      %1702 = vperm.xlu0 %1701, %v62
      %v1703 = vpop.permute.xlu0 %1702
      %1704 = vset.pattern.permute.xlu0 3
      %1705 = vperm.xlu0 %1704, %v63
      %v1706 = vpop.permute.xlu0 %1705
      %1707 = vset.pattern.permute.xlu0 3
      %1708 = vperm.xlu0 %1707, %v64
      %v1709 = vpop.permute.xlu0 %1708
      %1710 = vset.pattern.permute.xlu0 3
      %1711 = vperm.xlu0 %1710, %v65
      %v1712 = vpop.permute.xlu0 %1711
      %1713 = vset.pattern.permute.xlu0 3
      %1714 = vperm.xlu0 %1713, %v66
      %v1715 = vpop.permute.xlu0 %1714
      %1716 = vset.pattern.permute.xlu0 3
      %1717 = vperm.xlu0 %1716, %v67
      %v1718 = vpop.permute.xlu0 %1717
      %1719 = vset.pattern.permute.xlu0 3
      %1720 = vperm.xlu0 %1719, %v68
      %v1721 = vpop.permute.xlu0 %1720
      %1722 = vset.pattern.permute.xlu0 3
      %1723 = vperm.xlu0 %1722, %v69
      %v1724 = vpop.permute.xlu0 %1723
      %1725 = vset.pattern.permute.xlu0 3
      %1726 = vperm.xlu0 %1725, %v70
      %v1727 = vpop.permute.xlu0 %1726
      %1728 = vset.pattern.permute.xlu0 3
      %1729 = vperm.xlu0 %1728, %v71
      %v1730 = vpop.permute.xlu0 %1729
      %1731 = vset.pattern.permute.xlu0 3
      %1732 = vperm.xlu0 %1731, %v72
      %v1733 = vpop.permute.xlu0 %1732
      %1734 = vset.pattern.permute.xlu0 3
      %1735 = vperm.xlu0 %1734, %v73
      %v1736 = vpop.permute.xlu0 %1735
      %1737 = vset.pattern.permute.xlu0 3
      %1738 = vperm.xlu0 %1737, %v74
      %v1739 = vpop.permute.xlu0 %1738
      %1740 = vset.pattern.permute.xlu0 3
      %1741 = vperm.xlu0 %1740, %v75
      %v1742 = vpop.permute.xlu0 %1741
      %vm1743 = vcmp.eq.s32.totalorder %v1649, %v77
      %vm1744 = vcmp.eq.s32.totalorder %v1649, %v78
      %vm1745 = vcmp.eq.s32.totalorder %v1652, %v77
      %vm1746 = vcmp.eq.s32.totalorder %v1652, %v78
      %vm1747 = vcmp.eq.s32.totalorder %v1655, %v77
      %vm1748 = vcmp.eq.s32.totalorder %v1655, %v78
      %vm1749 = vcmp.eq.s32.totalorder %v1658, %v77
      %vm1750 = vcmp.eq.s32.totalorder %v1658, %v78
      %vm1751 = vcmp.eq.s32.totalorder %v1661, %v77
      %vm1752 = vcmp.eq.s32.totalorder %v1661, %v78
      %vm1753 = vcmp.eq.s32.totalorder %v1664, %v77
      %vm1754 = vcmp.eq.s32.totalorder %v1664, %v78
      %vm1755 = vcmp.eq.s32.totalorder %v1667, %v77
      %vm1756 = vcmp.eq.s32.totalorder %v1667, %v78
      %vm1757 = vcmp.eq.s32.totalorder %v1670, %v77
      %vm1758 = vcmp.eq.s32.totalorder %v1670, %v78
      %vm1759 = vcmp.eq.s32.totalorder %v1673, %v77
      %vm1760 = vcmp.eq.s32.totalorder %v1673, %v78
      %vm1761 = vcmp.eq.s32.totalorder %v1676, %v77
      %vm1762 = vcmp.eq.s32.totalorder %v1676, %v78
      %vm1763 = vcmp.eq.s32.totalorder %v1679, %v77
      %vm1764 = vcmp.eq.s32.totalorder %v1679, %v78
      %vm1765 = vcmp.eq.s32.totalorder %v1682, %v77
      %vm1766 = vcmp.eq.s32.totalorder %v1682, %v78
      %vm1767 = vcmp.eq.s32.totalorder %v1685, %v77
      %vm1768 = vcmp.eq.s32.totalorder %v1685, %v78
      %vm1769 = vcmp.eq.s32.totalorder %v1688, %v77
      %vm1770 = vcmp.eq.s32.totalorder %v1688, %v78
      %vm1771 = vcmp.eq.s32.totalorder %v1691, %v77
      %vm1772 = vcmp.eq.s32.totalorder %v1691, %v78
      %vm1773 = vcmp.eq.s32.totalorder %v1694, %v77
      %vm1774 = vcmp.eq.s32.totalorder %v1694, %v78
      %vm1775 = vcmp.eq.s32.totalorder %v1697, %v77
      %vm1776 = vcmp.eq.s32.totalorder %v1697, %v78
      %vm1777 = vcmp.eq.s32.totalorder %v1700, %v77
      %vm1778 = vcmp.eq.s32.totalorder %v1700, %v78
      %vm1779 = vcmp.eq.s32.totalorder %v1703, %v77
      %vm1780 = vcmp.eq.s32.totalorder %v1703, %v78
      %vm1781 = vcmp.eq.s32.totalorder %v1706, %v77
      %vm1782 = vcmp.eq.s32.totalorder %v1706, %v78
      %vm1783 = vcmp.eq.s32.totalorder %v1709, %v77
      %vm1784 = vcmp.eq.s32.totalorder %v1709, %v78
      %vm1785 = vcmp.eq.s32.totalorder %v1712, %v77
      %vm1786 = vcmp.eq.s32.totalorder %v1712, %v78
      %vm1787 = vcmp.eq.s32.totalorder %v1715, %v77
      %vm1788 = vcmp.eq.s32.totalorder %v1715, %v78
      %vm1789 = vcmp.eq.s32.totalorder %v1718, %v77
      %vm1790 = vcmp.eq.s32.totalorder %v1718, %v78
      %vm1791 = vcmp.eq.s32.totalorder %v1721, %v77
      %vm1792 = vcmp.eq.s32.totalorder %v1721, %v78
      %vm1793 = vcmp.eq.s32.totalorder %v1724, %v77
      %vm1794 = vcmp.eq.s32.totalorder %v1724, %v78
      %vm1795 = vcmp.eq.s32.totalorder %v1727, %v77
      %vm1796 = vcmp.eq.s32.totalorder %v1727, %v78
      %vm1797 = vcmp.eq.s32.totalorder %v1730, %v77
      %vm1798 = vcmp.eq.s32.totalorder %v1730, %v78
      %vm1799 = vcmp.eq.s32.totalorder %v1733, %v77
      %vm1800 = vcmp.eq.s32.totalorder %v1733, %v78
      %vm1801 = vcmp.eq.s32.totalorder %v1736, %v77
      %vm1802 = vcmp.eq.s32.totalorder %v1736, %v78
      %vm1803 = vcmp.eq.s32.totalorder %v1739, %v77
      %vm1804 = vcmp.eq.s32.totalorder %v1739, %v78
      %vm1805 = vcmp.eq.s32.totalorder %v1742, %v77
      %vm1806 = vcmp.eq.s32.totalorder %v1742, %v78
      %v1807 = vsel %vm1743, 1, 0
      %v1808 = vsel %vm1744, 1, 0
      %v1809 = vsel %vm1745, 1, 0
      %v1810 = vsel %vm1746, 1, 0
      %v1811 = vsel %vm1747, 1, 0
      %v1812 = vsel %vm1748, 1, 0
      %v1813 = vsel %vm1749, 1, 0
      %v1814 = vsel %vm1750, 1, 0
      %v1815 = vsel %vm1751, 1, 0
      %v1816 = vsel %vm1752, 1, 0
      %v1817 = vsel %vm1753, 1, 0
      %v1818 = vsel %vm1754, 1, 0
      %v1819 = vsel %vm1755, 1, 0
      %v1820 = vsel %vm1756, 1, 0
      %v1821 = vsel %vm1757, 1, 0
      %v1822 = vsel %vm1758, 1, 0
      %v1823 = vsel %vm1759, 1, 0
      %v1824 = vsel %vm1760, 1, 0
      %v1825 = vsel %vm1761, 1, 0
      %v1826 = vsel %vm1762, 1, 0
      %v1827 = vsel %vm1763, 1, 0
      %v1828 = vsel %vm1764, 1, 0
      %v1829 = vsel %vm1765, 1, 0
      %v1830 = vsel %vm1766, 1, 0
      %v1831 = vsel %vm1767, 1, 0
      %v1832 = vsel %vm1768, 1, 0
      %v1833 = vsel %vm1769, 1, 0
      %v1834 = vsel %vm1770, 1, 0
      %v1835 = vsel %vm1771, 1, 0
      %v1836 = vsel %vm1772, 1, 0
      %v1837 = vsel %vm1773, 1, 0
      %v1838 = vsel %vm1774, 1, 0
      %v1839 = vsel %vm1775, 1, 0
      %v1840 = vsel %vm1776, 1, 0
      %v1841 = vsel %vm1777, 1, 0
      %v1842 = vsel %vm1778, 1, 0
      %v1843 = vsel %vm1779, 1, 0
      %v1844 = vsel %vm1780, 1, 0
      %v1845 = vsel %vm1781, 1, 0
      %v1846 = vsel %vm1782, 1, 0
      %v1847 = vsel %vm1783, 1, 0
      %v1848 = vsel %vm1784, 1, 0
      %v1849 = vsel %vm1785, 1, 0
      %v1850 = vsel %vm1786, 1, 0
      %v1851 = vsel %vm1787, 1, 0
      %v1852 = vsel %vm1788, 1, 0
      %v1853 = vsel %vm1789, 1, 0
      %v1854 = vsel %vm1790, 1, 0
      %v1855 = vsel %vm1791, 1, 0
      %v1856 = vsel %vm1792, 1, 0
      %v1857 = vsel %vm1793, 1, 0
      %v1858 = vsel %vm1794, 1, 0
      %v1859 = vsel %vm1795, 1, 0
      %v1860 = vsel %vm1796, 1, 0
      %v1861 = vsel %vm1797, 1, 0
      %v1862 = vsel %vm1798, 1, 0
      %v1863 = vsel %vm1799, 1, 0
      %v1864 = vsel %vm1800, 1, 0
      %v1865 = vsel %vm1801, 1, 0
      %v1866 = vsel %vm1802, 1, 0
      %v1867 = vsel %vm1803, 1, 0
      %v1868 = vsel %vm1804, 1, 0
      %v1869 = vsel %vm1805, 1, 0
      %v1870 = vsel %vm1806, 1, 0
      %v1871 = vcvt.s32.f32 %v1807
      %v1872 = vcvt.s32.f32 %v1808
      %v1873 = vcvt.s32.f32 %v1809
      %v1874 = vcvt.s32.f32 %v1810
      %v1875 = vcvt.s32.f32 %v1811
      %v1876 = vcvt.s32.f32 %v1812
      %v1877 = vcvt.s32.f32 %v1813
      %v1878 = vcvt.s32.f32 %v1814
      %v1879 = vcvt.s32.f32 %v1815
      %v1880 = vcvt.s32.f32 %v1816
      %v1881 = vcvt.s32.f32 %v1817
      %v1882 = vcvt.s32.f32 %v1818
      %v1883 = vcvt.s32.f32 %v1819
      %v1884 = vcvt.s32.f32 %v1820
      %v1885 = vcvt.s32.f32 %v1821
      %v1886 = vcvt.s32.f32 %v1822
      %v1887 = vcvt.s32.f32 %v1823
      %v1888 = vcvt.s32.f32 %v1824
      %v1889 = vcvt.s32.f32 %v1825
      %v1890 = vcvt.s32.f32 %v1826
      %v1891 = vcvt.s32.f32 %v1827
      %v1892 = vcvt.s32.f32 %v1828
      %v1893 = vcvt.s32.f32 %v1829
      %v1894 = vcvt.s32.f32 %v1830
      %v1895 = vcvt.s32.f32 %v1831
      %v1896 = vcvt.s32.f32 %v1832
      %v1897 = vcvt.s32.f32 %v1833
      %v1898 = vcvt.s32.f32 %v1834
      %v1899 = vcvt.s32.f32 %v1835
      %v1900 = vcvt.s32.f32 %v1836
      %v1901 = vcvt.s32.f32 %v1837
      %v1902 = vcvt.s32.f32 %v1838
      %v1903 = vcvt.s32.f32 %v1839
      %v1904 = vcvt.s32.f32 %v1840
      %v1905 = vcvt.s32.f32 %v1841
      %v1906 = vcvt.s32.f32 %v1842
      %v1907 = vcvt.s32.f32 %v1843
      %v1908 = vcvt.s32.f32 %v1844
      %v1909 = vcvt.s32.f32 %v1845
      %v1910 = vcvt.s32.f32 %v1846
      %v1911 = vcvt.s32.f32 %v1847
      %v1912 = vcvt.s32.f32 %v1848
      %v1913 = vcvt.s32.f32 %v1849
      %v1914 = vcvt.s32.f32 %v1850
      %v1915 = vcvt.s32.f32 %v1851
      %v1916 = vcvt.s32.f32 %v1852
      %v1917 = vcvt.s32.f32 %v1853
      %v1918 = vcvt.s32.f32 %v1854
      %v1919 = vcvt.s32.f32 %v1855
      %v1920 = vcvt.s32.f32 %v1856
      %v1921 = vcvt.s32.f32 %v1857
      %v1922 = vcvt.s32.f32 %v1858
      %v1923 = vcvt.s32.f32 %v1859
      %v1924 = vcvt.s32.f32 %v1860
      %v1925 = vcvt.s32.f32 %v1861
      %v1926 = vcvt.s32.f32 %v1862
      %v1927 = vcvt.s32.f32 %v1863
      %v1928 = vcvt.s32.f32 %v1864
      %v1929 = vcvt.s32.f32 %v1865
      %v1930 = vcvt.s32.f32 %v1866
      %v1931 = vcvt.s32.f32 %v1867
      %v1932 = vcvt.s32.f32 %v1868
      %v1933 = vcvt.s32.f32 %v1869
      %v1934 = vcvt.s32.f32 %v1870
      %v1935 = vpack.c.bf16 %v1872, %v1871
      %v1936 = vpack.c.bf16 %v1874, %v1873
      %v1937 = vpack.c.bf16 %v1876, %v1875
      %v1938 = vpack.c.bf16 %v1878, %v1877
      %v1939 = vpack.c.bf16 %v1880, %v1879
      %v1940 = vpack.c.bf16 %v1882, %v1881
      %v1941 = vpack.c.bf16 %v1884, %v1883
      %v1942 = vpack.c.bf16 %v1886, %v1885
      %v1943 = vpack.c.bf16 %v1888, %v1887
      %v1944 = vpack.c.bf16 %v1890, %v1889
      %v1945 = vpack.c.bf16 %v1892, %v1891
      %v1946 = vpack.c.bf16 %v1894, %v1893
      %v1947 = vpack.c.bf16 %v1896, %v1895
      %v1948 = vpack.c.bf16 %v1898, %v1897
      %v1949 = vpack.c.bf16 %v1900, %v1899
      %v1950 = vpack.c.bf16 %v1902, %v1901
      %v1951 = vpack.c.bf16 %v1904, %v1903
      %v1952 = vpack.c.bf16 %v1906, %v1905
      %v1953 = vpack.c.bf16 %v1908, %v1907
      %v1954 = vpack.c.bf16 %v1910, %v1909
      %v1955 = vpack.c.bf16 %v1912, %v1911
      %v1956 = vpack.c.bf16 %v1914, %v1913
      %v1957 = vpack.c.bf16 %v1916, %v1915
      %v1958 = vpack.c.bf16 %v1918, %v1917
      %v1959 = vpack.c.bf16 %v1920, %v1919
      %v1960 = vpack.c.bf16 %v1922, %v1921
      %v1961 = vpack.c.bf16 %v1924, %v1923
      %v1962 = vpack.c.bf16 %v1926, %v1925
      %v1963 = vpack.c.bf16 %v1928, %v1927
      %v1964 = vpack.c.bf16 %v1930, %v1929
      %v1965 = vpack.c.bf16 %v1932, %v1931
      %v1966 = vpack.c.bf16 %v1934, %v1933
      %v1967 = vunpack.c.l.bf16 %v1615
      %v1968 = vunpack.c.h.bf16 %v1615
      %v1969 = vunpack.c.l.bf16 %v1616
      %v1970 = vunpack.c.h.bf16 %v1616
      %v1971 = vunpack.c.l.bf16 %v1617
      %v1972 = vunpack.c.h.bf16 %v1617
      %v1973 = vunpack.c.l.bf16 %v1618
      %v1974 = vunpack.c.h.bf16 %v1618
      %v1975 = vunpack.c.l.bf16 %v1619
      %v1976 = vunpack.c.h.bf16 %v1619
      %v1977 = vunpack.c.l.bf16 %v1620
      %v1978 = vunpack.c.h.bf16 %v1620
      %v1979 = vunpack.c.l.bf16 %v1621
      %v1980 = vunpack.c.h.bf16 %v1621
      %v1981 = vunpack.c.l.bf16 %v1622
      %v1982 = vunpack.c.h.bf16 %v1622
      %v1983 = vunpack.c.l.bf16 %v1623
      %v1984 = vunpack.c.h.bf16 %v1623
      %v1985 = vunpack.c.l.bf16 %v1624
      %v1986 = vunpack.c.h.bf16 %v1624
      %v1987 = vunpack.c.l.bf16 %v1625
      %v1988 = vunpack.c.h.bf16 %v1625
      %v1989 = vunpack.c.l.bf16 %v1626
      %v1990 = vunpack.c.h.bf16 %v1626
      %v1991 = vunpack.c.l.bf16 %v1627
      %v1992 = vunpack.c.h.bf16 %v1627
      %v1993 = vunpack.c.l.bf16 %v1628
      %v1994 = vunpack.c.h.bf16 %v1628
      %v1995 = vunpack.c.l.bf16 %v1629
      %v1996 = vunpack.c.h.bf16 %v1629
      %v1997 = vunpack.c.l.bf16 %v1630
      %v1998 = vunpack.c.h.bf16 %v1630
      %v1999 = vunpack.c.l.bf16 %v1631
      %v2000 = vunpack.c.h.bf16 %v1631
      %v2001 = vunpack.c.l.bf16 %v1632
      %v2002 = vunpack.c.h.bf16 %v1632
      %v2003 = vunpack.c.l.bf16 %v1633
      %v2004 = vunpack.c.h.bf16 %v1633
      %v2005 = vunpack.c.l.bf16 %v1634
      %v2006 = vunpack.c.h.bf16 %v1634
      %v2007 = vunpack.c.l.bf16 %v1635
      %v2008 = vunpack.c.h.bf16 %v1635
      %v2009 = vunpack.c.l.bf16 %v1636
      %v2010 = vunpack.c.h.bf16 %v1636
      %v2011 = vunpack.c.l.bf16 %v1637
      %v2012 = vunpack.c.h.bf16 %v1637
      %v2013 = vunpack.c.l.bf16 %v1638
      %v2014 = vunpack.c.h.bf16 %v1638
      %v2015 = vunpack.c.l.bf16 %v1639
      %v2016 = vunpack.c.h.bf16 %v1639
      %v2017 = vunpack.c.l.bf16 %v1640
      %v2018 = vunpack.c.h.bf16 %v1640
      %v2019 = vunpack.c.l.bf16 %v1641
      %v2020 = vunpack.c.h.bf16 %v1641
      %v2021 = vunpack.c.l.bf16 %v1642
      %v2022 = vunpack.c.h.bf16 %v1642
      %v2023 = vunpack.c.l.bf16 %v1643
      %v2024 = vunpack.c.h.bf16 %v1643
      %v2025 = vunpack.c.l.bf16 %v1644
      %v2026 = vunpack.c.h.bf16 %v1644
      %v2027 = vunpack.c.l.bf16 %v1645
      %v2028 = vunpack.c.h.bf16 %v1645
      %v2029 = vunpack.c.l.bf16 %v1646
      %v2030 = vunpack.c.h.bf16 %v1646
      %v2031 = vunpack.c.l.bf16 %v1935
      %v2032 = vunpack.c.h.bf16 %v1935
      %v2033 = vunpack.c.l.bf16 %v1936
      %v2034 = vunpack.c.h.bf16 %v1936
      %v2035 = vunpack.c.l.bf16 %v1937
      %v2036 = vunpack.c.h.bf16 %v1937
      %v2037 = vunpack.c.l.bf16 %v1938
      %v2038 = vunpack.c.h.bf16 %v1938
      %v2039 = vunpack.c.l.bf16 %v1939
      %v2040 = vunpack.c.h.bf16 %v1939
      %v2041 = vunpack.c.l.bf16 %v1940
      %v2042 = vunpack.c.h.bf16 %v1940
      %v2043 = vunpack.c.l.bf16 %v1941
      %v2044 = vunpack.c.h.bf16 %v1941
      %v2045 = vunpack.c.l.bf16 %v1942
      %v2046 = vunpack.c.h.bf16 %v1942
      %v2047 = vunpack.c.l.bf16 %v1943
      %v2048 = vunpack.c.h.bf16 %v1943
      %v2049 = vunpack.c.l.bf16 %v1944
      %v2050 = vunpack.c.h.bf16 %v1944
      %v2051 = vunpack.c.l.bf16 %v1945
      %v2052 = vunpack.c.h.bf16 %v1945
      %v2053 = vunpack.c.l.bf16 %v1946
      %v2054 = vunpack.c.h.bf16 %v1946
      %v2055 = vunpack.c.l.bf16 %v1947
      %v2056 = vunpack.c.h.bf16 %v1947
      %v2057 = vunpack.c.l.bf16 %v1948
      %v2058 = vunpack.c.h.bf16 %v1948
      %v2059 = vunpack.c.l.bf16 %v1949
      %v2060 = vunpack.c.h.bf16 %v1949
      %v2061 = vunpack.c.l.bf16 %v1950
      %v2062 = vunpack.c.h.bf16 %v1950
      %v2063 = vunpack.c.l.bf16 %v1951
      %v2064 = vunpack.c.h.bf16 %v1951
      %v2065 = vunpack.c.l.bf16 %v1952
      %v2066 = vunpack.c.h.bf16 %v1952
      %v2067 = vunpack.c.l.bf16 %v1953
      %v2068 = vunpack.c.h.bf16 %v1953
      %v2069 = vunpack.c.l.bf16 %v1954
      %v2070 = vunpack.c.h.bf16 %v1954
      %v2071 = vunpack.c.l.bf16 %v1955
      %v2072 = vunpack.c.h.bf16 %v1955
      %v2073 = vunpack.c.l.bf16 %v1956
      %v2074 = vunpack.c.h.bf16 %v1956
      %v2075 = vunpack.c.l.bf16 %v1957
      %v2076 = vunpack.c.h.bf16 %v1957
      %v2077 = vunpack.c.l.bf16 %v1958
      %v2078 = vunpack.c.h.bf16 %v1958
      %v2079 = vunpack.c.l.bf16 %v1959
      %v2080 = vunpack.c.h.bf16 %v1959
      %v2081 = vunpack.c.l.bf16 %v1960
      %v2082 = vunpack.c.h.bf16 %v1960
      %v2083 = vunpack.c.l.bf16 %v1961
      %v2084 = vunpack.c.h.bf16 %v1961
      %v2085 = vunpack.c.l.bf16 %v1962
      %v2086 = vunpack.c.h.bf16 %v1962
      %v2087 = vunpack.c.l.bf16 %v1963
      %v2088 = vunpack.c.h.bf16 %v1963
      %v2089 = vunpack.c.l.bf16 %v1964
      %v2090 = vunpack.c.h.bf16 %v1964
      %v2091 = vunpack.c.l.bf16 %v1965
      %v2092 = vunpack.c.h.bf16 %v1965
      %v2093 = vunpack.c.l.bf16 %v1966
      %v2094 = vunpack.c.h.bf16 %v1966
      %v2095 = vadd.f32 %v1967, %v2031
      %v2096 = vadd.f32 %v1968, %v2032
      %v2097 = vadd.f32 %v1969, %v2033
      %v2098 = vadd.f32 %v1970, %v2034
      %v2099 = vadd.f32 %v1971, %v2035
      %v2100 = vadd.f32 %v1972, %v2036
      %v2101 = vadd.f32 %v1973, %v2037
      %v2102 = vadd.f32 %v1974, %v2038
      %v2103 = vadd.f32 %v1975, %v2039
      %v2104 = vadd.f32 %v1976, %v2040
      %v2105 = vadd.f32 %v1977, %v2041
      %v2106 = vadd.f32 %v1978, %v2042
      %v2107 = vadd.f32 %v1979, %v2043
      %v2108 = vadd.f32 %v1980, %v2044
      %v2109 = vadd.f32 %v1981, %v2045
      %v2110 = vadd.f32 %v1982, %v2046
      %v2111 = vadd.f32 %v1983, %v2047
      %v2112 = vadd.f32 %v1984, %v2048
      %v2113 = vadd.f32 %v1985, %v2049
      %v2114 = vadd.f32 %v1986, %v2050
      %v2115 = vadd.f32 %v1987, %v2051
      %v2116 = vadd.f32 %v1988, %v2052
      %v2117 = vadd.f32 %v1989, %v2053
      %v2118 = vadd.f32 %v1990, %v2054
      %v2119 = vadd.f32 %v1991, %v2055
      %v2120 = vadd.f32 %v1992, %v2056
      %v2121 = vadd.f32 %v1993, %v2057
      %v2122 = vadd.f32 %v1994, %v2058
      %v2123 = vadd.f32 %v1995, %v2059
      %v2124 = vadd.f32 %v1996, %v2060
      %v2125 = vadd.f32 %v1997, %v2061
      %v2126 = vadd.f32 %v1998, %v2062
      %v2127 = vadd.f32 %v1999, %v2063
      %v2128 = vadd.f32 %v2000, %v2064
      %v2129 = vadd.f32 %v2001, %v2065
      %v2130 = vadd.f32 %v2002, %v2066
      %v2131 = vadd.f32 %v2003, %v2067
      %v2132 = vadd.f32 %v2004, %v2068
      %v2133 = vadd.f32 %v2005, %v2069
      %v2134 = vadd.f32 %v2006, %v2070
      %v2135 = vadd.f32 %v2007, %v2071
      %v2136 = vadd.f32 %v2008, %v2072
      %v2137 = vadd.f32 %v2009, %v2073
      %v2138 = vadd.f32 %v2010, %v2074
      %v2139 = vadd.f32 %v2011, %v2075
      %v2140 = vadd.f32 %v2012, %v2076
      %v2141 = vadd.f32 %v2013, %v2077
      %v2142 = vadd.f32 %v2014, %v2078
      %v2143 = vadd.f32 %v2015, %v2079
      %v2144 = vadd.f32 %v2016, %v2080
      %v2145 = vadd.f32 %v2017, %v2081
      %v2146 = vadd.f32 %v2018, %v2082
      %v2147 = vadd.f32 %v2019, %v2083
      %v2148 = vadd.f32 %v2020, %v2084
      %v2149 = vadd.f32 %v2021, %v2085
      %v2150 = vadd.f32 %v2022, %v2086
      %v2151 = vadd.f32 %v2023, %v2087
      %v2152 = vadd.f32 %v2024, %v2088
      %v2153 = vadd.f32 %v2025, %v2089
      %v2154 = vadd.f32 %v2026, %v2090
      %v2155 = vadd.f32 %v2027, %v2091
      %v2156 = vadd.f32 %v2028, %v2092
      %v2157 = vadd.f32 %v2029, %v2093
      %v2158 = vadd.f32 %v2030, %v2094
      %v2159 = vpack.c.bf16 %v2096, %v2095
      %v2160 = vpack.c.bf16 %v2098, %v2097
      %v2161 = vpack.c.bf16 %v2100, %v2099
      %v2162 = vpack.c.bf16 %v2102, %v2101
      %v2163 = vpack.c.bf16 %v2104, %v2103
      %v2164 = vpack.c.bf16 %v2106, %v2105
      %v2165 = vpack.c.bf16 %v2108, %v2107
      %v2166 = vpack.c.bf16 %v2110, %v2109
      %v2167 = vpack.c.bf16 %v2112, %v2111
      %v2168 = vpack.c.bf16 %v2114, %v2113
      %v2169 = vpack.c.bf16 %v2116, %v2115
      %v2170 = vpack.c.bf16 %v2118, %v2117
      %v2171 = vpack.c.bf16 %v2120, %v2119
      %v2172 = vpack.c.bf16 %v2122, %v2121
      %v2173 = vpack.c.bf16 %v2124, %v2123
      %v2174 = vpack.c.bf16 %v2126, %v2125
      %v2175 = vpack.c.bf16 %v2128, %v2127
      %v2176 = vpack.c.bf16 %v2130, %v2129
      %v2177 = vpack.c.bf16 %v2132, %v2131
      %v2178 = vpack.c.bf16 %v2134, %v2133
      %v2179 = vpack.c.bf16 %v2136, %v2135
      %v2180 = vpack.c.bf16 %v2138, %v2137
      %v2181 = vpack.c.bf16 %v2140, %v2139
      %v2182 = vpack.c.bf16 %v2142, %v2141
      %v2183 = vpack.c.bf16 %v2144, %v2143
      %v2184 = vpack.c.bf16 %v2146, %v2145
      %v2185 = vpack.c.bf16 %v2148, %v2147
      %v2186 = vpack.c.bf16 %v2150, %v2149
      %v2187 = vpack.c.bf16 %v2152, %v2151
      %v2188 = vpack.c.bf16 %v2154, %v2153
      %v2189 = vpack.c.bf16 %v2156, %v2155
      %v2190 = vpack.c.bf16 %v2158, %v2157
      %2191 = vset.pattern.permute.xlu0 4
      %2192 = vperm.xlu0 %2191, %v44
      %v2193 = vpop.permute.xlu0 %2192
      %2194 = vset.pattern.permute.xlu0 4
      %2195 = vperm.xlu0 %2194, %v45
      %v2196 = vpop.permute.xlu0 %2195
      %2197 = vset.pattern.permute.xlu0 4
      %2198 = vperm.xlu0 %2197, %v46
      %v2199 = vpop.permute.xlu0 %2198
      %2200 = vset.pattern.permute.xlu0 4
      %2201 = vperm.xlu0 %2200, %v47
      %v2202 = vpop.permute.xlu0 %2201
      %2203 = vset.pattern.permute.xlu0 4
      %2204 = vperm.xlu0 %2203, %v48
      %v2205 = vpop.permute.xlu0 %2204
      %2206 = vset.pattern.permute.xlu0 4
      %2207 = vperm.xlu0 %2206, %v49
      %v2208 = vpop.permute.xlu0 %2207
      %2209 = vset.pattern.permute.xlu0 4
      %2210 = vperm.xlu0 %2209, %v50
      %v2211 = vpop.permute.xlu0 %2210
      %2212 = vset.pattern.permute.xlu0 4
      %2213 = vperm.xlu0 %2212, %v51
      %v2214 = vpop.permute.xlu0 %2213
      %2215 = vset.pattern.permute.xlu0 4
      %2216 = vperm.xlu0 %2215, %v52
      %v2217 = vpop.permute.xlu0 %2216
      %2218 = vset.pattern.permute.xlu0 4
      %2219 = vperm.xlu0 %2218, %v53
      %v2220 = vpop.permute.xlu0 %2219
      %2221 = vset.pattern.permute.xlu0 4
      %2222 = vperm.xlu0 %2221, %v54
      %v2223 = vpop.permute.xlu0 %2222
      %2224 = vset.pattern.permute.xlu0 4
      %2225 = vperm.xlu0 %2224, %v55
      %v2226 = vpop.permute.xlu0 %2225
      %2227 = vset.pattern.permute.xlu0 4
      %2228 = vperm.xlu0 %2227, %v56
      %v2229 = vpop.permute.xlu0 %2228
      %2230 = vset.pattern.permute.xlu0 4
      %2231 = vperm.xlu0 %2230, %v57
      %v2232 = vpop.permute.xlu0 %2231
      %2233 = vset.pattern.permute.xlu0 4
      %2234 = vperm.xlu0 %2233, %v58
      %v2235 = vpop.permute.xlu0 %2234
      %2236 = vset.pattern.permute.xlu0 4
      %2237 = vperm.xlu0 %2236, %v59
      %v2238 = vpop.permute.xlu0 %2237
      %2239 = vset.pattern.permute.xlu0 4
      %2240 = vperm.xlu0 %2239, %v60
      %v2241 = vpop.permute.xlu0 %2240
      %2242 = vset.pattern.permute.xlu0 4
      %2243 = vperm.xlu0 %2242, %v61
      %v2244 = vpop.permute.xlu0 %2243
      %2245 = vset.pattern.permute.xlu0 4
      %2246 = vperm.xlu0 %2245, %v62
      %v2247 = vpop.permute.xlu0 %2246
      %2248 = vset.pattern.permute.xlu0 4
      %2249 = vperm.xlu0 %2248, %v63
      %v2250 = vpop.permute.xlu0 %2249
      %2251 = vset.pattern.permute.xlu0 4
      %2252 = vperm.xlu0 %2251, %v64
      %v2253 = vpop.permute.xlu0 %2252
      %2254 = vset.pattern.permute.xlu0 4
      %2255 = vperm.xlu0 %2254, %v65
      %v2256 = vpop.permute.xlu0 %2255
      %2257 = vset.pattern.permute.xlu0 4
      %2258 = vperm.xlu0 %2257, %v66
      %v2259 = vpop.permute.xlu0 %2258
      %2260 = vset.pattern.permute.xlu0 4
      %2261 = vperm.xlu0 %2260, %v67
      %v2262 = vpop.permute.xlu0 %2261
      %2263 = vset.pattern.permute.xlu0 4
      %2264 = vperm.xlu0 %2263, %v68
      %v2265 = vpop.permute.xlu0 %2264
      %2266 = vset.pattern.permute.xlu0 4
      %2267 = vperm.xlu0 %2266, %v69
      %v2268 = vpop.permute.xlu0 %2267
      %2269 = vset.pattern.permute.xlu0 4
      %2270 = vperm.xlu0 %2269, %v70
      %v2271 = vpop.permute.xlu0 %2270
      %2272 = vset.pattern.permute.xlu0 4
      %2273 = vperm.xlu0 %2272, %v71
      %v2274 = vpop.permute.xlu0 %2273
      %2275 = vset.pattern.permute.xlu0 4
      %2276 = vperm.xlu0 %2275, %v72
      %v2277 = vpop.permute.xlu0 %2276
      %2278 = vset.pattern.permute.xlu0 4
      %2279 = vperm.xlu0 %2278, %v73
      %v2280 = vpop.permute.xlu0 %2279
      %2281 = vset.pattern.permute.xlu0 4
      %2282 = vperm.xlu0 %2281, %v74
      %v2283 = vpop.permute.xlu0 %2282
      %2284 = vset.pattern.permute.xlu0 4
      %2285 = vperm.xlu0 %2284, %v75
      %v2286 = vpop.permute.xlu0 %2285
      %vm2287 = vcmp.eq.s32.totalorder %v2193, %v77
      %vm2288 = vcmp.eq.s32.totalorder %v2193, %v78
      %vm2289 = vcmp.eq.s32.totalorder %v2196, %v77
      %vm2290 = vcmp.eq.s32.totalorder %v2196, %v78
      %vm2291 = vcmp.eq.s32.totalorder %v2199, %v77
      %vm2292 = vcmp.eq.s32.totalorder %v2199, %v78
      %vm2293 = vcmp.eq.s32.totalorder %v2202, %v77
      %vm2294 = vcmp.eq.s32.totalorder %v2202, %v78
      %vm2295 = vcmp.eq.s32.totalorder %v2205, %v77
      %vm2296 = vcmp.eq.s32.totalorder %v2205, %v78
      %vm2297 = vcmp.eq.s32.totalorder %v2208, %v77
      %vm2298 = vcmp.eq.s32.totalorder %v2208, %v78
      %vm2299 = vcmp.eq.s32.totalorder %v2211, %v77
      %vm2300 = vcmp.eq.s32.totalorder %v2211, %v78
      %vm2301 = vcmp.eq.s32.totalorder %v2214, %v77
      %vm2302 = vcmp.eq.s32.totalorder %v2214, %v78
      %vm2303 = vcmp.eq.s32.totalorder %v2217, %v77
      %vm2304 = vcmp.eq.s32.totalorder %v2217, %v78
      %vm2305 = vcmp.eq.s32.totalorder %v2220, %v77
      %vm2306 = vcmp.eq.s32.totalorder %v2220, %v78
      %vm2307 = vcmp.eq.s32.totalorder %v2223, %v77
      %vm2308 = vcmp.eq.s32.totalorder %v2223, %v78
      %vm2309 = vcmp.eq.s32.totalorder %v2226, %v77
      %vm2310 = vcmp.eq.s32.totalorder %v2226, %v78
      %vm2311 = vcmp.eq.s32.totalorder %v2229, %v77
      %vm2312 = vcmp.eq.s32.totalorder %v2229, %v78
      %vm2313 = vcmp.eq.s32.totalorder %v2232, %v77
      %vm2314 = vcmp.eq.s32.totalorder %v2232, %v78
      %vm2315 = vcmp.eq.s32.totalorder %v2235, %v77
      %vm2316 = vcmp.eq.s32.totalorder %v2235, %v78
      %vm2317 = vcmp.eq.s32.totalorder %v2238, %v77
      %vm2318 = vcmp.eq.s32.totalorder %v2238, %v78
      %vm2319 = vcmp.eq.s32.totalorder %v2241, %v77
      %vm2320 = vcmp.eq.s32.totalorder %v2241, %v78
      %vm2321 = vcmp.eq.s32.totalorder %v2244, %v77
      %vm2322 = vcmp.eq.s32.totalorder %v2244, %v78
      %vm2323 = vcmp.eq.s32.totalorder %v2247, %v77
      %vm2324 = vcmp.eq.s32.totalorder %v2247, %v78
      %vm2325 = vcmp.eq.s32.totalorder %v2250, %v77
      %vm2326 = vcmp.eq.s32.totalorder %v2250, %v78
      %vm2327 = vcmp.eq.s32.totalorder %v2253, %v77
      %vm2328 = vcmp.eq.s32.totalorder %v2253, %v78
      %vm2329 = vcmp.eq.s32.totalorder %v2256, %v77
      %vm2330 = vcmp.eq.s32.totalorder %v2256, %v78
      %vm2331 = vcmp.eq.s32.totalorder %v2259, %v77
      %vm2332 = vcmp.eq.s32.totalorder %v2259, %v78
      %vm2333 = vcmp.eq.s32.totalorder %v2262, %v77
      %vm2334 = vcmp.eq.s32.totalorder %v2262, %v78
      %vm2335 = vcmp.eq.s32.totalorder %v2265, %v77
      %vm2336 = vcmp.eq.s32.totalorder %v2265, %v78
      %vm2337 = vcmp.eq.s32.totalorder %v2268, %v77
      %vm2338 = vcmp.eq.s32.totalorder %v2268, %v78
      %vm2339 = vcmp.eq.s32.totalorder %v2271, %v77
      %vm2340 = vcmp.eq.s32.totalorder %v2271, %v78
      %vm2341 = vcmp.eq.s32.totalorder %v2274, %v77
      %vm2342 = vcmp.eq.s32.totalorder %v2274, %v78
      %vm2343 = vcmp.eq.s32.totalorder %v2277, %v77
      %vm2344 = vcmp.eq.s32.totalorder %v2277, %v78
      %vm2345 = vcmp.eq.s32.totalorder %v2280, %v77
      %vm2346 = vcmp.eq.s32.totalorder %v2280, %v78
      %vm2347 = vcmp.eq.s32.totalorder %v2283, %v77
      %vm2348 = vcmp.eq.s32.totalorder %v2283, %v78
      %vm2349 = vcmp.eq.s32.totalorder %v2286, %v77
      %vm2350 = vcmp.eq.s32.totalorder %v2286, %v78
      %v2351 = vsel %vm2287, 1, 0
      %v2352 = vsel %vm2288, 1, 0
      %v2353 = vsel %vm2289, 1, 0
      %v2354 = vsel %vm2290, 1, 0
      %v2355 = vsel %vm2291, 1, 0
      %v2356 = vsel %vm2292, 1, 0
      %v2357 = vsel %vm2293, 1, 0
      %v2358 = vsel %vm2294, 1, 0
      %v2359 = vsel %vm2295, 1, 0
      %v2360 = vsel %vm2296, 1, 0
      %v2361 = vsel %vm2297, 1, 0
      %v2362 = vsel %vm2298, 1, 0
      %v2363 = vsel %vm2299, 1, 0
      %v2364 = vsel %vm2300, 1, 0
      %v2365 = vsel %vm2301, 1, 0
      %v2366 = vsel %vm2302, 1, 0
      %v2367 = vsel %vm2303, 1, 0
      %v2368 = vsel %vm2304, 1, 0
      %v2369 = vsel %vm2305, 1, 0
      %v2370 = vsel %vm2306, 1, 0
      %v2371 = vsel %vm2307, 1, 0
      %v2372 = vsel %vm2308, 1, 0
      %v2373 = vsel %vm2309, 1, 0
      %v2374 = vsel %vm2310, 1, 0
      %v2375 = vsel %vm2311, 1, 0
      %v2376 = vsel %vm2312, 1, 0
      %v2377 = vsel %vm2313, 1, 0
      %v2378 = vsel %vm2314, 1, 0
      %v2379 = vsel %vm2315, 1, 0
      %v2380 = vsel %vm2316, 1, 0
      %v2381 = vsel %vm2317, 1, 0
      %v2382 = vsel %vm2318, 1, 0
      %v2383 = vsel %vm2319, 1, 0
      %v2384 = vsel %vm2320, 1, 0
      %v2385 = vsel %vm2321, 1, 0
      %v2386 = vsel %vm2322, 1, 0
      %v2387 = vsel %vm2323, 1, 0
      %v2388 = vsel %vm2324, 1, 0
      %v2389 = vsel %vm2325, 1, 0
      %v2390 = vsel %vm2326, 1, 0
      %v2391 = vsel %vm2327, 1, 0
      %v2392 = vsel %vm2328, 1, 0
      %v2393 = vsel %vm2329, 1, 0
      %v2394 = vsel %vm2330, 1, 0
      %v2395 = vsel %vm2331, 1, 0
      %v2396 = vsel %vm2332, 1, 0
      %v2397 = vsel %vm2333, 1, 0
      %v2398 = vsel %vm2334, 1, 0
      %v2399 = vsel %vm2335, 1, 0
      %v2400 = vsel %vm2336, 1, 0
      %v2401 = vsel %vm2337, 1, 0
      %v2402 = vsel %vm2338, 1, 0
      %v2403 = vsel %vm2339, 1, 0
      %v2404 = vsel %vm2340, 1, 0
      %v2405 = vsel %vm2341, 1, 0
      %v2406 = vsel %vm2342, 1, 0
      %v2407 = vsel %vm2343, 1, 0
      %v2408 = vsel %vm2344, 1, 0
      %v2409 = vsel %vm2345, 1, 0
      %v2410 = vsel %vm2346, 1, 0
      %v2411 = vsel %vm2347, 1, 0
      %v2412 = vsel %vm2348, 1, 0
      %v2413 = vsel %vm2349, 1, 0
      %v2414 = vsel %vm2350, 1, 0
      %v2415 = vcvt.s32.f32 %v2351
      %v2416 = vcvt.s32.f32 %v2352
      %v2417 = vcvt.s32.f32 %v2353
      %v2418 = vcvt.s32.f32 %v2354
      %v2419 = vcvt.s32.f32 %v2355
      %v2420 = vcvt.s32.f32 %v2356
      %v2421 = vcvt.s32.f32 %v2357
      %v2422 = vcvt.s32.f32 %v2358
      %v2423 = vcvt.s32.f32 %v2359
      %v2424 = vcvt.s32.f32 %v2360
      %v2425 = vcvt.s32.f32 %v2361
      %v2426 = vcvt.s32.f32 %v2362
      %v2427 = vcvt.s32.f32 %v2363
      %v2428 = vcvt.s32.f32 %v2364
      %v2429 = vcvt.s32.f32 %v2365
      %v2430 = vcvt.s32.f32 %v2366
      %v2431 = vcvt.s32.f32 %v2367
      %v2432 = vcvt.s32.f32 %v2368
      %v2433 = vcvt.s32.f32 %v2369
      %v2434 = vcvt.s32.f32 %v2370
      %v2435 = vcvt.s32.f32 %v2371
      %v2436 = vcvt.s32.f32 %v2372
      %v2437 = vcvt.s32.f32 %v2373
      %v2438 = vcvt.s32.f32 %v2374
      %v2439 = vcvt.s32.f32 %v2375
      %v2440 = vcvt.s32.f32 %v2376
      %v2441 = vcvt.s32.f32 %v2377
      %v2442 = vcvt.s32.f32 %v2378
      %v2443 = vcvt.s32.f32 %v2379
      %v2444 = vcvt.s32.f32 %v2380
      %v2445 = vcvt.s32.f32 %v2381
      %v2446 = vcvt.s32.f32 %v2382
      %v2447 = vcvt.s32.f32 %v2383
      %v2448 = vcvt.s32.f32 %v2384
      %v2449 = vcvt.s32.f32 %v2385
      %v2450 = vcvt.s32.f32 %v2386
      %v2451 = vcvt.s32.f32 %v2387
      %v2452 = vcvt.s32.f32 %v2388
      %v2453 = vcvt.s32.f32 %v2389
      %v2454 = vcvt.s32.f32 %v2390
      %v2455 = vcvt.s32.f32 %v2391
      %v2456 = vcvt.s32.f32 %v2392
      %v2457 = vcvt.s32.f32 %v2393
      %v2458 = vcvt.s32.f32 %v2394
      %v2459 = vcvt.s32.f32 %v2395
      %v2460 = vcvt.s32.f32 %v2396
      %v2461 = vcvt.s32.f32 %v2397
      %v2462 = vcvt.s32.f32 %v2398
      %v2463 = vcvt.s32.f32 %v2399
      %v2464 = vcvt.s32.f32 %v2400
      %v2465 = vcvt.s32.f32 %v2401
      %v2466 = vcvt.s32.f32 %v2402
      %v2467 = vcvt.s32.f32 %v2403
      %v2468 = vcvt.s32.f32 %v2404
      %v2469 = vcvt.s32.f32 %v2405
      %v2470 = vcvt.s32.f32 %v2406
      %v2471 = vcvt.s32.f32 %v2407
      %v2472 = vcvt.s32.f32 %v2408
      %v2473 = vcvt.s32.f32 %v2409
      %v2474 = vcvt.s32.f32 %v2410
      %v2475 = vcvt.s32.f32 %v2411
      %v2476 = vcvt.s32.f32 %v2412
      %v2477 = vcvt.s32.f32 %v2413
      %v2478 = vcvt.s32.f32 %v2414
      %v2479 = vpack.c.bf16 %v2416, %v2415
      %v2480 = vpack.c.bf16 %v2418, %v2417
      %v2481 = vpack.c.bf16 %v2420, %v2419
      %v2482 = vpack.c.bf16 %v2422, %v2421
      %v2483 = vpack.c.bf16 %v2424, %v2423
      %v2484 = vpack.c.bf16 %v2426, %v2425
      %v2485 = vpack.c.bf16 %v2428, %v2427
      %v2486 = vpack.c.bf16 %v2430, %v2429
      %v2487 = vpack.c.bf16 %v2432, %v2431
      %v2488 = vpack.c.bf16 %v2434, %v2433
      %v2489 = vpack.c.bf16 %v2436, %v2435
      %v2490 = vpack.c.bf16 %v2438, %v2437
      %v2491 = vpack.c.bf16 %v2440, %v2439
      %v2492 = vpack.c.bf16 %v2442, %v2441
      %v2493 = vpack.c.bf16 %v2444, %v2443
      %v2494 = vpack.c.bf16 %v2446, %v2445
      %v2495 = vpack.c.bf16 %v2448, %v2447
      %v2496 = vpack.c.bf16 %v2450, %v2449
      %v2497 = vpack.c.bf16 %v2452, %v2451
      %v2498 = vpack.c.bf16 %v2454, %v2453
      %v2499 = vpack.c.bf16 %v2456, %v2455
      %v2500 = vpack.c.bf16 %v2458, %v2457
      %v2501 = vpack.c.bf16 %v2460, %v2459
      %v2502 = vpack.c.bf16 %v2462, %v2461
      %v2503 = vpack.c.bf16 %v2464, %v2463
      %v2504 = vpack.c.bf16 %v2466, %v2465
      %v2505 = vpack.c.bf16 %v2468, %v2467
      %v2506 = vpack.c.bf16 %v2470, %v2469
      %v2507 = vpack.c.bf16 %v2472, %v2471
      %v2508 = vpack.c.bf16 %v2474, %v2473
      %v2509 = vpack.c.bf16 %v2476, %v2475
      %v2510 = vpack.c.bf16 %v2478, %v2477
      %v2511 = vunpack.c.l.bf16 %v2159
      %v2512 = vunpack.c.h.bf16 %v2159
      %v2513 = vunpack.c.l.bf16 %v2160
      %v2514 = vunpack.c.h.bf16 %v2160
      %v2515 = vunpack.c.l.bf16 %v2161
      %v2516 = vunpack.c.h.bf16 %v2161
      %v2517 = vunpack.c.l.bf16 %v2162
      %v2518 = vunpack.c.h.bf16 %v2162
      %v2519 = vunpack.c.l.bf16 %v2163
      %v2520 = vunpack.c.h.bf16 %v2163
      %v2521 = vunpack.c.l.bf16 %v2164
      %v2522 = vunpack.c.h.bf16 %v2164
      %v2523 = vunpack.c.l.bf16 %v2165
      %v2524 = vunpack.c.h.bf16 %v2165
      %v2525 = vunpack.c.l.bf16 %v2166
      %v2526 = vunpack.c.h.bf16 %v2166
      %v2527 = vunpack.c.l.bf16 %v2167
      %v2528 = vunpack.c.h.bf16 %v2167
      %v2529 = vunpack.c.l.bf16 %v2168
      %v2530 = vunpack.c.h.bf16 %v2168
      %v2531 = vunpack.c.l.bf16 %v2169
      %v2532 = vunpack.c.h.bf16 %v2169
      %v2533 = vunpack.c.l.bf16 %v2170
      %v2534 = vunpack.c.h.bf16 %v2170
      %v2535 = vunpack.c.l.bf16 %v2171
      %v2536 = vunpack.c.h.bf16 %v2171
      %v2537 = vunpack.c.l.bf16 %v2172
      %v2538 = vunpack.c.h.bf16 %v2172
      %v2539 = vunpack.c.l.bf16 %v2173
      %v2540 = vunpack.c.h.bf16 %v2173
      %v2541 = vunpack.c.l.bf16 %v2174
      %v2542 = vunpack.c.h.bf16 %v2174
      %v2543 = vunpack.c.l.bf16 %v2175
      %v2544 = vunpack.c.h.bf16 %v2175
      %v2545 = vunpack.c.l.bf16 %v2176
      %v2546 = vunpack.c.h.bf16 %v2176
      %v2547 = vunpack.c.l.bf16 %v2177
      %v2548 = vunpack.c.h.bf16 %v2177
      %v2549 = vunpack.c.l.bf16 %v2178
      %v2550 = vunpack.c.h.bf16 %v2178
      %v2551 = vunpack.c.l.bf16 %v2179
      %v2552 = vunpack.c.h.bf16 %v2179
      %v2553 = vunpack.c.l.bf16 %v2180
      %v2554 = vunpack.c.h.bf16 %v2180
      %v2555 = vunpack.c.l.bf16 %v2181
      %v2556 = vunpack.c.h.bf16 %v2181
      %v2557 = vunpack.c.l.bf16 %v2182
      %v2558 = vunpack.c.h.bf16 %v2182
      %v2559 = vunpack.c.l.bf16 %v2183
      %v2560 = vunpack.c.h.bf16 %v2183
      %v2561 = vunpack.c.l.bf16 %v2184
      %v2562 = vunpack.c.h.bf16 %v2184
      %v2563 = vunpack.c.l.bf16 %v2185
      %v2564 = vunpack.c.h.bf16 %v2185
      %v2565 = vunpack.c.l.bf16 %v2186
      %v2566 = vunpack.c.h.bf16 %v2186
      %v2567 = vunpack.c.l.bf16 %v2187
      %v2568 = vunpack.c.h.bf16 %v2187
      %v2569 = vunpack.c.l.bf16 %v2188
      %v2570 = vunpack.c.h.bf16 %v2188
      %v2571 = vunpack.c.l.bf16 %v2189
      %v2572 = vunpack.c.h.bf16 %v2189
      %v2573 = vunpack.c.l.bf16 %v2190
      %v2574 = vunpack.c.h.bf16 %v2190
      %v2575 = vunpack.c.l.bf16 %v2479
      %v2576 = vunpack.c.h.bf16 %v2479
      %v2577 = vunpack.c.l.bf16 %v2480
      %v2578 = vunpack.c.h.bf16 %v2480
      %v2579 = vunpack.c.l.bf16 %v2481
      %v2580 = vunpack.c.h.bf16 %v2481
      %v2581 = vunpack.c.l.bf16 %v2482
      %v2582 = vunpack.c.h.bf16 %v2482
      %v2583 = vunpack.c.l.bf16 %v2483
      %v2584 = vunpack.c.h.bf16 %v2483
      %v2585 = vunpack.c.l.bf16 %v2484
      %v2586 = vunpack.c.h.bf16 %v2484
      %v2587 = vunpack.c.l.bf16 %v2485
      %v2588 = vunpack.c.h.bf16 %v2485
      %v2589 = vunpack.c.l.bf16 %v2486
      %v2590 = vunpack.c.h.bf16 %v2486
      %v2591 = vunpack.c.l.bf16 %v2487
      %v2592 = vunpack.c.h.bf16 %v2487
      %v2593 = vunpack.c.l.bf16 %v2488
      %v2594 = vunpack.c.h.bf16 %v2488
      %v2595 = vunpack.c.l.bf16 %v2489
      %v2596 = vunpack.c.h.bf16 %v2489
      %v2597 = vunpack.c.l.bf16 %v2490
      %v2598 = vunpack.c.h.bf16 %v2490
      %v2599 = vunpack.c.l.bf16 %v2491
      %v2600 = vunpack.c.h.bf16 %v2491
      %v2601 = vunpack.c.l.bf16 %v2492
      %v2602 = vunpack.c.h.bf16 %v2492
      %v2603 = vunpack.c.l.bf16 %v2493
      %v2604 = vunpack.c.h.bf16 %v2493
      %v2605 = vunpack.c.l.bf16 %v2494
      %v2606 = vunpack.c.h.bf16 %v2494
      %v2607 = vunpack.c.l.bf16 %v2495
      %v2608 = vunpack.c.h.bf16 %v2495
      %v2609 = vunpack.c.l.bf16 %v2496
      %v2610 = vunpack.c.h.bf16 %v2496
      %v2611 = vunpack.c.l.bf16 %v2497
      %v2612 = vunpack.c.h.bf16 %v2497
      %v2613 = vunpack.c.l.bf16 %v2498
      %v2614 = vunpack.c.h.bf16 %v2498
      %v2615 = vunpack.c.l.bf16 %v2499
      %v2616 = vunpack.c.h.bf16 %v2499
      %v2617 = vunpack.c.l.bf16 %v2500
      %v2618 = vunpack.c.h.bf16 %v2500
      %v2619 = vunpack.c.l.bf16 %v2501
      %v2620 = vunpack.c.h.bf16 %v2501
      %v2621 = vunpack.c.l.bf16 %v2502
      %v2622 = vunpack.c.h.bf16 %v2502
      %v2623 = vunpack.c.l.bf16 %v2503
      %v2624 = vunpack.c.h.bf16 %v2503
      %v2625 = vunpack.c.l.bf16 %v2504
      %v2626 = vunpack.c.h.bf16 %v2504
      %v2627 = vunpack.c.l.bf16 %v2505
      %v2628 = vunpack.c.h.bf16 %v2505
      %v2629 = vunpack.c.l.bf16 %v2506
      %v2630 = vunpack.c.h.bf16 %v2506
      %v2631 = vunpack.c.l.bf16 %v2507
      %v2632 = vunpack.c.h.bf16 %v2507
      %v2633 = vunpack.c.l.bf16 %v2508
      %v2634 = vunpack.c.h.bf16 %v2508
      %v2635 = vunpack.c.l.bf16 %v2509
      %v2636 = vunpack.c.h.bf16 %v2509
      %v2637 = vunpack.c.l.bf16 %v2510
      %v2638 = vunpack.c.h.bf16 %v2510
      %v2639 = vadd.f32 %v2511, %v2575
      %v2640 = vadd.f32 %v2512, %v2576
      %v2641 = vadd.f32 %v2513, %v2577
      %v2642 = vadd.f32 %v2514, %v2578
      %v2643 = vadd.f32 %v2515, %v2579
      %v2644 = vadd.f32 %v2516, %v2580
      %v2645 = vadd.f32 %v2517, %v2581
      %v2646 = vadd.f32 %v2518, %v2582
      %v2647 = vadd.f32 %v2519, %v2583
      %v2648 = vadd.f32 %v2520, %v2584
      %v2649 = vadd.f32 %v2521, %v2585
      %v2650 = vadd.f32 %v2522, %v2586
      %v2651 = vadd.f32 %v2523, %v2587
      %v2652 = vadd.f32 %v2524, %v2588
      %v2653 = vadd.f32 %v2525, %v2589
      %v2654 = vadd.f32 %v2526, %v2590
      %v2655 = vadd.f32 %v2527, %v2591
      %v2656 = vadd.f32 %v2528, %v2592
      %v2657 = vadd.f32 %v2529, %v2593
      %v2658 = vadd.f32 %v2530, %v2594
      %v2659 = vadd.f32 %v2531, %v2595
      %v2660 = vadd.f32 %v2532, %v2596
      %v2661 = vadd.f32 %v2533, %v2597
      %v2662 = vadd.f32 %v2534, %v2598
      %v2663 = vadd.f32 %v2535, %v2599
      %v2664 = vadd.f32 %v2536, %v2600
      %v2665 = vadd.f32 %v2537, %v2601
      %v2666 = vadd.f32 %v2538, %v2602
      %v2667 = vadd.f32 %v2539, %v2603
      %v2668 = vadd.f32 %v2540, %v2604
      %v2669 = vadd.f32 %v2541, %v2605
      %v2670 = vadd.f32 %v2542, %v2606
      %v2671 = vadd.f32 %v2543, %v2607
      %v2672 = vadd.f32 %v2544, %v2608
      %v2673 = vadd.f32 %v2545, %v2609
      %v2674 = vadd.f32 %v2546, %v2610
      %v2675 = vadd.f32 %v2547, %v2611
      %v2676 = vadd.f32 %v2548, %v2612
      %v2677 = vadd.f32 %v2549, %v2613
      %v2678 = vadd.f32 %v2550, %v2614
      %v2679 = vadd.f32 %v2551, %v2615
      %v2680 = vadd.f32 %v2552, %v2616
      %v2681 = vadd.f32 %v2553, %v2617
      %v2682 = vadd.f32 %v2554, %v2618
      %v2683 = vadd.f32 %v2555, %v2619
      %v2684 = vadd.f32 %v2556, %v2620
      %v2685 = vadd.f32 %v2557, %v2621
      %v2686 = vadd.f32 %v2558, %v2622
      %v2687 = vadd.f32 %v2559, %v2623
      %v2688 = vadd.f32 %v2560, %v2624
      %v2689 = vadd.f32 %v2561, %v2625
      %v2690 = vadd.f32 %v2562, %v2626
      %v2691 = vadd.f32 %v2563, %v2627
      %v2692 = vadd.f32 %v2564, %v2628
      %v2693 = vadd.f32 %v2565, %v2629
      %v2694 = vadd.f32 %v2566, %v2630
      %v2695 = vadd.f32 %v2567, %v2631
      %v2696 = vadd.f32 %v2568, %v2632
      %v2697 = vadd.f32 %v2569, %v2633
      %v2698 = vadd.f32 %v2570, %v2634
      %v2699 = vadd.f32 %v2571, %v2635
      %v2700 = vadd.f32 %v2572, %v2636
      %v2701 = vadd.f32 %v2573, %v2637
      %v2702 = vadd.f32 %v2574, %v2638
      %v2703 = vpack.c.bf16 %v2640, %v2639
      %v2704 = vpack.c.bf16 %v2642, %v2641
      %v2705 = vpack.c.bf16 %v2644, %v2643
      %v2706 = vpack.c.bf16 %v2646, %v2645
      %v2707 = vpack.c.bf16 %v2648, %v2647
      %v2708 = vpack.c.bf16 %v2650, %v2649
      %v2709 = vpack.c.bf16 %v2652, %v2651
      %v2710 = vpack.c.bf16 %v2654, %v2653
      %v2711 = vpack.c.bf16 %v2656, %v2655
      %v2712 = vpack.c.bf16 %v2658, %v2657
      %v2713 = vpack.c.bf16 %v2660, %v2659
      %v2714 = vpack.c.bf16 %v2662, %v2661
      %v2715 = vpack.c.bf16 %v2664, %v2663
      %v2716 = vpack.c.bf16 %v2666, %v2665
      %v2717 = vpack.c.bf16 %v2668, %v2667
      %v2718 = vpack.c.bf16 %v2670, %v2669
      %v2719 = vpack.c.bf16 %v2672, %v2671
      %v2720 = vpack.c.bf16 %v2674, %v2673
      %v2721 = vpack.c.bf16 %v2676, %v2675
      %v2722 = vpack.c.bf16 %v2678, %v2677
      %v2723 = vpack.c.bf16 %v2680, %v2679
      %v2724 = vpack.c.bf16 %v2682, %v2681
      %v2725 = vpack.c.bf16 %v2684, %v2683
      %v2726 = vpack.c.bf16 %v2686, %v2685
      %v2727 = vpack.c.bf16 %v2688, %v2687
      %v2728 = vpack.c.bf16 %v2690, %v2689
      %v2729 = vpack.c.bf16 %v2692, %v2691
      %v2730 = vpack.c.bf16 %v2694, %v2693
      %v2731 = vpack.c.bf16 %v2696, %v2695
      %v2732 = vpack.c.bf16 %v2698, %v2697
      %v2733 = vpack.c.bf16 %v2700, %v2699
      %v2734 = vpack.c.bf16 %v2702, %v2701
      %2735 = vset.pattern.permute.xlu0 5
      %2736 = vperm.xlu0 %2735, %v44
      %v2737 = vpop.permute.xlu0 %2736
      %2738 = vset.pattern.permute.xlu0 5
      %2739 = vperm.xlu0 %2738, %v45
      %v2740 = vpop.permute.xlu0 %2739
      %2741 = vset.pattern.permute.xlu0 5
      %2742 = vperm.xlu0 %2741, %v46
      %v2743 = vpop.permute.xlu0 %2742
      %2744 = vset.pattern.permute.xlu0 5
      %2745 = vperm.xlu0 %2744, %v47
      %v2746 = vpop.permute.xlu0 %2745
      %2747 = vset.pattern.permute.xlu0 5
      %2748 = vperm.xlu0 %2747, %v48
      %v2749 = vpop.permute.xlu0 %2748
      %2750 = vset.pattern.permute.xlu0 5
      %2751 = vperm.xlu0 %2750, %v49
      %v2752 = vpop.permute.xlu0 %2751
      %2753 = vset.pattern.permute.xlu0 5
      %2754 = vperm.xlu0 %2753, %v50
      %v2755 = vpop.permute.xlu0 %2754
      %2756 = vset.pattern.permute.xlu0 5
      %2757 = vperm.xlu0 %2756, %v51
      %v2758 = vpop.permute.xlu0 %2757
      %2759 = vset.pattern.permute.xlu0 5
      %2760 = vperm.xlu0 %2759, %v52
      %v2761 = vpop.permute.xlu0 %2760
      %2762 = vset.pattern.permute.xlu0 5
      %2763 = vperm.xlu0 %2762, %v53
      %v2764 = vpop.permute.xlu0 %2763
      %2765 = vset.pattern.permute.xlu0 5
      %2766 = vperm.xlu0 %2765, %v54
      %v2767 = vpop.permute.xlu0 %2766
      %2768 = vset.pattern.permute.xlu0 5
      %2769 = vperm.xlu0 %2768, %v55
      %v2770 = vpop.permute.xlu0 %2769
      %2771 = vset.pattern.permute.xlu0 5
      %2772 = vperm.xlu0 %2771, %v56
      %v2773 = vpop.permute.xlu0 %2772
      %2774 = vset.pattern.permute.xlu0 5
      %2775 = vperm.xlu0 %2774, %v57
      %v2776 = vpop.permute.xlu0 %2775
      %2777 = vset.pattern.permute.xlu0 5
      %2778 = vperm.xlu0 %2777, %v58
      %v2779 = vpop.permute.xlu0 %2778
      %2780 = vset.pattern.permute.xlu0 5
      %2781 = vperm.xlu0 %2780, %v59
      %v2782 = vpop.permute.xlu0 %2781
      %2783 = vset.pattern.permute.xlu0 5
      %2784 = vperm.xlu0 %2783, %v60
      %v2785 = vpop.permute.xlu0 %2784
      %2786 = vset.pattern.permute.xlu0 5
      %2787 = vperm.xlu0 %2786, %v61
      %v2788 = vpop.permute.xlu0 %2787
      %2789 = vset.pattern.permute.xlu0 5
      %2790 = vperm.xlu0 %2789, %v62
      %v2791 = vpop.permute.xlu0 %2790
      %2792 = vset.pattern.permute.xlu0 5
      %2793 = vperm.xlu0 %2792, %v63
      %v2794 = vpop.permute.xlu0 %2793
      %2795 = vset.pattern.permute.xlu0 5
      %2796 = vperm.xlu0 %2795, %v64
      %v2797 = vpop.permute.xlu0 %2796
      %2798 = vset.pattern.permute.xlu0 5
      %2799 = vperm.xlu0 %2798, %v65
      %v2800 = vpop.permute.xlu0 %2799
      %2801 = vset.pattern.permute.xlu0 5
      %2802 = vperm.xlu0 %2801, %v66
      %v2803 = vpop.permute.xlu0 %2802
      %2804 = vset.pattern.permute.xlu0 5
      %2805 = vperm.xlu0 %2804, %v67
      %v2806 = vpop.permute.xlu0 %2805
      %2807 = vset.pattern.permute.xlu0 5
      %2808 = vperm.xlu0 %2807, %v68
      %v2809 = vpop.permute.xlu0 %2808
      %2810 = vset.pattern.permute.xlu0 5
      %2811 = vperm.xlu0 %2810, %v69
      %v2812 = vpop.permute.xlu0 %2811
      %2813 = vset.pattern.permute.xlu0 5
      %2814 = vperm.xlu0 %2813, %v70
      %v2815 = vpop.permute.xlu0 %2814
      %2816 = vset.pattern.permute.xlu0 5
      %2817 = vperm.xlu0 %2816, %v71
      %v2818 = vpop.permute.xlu0 %2817
      %2819 = vset.pattern.permute.xlu0 5
      %2820 = vperm.xlu0 %2819, %v72
      %v2821 = vpop.permute.xlu0 %2820
      %2822 = vset.pattern.permute.xlu0 5
      %2823 = vperm.xlu0 %2822, %v73
      %v2824 = vpop.permute.xlu0 %2823
      %2825 = vset.pattern.permute.xlu0 5
      %2826 = vperm.xlu0 %2825, %v74
      %v2827 = vpop.permute.xlu0 %2826
      %2828 = vset.pattern.permute.xlu0 5
      %2829 = vperm.xlu0 %2828, %v75
      %v2830 = vpop.permute.xlu0 %2829
      %vm2831 = vcmp.eq.s32.totalorder %v2737, %v77
      %vm2832 = vcmp.eq.s32.totalorder %v2737, %v78
      %vm2833 = vcmp.eq.s32.totalorder %v2740, %v77
      %vm2834 = vcmp.eq.s32.totalorder %v2740, %v78
      %vm2835 = vcmp.eq.s32.totalorder %v2743, %v77
      %vm2836 = vcmp.eq.s32.totalorder %v2743, %v78
      %vm2837 = vcmp.eq.s32.totalorder %v2746, %v77
      %vm2838 = vcmp.eq.s32.totalorder %v2746, %v78
      %vm2839 = vcmp.eq.s32.totalorder %v2749, %v77
      %vm2840 = vcmp.eq.s32.totalorder %v2749, %v78
      %vm2841 = vcmp.eq.s32.totalorder %v2752, %v77
      %vm2842 = vcmp.eq.s32.totalorder %v2752, %v78
      %vm2843 = vcmp.eq.s32.totalorder %v2755, %v77
      %vm2844 = vcmp.eq.s32.totalorder %v2755, %v78
      %vm2845 = vcmp.eq.s32.totalorder %v2758, %v77
      %vm2846 = vcmp.eq.s32.totalorder %v2758, %v78
      %vm2847 = vcmp.eq.s32.totalorder %v2761, %v77
      %vm2848 = vcmp.eq.s32.totalorder %v2761, %v78
      %vm2849 = vcmp.eq.s32.totalorder %v2764, %v77
      %vm2850 = vcmp.eq.s32.totalorder %v2764, %v78
      %vm2851 = vcmp.eq.s32.totalorder %v2767, %v77
      %vm2852 = vcmp.eq.s32.totalorder %v2767, %v78
      %vm2853 = vcmp.eq.s32.totalorder %v2770, %v77
      %vm2854 = vcmp.eq.s32.totalorder %v2770, %v78
      %vm2855 = vcmp.eq.s32.totalorder %v2773, %v77
      %vm2856 = vcmp.eq.s32.totalorder %v2773, %v78
      %vm2857 = vcmp.eq.s32.totalorder %v2776, %v77
      %vm2858 = vcmp.eq.s32.totalorder %v2776, %v78
      %vm2859 = vcmp.eq.s32.totalorder %v2779, %v77
      %vm2860 = vcmp.eq.s32.totalorder %v2779, %v78
      %vm2861 = vcmp.eq.s32.totalorder %v2782, %v77
      %vm2862 = vcmp.eq.s32.totalorder %v2782, %v78
      %vm2863 = vcmp.eq.s32.totalorder %v2785, %v77
      %vm2864 = vcmp.eq.s32.totalorder %v2785, %v78
      %vm2865 = vcmp.eq.s32.totalorder %v2788, %v77
      %vm2866 = vcmp.eq.s32.totalorder %v2788, %v78
      %vm2867 = vcmp.eq.s32.totalorder %v2791, %v77
      %vm2868 = vcmp.eq.s32.totalorder %v2791, %v78
      %vm2869 = vcmp.eq.s32.totalorder %v2794, %v77
      %vm2870 = vcmp.eq.s32.totalorder %v2794, %v78
      %vm2871 = vcmp.eq.s32.totalorder %v2797, %v77
      %vm2872 = vcmp.eq.s32.totalorder %v2797, %v78
      %vm2873 = vcmp.eq.s32.totalorder %v2800, %v77
      %vm2874 = vcmp.eq.s32.totalorder %v2800, %v78
      %vm2875 = vcmp.eq.s32.totalorder %v2803, %v77
      %vm2876 = vcmp.eq.s32.totalorder %v2803, %v78
      %vm2877 = vcmp.eq.s32.totalorder %v2806, %v77
      %vm2878 = vcmp.eq.s32.totalorder %v2806, %v78
      %vm2879 = vcmp.eq.s32.totalorder %v2809, %v77
      %vm2880 = vcmp.eq.s32.totalorder %v2809, %v78
      %vm2881 = vcmp.eq.s32.totalorder %v2812, %v77
      %vm2882 = vcmp.eq.s32.totalorder %v2812, %v78
      %vm2883 = vcmp.eq.s32.totalorder %v2815, %v77
      %vm2884 = vcmp.eq.s32.totalorder %v2815, %v78
      %vm2885 = vcmp.eq.s32.totalorder %v2818, %v77
      %vm2886 = vcmp.eq.s32.totalorder %v2818, %v78
      %vm2887 = vcmp.eq.s32.totalorder %v2821, %v77
      %vm2888 = vcmp.eq.s32.totalorder %v2821, %v78
      %vm2889 = vcmp.eq.s32.totalorder %v2824, %v77
      %vm2890 = vcmp.eq.s32.totalorder %v2824, %v78
      %vm2891 = vcmp.eq.s32.totalorder %v2827, %v77
      %vm2892 = vcmp.eq.s32.totalorder %v2827, %v78
      %vm2893 = vcmp.eq.s32.totalorder %v2830, %v77
      %vm2894 = vcmp.eq.s32.totalorder %v2830, %v78
      %v2895 = vsel %vm2831, 1, 0
      %v2896 = vsel %vm2832, 1, 0
      %v2897 = vsel %vm2833, 1, 0
      %v2898 = vsel %vm2834, 1, 0
      %v2899 = vsel %vm2835, 1, 0
      %v2900 = vsel %vm2836, 1, 0
      %v2901 = vsel %vm2837, 1, 0
      %v2902 = vsel %vm2838, 1, 0
      %v2903 = vsel %vm2839, 1, 0
      %v2904 = vsel %vm2840, 1, 0
      %v2905 = vsel %vm2841, 1, 0
      %v2906 = vsel %vm2842, 1, 0
      %v2907 = vsel %vm2843, 1, 0
      %v2908 = vsel %vm2844, 1, 0
      %v2909 = vsel %vm2845, 1, 0
      %v2910 = vsel %vm2846, 1, 0
      %v2911 = vsel %vm2847, 1, 0
      %v2912 = vsel %vm2848, 1, 0
      %v2913 = vsel %vm2849, 1, 0
      %v2914 = vsel %vm2850, 1, 0
      %v2915 = vsel %vm2851, 1, 0
      %v2916 = vsel %vm2852, 1, 0
      %v2917 = vsel %vm2853, 1, 0
      %v2918 = vsel %vm2854, 1, 0
      %v2919 = vsel %vm2855, 1, 0
      %v2920 = vsel %vm2856, 1, 0
      %v2921 = vsel %vm2857, 1, 0
      %v2922 = vsel %vm2858, 1, 0
      %v2923 = vsel %vm2859, 1, 0
      %v2924 = vsel %vm2860, 1, 0
      %v2925 = vsel %vm2861, 1, 0
      %v2926 = vsel %vm2862, 1, 0
      %v2927 = vsel %vm2863, 1, 0
      %v2928 = vsel %vm2864, 1, 0
      %v2929 = vsel %vm2865, 1, 0
      %v2930 = vsel %vm2866, 1, 0
      %v2931 = vsel %vm2867, 1, 0
      %v2932 = vsel %vm2868, 1, 0
      %v2933 = vsel %vm2869, 1, 0
      %v2934 = vsel %vm2870, 1, 0
      %v2935 = vsel %vm2871, 1, 0
      %v2936 = vsel %vm2872, 1, 0
      %v2937 = vsel %vm2873, 1, 0
      %v2938 = vsel %vm2874, 1, 0
      %v2939 = vsel %vm2875, 1, 0
      %v2940 = vsel %vm2876, 1, 0
      %v2941 = vsel %vm2877, 1, 0
      %v2942 = vsel %vm2878, 1, 0
      %v2943 = vsel %vm2879, 1, 0
      %v2944 = vsel %vm2880, 1, 0
      %v2945 = vsel %vm2881, 1, 0
      %v2946 = vsel %vm2882, 1, 0
      %v2947 = vsel %vm2883, 1, 0
      %v2948 = vsel %vm2884, 1, 0
      %v2949 = vsel %vm2885, 1, 0
      %v2950 = vsel %vm2886, 1, 0
      %v2951 = vsel %vm2887, 1, 0
      %v2952 = vsel %vm2888, 1, 0
      %v2953 = vsel %vm2889, 1, 0
      %v2954 = vsel %vm2890, 1, 0
      %v2955 = vsel %vm2891, 1, 0
      %v2956 = vsel %vm2892, 1, 0
      %v2957 = vsel %vm2893, 1, 0
      %v2958 = vsel %vm2894, 1, 0
      %v2959 = vcvt.s32.f32 %v2895
      %v2960 = vcvt.s32.f32 %v2896
      %v2961 = vcvt.s32.f32 %v2897
      %v2962 = vcvt.s32.f32 %v2898
      %v2963 = vcvt.s32.f32 %v2899
      %v2964 = vcvt.s32.f32 %v2900
      %v2965 = vcvt.s32.f32 %v2901
      %v2966 = vcvt.s32.f32 %v2902
      %v2967 = vcvt.s32.f32 %v2903
      %v2968 = vcvt.s32.f32 %v2904
      %v2969 = vcvt.s32.f32 %v2905
      %v2970 = vcvt.s32.f32 %v2906
      %v2971 = vcvt.s32.f32 %v2907
      %v2972 = vcvt.s32.f32 %v2908
      %v2973 = vcvt.s32.f32 %v2909
      %v2974 = vcvt.s32.f32 %v2910
      %v2975 = vcvt.s32.f32 %v2911
      %v2976 = vcvt.s32.f32 %v2912
      %v2977 = vcvt.s32.f32 %v2913
      %v2978 = vcvt.s32.f32 %v2914
      %v2979 = vcvt.s32.f32 %v2915
      %v2980 = vcvt.s32.f32 %v2916
      %v2981 = vcvt.s32.f32 %v2917
      %v2982 = vcvt.s32.f32 %v2918
      %v2983 = vcvt.s32.f32 %v2919
      %v2984 = vcvt.s32.f32 %v2920
      %v2985 = vcvt.s32.f32 %v2921
      %v2986 = vcvt.s32.f32 %v2922
      %v2987 = vcvt.s32.f32 %v2923
      %v2988 = vcvt.s32.f32 %v2924
      %v2989 = vcvt.s32.f32 %v2925
      %v2990 = vcvt.s32.f32 %v2926
      %v2991 = vcvt.s32.f32 %v2927
      %v2992 = vcvt.s32.f32 %v2928
      %v2993 = vcvt.s32.f32 %v2929
      %v2994 = vcvt.s32.f32 %v2930
      %v2995 = vcvt.s32.f32 %v2931
      %v2996 = vcvt.s32.f32 %v2932
      %v2997 = vcvt.s32.f32 %v2933
      %v2998 = vcvt.s32.f32 %v2934
      %v2999 = vcvt.s32.f32 %v2935
      %v3000 = vcvt.s32.f32 %v2936
      %v3001 = vcvt.s32.f32 %v2937
      %v3002 = vcvt.s32.f32 %v2938
      %v3003 = vcvt.s32.f32 %v2939
      %v3004 = vcvt.s32.f32 %v2940
      %v3005 = vcvt.s32.f32 %v2941
      %v3006 = vcvt.s32.f32 %v2942
      %v3007 = vcvt.s32.f32 %v2943
      %v3008 = vcvt.s32.f32 %v2944
      %v3009 = vcvt.s32.f32 %v2945
      %v3010 = vcvt.s32.f32 %v2946
      %v3011 = vcvt.s32.f32 %v2947
      %v3012 = vcvt.s32.f32 %v2948
      %v3013 = vcvt.s32.f32 %v2949
      %v3014 = vcvt.s32.f32 %v2950
      %v3015 = vcvt.s32.f32 %v2951
      %v3016 = vcvt.s32.f32 %v2952
      %v3017 = vcvt.s32.f32 %v2953
      %v3018 = vcvt.s32.f32 %v2954
      %v3019 = vcvt.s32.f32 %v2955
      %v3020 = vcvt.s32.f32 %v2956
      %v3021 = vcvt.s32.f32 %v2957
      %v3022 = vcvt.s32.f32 %v2958
      %v3023 = vpack.c.bf16 %v2960, %v2959
      %v3024 = vpack.c.bf16 %v2962, %v2961
      %v3025 = vpack.c.bf16 %v2964, %v2963
      %v3026 = vpack.c.bf16 %v2966, %v2965
      %v3027 = vpack.c.bf16 %v2968, %v2967
      %v3028 = vpack.c.bf16 %v2970, %v2969
      %v3029 = vpack.c.bf16 %v2972, %v2971
      %v3030 = vpack.c.bf16 %v2974, %v2973
      %v3031 = vpack.c.bf16 %v2976, %v2975
      %v3032 = vpack.c.bf16 %v2978, %v2977
      %v3033 = vpack.c.bf16 %v2980, %v2979
      %v3034 = vpack.c.bf16 %v2982, %v2981
      %v3035 = vpack.c.bf16 %v2984, %v2983
      %v3036 = vpack.c.bf16 %v2986, %v2985
      %v3037 = vpack.c.bf16 %v2988, %v2987
      %v3038 = vpack.c.bf16 %v2990, %v2989
      %v3039 = vpack.c.bf16 %v2992, %v2991
      %v3040 = vpack.c.bf16 %v2994, %v2993
      %v3041 = vpack.c.bf16 %v2996, %v2995
      %v3042 = vpack.c.bf16 %v2998, %v2997
      %v3043 = vpack.c.bf16 %v3000, %v2999
      %v3044 = vpack.c.bf16 %v3002, %v3001
      %v3045 = vpack.c.bf16 %v3004, %v3003
      %v3046 = vpack.c.bf16 %v3006, %v3005
      %v3047 = vpack.c.bf16 %v3008, %v3007
      %v3048 = vpack.c.bf16 %v3010, %v3009
      %v3049 = vpack.c.bf16 %v3012, %v3011
      %v3050 = vpack.c.bf16 %v3014, %v3013
      %v3051 = vpack.c.bf16 %v3016, %v3015
      %v3052 = vpack.c.bf16 %v3018, %v3017
      %v3053 = vpack.c.bf16 %v3020, %v3019
      %v3054 = vpack.c.bf16 %v3022, %v3021
      %v3055 = vunpack.c.l.bf16 %v2703
      %v3056 = vunpack.c.h.bf16 %v2703
      %v3057 = vunpack.c.l.bf16 %v2704
      %v3058 = vunpack.c.h.bf16 %v2704
      %v3059 = vunpack.c.l.bf16 %v2705
      %v3060 = vunpack.c.h.bf16 %v2705
      %v3061 = vunpack.c.l.bf16 %v2706
      %v3062 = vunpack.c.h.bf16 %v2706
      %v3063 = vunpack.c.l.bf16 %v2707
      %v3064 = vunpack.c.h.bf16 %v2707
      %v3065 = vunpack.c.l.bf16 %v2708
      %v3066 = vunpack.c.h.bf16 %v2708
      %v3067 = vunpack.c.l.bf16 %v2709
      %v3068 = vunpack.c.h.bf16 %v2709
      %v3069 = vunpack.c.l.bf16 %v2710
      %v3070 = vunpack.c.h.bf16 %v2710
      %v3071 = vunpack.c.l.bf16 %v2711
      %v3072 = vunpack.c.h.bf16 %v2711
      %v3073 = vunpack.c.l.bf16 %v2712
      %v3074 = vunpack.c.h.bf16 %v2712
      %v3075 = vunpack.c.l.bf16 %v2713
      %v3076 = vunpack.c.h.bf16 %v2713
      %v3077 = vunpack.c.l.bf16 %v2714
      %v3078 = vunpack.c.h.bf16 %v2714
      %v3079 = vunpack.c.l.bf16 %v2715
      %v3080 = vunpack.c.h.bf16 %v2715
      %v3081 = vunpack.c.l.bf16 %v2716
      %v3082 = vunpack.c.h.bf16 %v2716
      %v3083 = vunpack.c.l.bf16 %v2717
      %v3084 = vunpack.c.h.bf16 %v2717
      %v3085 = vunpack.c.l.bf16 %v2718
      %v3086 = vunpack.c.h.bf16 %v2718
      %v3087 = vunpack.c.l.bf16 %v2719
      %v3088 = vunpack.c.h.bf16 %v2719
      %v3089 = vunpack.c.l.bf16 %v2720
      %v3090 = vunpack.c.h.bf16 %v2720
      %v3091 = vunpack.c.l.bf16 %v2721
      %v3092 = vunpack.c.h.bf16 %v2721
      %v3093 = vunpack.c.l.bf16 %v2722
      %v3094 = vunpack.c.h.bf16 %v2722
      %v3095 = vunpack.c.l.bf16 %v2723
      %v3096 = vunpack.c.h.bf16 %v2723
      %v3097 = vunpack.c.l.bf16 %v2724
      %v3098 = vunpack.c.h.bf16 %v2724
      %v3099 = vunpack.c.l.bf16 %v2725
      %v3100 = vunpack.c.h.bf16 %v2725
      %v3101 = vunpack.c.l.bf16 %v2726
      %v3102 = vunpack.c.h.bf16 %v2726
      %v3103 = vunpack.c.l.bf16 %v2727
      %v3104 = vunpack.c.h.bf16 %v2727
      %v3105 = vunpack.c.l.bf16 %v2728
      %v3106 = vunpack.c.h.bf16 %v2728
      %v3107 = vunpack.c.l.bf16 %v2729
      %v3108 = vunpack.c.h.bf16 %v2729
      %v3109 = vunpack.c.l.bf16 %v2730
      %v3110 = vunpack.c.h.bf16 %v2730
      %v3111 = vunpack.c.l.bf16 %v2731
      %v3112 = vunpack.c.h.bf16 %v2731
      %v3113 = vunpack.c.l.bf16 %v2732
      %v3114 = vunpack.c.h.bf16 %v2732
      %v3115 = vunpack.c.l.bf16 %v2733
      %v3116 = vunpack.c.h.bf16 %v2733
      %v3117 = vunpack.c.l.bf16 %v2734
      %v3118 = vunpack.c.h.bf16 %v2734
      %v3119 = vunpack.c.l.bf16 %v3023
      %v3120 = vunpack.c.h.bf16 %v3023
      %v3121 = vunpack.c.l.bf16 %v3024
      %v3122 = vunpack.c.h.bf16 %v3024
      %v3123 = vunpack.c.l.bf16 %v3025
      %v3124 = vunpack.c.h.bf16 %v3025
      %v3125 = vunpack.c.l.bf16 %v3026
      %v3126 = vunpack.c.h.bf16 %v3026
      %v3127 = vunpack.c.l.bf16 %v3027
      %v3128 = vunpack.c.h.bf16 %v3027
      %v3129 = vunpack.c.l.bf16 %v3028
      %v3130 = vunpack.c.h.bf16 %v3028
      %v3131 = vunpack.c.l.bf16 %v3029
      %v3132 = vunpack.c.h.bf16 %v3029
      %v3133 = vunpack.c.l.bf16 %v3030
      %v3134 = vunpack.c.h.bf16 %v3030
      %v3135 = vunpack.c.l.bf16 %v3031
      %v3136 = vunpack.c.h.bf16 %v3031
      %v3137 = vunpack.c.l.bf16 %v3032
      %v3138 = vunpack.c.h.bf16 %v3032
      %v3139 = vunpack.c.l.bf16 %v3033
      %v3140 = vunpack.c.h.bf16 %v3033
      %v3141 = vunpack.c.l.bf16 %v3034
      %v3142 = vunpack.c.h.bf16 %v3034
      %v3143 = vunpack.c.l.bf16 %v3035
      %v3144 = vunpack.c.h.bf16 %v3035
      %v3145 = vunpack.c.l.bf16 %v3036
      %v3146 = vunpack.c.h.bf16 %v3036
      %v3147 = vunpack.c.l.bf16 %v3037
      %v3148 = vunpack.c.h.bf16 %v3037
      %v3149 = vunpack.c.l.bf16 %v3038
      %v3150 = vunpack.c.h.bf16 %v3038
      %v3151 = vunpack.c.l.bf16 %v3039
      %v3152 = vunpack.c.h.bf16 %v3039
      %v3153 = vunpack.c.l.bf16 %v3040
      %v3154 = vunpack.c.h.bf16 %v3040
      %v3155 = vunpack.c.l.bf16 %v3041
      %v3156 = vunpack.c.h.bf16 %v3041
      %v3157 = vunpack.c.l.bf16 %v3042
      %v3158 = vunpack.c.h.bf16 %v3042
      %v3159 = vunpack.c.l.bf16 %v3043
      %v3160 = vunpack.c.h.bf16 %v3043
      %v3161 = vunpack.c.l.bf16 %v3044
      %v3162 = vunpack.c.h.bf16 %v3044
      %v3163 = vunpack.c.l.bf16 %v3045
      %v3164 = vunpack.c.h.bf16 %v3045
      %v3165 = vunpack.c.l.bf16 %v3046
      %v3166 = vunpack.c.h.bf16 %v3046
      %v3167 = vunpack.c.l.bf16 %v3047
      %v3168 = vunpack.c.h.bf16 %v3047
      %v3169 = vunpack.c.l.bf16 %v3048
      %v3170 = vunpack.c.h.bf16 %v3048
      %v3171 = vunpack.c.l.bf16 %v3049
      %v3172 = vunpack.c.h.bf16 %v3049
      %v3173 = vunpack.c.l.bf16 %v3050
      %v3174 = vunpack.c.h.bf16 %v3050
      %v3175 = vunpack.c.l.bf16 %v3051
      %v3176 = vunpack.c.h.bf16 %v3051
      %v3177 = vunpack.c.l.bf16 %v3052
      %v3178 = vunpack.c.h.bf16 %v3052
      %v3179 = vunpack.c.l.bf16 %v3053
      %v3180 = vunpack.c.h.bf16 %v3053
      %v3181 = vunpack.c.l.bf16 %v3054
      %v3182 = vunpack.c.h.bf16 %v3054
      %v3183 = vadd.f32 %v3055, %v3119
      %v3184 = vadd.f32 %v3056, %v3120
      %v3185 = vadd.f32 %v3057, %v3121
      %v3186 = vadd.f32 %v3058, %v3122
      %v3187 = vadd.f32 %v3059, %v3123
      %v3188 = vadd.f32 %v3060, %v3124
      %v3189 = vadd.f32 %v3061, %v3125
      %v3190 = vadd.f32 %v3062, %v3126
      %v3191 = vadd.f32 %v3063, %v3127
      %v3192 = vadd.f32 %v3064, %v3128
      %v3193 = vadd.f32 %v3065, %v3129
      %v3194 = vadd.f32 %v3066, %v3130
      %v3195 = vadd.f32 %v3067, %v3131
      %v3196 = vadd.f32 %v3068, %v3132
      %v3197 = vadd.f32 %v3069, %v3133
      %v3198 = vadd.f32 %v3070, %v3134
      %v3199 = vadd.f32 %v3071, %v3135
      %v3200 = vadd.f32 %v3072, %v3136
      %v3201 = vadd.f32 %v3073, %v3137
      %v3202 = vadd.f32 %v3074, %v3138
      %v3203 = vadd.f32 %v3075, %v3139
      %v3204 = vadd.f32 %v3076, %v3140
      %v3205 = vadd.f32 %v3077, %v3141
      %v3206 = vadd.f32 %v3078, %v3142
      %v3207 = vadd.f32 %v3079, %v3143
      %v3208 = vadd.f32 %v3080, %v3144
      %v3209 = vadd.f32 %v3081, %v3145
      %v3210 = vadd.f32 %v3082, %v3146
      %v3211 = vadd.f32 %v3083, %v3147
      %v3212 = vadd.f32 %v3084, %v3148
      %v3213 = vadd.f32 %v3085, %v3149
      %v3214 = vadd.f32 %v3086, %v3150
      %v3215 = vadd.f32 %v3087, %v3151
      %v3216 = vadd.f32 %v3088, %v3152
      %v3217 = vadd.f32 %v3089, %v3153
      %v3218 = vadd.f32 %v3090, %v3154
      %v3219 = vadd.f32 %v3091, %v3155
      %v3220 = vadd.f32 %v3092, %v3156
      %v3221 = vadd.f32 %v3093, %v3157
      %v3222 = vadd.f32 %v3094, %v3158
      %v3223 = vadd.f32 %v3095, %v3159
      %v3224 = vadd.f32 %v3096, %v3160
      %v3225 = vadd.f32 %v3097, %v3161
      %v3226 = vadd.f32 %v3098, %v3162
      %v3227 = vadd.f32 %v3099, %v3163
      %v3228 = vadd.f32 %v3100, %v3164
      %v3229 = vadd.f32 %v3101, %v3165
      %v3230 = vadd.f32 %v3102, %v3166
      %v3231 = vadd.f32 %v3103, %v3167
      %v3232 = vadd.f32 %v3104, %v3168
      %v3233 = vadd.f32 %v3105, %v3169
      %v3234 = vadd.f32 %v3106, %v3170
      %v3235 = vadd.f32 %v3107, %v3171
      %v3236 = vadd.f32 %v3108, %v3172
      %v3237 = vadd.f32 %v3109, %v3173
      %v3238 = vadd.f32 %v3110, %v3174
      %v3239 = vadd.f32 %v3111, %v3175
      %v3240 = vadd.f32 %v3112, %v3176
      %v3241 = vadd.f32 %v3113, %v3177
      %v3242 = vadd.f32 %v3114, %v3178
      %v3243 = vadd.f32 %v3115, %v3179
      %v3244 = vadd.f32 %v3116, %v3180
      %v3245 = vadd.f32 %v3117, %v3181
      %v3246 = vadd.f32 %v3118, %v3182
      %v3247 = vpack.c.bf16 %v3184, %v3183
      %v3248 = vpack.c.bf16 %v3186, %v3185
      %v3249 = vpack.c.bf16 %v3188, %v3187
      %v3250 = vpack.c.bf16 %v3190, %v3189
      %v3251 = vpack.c.bf16 %v3192, %v3191
      %v3252 = vpack.c.bf16 %v3194, %v3193
      %v3253 = vpack.c.bf16 %v3196, %v3195
      %v3254 = vpack.c.bf16 %v3198, %v3197
      %v3255 = vpack.c.bf16 %v3200, %v3199
      %v3256 = vpack.c.bf16 %v3202, %v3201
      %v3257 = vpack.c.bf16 %v3204, %v3203
      %v3258 = vpack.c.bf16 %v3206, %v3205
      %v3259 = vpack.c.bf16 %v3208, %v3207
      %v3260 = vpack.c.bf16 %v3210, %v3209
      %v3261 = vpack.c.bf16 %v3212, %v3211
      %v3262 = vpack.c.bf16 %v3214, %v3213
      %v3263 = vpack.c.bf16 %v3216, %v3215
      %v3264 = vpack.c.bf16 %v3218, %v3217
      %v3265 = vpack.c.bf16 %v3220, %v3219
      %v3266 = vpack.c.bf16 %v3222, %v3221
      %v3267 = vpack.c.bf16 %v3224, %v3223
      %v3268 = vpack.c.bf16 %v3226, %v3225
      %v3269 = vpack.c.bf16 %v3228, %v3227
      %v3270 = vpack.c.bf16 %v3230, %v3229
      %v3271 = vpack.c.bf16 %v3232, %v3231
      %v3272 = vpack.c.bf16 %v3234, %v3233
      %v3273 = vpack.c.bf16 %v3236, %v3235
      %v3274 = vpack.c.bf16 %v3238, %v3237
      %v3275 = vpack.c.bf16 %v3240, %v3239
      %v3276 = vpack.c.bf16 %v3242, %v3241
      %v3277 = vpack.c.bf16 %v3244, %v3243
      %v3278 = vpack.c.bf16 %v3246, %v3245
      %3279 = vset.pattern.permute.xlu0 6
      %3280 = vperm.xlu0 %3279, %v44
      %v3281 = vpop.permute.xlu0 %3280
      %3282 = vset.pattern.permute.xlu0 6
      %3283 = vperm.xlu0 %3282, %v45
      %v3284 = vpop.permute.xlu0 %3283
      %3285 = vset.pattern.permute.xlu0 6
      %3286 = vperm.xlu0 %3285, %v46
      %v3287 = vpop.permute.xlu0 %3286
      %3288 = vset.pattern.permute.xlu0 6
      %3289 = vperm.xlu0 %3288, %v47
      %v3290 = vpop.permute.xlu0 %3289
      %3291 = vset.pattern.permute.xlu0 6
      %3292 = vperm.xlu0 %3291, %v48
      %v3293 = vpop.permute.xlu0 %3292
      %3294 = vset.pattern.permute.xlu0 6
      %3295 = vperm.xlu0 %3294, %v49
      %v3296 = vpop.permute.xlu0 %3295
      %3297 = vset.pattern.permute.xlu0 6
      %3298 = vperm.xlu0 %3297, %v50
      %v3299 = vpop.permute.xlu0 %3298
      %3300 = vset.pattern.permute.xlu0 6
      %3301 = vperm.xlu0 %3300, %v51
      %v3302 = vpop.permute.xlu0 %3301
      %3303 = vset.pattern.permute.xlu0 6
      %3304 = vperm.xlu0 %3303, %v52
      %v3305 = vpop.permute.xlu0 %3304
      %3306 = vset.pattern.permute.xlu0 6
      %3307 = vperm.xlu0 %3306, %v53
      %v3308 = vpop.permute.xlu0 %3307
      %3309 = vset.pattern.permute.xlu0 6
      %3310 = vperm.xlu0 %3309, %v54
      %v3311 = vpop.permute.xlu0 %3310
      %3312 = vset.pattern.permute.xlu0 6
      %3313 = vperm.xlu0 %3312, %v55
      %v3314 = vpop.permute.xlu0 %3313
      %3315 = vset.pattern.permute.xlu0 6
      %3316 = vperm.xlu0 %3315, %v56
      %v3317 = vpop.permute.xlu0 %3316
      %3318 = vset.pattern.permute.xlu0 6
      %3319 = vperm.xlu0 %3318, %v57
      %v3320 = vpop.permute.xlu0 %3319
      %3321 = vset.pattern.permute.xlu0 6
      %3322 = vperm.xlu0 %3321, %v58
      %v3323 = vpop.permute.xlu0 %3322
      %3324 = vset.pattern.permute.xlu0 6
      %3325 = vperm.xlu0 %3324, %v59
      %v3326 = vpop.permute.xlu0 %3325
      %3327 = vset.pattern.permute.xlu0 6
      %3328 = vperm.xlu0 %3327, %v60
      %v3329 = vpop.permute.xlu0 %3328
      %3330 = vset.pattern.permute.xlu0 6
      %3331 = vperm.xlu0 %3330, %v61
      %v3332 = vpop.permute.xlu0 %3331
      %3333 = vset.pattern.permute.xlu0 6
      %3334 = vperm.xlu0 %3333, %v62
      %v3335 = vpop.permute.xlu0 %3334
      %3336 = vset.pattern.permute.xlu0 6
      %3337 = vperm.xlu0 %3336, %v63
      %v3338 = vpop.permute.xlu0 %3337
      %3339 = vset.pattern.permute.xlu0 6
      %3340 = vperm.xlu0 %3339, %v64
      %v3341 = vpop.permute.xlu0 %3340
      %3342 = vset.pattern.permute.xlu0 6
      %3343 = vperm.xlu0 %3342, %v65
      %v3344 = vpop.permute.xlu0 %3343
      %3345 = vset.pattern.permute.xlu0 6
      %3346 = vperm.xlu0 %3345, %v66
      %v3347 = vpop.permute.xlu0 %3346
      %3348 = vset.pattern.permute.xlu0 6
      %3349 = vperm.xlu0 %3348, %v67
      %v3350 = vpop.permute.xlu0 %3349
      %3351 = vset.pattern.permute.xlu0 6
      %3352 = vperm.xlu0 %3351, %v68
      %v3353 = vpop.permute.xlu0 %3352
      %3354 = vset.pattern.permute.xlu0 6
      %3355 = vperm.xlu0 %3354, %v69
      %v3356 = vpop.permute.xlu0 %3355
      %3357 = vset.pattern.permute.xlu0 6
      %3358 = vperm.xlu0 %3357, %v70
      %v3359 = vpop.permute.xlu0 %3358
      %3360 = vset.pattern.permute.xlu0 6
      %3361 = vperm.xlu0 %3360, %v71
      %v3362 = vpop.permute.xlu0 %3361
      %3363 = vset.pattern.permute.xlu0 6
      %3364 = vperm.xlu0 %3363, %v72
      %v3365 = vpop.permute.xlu0 %3364
      %3366 = vset.pattern.permute.xlu0 6
      %3367 = vperm.xlu0 %3366, %v73
      %v3368 = vpop.permute.xlu0 %3367
      %3369 = vset.pattern.permute.xlu0 6
      %3370 = vperm.xlu0 %3369, %v74
      %v3371 = vpop.permute.xlu0 %3370
      %3372 = vset.pattern.permute.xlu0 6
      %3373 = vperm.xlu0 %3372, %v75
      %v3374 = vpop.permute.xlu0 %3373
      %vm3375 = vcmp.eq.s32.totalorder %v3281, %v77
      %vm3376 = vcmp.eq.s32.totalorder %v3281, %v78
      %vm3377 = vcmp.eq.s32.totalorder %v3284, %v77
      %vm3378 = vcmp.eq.s32.totalorder %v3284, %v78
      %vm3379 = vcmp.eq.s32.totalorder %v3287, %v77
      %vm3380 = vcmp.eq.s32.totalorder %v3287, %v78
      %vm3381 = vcmp.eq.s32.totalorder %v3290, %v77
      %vm3382 = vcmp.eq.s32.totalorder %v3290, %v78
      %vm3383 = vcmp.eq.s32.totalorder %v3293, %v77
      %vm3384 = vcmp.eq.s32.totalorder %v3293, %v78
      %vm3385 = vcmp.eq.s32.totalorder %v3296, %v77
      %vm3386 = vcmp.eq.s32.totalorder %v3296, %v78
      %vm3387 = vcmp.eq.s32.totalorder %v3299, %v77
      %vm3388 = vcmp.eq.s32.totalorder %v3299, %v78
      %vm3389 = vcmp.eq.s32.totalorder %v3302, %v77
      %vm3390 = vcmp.eq.s32.totalorder %v3302, %v78
      %vm3391 = vcmp.eq.s32.totalorder %v3305, %v77
      %vm3392 = vcmp.eq.s32.totalorder %v3305, %v78
      %vm3393 = vcmp.eq.s32.totalorder %v3308, %v77
      %vm3394 = vcmp.eq.s32.totalorder %v3308, %v78
      %vm3395 = vcmp.eq.s32.totalorder %v3311, %v77
      %vm3396 = vcmp.eq.s32.totalorder %v3311, %v78
      %vm3397 = vcmp.eq.s32.totalorder %v3314, %v77
      %vm3398 = vcmp.eq.s32.totalorder %v3314, %v78
      %vm3399 = vcmp.eq.s32.totalorder %v3317, %v77
      %vm3400 = vcmp.eq.s32.totalorder %v3317, %v78
      %vm3401 = vcmp.eq.s32.totalorder %v3320, %v77
      %vm3402 = vcmp.eq.s32.totalorder %v3320, %v78
      %vm3403 = vcmp.eq.s32.totalorder %v3323, %v77
      %vm3404 = vcmp.eq.s32.totalorder %v3323, %v78
      %vm3405 = vcmp.eq.s32.totalorder %v3326, %v77
      %vm3406 = vcmp.eq.s32.totalorder %v3326, %v78
      %vm3407 = vcmp.eq.s32.totalorder %v3329, %v77
      %vm3408 = vcmp.eq.s32.totalorder %v3329, %v78
      %vm3409 = vcmp.eq.s32.totalorder %v3332, %v77
      %vm3410 = vcmp.eq.s32.totalorder %v3332, %v78
      %vm3411 = vcmp.eq.s32.totalorder %v3335, %v77
      %vm3412 = vcmp.eq.s32.totalorder %v3335, %v78
      %vm3413 = vcmp.eq.s32.totalorder %v3338, %v77
      %vm3414 = vcmp.eq.s32.totalorder %v3338, %v78
      %vm3415 = vcmp.eq.s32.totalorder %v3341, %v77
      %vm3416 = vcmp.eq.s32.totalorder %v3341, %v78
      %vm3417 = vcmp.eq.s32.totalorder %v3344, %v77
      %vm3418 = vcmp.eq.s32.totalorder %v3344, %v78
      %vm3419 = vcmp.eq.s32.totalorder %v3347, %v77
      %vm3420 = vcmp.eq.s32.totalorder %v3347, %v78
      %vm3421 = vcmp.eq.s32.totalorder %v3350, %v77
      %vm3422 = vcmp.eq.s32.totalorder %v3350, %v78
      %vm3423 = vcmp.eq.s32.totalorder %v3353, %v77
      %vm3424 = vcmp.eq.s32.totalorder %v3353, %v78
      %vm3425 = vcmp.eq.s32.totalorder %v3356, %v77
      %vm3426 = vcmp.eq.s32.totalorder %v3356, %v78
      %vm3427 = vcmp.eq.s32.totalorder %v3359, %v77
      %vm3428 = vcmp.eq.s32.totalorder %v3359, %v78
      %vm3429 = vcmp.eq.s32.totalorder %v3362, %v77
      %vm3430 = vcmp.eq.s32.totalorder %v3362, %v78
      %vm3431 = vcmp.eq.s32.totalorder %v3365, %v77
      %vm3432 = vcmp.eq.s32.totalorder %v3365, %v78
      %vm3433 = vcmp.eq.s32.totalorder %v3368, %v77
      %vm3434 = vcmp.eq.s32.totalorder %v3368, %v78
      %vm3435 = vcmp.eq.s32.totalorder %v3371, %v77
      %vm3436 = vcmp.eq.s32.totalorder %v3371, %v78
      %vm3437 = vcmp.eq.s32.totalorder %v3374, %v77
      %vm3438 = vcmp.eq.s32.totalorder %v3374, %v78
      %v3439 = vsel %vm3375, 1, 0
      %v3440 = vsel %vm3376, 1, 0
      %v3441 = vsel %vm3377, 1, 0
      %v3442 = vsel %vm3378, 1, 0
      %v3443 = vsel %vm3379, 1, 0
      %v3444 = vsel %vm3380, 1, 0
      %v3445 = vsel %vm3381, 1, 0
      %v3446 = vsel %vm3382, 1, 0
      %v3447 = vsel %vm3383, 1, 0
      %v3448 = vsel %vm3384, 1, 0
      %v3449 = vsel %vm3385, 1, 0
      %v3450 = vsel %vm3386, 1, 0
      %v3451 = vsel %vm3387, 1, 0
      %v3452 = vsel %vm3388, 1, 0
      %v3453 = vsel %vm3389, 1, 0
      %v3454 = vsel %vm3390, 1, 0
      %v3455 = vsel %vm3391, 1, 0
      %v3456 = vsel %vm3392, 1, 0
      %v3457 = vsel %vm3393, 1, 0
      %v3458 = vsel %vm3394, 1, 0
      %v3459 = vsel %vm3395, 1, 0
      %v3460 = vsel %vm3396, 1, 0
      %v3461 = vsel %vm3397, 1, 0
      %v3462 = vsel %vm3398, 1, 0
      %v3463 = vsel %vm3399, 1, 0
      %v3464 = vsel %vm3400, 1, 0
      %v3465 = vsel %vm3401, 1, 0
      %v3466 = vsel %vm3402, 1, 0
      %v3467 = vsel %vm3403, 1, 0
      %v3468 = vsel %vm3404, 1, 0
      %v3469 = vsel %vm3405, 1, 0
      %v3470 = vsel %vm3406, 1, 0
      %v3471 = vsel %vm3407, 1, 0
      %v3472 = vsel %vm3408, 1, 0
      %v3473 = vsel %vm3409, 1, 0
      %v3474 = vsel %vm3410, 1, 0
      %v3475 = vsel %vm3411, 1, 0
      %v3476 = vsel %vm3412, 1, 0
      %v3477 = vsel %vm3413, 1, 0
      %v3478 = vsel %vm3414, 1, 0
      %v3479 = vsel %vm3415, 1, 0
      %v3480 = vsel %vm3416, 1, 0
      %v3481 = vsel %vm3417, 1, 0
      %v3482 = vsel %vm3418, 1, 0
      %v3483 = vsel %vm3419, 1, 0
      %v3484 = vsel %vm3420, 1, 0
      %v3485 = vsel %vm3421, 1, 0
      %v3486 = vsel %vm3422, 1, 0
      %v3487 = vsel %vm3423, 1, 0
      %v3488 = vsel %vm3424, 1, 0
      %v3489 = vsel %vm3425, 1, 0
      %v3490 = vsel %vm3426, 1, 0
      %v3491 = vsel %vm3427, 1, 0
      %v3492 = vsel %vm3428, 1, 0
      %v3493 = vsel %vm3429, 1, 0
      %v3494 = vsel %vm3430, 1, 0
      %v3495 = vsel %vm3431, 1, 0
      %v3496 = vsel %vm3432, 1, 0
      %v3497 = vsel %vm3433, 1, 0
      %v3498 = vsel %vm3434, 1, 0
      %v3499 = vsel %vm3435, 1, 0
      %v3500 = vsel %vm3436, 1, 0
      %v3501 = vsel %vm3437, 1, 0
      %v3502 = vsel %vm3438, 1, 0
      %v3503 = vcvt.s32.f32 %v3439
      %v3504 = vcvt.s32.f32 %v3440
      %v3505 = vcvt.s32.f32 %v3441
      %v3506 = vcvt.s32.f32 %v3442
      %v3507 = vcvt.s32.f32 %v3443
      %v3508 = vcvt.s32.f32 %v3444
      %v3509 = vcvt.s32.f32 %v3445
      %v3510 = vcvt.s32.f32 %v3446
      %v3511 = vcvt.s32.f32 %v3447
      %v3512 = vcvt.s32.f32 %v3448
      %v3513 = vcvt.s32.f32 %v3449
      %v3514 = vcvt.s32.f32 %v3450
      %v3515 = vcvt.s32.f32 %v3451
      %v3516 = vcvt.s32.f32 %v3452
      %v3517 = vcvt.s32.f32 %v3453
      %v3518 = vcvt.s32.f32 %v3454
      %v3519 = vcvt.s32.f32 %v3455
      %v3520 = vcvt.s32.f32 %v3456
      %v3521 = vcvt.s32.f32 %v3457
      %v3522 = vcvt.s32.f32 %v3458
      %v3523 = vcvt.s32.f32 %v3459
      %v3524 = vcvt.s32.f32 %v3460
      %v3525 = vcvt.s32.f32 %v3461
      %v3526 = vcvt.s32.f32 %v3462
      %v3527 = vcvt.s32.f32 %v3463
      %v3528 = vcvt.s32.f32 %v3464
      %v3529 = vcvt.s32.f32 %v3465
      %v3530 = vcvt.s32.f32 %v3466
      %v3531 = vcvt.s32.f32 %v3467
      %v3532 = vcvt.s32.f32 %v3468
      %v3533 = vcvt.s32.f32 %v3469
      %v3534 = vcvt.s32.f32 %v3470
      %v3535 = vcvt.s32.f32 %v3471
      %v3536 = vcvt.s32.f32 %v3472
      %v3537 = vcvt.s32.f32 %v3473
      %v3538 = vcvt.s32.f32 %v3474
      %v3539 = vcvt.s32.f32 %v3475
      %v3540 = vcvt.s32.f32 %v3476
      %v3541 = vcvt.s32.f32 %v3477
      %v3542 = vcvt.s32.f32 %v3478
      %v3543 = vcvt.s32.f32 %v3479
      %v3544 = vcvt.s32.f32 %v3480
      %v3545 = vcvt.s32.f32 %v3481
      %v3546 = vcvt.s32.f32 %v3482
      %v3547 = vcvt.s32.f32 %v3483
      %v3548 = vcvt.s32.f32 %v3484
      %v3549 = vcvt.s32.f32 %v3485
      %v3550 = vcvt.s32.f32 %v3486
      %v3551 = vcvt.s32.f32 %v3487
      %v3552 = vcvt.s32.f32 %v3488
      %v3553 = vcvt.s32.f32 %v3489
      %v3554 = vcvt.s32.f32 %v3490
      %v3555 = vcvt.s32.f32 %v3491
      %v3556 = vcvt.s32.f32 %v3492
      %v3557 = vcvt.s32.f32 %v3493
      %v3558 = vcvt.s32.f32 %v3494
      %v3559 = vcvt.s32.f32 %v3495
      %v3560 = vcvt.s32.f32 %v3496
      %v3561 = vcvt.s32.f32 %v3497
      %v3562 = vcvt.s32.f32 %v3498
      %v3563 = vcvt.s32.f32 %v3499
      %v3564 = vcvt.s32.f32 %v3500
      %v3565 = vcvt.s32.f32 %v3501
      %v3566 = vcvt.s32.f32 %v3502
      %v3567 = vpack.c.bf16 %v3504, %v3503
      %v3568 = vpack.c.bf16 %v3506, %v3505
      %v3569 = vpack.c.bf16 %v3508, %v3507
      %v3570 = vpack.c.bf16 %v3510, %v3509
      %v3571 = vpack.c.bf16 %v3512, %v3511
      %v3572 = vpack.c.bf16 %v3514, %v3513
      %v3573 = vpack.c.bf16 %v3516, %v3515
      %v3574 = vpack.c.bf16 %v3518, %v3517
      %v3575 = vpack.c.bf16 %v3520, %v3519
      %v3576 = vpack.c.bf16 %v3522, %v3521
      %v3577 = vpack.c.bf16 %v3524, %v3523
      %v3578 = vpack.c.bf16 %v3526, %v3525
      %v3579 = vpack.c.bf16 %v3528, %v3527
      %v3580 = vpack.c.bf16 %v3530, %v3529
      %v3581 = vpack.c.bf16 %v3532, %v3531
      %v3582 = vpack.c.bf16 %v3534, %v3533
      %v3583 = vpack.c.bf16 %v3536, %v3535
      %v3584 = vpack.c.bf16 %v3538, %v3537
      %v3585 = vpack.c.bf16 %v3540, %v3539
      %v3586 = vpack.c.bf16 %v3542, %v3541
      %v3587 = vpack.c.bf16 %v3544, %v3543
      %v3588 = vpack.c.bf16 %v3546, %v3545
      %v3589 = vpack.c.bf16 %v3548, %v3547
      %v3590 = vpack.c.bf16 %v3550, %v3549
      %v3591 = vpack.c.bf16 %v3552, %v3551
      %v3592 = vpack.c.bf16 %v3554, %v3553
      %v3593 = vpack.c.bf16 %v3556, %v3555
      %v3594 = vpack.c.bf16 %v3558, %v3557
      %v3595 = vpack.c.bf16 %v3560, %v3559
      %v3596 = vpack.c.bf16 %v3562, %v3561
      %v3597 = vpack.c.bf16 %v3564, %v3563
      %v3598 = vpack.c.bf16 %v3566, %v3565
      %v3599 = vunpack.c.l.bf16 %v3247
      %v3600 = vunpack.c.h.bf16 %v3247
      %v3601 = vunpack.c.l.bf16 %v3248
      %v3602 = vunpack.c.h.bf16 %v3248
      %v3603 = vunpack.c.l.bf16 %v3249
      %v3604 = vunpack.c.h.bf16 %v3249
      %v3605 = vunpack.c.l.bf16 %v3250
      %v3606 = vunpack.c.h.bf16 %v3250
      %v3607 = vunpack.c.l.bf16 %v3251
      %v3608 = vunpack.c.h.bf16 %v3251
      %v3609 = vunpack.c.l.bf16 %v3252
      %v3610 = vunpack.c.h.bf16 %v3252
      %v3611 = vunpack.c.l.bf16 %v3253
      %v3612 = vunpack.c.h.bf16 %v3253
      %v3613 = vunpack.c.l.bf16 %v3254
      %v3614 = vunpack.c.h.bf16 %v3254
      %v3615 = vunpack.c.l.bf16 %v3255
      %v3616 = vunpack.c.h.bf16 %v3255
      %v3617 = vunpack.c.l.bf16 %v3256
      %v3618 = vunpack.c.h.bf16 %v3256
      %v3619 = vunpack.c.l.bf16 %v3257
      %v3620 = vunpack.c.h.bf16 %v3257
      %v3621 = vunpack.c.l.bf16 %v3258
      %v3622 = vunpack.c.h.bf16 %v3258
      %v3623 = vunpack.c.l.bf16 %v3259
      %v3624 = vunpack.c.h.bf16 %v3259
      %v3625 = vunpack.c.l.bf16 %v3260
      %v3626 = vunpack.c.h.bf16 %v3260
      %v3627 = vunpack.c.l.bf16 %v3261
      %v3628 = vunpack.c.h.bf16 %v3261
      %v3629 = vunpack.c.l.bf16 %v3262
      %v3630 = vunpack.c.h.bf16 %v3262
      %v3631 = vunpack.c.l.bf16 %v3263
      %v3632 = vunpack.c.h.bf16 %v3263
      %v3633 = vunpack.c.l.bf16 %v3264
      %v3634 = vunpack.c.h.bf16 %v3264
      %v3635 = vunpack.c.l.bf16 %v3265
      %v3636 = vunpack.c.h.bf16 %v3265
      %v3637 = vunpack.c.l.bf16 %v3266
      %v3638 = vunpack.c.h.bf16 %v3266
      %v3639 = vunpack.c.l.bf16 %v3267
      %v3640 = vunpack.c.h.bf16 %v3267
      %v3641 = vunpack.c.l.bf16 %v3268
      %v3642 = vunpack.c.h.bf16 %v3268
      %v3643 = vunpack.c.l.bf16 %v3269
      %v3644 = vunpack.c.h.bf16 %v3269
      %v3645 = vunpack.c.l.bf16 %v3270
      %v3646 = vunpack.c.h.bf16 %v3270
      %v3647 = vunpack.c.l.bf16 %v3271
      %v3648 = vunpack.c.h.bf16 %v3271
      %v3649 = vunpack.c.l.bf16 %v3272
      %v3650 = vunpack.c.h.bf16 %v3272
      %v3651 = vunpack.c.l.bf16 %v3273
      %v3652 = vunpack.c.h.bf16 %v3273
      %v3653 = vunpack.c.l.bf16 %v3274
      %v3654 = vunpack.c.h.bf16 %v3274
      %v3655 = vunpack.c.l.bf16 %v3275
      %v3656 = vunpack.c.h.bf16 %v3275
      %v3657 = vunpack.c.l.bf16 %v3276
      %v3658 = vunpack.c.h.bf16 %v3276
      %v3659 = vunpack.c.l.bf16 %v3277
      %v3660 = vunpack.c.h.bf16 %v3277
      %v3661 = vunpack.c.l.bf16 %v3278
      %v3662 = vunpack.c.h.bf16 %v3278
      %v3663 = vunpack.c.l.bf16 %v3567
      %v3664 = vunpack.c.h.bf16 %v3567
      %v3665 = vunpack.c.l.bf16 %v3568
      %v3666 = vunpack.c.h.bf16 %v3568
      %v3667 = vunpack.c.l.bf16 %v3569
      %v3668 = vunpack.c.h.bf16 %v3569
      %v3669 = vunpack.c.l.bf16 %v3570
      %v3670 = vunpack.c.h.bf16 %v3570
      %v3671 = vunpack.c.l.bf16 %v3571
      %v3672 = vunpack.c.h.bf16 %v3571
      %v3673 = vunpack.c.l.bf16 %v3572
      %v3674 = vunpack.c.h.bf16 %v3572
      %v3675 = vunpack.c.l.bf16 %v3573
      %v3676 = vunpack.c.h.bf16 %v3573
      %v3677 = vunpack.c.l.bf16 %v3574
      %v3678 = vunpack.c.h.bf16 %v3574
      %v3679 = vunpack.c.l.bf16 %v3575
      %v3680 = vunpack.c.h.bf16 %v3575
      %v3681 = vunpack.c.l.bf16 %v3576
      %v3682 = vunpack.c.h.bf16 %v3576
      %v3683 = vunpack.c.l.bf16 %v3577
      %v3684 = vunpack.c.h.bf16 %v3577
      %v3685 = vunpack.c.l.bf16 %v3578
      %v3686 = vunpack.c.h.bf16 %v3578
      %v3687 = vunpack.c.l.bf16 %v3579
      %v3688 = vunpack.c.h.bf16 %v3579
      %v3689 = vunpack.c.l.bf16 %v3580
      %v3690 = vunpack.c.h.bf16 %v3580
      %v3691 = vunpack.c.l.bf16 %v3581
      %v3692 = vunpack.c.h.bf16 %v3581
      %v3693 = vunpack.c.l.bf16 %v3582
      %v3694 = vunpack.c.h.bf16 %v3582
      %v3695 = vunpack.c.l.bf16 %v3583
      %v3696 = vunpack.c.h.bf16 %v3583
      %v3697 = vunpack.c.l.bf16 %v3584
      %v3698 = vunpack.c.h.bf16 %v3584
      %v3699 = vunpack.c.l.bf16 %v3585
      %v3700 = vunpack.c.h.bf16 %v3585
      %v3701 = vunpack.c.l.bf16 %v3586
      %v3702 = vunpack.c.h.bf16 %v3586
      %v3703 = vunpack.c.l.bf16 %v3587
      %v3704 = vunpack.c.h.bf16 %v3587
      %v3705 = vunpack.c.l.bf16 %v3588
      %v3706 = vunpack.c.h.bf16 %v3588
      %v3707 = vunpack.c.l.bf16 %v3589
      %v3708 = vunpack.c.h.bf16 %v3589
      %v3709 = vunpack.c.l.bf16 %v3590
      %v3710 = vunpack.c.h.bf16 %v3590
      %v3711 = vunpack.c.l.bf16 %v3591
      %v3712 = vunpack.c.h.bf16 %v3591
      %v3713 = vunpack.c.l.bf16 %v3592
      %v3714 = vunpack.c.h.bf16 %v3592
      %v3715 = vunpack.c.l.bf16 %v3593
      %v3716 = vunpack.c.h.bf16 %v3593
      %v3717 = vunpack.c.l.bf16 %v3594
      %v3718 = vunpack.c.h.bf16 %v3594
      %v3719 = vunpack.c.l.bf16 %v3595
      %v3720 = vunpack.c.h.bf16 %v3595
      %v3721 = vunpack.c.l.bf16 %v3596
      %v3722 = vunpack.c.h.bf16 %v3596
      %v3723 = vunpack.c.l.bf16 %v3597
      %v3724 = vunpack.c.h.bf16 %v3597
      %v3725 = vunpack.c.l.bf16 %v3598
      %v3726 = vunpack.c.h.bf16 %v3598
      %v3727 = vadd.f32 %v3599, %v3663
      %v3728 = vadd.f32 %v3600, %v3664
      %v3729 = vadd.f32 %v3601, %v3665
      %v3730 = vadd.f32 %v3602, %v3666
      %v3731 = vadd.f32 %v3603, %v3667
      %v3732 = vadd.f32 %v3604, %v3668
      %v3733 = vadd.f32 %v3605, %v3669
      %v3734 = vadd.f32 %v3606, %v3670
      %v3735 = vadd.f32 %v3607, %v3671
      %v3736 = vadd.f32 %v3608, %v3672
      %v3737 = vadd.f32 %v3609, %v3673
      %v3738 = vadd.f32 %v3610, %v3674
      %v3739 = vadd.f32 %v3611, %v3675
      %v3740 = vadd.f32 %v3612, %v3676
      %v3741 = vadd.f32 %v3613, %v3677
      %v3742 = vadd.f32 %v3614, %v3678
      %v3743 = vadd.f32 %v3615, %v3679
      %v3744 = vadd.f32 %v3616, %v3680
      %v3745 = vadd.f32 %v3617, %v3681
      %v3746 = vadd.f32 %v3618, %v3682
      %v3747 = vadd.f32 %v3619, %v3683
      %v3748 = vadd.f32 %v3620, %v3684
      %v3749 = vadd.f32 %v3621, %v3685
      %v3750 = vadd.f32 %v3622, %v3686
      %v3751 = vadd.f32 %v3623, %v3687
      %v3752 = vadd.f32 %v3624, %v3688
      %v3753 = vadd.f32 %v3625, %v3689
      %v3754 = vadd.f32 %v3626, %v3690
      %v3755 = vadd.f32 %v3627, %v3691
      %v3756 = vadd.f32 %v3628, %v3692
      %v3757 = vadd.f32 %v3629, %v3693
      %v3758 = vadd.f32 %v3630, %v3694
      %v3759 = vadd.f32 %v3631, %v3695
      %v3760 = vadd.f32 %v3632, %v3696
      %v3761 = vadd.f32 %v3633, %v3697
      %v3762 = vadd.f32 %v3634, %v3698
      %v3763 = vadd.f32 %v3635, %v3699
      %v3764 = vadd.f32 %v3636, %v3700
      %v3765 = vadd.f32 %v3637, %v3701
      %v3766 = vadd.f32 %v3638, %v3702
      %v3767 = vadd.f32 %v3639, %v3703
      %v3768 = vadd.f32 %v3640, %v3704
      %v3769 = vadd.f32 %v3641, %v3705
      %v3770 = vadd.f32 %v3642, %v3706
      %v3771 = vadd.f32 %v3643, %v3707
      %v3772 = vadd.f32 %v3644, %v3708
      %v3773 = vadd.f32 %v3645, %v3709
      %v3774 = vadd.f32 %v3646, %v3710
      %v3775 = vadd.f32 %v3647, %v3711
      %v3776 = vadd.f32 %v3648, %v3712
      %v3777 = vadd.f32 %v3649, %v3713
      %v3778 = vadd.f32 %v3650, %v3714
      %v3779 = vadd.f32 %v3651, %v3715
      %v3780 = vadd.f32 %v3652, %v3716
      %v3781 = vadd.f32 %v3653, %v3717
      %v3782 = vadd.f32 %v3654, %v3718
      %v3783 = vadd.f32 %v3655, %v3719
      %v3784 = vadd.f32 %v3656, %v3720
      %v3785 = vadd.f32 %v3657, %v3721
      %v3786 = vadd.f32 %v3658, %v3722
      %v3787 = vadd.f32 %v3659, %v3723
      %v3788 = vadd.f32 %v3660, %v3724
      %v3789 = vadd.f32 %v3661, %v3725
      %v3790 = vadd.f32 %v3662, %v3726
      %v3791 = vpack.c.bf16 %v3728, %v3727
      %v3792 = vpack.c.bf16 %v3730, %v3729
      %v3793 = vpack.c.bf16 %v3732, %v3731
      %v3794 = vpack.c.bf16 %v3734, %v3733
      %v3795 = vpack.c.bf16 %v3736, %v3735
      %v3796 = vpack.c.bf16 %v3738, %v3737
      %v3797 = vpack.c.bf16 %v3740, %v3739
      %v3798 = vpack.c.bf16 %v3742, %v3741
      %v3799 = vpack.c.bf16 %v3744, %v3743
      %v3800 = vpack.c.bf16 %v3746, %v3745
      %v3801 = vpack.c.bf16 %v3748, %v3747
      %v3802 = vpack.c.bf16 %v3750, %v3749
      %v3803 = vpack.c.bf16 %v3752, %v3751
      %v3804 = vpack.c.bf16 %v3754, %v3753
      %v3805 = vpack.c.bf16 %v3756, %v3755
      %v3806 = vpack.c.bf16 %v3758, %v3757
      %v3807 = vpack.c.bf16 %v3760, %v3759
      %v3808 = vpack.c.bf16 %v3762, %v3761
      %v3809 = vpack.c.bf16 %v3764, %v3763
      %v3810 = vpack.c.bf16 %v3766, %v3765
      %v3811 = vpack.c.bf16 %v3768, %v3767
      %v3812 = vpack.c.bf16 %v3770, %v3769
      %v3813 = vpack.c.bf16 %v3772, %v3771
      %v3814 = vpack.c.bf16 %v3774, %v3773
      %v3815 = vpack.c.bf16 %v3776, %v3775
      %v3816 = vpack.c.bf16 %v3778, %v3777
      %v3817 = vpack.c.bf16 %v3780, %v3779
      %v3818 = vpack.c.bf16 %v3782, %v3781
      %v3819 = vpack.c.bf16 %v3784, %v3783
      %v3820 = vpack.c.bf16 %v3786, %v3785
      %v3821 = vpack.c.bf16 %v3788, %v3787
      %v3822 = vpack.c.bf16 %v3790, %v3789
      %3823 = vset.pattern.permute.xlu0 7
      %3824 = vperm.xlu0 %3823, %v44
      %v3825 = vpop.permute.xlu0 %3824
      %3826 = vset.pattern.permute.xlu0 7
      %3827 = vperm.xlu0 %3826, %v45
      %v3828 = vpop.permute.xlu0 %3827
      %3829 = vset.pattern.permute.xlu0 7
      %3830 = vperm.xlu0 %3829, %v46
      %v3831 = vpop.permute.xlu0 %3830
      %3832 = vset.pattern.permute.xlu0 7
      %3833 = vperm.xlu0 %3832, %v47
      %v3834 = vpop.permute.xlu0 %3833
      %3835 = vset.pattern.permute.xlu0 7
      %3836 = vperm.xlu0 %3835, %v48
      %v3837 = vpop.permute.xlu0 %3836
      %3838 = vset.pattern.permute.xlu0 7
      %3839 = vperm.xlu0 %3838, %v49
      %v3840 = vpop.permute.xlu0 %3839
      %3841 = vset.pattern.permute.xlu0 7
      %3842 = vperm.xlu0 %3841, %v50
      %v3843 = vpop.permute.xlu0 %3842
      %3844 = vset.pattern.permute.xlu0 7
      %3845 = vperm.xlu0 %3844, %v51
      %v3846 = vpop.permute.xlu0 %3845
      %3847 = vset.pattern.permute.xlu0 7
      %3848 = vperm.xlu0 %3847, %v52
      %v3849 = vpop.permute.xlu0 %3848
      %3850 = vset.pattern.permute.xlu0 7
      %3851 = vperm.xlu0 %3850, %v53
      %v3852 = vpop.permute.xlu0 %3851
      %3853 = vset.pattern.permute.xlu0 7
      %3854 = vperm.xlu0 %3853, %v54
      %v3855 = vpop.permute.xlu0 %3854
      %3856 = vset.pattern.permute.xlu0 7
      %3857 = vperm.xlu0 %3856, %v55
      %v3858 = vpop.permute.xlu0 %3857
      %3859 = vset.pattern.permute.xlu0 7
      %3860 = vperm.xlu0 %3859, %v56
      %v3861 = vpop.permute.xlu0 %3860
      %3862 = vset.pattern.permute.xlu0 7
      %3863 = vperm.xlu0 %3862, %v57
      %v3864 = vpop.permute.xlu0 %3863
      %3865 = vset.pattern.permute.xlu0 7
      %3866 = vperm.xlu0 %3865, %v58
      %v3867 = vpop.permute.xlu0 %3866
      %3868 = vset.pattern.permute.xlu0 7
      %3869 = vperm.xlu0 %3868, %v59
      %v3870 = vpop.permute.xlu0 %3869
      %3871 = vset.pattern.permute.xlu0 7
      %3872 = vperm.xlu0 %3871, %v60
      %v3873 = vpop.permute.xlu0 %3872
      %3874 = vset.pattern.permute.xlu0 7
      %3875 = vperm.xlu0 %3874, %v61
      %v3876 = vpop.permute.xlu0 %3875
      %3877 = vset.pattern.permute.xlu0 7
      %3878 = vperm.xlu0 %3877, %v62
      %v3879 = vpop.permute.xlu0 %3878
      %3880 = vset.pattern.permute.xlu0 7
      %3881 = vperm.xlu0 %3880, %v63
      %v3882 = vpop.permute.xlu0 %3881
      %3883 = vset.pattern.permute.xlu0 7
      %3884 = vperm.xlu0 %3883, %v64
      %v3885 = vpop.permute.xlu0 %3884
      %3886 = vset.pattern.permute.xlu0 7
      %3887 = vperm.xlu0 %3886, %v65
      %v3888 = vpop.permute.xlu0 %3887
      %3889 = vset.pattern.permute.xlu0 7
      %3890 = vperm.xlu0 %3889, %v66
      %v3891 = vpop.permute.xlu0 %3890
      %3892 = vset.pattern.permute.xlu0 7
      %3893 = vperm.xlu0 %3892, %v67
      %v3894 = vpop.permute.xlu0 %3893
      %3895 = vset.pattern.permute.xlu0 7
      %3896 = vperm.xlu0 %3895, %v68
      %v3897 = vpop.permute.xlu0 %3896
      %3898 = vset.pattern.permute.xlu0 7
      %3899 = vperm.xlu0 %3898, %v69
      %v3900 = vpop.permute.xlu0 %3899
      %3901 = vset.pattern.permute.xlu0 7
      %3902 = vperm.xlu0 %3901, %v70
      %v3903 = vpop.permute.xlu0 %3902
      %3904 = vset.pattern.permute.xlu0 7
      %3905 = vperm.xlu0 %3904, %v71
      %v3906 = vpop.permute.xlu0 %3905
      %3907 = vset.pattern.permute.xlu0 7
      %3908 = vperm.xlu0 %3907, %v72
      %v3909 = vpop.permute.xlu0 %3908
      %3910 = vset.pattern.permute.xlu0 7
      %3911 = vperm.xlu0 %3910, %v73
      %v3912 = vpop.permute.xlu0 %3911
      %3913 = vset.pattern.permute.xlu0 7
      %3914 = vperm.xlu0 %3913, %v74
      %v3915 = vpop.permute.xlu0 %3914
      %3916 = vset.pattern.permute.xlu0 7
      %3917 = vperm.xlu0 %3916, %v75
      %v3918 = vpop.permute.xlu0 %3917
      %vm3919 = vcmp.eq.s32.totalorder %v3825, %v77
      %vm3920 = vcmp.eq.s32.totalorder %v3825, %v78
      %vm3921 = vcmp.eq.s32.totalorder %v3828, %v77
      %vm3922 = vcmp.eq.s32.totalorder %v3828, %v78
      %vm3923 = vcmp.eq.s32.totalorder %v3831, %v77
      %vm3924 = vcmp.eq.s32.totalorder %v3831, %v78
      %vm3925 = vcmp.eq.s32.totalorder %v3834, %v77
      %vm3926 = vcmp.eq.s32.totalorder %v3834, %v78
      %vm3927 = vcmp.eq.s32.totalorder %v3837, %v77
      %vm3928 = vcmp.eq.s32.totalorder %v3837, %v78
      %vm3929 = vcmp.eq.s32.totalorder %v3840, %v77
      %vm3930 = vcmp.eq.s32.totalorder %v3840, %v78
      %vm3931 = vcmp.eq.s32.totalorder %v3843, %v77
      %vm3932 = vcmp.eq.s32.totalorder %v3843, %v78
      %vm3933 = vcmp.eq.s32.totalorder %v3846, %v77
      %vm3934 = vcmp.eq.s32.totalorder %v3846, %v78
      %vm3935 = vcmp.eq.s32.totalorder %v3849, %v77
      %vm3936 = vcmp.eq.s32.totalorder %v3849, %v78
      %vm3937 = vcmp.eq.s32.totalorder %v3852, %v77
      %vm3938 = vcmp.eq.s32.totalorder %v3852, %v78
      %vm3939 = vcmp.eq.s32.totalorder %v3855, %v77
      %vm3940 = vcmp.eq.s32.totalorder %v3855, %v78
      %vm3941 = vcmp.eq.s32.totalorder %v3858, %v77
      %vm3942 = vcmp.eq.s32.totalorder %v3858, %v78
      %vm3943 = vcmp.eq.s32.totalorder %v3861, %v77
      %vm3944 = vcmp.eq.s32.totalorder %v3861, %v78
      %vm3945 = vcmp.eq.s32.totalorder %v3864, %v77
      %vm3946 = vcmp.eq.s32.totalorder %v3864, %v78
      %vm3947 = vcmp.eq.s32.totalorder %v3867, %v77
      %vm3948 = vcmp.eq.s32.totalorder %v3867, %v78
      %vm3949 = vcmp.eq.s32.totalorder %v3870, %v77
      %vm3950 = vcmp.eq.s32.totalorder %v3870, %v78
      %vm3951 = vcmp.eq.s32.totalorder %v3873, %v77
      %vm3952 = vcmp.eq.s32.totalorder %v3873, %v78
      %vm3953 = vcmp.eq.s32.totalorder %v3876, %v77
      %vm3954 = vcmp.eq.s32.totalorder %v3876, %v78
      %vm3955 = vcmp.eq.s32.totalorder %v3879, %v77
      %vm3956 = vcmp.eq.s32.totalorder %v3879, %v78
      %vm3957 = vcmp.eq.s32.totalorder %v3882, %v77
      %vm3958 = vcmp.eq.s32.totalorder %v3882, %v78
      %vm3959 = vcmp.eq.s32.totalorder %v3885, %v77
      %vm3960 = vcmp.eq.s32.totalorder %v3885, %v78
      %vm3961 = vcmp.eq.s32.totalorder %v3888, %v77
      %vm3962 = vcmp.eq.s32.totalorder %v3888, %v78
      %vm3963 = vcmp.eq.s32.totalorder %v3891, %v77
      %vm3964 = vcmp.eq.s32.totalorder %v3891, %v78
      %vm3965 = vcmp.eq.s32.totalorder %v3894, %v77
      %vm3966 = vcmp.eq.s32.totalorder %v3894, %v78
      %vm3967 = vcmp.eq.s32.totalorder %v3897, %v77
      %vm3968 = vcmp.eq.s32.totalorder %v3897, %v78
      %vm3969 = vcmp.eq.s32.totalorder %v3900, %v77
      %vm3970 = vcmp.eq.s32.totalorder %v3900, %v78
      %vm3971 = vcmp.eq.s32.totalorder %v3903, %v77
      %vm3972 = vcmp.eq.s32.totalorder %v3903, %v78
      %vm3973 = vcmp.eq.s32.totalorder %v3906, %v77
      %vm3974 = vcmp.eq.s32.totalorder %v3906, %v78
      %vm3975 = vcmp.eq.s32.totalorder %v3909, %v77
      %vm3976 = vcmp.eq.s32.totalorder %v3909, %v78
      %vm3977 = vcmp.eq.s32.totalorder %v3912, %v77
      %vm3978 = vcmp.eq.s32.totalorder %v3912, %v78
      %vm3979 = vcmp.eq.s32.totalorder %v3915, %v77
      %vm3980 = vcmp.eq.s32.totalorder %v3915, %v78
      %vm3981 = vcmp.eq.s32.totalorder %v3918, %v77
      %vm3982 = vcmp.eq.s32.totalorder %v3918, %v78
      %v3983 = vsel %vm3919, 1, 0
      %v3984 = vsel %vm3920, 1, 0
      %v3985 = vsel %vm3921, 1, 0
      %v3986 = vsel %vm3922, 1, 0
      %v3987 = vsel %vm3923, 1, 0
      %v3988 = vsel %vm3924, 1, 0
      %v3989 = vsel %vm3925, 1, 0
      %v3990 = vsel %vm3926, 1, 0
      %v3991 = vsel %vm3927, 1, 0
      %v3992 = vsel %vm3928, 1, 0
      %v3993 = vsel %vm3929, 1, 0
      %v3994 = vsel %vm3930, 1, 0
      %v3995 = vsel %vm3931, 1, 0
      %v3996 = vsel %vm3932, 1, 0
      %v3997 = vsel %vm3933, 1, 0
      %v3998 = vsel %vm3934, 1, 0
      %v3999 = vsel %vm3935, 1, 0
      %v4000 = vsel %vm3936, 1, 0
      %v4001 = vsel %vm3937, 1, 0
      %v4002 = vsel %vm3938, 1, 0
      %v4003 = vsel %vm3939, 1, 0
      %v4004 = vsel %vm3940, 1, 0
      %v4005 = vsel %vm3941, 1, 0
      %v4006 = vsel %vm3942, 1, 0
      %v4007 = vsel %vm3943, 1, 0
      %v4008 = vsel %vm3944, 1, 0
      %v4009 = vsel %vm3945, 1, 0
      %v4010 = vsel %vm3946, 1, 0
      %v4011 = vsel %vm3947, 1, 0
      %v4012 = vsel %vm3948, 1, 0
      %v4013 = vsel %vm3949, 1, 0
      %v4014 = vsel %vm3950, 1, 0
      %v4015 = vsel %vm3951, 1, 0
      %v4016 = vsel %vm3952, 1, 0
      %v4017 = vsel %vm3953, 1, 0
      %v4018 = vsel %vm3954, 1, 0
      %v4019 = vsel %vm3955, 1, 0
      %v4020 = vsel %vm3956, 1, 0
      %v4021 = vsel %vm3957, 1, 0
      %v4022 = vsel %vm3958, 1, 0
      %v4023 = vsel %vm3959, 1, 0
      %v4024 = vsel %vm3960, 1, 0
      %v4025 = vsel %vm3961, 1, 0
      %v4026 = vsel %vm3962, 1, 0
      %v4027 = vsel %vm3963, 1, 0
      %v4028 = vsel %vm3964, 1, 0
      %v4029 = vsel %vm3965, 1, 0
      %v4030 = vsel %vm3966, 1, 0
      %v4031 = vsel %vm3967, 1, 0
      %v4032 = vsel %vm3968, 1, 0
      %v4033 = vsel %vm3969, 1, 0
      %v4034 = vsel %vm3970, 1, 0
      %v4035 = vsel %vm3971, 1, 0
      %v4036 = vsel %vm3972, 1, 0
      %v4037 = vsel %vm3973, 1, 0
      %v4038 = vsel %vm3974, 1, 0
      %v4039 = vsel %vm3975, 1, 0
      %v4040 = vsel %vm3976, 1, 0
      %v4041 = vsel %vm3977, 1, 0
      %v4042 = vsel %vm3978, 1, 0
      %v4043 = vsel %vm3979, 1, 0
      %v4044 = vsel %vm3980, 1, 0
      %v4045 = vsel %vm3981, 1, 0
      %v4046 = vsel %vm3982, 1, 0
      %v4047 = vcvt.s32.f32 %v3983
      %v4048 = vcvt.s32.f32 %v3984
      %v4049 = vcvt.s32.f32 %v3985
      %v4050 = vcvt.s32.f32 %v3986
      %v4051 = vcvt.s32.f32 %v3987
      %v4052 = vcvt.s32.f32 %v3988
      %v4053 = vcvt.s32.f32 %v3989
      %v4054 = vcvt.s32.f32 %v3990
      %v4055 = vcvt.s32.f32 %v3991
      %v4056 = vcvt.s32.f32 %v3992
      %v4057 = vcvt.s32.f32 %v3993
      %v4058 = vcvt.s32.f32 %v3994
      %v4059 = vcvt.s32.f32 %v3995
      %v4060 = vcvt.s32.f32 %v3996
      %v4061 = vcvt.s32.f32 %v3997
      %v4062 = vcvt.s32.f32 %v3998
      %v4063 = vcvt.s32.f32 %v3999
      %v4064 = vcvt.s32.f32 %v4000
      %v4065 = vcvt.s32.f32 %v4001
      %v4066 = vcvt.s32.f32 %v4002
      %v4067 = vcvt.s32.f32 %v4003
      %v4068 = vcvt.s32.f32 %v4004
      %v4069 = vcvt.s32.f32 %v4005
      %v4070 = vcvt.s32.f32 %v4006
      %v4071 = vcvt.s32.f32 %v4007
      %v4072 = vcvt.s32.f32 %v4008
      %v4073 = vcvt.s32.f32 %v4009
      %v4074 = vcvt.s32.f32 %v4010
      %v4075 = vcvt.s32.f32 %v4011
      %v4076 = vcvt.s32.f32 %v4012
      %v4077 = vcvt.s32.f32 %v4013
      %v4078 = vcvt.s32.f32 %v4014
      %v4079 = vcvt.s32.f32 %v4015
      %v4080 = vcvt.s32.f32 %v4016
      %v4081 = vcvt.s32.f32 %v4017
      %v4082 = vcvt.s32.f32 %v4018
      %v4083 = vcvt.s32.f32 %v4019
      %v4084 = vcvt.s32.f32 %v4020
      %v4085 = vcvt.s32.f32 %v4021
      %v4086 = vcvt.s32.f32 %v4022
      %v4087 = vcvt.s32.f32 %v4023
      %v4088 = vcvt.s32.f32 %v4024
      %v4089 = vcvt.s32.f32 %v4025
      %v4090 = vcvt.s32.f32 %v4026
      %v4091 = vcvt.s32.f32 %v4027
      %v4092 = vcvt.s32.f32 %v4028
      %v4093 = vcvt.s32.f32 %v4029
      %v4094 = vcvt.s32.f32 %v4030
      %v4095 = vcvt.s32.f32 %v4031
      %v4096 = vcvt.s32.f32 %v4032
      %v4097 = vcvt.s32.f32 %v4033
      %v4098 = vcvt.s32.f32 %v4034
      %v4099 = vcvt.s32.f32 %v4035
      %v4100 = vcvt.s32.f32 %v4036
      %v4101 = vcvt.s32.f32 %v4037
      %v4102 = vcvt.s32.f32 %v4038
      %v4103 = vcvt.s32.f32 %v4039
      %v4104 = vcvt.s32.f32 %v4040
      %v4105 = vcvt.s32.f32 %v4041
      %v4106 = vcvt.s32.f32 %v4042
      %v4107 = vcvt.s32.f32 %v4043
      %v4108 = vcvt.s32.f32 %v4044
      %v4109 = vcvt.s32.f32 %v4045
      %v4110 = vcvt.s32.f32 %v4046
      %v4111 = vpack.c.bf16 %v4048, %v4047
      %v4112 = vpack.c.bf16 %v4050, %v4049
      %v4113 = vpack.c.bf16 %v4052, %v4051
      %v4114 = vpack.c.bf16 %v4054, %v4053
      %v4115 = vpack.c.bf16 %v4056, %v4055
      %v4116 = vpack.c.bf16 %v4058, %v4057
      %v4117 = vpack.c.bf16 %v4060, %v4059
      %v4118 = vpack.c.bf16 %v4062, %v4061
      %v4119 = vpack.c.bf16 %v4064, %v4063
      %v4120 = vpack.c.bf16 %v4066, %v4065
      %v4121 = vpack.c.bf16 %v4068, %v4067
      %v4122 = vpack.c.bf16 %v4070, %v4069
      %v4123 = vpack.c.bf16 %v4072, %v4071
      %v4124 = vpack.c.bf16 %v4074, %v4073
      %v4125 = vpack.c.bf16 %v4076, %v4075
      %v4126 = vpack.c.bf16 %v4078, %v4077
      %v4127 = vpack.c.bf16 %v4080, %v4079
      %v4128 = vpack.c.bf16 %v4082, %v4081
      %v4129 = vpack.c.bf16 %v4084, %v4083
      %v4130 = vpack.c.bf16 %v4086, %v4085
      %v4131 = vpack.c.bf16 %v4088, %v4087
      %v4132 = vpack.c.bf16 %v4090, %v4089
      %v4133 = vpack.c.bf16 %v4092, %v4091
      %v4134 = vpack.c.bf16 %v4094, %v4093
      %v4135 = vpack.c.bf16 %v4096, %v4095
      %v4136 = vpack.c.bf16 %v4098, %v4097
      %v4137 = vpack.c.bf16 %v4100, %v4099
      %v4138 = vpack.c.bf16 %v4102, %v4101
      %v4139 = vpack.c.bf16 %v4104, %v4103
      %v4140 = vpack.c.bf16 %v4106, %v4105
      %v4141 = vpack.c.bf16 %v4108, %v4107
      %v4142 = vpack.c.bf16 %v4110, %v4109
      %v4143 = vunpack.c.l.bf16 %v3791
      %v4144 = vunpack.c.h.bf16 %v3791
      %v4145 = vunpack.c.l.bf16 %v3792
      %v4146 = vunpack.c.h.bf16 %v3792
      %v4147 = vunpack.c.l.bf16 %v3793
      %v4148 = vunpack.c.h.bf16 %v3793
      %v4149 = vunpack.c.l.bf16 %v3794
      %v4150 = vunpack.c.h.bf16 %v3794
      %v4151 = vunpack.c.l.bf16 %v3795
      %v4152 = vunpack.c.h.bf16 %v3795
      %v4153 = vunpack.c.l.bf16 %v3796
      %v4154 = vunpack.c.h.bf16 %v3796
      %v4155 = vunpack.c.l.bf16 %v3797
      %v4156 = vunpack.c.h.bf16 %v3797
      %v4157 = vunpack.c.l.bf16 %v3798
      %v4158 = vunpack.c.h.bf16 %v3798
      %v4159 = vunpack.c.l.bf16 %v3799
      %v4160 = vunpack.c.h.bf16 %v3799
      %v4161 = vunpack.c.l.bf16 %v3800
      %v4162 = vunpack.c.h.bf16 %v3800
      %v4163 = vunpack.c.l.bf16 %v3801
      %v4164 = vunpack.c.h.bf16 %v3801
      %v4165 = vunpack.c.l.bf16 %v3802
      %v4166 = vunpack.c.h.bf16 %v3802
      %v4167 = vunpack.c.l.bf16 %v3803
      %v4168 = vunpack.c.h.bf16 %v3803
      %v4169 = vunpack.c.l.bf16 %v3804
      %v4170 = vunpack.c.h.bf16 %v3804
      %v4171 = vunpack.c.l.bf16 %v3805
      %v4172 = vunpack.c.h.bf16 %v3805
      %v4173 = vunpack.c.l.bf16 %v3806
      %v4174 = vunpack.c.h.bf16 %v3806
      %v4175 = vunpack.c.l.bf16 %v3807
      %v4176 = vunpack.c.h.bf16 %v3807
      %v4177 = vunpack.c.l.bf16 %v3808
      %v4178 = vunpack.c.h.bf16 %v3808
      %v4179 = vunpack.c.l.bf16 %v3809
      %v4180 = vunpack.c.h.bf16 %v3809
      %v4181 = vunpack.c.l.bf16 %v3810
      %v4182 = vunpack.c.h.bf16 %v3810
      %v4183 = vunpack.c.l.bf16 %v3811
      %v4184 = vunpack.c.h.bf16 %v3811
      %v4185 = vunpack.c.l.bf16 %v3812
      %v4186 = vunpack.c.h.bf16 %v3812
      %v4187 = vunpack.c.l.bf16 %v3813
      %v4188 = vunpack.c.h.bf16 %v3813
      %v4189 = vunpack.c.l.bf16 %v3814
      %v4190 = vunpack.c.h.bf16 %v3814
      %v4191 = vunpack.c.l.bf16 %v3815
      %v4192 = vunpack.c.h.bf16 %v3815
      %v4193 = vunpack.c.l.bf16 %v3816
      %v4194 = vunpack.c.h.bf16 %v3816
      %v4195 = vunpack.c.l.bf16 %v3817
      %v4196 = vunpack.c.h.bf16 %v3817
      %v4197 = vunpack.c.l.bf16 %v3818
      %v4198 = vunpack.c.h.bf16 %v3818
      %v4199 = vunpack.c.l.bf16 %v3819
      %v4200 = vunpack.c.h.bf16 %v3819
      %v4201 = vunpack.c.l.bf16 %v3820
      %v4202 = vunpack.c.h.bf16 %v3820
      %v4203 = vunpack.c.l.bf16 %v3821
      %v4204 = vunpack.c.h.bf16 %v3821
      %v4205 = vunpack.c.l.bf16 %v3822
      %v4206 = vunpack.c.h.bf16 %v3822
      %v4207 = vunpack.c.l.bf16 %v4111
      %v4208 = vunpack.c.h.bf16 %v4111
      %v4209 = vunpack.c.l.bf16 %v4112
      %v4210 = vunpack.c.h.bf16 %v4112
      %v4211 = vunpack.c.l.bf16 %v4113
      %v4212 = vunpack.c.h.bf16 %v4113
      %v4213 = vunpack.c.l.bf16 %v4114
      %v4214 = vunpack.c.h.bf16 %v4114
      %v4215 = vunpack.c.l.bf16 %v4115
      %v4216 = vunpack.c.h.bf16 %v4115
      %v4217 = vunpack.c.l.bf16 %v4116
      %v4218 = vunpack.c.h.bf16 %v4116
      %v4219 = vunpack.c.l.bf16 %v4117
      %v4220 = vunpack.c.h.bf16 %v4117
      %v4221 = vunpack.c.l.bf16 %v4118
      %v4222 = vunpack.c.h.bf16 %v4118
      %v4223 = vunpack.c.l.bf16 %v4119
      %v4224 = vunpack.c.h.bf16 %v4119
      %v4225 = vunpack.c.l.bf16 %v4120
      %v4226 = vunpack.c.h.bf16 %v4120
      %v4227 = vunpack.c.l.bf16 %v4121
      %v4228 = vunpack.c.h.bf16 %v4121
      %v4229 = vunpack.c.l.bf16 %v4122
      %v4230 = vunpack.c.h.bf16 %v4122
      %v4231 = vunpack.c.l.bf16 %v4123
      %v4232 = vunpack.c.h.bf16 %v4123
      %v4233 = vunpack.c.l.bf16 %v4124
      %v4234 = vunpack.c.h.bf16 %v4124
      %v4235 = vunpack.c.l.bf16 %v4125
      %v4236 = vunpack.c.h.bf16 %v4125
      %v4237 = vunpack.c.l.bf16 %v4126
      %v4238 = vunpack.c.h.bf16 %v4126
      %v4239 = vunpack.c.l.bf16 %v4127
      %v4240 = vunpack.c.h.bf16 %v4127
      %v4241 = vunpack.c.l.bf16 %v4128
      %v4242 = vunpack.c.h.bf16 %v4128
      %v4243 = vunpack.c.l.bf16 %v4129
      %v4244 = vunpack.c.h.bf16 %v4129
      %v4245 = vunpack.c.l.bf16 %v4130
      %v4246 = vunpack.c.h.bf16 %v4130
      %v4247 = vunpack.c.l.bf16 %v4131
      %v4248 = vunpack.c.h.bf16 %v4131
      %v4249 = vunpack.c.l.bf16 %v4132
      %v4250 = vunpack.c.h.bf16 %v4132
      %v4251 = vunpack.c.l.bf16 %v4133
      %v4252 = vunpack.c.h.bf16 %v4133
      %v4253 = vunpack.c.l.bf16 %v4134
      %v4254 = vunpack.c.h.bf16 %v4134
      %v4255 = vunpack.c.l.bf16 %v4135
      %v4256 = vunpack.c.h.bf16 %v4135
      %v4257 = vunpack.c.l.bf16 %v4136
      %v4258 = vunpack.c.h.bf16 %v4136
      %v4259 = vunpack.c.l.bf16 %v4137
      %v4260 = vunpack.c.h.bf16 %v4137
      %v4261 = vunpack.c.l.bf16 %v4138
      %v4262 = vunpack.c.h.bf16 %v4138
      %v4263 = vunpack.c.l.bf16 %v4139
      %v4264 = vunpack.c.h.bf16 %v4139
      %v4265 = vunpack.c.l.bf16 %v4140
      %v4266 = vunpack.c.h.bf16 %v4140
      %v4267 = vunpack.c.l.bf16 %v4141
      %v4268 = vunpack.c.h.bf16 %v4141
      %v4269 = vunpack.c.l.bf16 %v4142
      %v4270 = vunpack.c.h.bf16 %v4142
      %v4271 = vadd.f32 %v4143, %v4207
      %v4272 = vadd.f32 %v4144, %v4208
      %v4273 = vadd.f32 %v4145, %v4209
      %v4274 = vadd.f32 %v4146, %v4210
      %v4275 = vadd.f32 %v4147, %v4211
      %v4276 = vadd.f32 %v4148, %v4212
      %v4277 = vadd.f32 %v4149, %v4213
      %v4278 = vadd.f32 %v4150, %v4214
      %v4279 = vadd.f32 %v4151, %v4215
      %v4280 = vadd.f32 %v4152, %v4216
      %v4281 = vadd.f32 %v4153, %v4217
      %v4282 = vadd.f32 %v4154, %v4218
      %v4283 = vadd.f32 %v4155, %v4219
      %v4284 = vadd.f32 %v4156, %v4220
      %v4285 = vadd.f32 %v4157, %v4221
      %v4286 = vadd.f32 %v4158, %v4222
      %v4287 = vadd.f32 %v4159, %v4223
      %v4288 = vadd.f32 %v4160, %v4224
      %v4289 = vadd.f32 %v4161, %v4225
      %v4290 = vadd.f32 %v4162, %v4226
      %v4291 = vadd.f32 %v4163, %v4227
      %v4292 = vadd.f32 %v4164, %v4228
      %v4293 = vadd.f32 %v4165, %v4229
      %v4294 = vadd.f32 %v4166, %v4230
      %v4295 = vadd.f32 %v4167, %v4231
      %v4296 = vadd.f32 %v4168, %v4232
      %v4297 = vadd.f32 %v4169, %v4233
      %v4298 = vadd.f32 %v4170, %v4234
      %v4299 = vadd.f32 %v4171, %v4235
      %v4300 = vadd.f32 %v4172, %v4236
      %v4301 = vadd.f32 %v4173, %v4237
      %v4302 = vadd.f32 %v4174, %v4238
      %v4303 = vadd.f32 %v4175, %v4239
      %v4304 = vadd.f32 %v4176, %v4240
      %v4305 = vadd.f32 %v4177, %v4241
      %v4306 = vadd.f32 %v4178, %v4242
      %v4307 = vadd.f32 %v4179, %v4243
      %v4308 = vadd.f32 %v4180, %v4244
      %v4309 = vadd.f32 %v4181, %v4245
      %v4310 = vadd.f32 %v4182, %v4246
      %v4311 = vadd.f32 %v4183, %v4247
      %v4312 = vadd.f32 %v4184, %v4248
      %v4313 = vadd.f32 %v4185, %v4249
      %v4314 = vadd.f32 %v4186, %v4250
      %v4315 = vadd.f32 %v4187, %v4251
      %v4316 = vadd.f32 %v4188, %v4252
      %v4317 = vadd.f32 %v4189, %v4253
      %v4318 = vadd.f32 %v4190, %v4254
      %v4319 = vadd.f32 %v4191, %v4255
      %v4320 = vadd.f32 %v4192, %v4256
      %v4321 = vadd.f32 %v4193, %v4257
      %v4322 = vadd.f32 %v4194, %v4258
      %v4323 = vadd.f32 %v4195, %v4259
      %v4324 = vadd.f32 %v4196, %v4260
      %v4325 = vadd.f32 %v4197, %v4261
      %v4326 = vadd.f32 %v4198, %v4262
      %v4327 = vadd.f32 %v4199, %v4263
      %v4328 = vadd.f32 %v4200, %v4264
      %v4329 = vadd.f32 %v4201, %v4265
      %v4330 = vadd.f32 %v4202, %v4266
      %v4331 = vadd.f32 %v4203, %v4267
      %v4332 = vadd.f32 %v4204, %v4268
      %v4333 = vadd.f32 %v4205, %v4269
      %v4334 = vadd.f32 %v4206, %v4270
      %v4335 = vpack.c.bf16 %v4273, %v4271
      %v4336 = vpack.c.bf16 %v4274, %v4272
      %v4337 = vpack.c.bf16 %v4277, %v4275
      %v4338 = vpack.c.bf16 %v4278, %v4276
      %v4339 = vpack.c.bf16 %v4281, %v4279
      %v4340 = vpack.c.bf16 %v4282, %v4280
      %v4341 = vpack.c.bf16 %v4285, %v4283
      %v4342 = vpack.c.bf16 %v4286, %v4284
      %v4343 = vpack.c.bf16 %v4289, %v4287
      %v4344 = vpack.c.bf16 %v4290, %v4288
      %v4345 = vpack.c.bf16 %v4293, %v4291
      %v4346 = vpack.c.bf16 %v4294, %v4292
      %v4347 = vpack.c.bf16 %v4297, %v4295
      %v4348 = vpack.c.bf16 %v4298, %v4296
      %v4349 = vpack.c.bf16 %v4301, %v4299
      %v4350 = vpack.c.bf16 %v4302, %v4300
      %v4351 = vpack.c.bf16 %v4305, %v4303
      %v4352 = vpack.c.bf16 %v4306, %v4304
      %v4353 = vpack.c.bf16 %v4309, %v4307
      %v4354 = vpack.c.bf16 %v4310, %v4308
      %v4355 = vpack.c.bf16 %v4313, %v4311
      %v4356 = vpack.c.bf16 %v4314, %v4312
      %v4357 = vpack.c.bf16 %v4317, %v4315
      %v4358 = vpack.c.bf16 %v4318, %v4316
      %v4359 = vpack.c.bf16 %v4321, %v4319
      %v4360 = vpack.c.bf16 %v4322, %v4320
      %v4361 = vpack.c.bf16 %v4325, %v4323
      %v4362 = vpack.c.bf16 %v4326, %v4324
      %v4363 = vpack.c.bf16 %v4329, %v4327
      %v4364 = vpack.c.bf16 %v4330, %v4328
      %v4365 = vpack.c.bf16 %v4333, %v4331
      %v4366 = vpack.c.bf16 %v4334, %v4332
      %v4367 = vld [vmem:[%s1] sm:$0xf]
      %v4368 = vld [vmem:[%s1 + $0x4] sm:$0xf]
      %v4369 = vld [vmem:[%s1 + $0x8] sm:$0xf]
      %v4370 = vld [vmem:[%s1 + $0xc] sm:$0xf]
      %v4371 = vld [vmem:[%s1 + $0x10] sm:$0xf]
      %v4372 = vld [vmem:[%s1 + $0x14] sm:$0xf]
      %v4373 = vld [vmem:[%s1 + $0x18] sm:$0xf]
      %v4374 = vld [vmem:[%s1 + $0x1c] sm:$0xf]
      %v4375 = vld [vmem:[%s1 + $0x20] sm:$0xf]
      %v4376 = vld [vmem:[%s1 + $0x24] sm:$0xf]
      %v4377 = vld [vmem:[%s1 + $0x28] sm:$0xf]
      %v4378 = vld [vmem:[%s1 + $0x2c] sm:$0xf]
      %v4379 = vld [vmem:[%s1 + $0x30] sm:$0xf]
      %v4380 = vld [vmem:[%s1 + $0x34] sm:$0xf]
      %v4381 = vld [vmem:[%s1 + $0x38] sm:$0xf]
      %v4382 = vld [vmem:[%s1 + $0x3c] sm:$0xf]
      %v4383 = vld [vmem:[%s1 + $0x40] sm:$0xf]
      %v4384 = vld [vmem:[%s1 + $0x44] sm:$0xf]
      %v4385 = vld [vmem:[%s1 + $0x48] sm:$0xf]
      %v4386 = vld [vmem:[%s1 + $0x4c] sm:$0xf]
      %v4387 = vld [vmem:[%s1 + $0x50] sm:$0xf]
      %v4388 = vld [vmem:[%s1 + $0x54] sm:$0xf]
      %v4389 = vld [vmem:[%s1 + $0x58] sm:$0xf]
      %v4390 = vld [vmem:[%s1 + $0x5c] sm:$0xf]
      %v4391 = vld [vmem:[%s1 + $0x60] sm:$0xf]
      %v4392 = vld [vmem:[%s1 + $0x64] sm:$0xf]
      %v4393 = vld [vmem:[%s1 + $0x68] sm:$0xf]
      %v4394 = vld [vmem:[%s1 + $0x6c] sm:$0xf]
      %v4395 = vld [vmem:[%s1 + $0x70] sm:$0xf]
      %v4396 = vld [vmem:[%s1 + $0x74] sm:$0xf]
      %v4397 = vld [vmem:[%s1 + $0x78] sm:$0xf]
      %v4398 = vld [vmem:[%s1 + $0x7c] sm:$0xf]
      %v4431 = vunpack.c.l.b16 %v4367
      %v4432 = vunpack.c.l.b16 %v4368
      %v4433 = vunpack.c.l.b16 %v4369
      %v4434 = vunpack.c.l.b16 %v4370
      %v4435 = vunpack.c.l.b16 %v4371
      %v4436 = vunpack.c.l.b16 %v4372
      %v4437 = vunpack.c.l.b16 %v4373
      %v4438 = vunpack.c.l.b16 %v4374
      %v4439 = vunpack.c.l.b16 %v4375
      %v4440 = vunpack.c.l.b16 %v4376
      %v4441 = vunpack.c.l.b16 %v4377
      %v4442 = vunpack.c.l.b16 %v4378
      %v4443 = vunpack.c.l.b16 %v4379
      %v4444 = vunpack.c.l.b16 %v4380
      %v4445 = vunpack.c.l.b16 %v4381
      %v4446 = vunpack.c.l.b16 %v4382
      %v4447 = vunpack.c.l.b16 %v4383
      %v4448 = vunpack.c.l.b16 %v4384
      %v4449 = vunpack.c.l.b16 %v4385
      %v4450 = vunpack.c.l.b16 %v4386
      %v4451 = vunpack.c.l.b16 %v4387
      %v4452 = vunpack.c.l.b16 %v4388
      %v4453 = vunpack.c.l.b16 %v4389
      %v4454 = vunpack.c.l.b16 %v4390
      %v4455 = vunpack.c.l.b16 %v4391
      %v4456 = vunpack.c.l.b16 %v4392
      %v4457 = vunpack.c.l.b16 %v4393
      %v4458 = vunpack.c.l.b16 %v4394
      %v4459 = vunpack.c.l.b16 %v4395
      %v4460 = vunpack.c.l.b16 %v4396
      %v4461 = vunpack.c.l.b16 %v4397
      %v4462 = vunpack.c.l.b16 %v4398
      %v4463 = vpack.c.b16 %v4432, %v4431
      %v4464 = vpack.c.b16 %v4434, %v4433
      %v4465 = vpack.c.b16 %v4436, %v4435
      %v4466 = vpack.c.b16 %v4438, %v4437
      %v4467 = vpack.c.b16 %v4440, %v4439
      %v4468 = vpack.c.b16 %v4442, %v4441
      %v4469 = vpack.c.b16 %v4444, %v4443
      %v4470 = vpack.c.b16 %v4446, %v4445
      %v4471 = vpack.c.b16 %v4448, %v4447
      %v4472 = vpack.c.b16 %v4450, %v4449
      %v4473 = vpack.c.b16 %v4452, %v4451
      %v4474 = vpack.c.b16 %v4454, %v4453
      %v4475 = vpack.c.b16 %v4456, %v4455
      %v4476 = vpack.c.b16 %v4458, %v4457
      %v4477 = vpack.c.b16 %v4460, %v4459
      %v4478 = vpack.c.b16 %v4462, %v4461
      %4495 = vmatpush.bf16.msra.mxu0 %v4470
      %4496 = vmatpush.bf16.msra.mxu0 %v4469
      %4497 = vmatpush.bf16.msra.mxu0 %v4468
      %4498 = vmatpush.bf16.msra.mxu0 %v4467
      %4499 = vmatpush.bf16.msra.mxu0 %v4466
      %4500 = vmatpush.bf16.msra.mxu0 %v4465
      %4501 = vmatpush.bf16.msra.mxu0 %v4464
      %4502 = vmatpush.bf16.msra.mxu0 %v4463
      %4503 = vmatmul.bf16.gmra.mxu0 %v4335
      %v4504 = vpop.f32.mrf.mxu0
      %v4505 = vadd.f32 0.0, %v4504
      %v4506 = vpop.f32.mrf.mxu0
      %v4507 = vadd.f32 0.0, %v4506
      %4508 = vmatmul.bf16.gmra.mxu0 %v4337
      %v4509 = vpop.f32.mrf.mxu0
      %v4510 = vadd.f32 0.0, %v4509
      %v4511 = vpop.f32.mrf.mxu0
      %v4512 = vadd.f32 0.0, %v4511
      %4513 = vmatmul.bf16.gmra.mxu0 %v4339
      %v4514 = vpop.f32.mrf.mxu0
      %v4515 = vadd.f32 0.0, %v4514
      %v4516 = vpop.f32.mrf.mxu0
      %v4517 = vadd.f32 0.0, %v4516
      %4518 = vmatmul.bf16.gmra.mxu0 %v4341
      %v4519 = vpop.f32.mrf.mxu0
      %v4520 = vadd.f32 0.0, %v4519
      %v4521 = vpop.f32.mrf.mxu0
      %v4522 = vadd.f32 0.0, %v4521
      %4523 = vmatmul.bf16.gmra.mxu0 %v4343
      %v4524 = vpop.f32.mrf.mxu0
      %v4525 = vadd.f32 0.0, %v4524
      %v4526 = vpop.f32.mrf.mxu0
      %v4527 = vadd.f32 0.0, %v4526
      %4528 = vmatmul.bf16.gmra.mxu0 %v4345
      %v4529 = vpop.f32.mrf.mxu0
      %v4530 = vadd.f32 0.0, %v4529
      %v4531 = vpop.f32.mrf.mxu0
      %v4532 = vadd.f32 0.0, %v4531
      %4533 = vmatmul.bf16.gmra.mxu0 %v4347
      %v4534 = vpop.f32.mrf.mxu0
      %v4535 = vadd.f32 0.0, %v4534
      %v4536 = vpop.f32.mrf.mxu0
      %v4537 = vadd.f32 0.0, %v4536
      %4538 = vmatmul.bf16.gmra.mxu0 %v4349
      %v4539 = vpop.f32.mrf.mxu0
      %v4540 = vadd.f32 0.0, %v4539
      %v4541 = vpop.f32.mrf.mxu0
      %v4542 = vadd.f32 0.0, %v4541
      %4543 = vmatmul.bf16.gmra.mxu0 %v4351
      %v4544 = vpop.f32.mrf.mxu0
      %v4545 = vadd.f32 0.0, %v4544
      %v4546 = vpop.f32.mrf.mxu0
      %v4547 = vadd.f32 0.0, %v4546
      %4548 = vmatmul.bf16.gmra.mxu0 %v4353
      %v4549 = vpop.f32.mrf.mxu0
      %v4550 = vadd.f32 0.0, %v4549
      %v4551 = vpop.f32.mrf.mxu0
      %v4552 = vadd.f32 0.0, %v4551
      %4553 = vmatmul.bf16.gmra.mxu0 %v4355
      %v4554 = vpop.f32.mrf.mxu0
      %v4555 = vadd.f32 0.0, %v4554
      %v4556 = vpop.f32.mrf.mxu0
      %v4557 = vadd.f32 0.0, %v4556
      %4558 = vmatmul.bf16.gmra.mxu0 %v4357
      %v4559 = vpop.f32.mrf.mxu0
      %v4560 = vadd.f32 0.0, %v4559
      %v4561 = vpop.f32.mrf.mxu0
      %v4562 = vadd.f32 0.0, %v4561
      %4563 = vmatmul.bf16.gmra.mxu0 %v4359
      %v4564 = vpop.f32.mrf.mxu0
      %v4565 = vadd.f32 0.0, %v4564
      %v4566 = vpop.f32.mrf.mxu0
      %v4567 = vadd.f32 0.0, %v4566
      %4568 = vmatmul.bf16.gmra.mxu0 %v4361
      %v4569 = vpop.f32.mrf.mxu0
      %v4570 = vadd.f32 0.0, %v4569
      %v4571 = vpop.f32.mrf.mxu0
      %v4572 = vadd.f32 0.0, %v4571
      %4573 = vmatmul.bf16.gmra.mxu0 %v4363
      %v4574 = vpop.f32.mrf.mxu0
      %v4575 = vadd.f32 0.0, %v4574
      %v4576 = vpop.f32.mrf.mxu0
      %v4577 = vadd.f32 0.0, %v4576
      %4578 = vmatmul.bf16.gmra.mxu0 %v4365
      %v4579 = vpop.f32.mrf.mxu0
      %v4580 = vadd.f32 0.0, %v4579
      %v4581 = vpop.f32.mrf.mxu0
      %v4582 = vadd.f32 0.0, %v4581
      %4583 = vdwg.mxu0
      %4584 = vmatpush.bf16.msra.mxu0 %v4478
      %4585 = vmatpush.bf16.msra.mxu0 %v4477
      %4586 = vmatpush.bf16.msra.mxu0 %v4476
      %4587 = vmatpush.bf16.msra.mxu0 %v4475
      %4588 = vmatpush.bf16.msra.mxu0 %v4474
      %4589 = vmatpush.bf16.msra.mxu0 %v4473
      %4590 = vmatpush.bf16.msra.mxu0 %v4472
      %4591 = vmatpush.bf16.msra.mxu0 %v4471
      %4592 = vmatmul.bf16.gmra.mxu0 %v4336
      %v4593 = vpop.f32.mrf.mxu0
      %v4594 = vadd.f32 %v4505, %v4593
      %v4595 = vpop.f32.mrf.mxu0
      %v4596 = vadd.f32 %v4507, %v4595
      %4597 = vmatmul.bf16.gmra.mxu0 %v4338
      %v4598 = vpop.f32.mrf.mxu0
      %v4599 = vadd.f32 %v4510, %v4598
      %v4600 = vpop.f32.mrf.mxu0
      %v4601 = vadd.f32 %v4512, %v4600
      %4602 = vmatmul.bf16.gmra.mxu0 %v4340
      %v4603 = vpop.f32.mrf.mxu0
      %v4604 = vadd.f32 %v4515, %v4603
      %v4605 = vpop.f32.mrf.mxu0
      %v4606 = vadd.f32 %v4517, %v4605
      %4607 = vmatmul.bf16.gmra.mxu0 %v4342
      %v4608 = vpop.f32.mrf.mxu0
      %v4609 = vadd.f32 %v4520, %v4608
      %v4610 = vpop.f32.mrf.mxu0
      %v4611 = vadd.f32 %v4522, %v4610
      %4612 = vmatmul.bf16.gmra.mxu0 %v4344
      %v4613 = vpop.f32.mrf.mxu0
      %v4614 = vadd.f32 %v4525, %v4613
      %v4615 = vpop.f32.mrf.mxu0
      %v4616 = vadd.f32 %v4527, %v4615
      %4617 = vmatmul.bf16.gmra.mxu0 %v4346
      %v4618 = vpop.f32.mrf.mxu0
      %v4619 = vadd.f32 %v4530, %v4618
      %v4620 = vpop.f32.mrf.mxu0
      %v4621 = vadd.f32 %v4532, %v4620
      %4622 = vmatmul.bf16.gmra.mxu0 %v4348
      %v4623 = vpop.f32.mrf.mxu0
      %v4624 = vadd.f32 %v4535, %v4623
      %v4625 = vpop.f32.mrf.mxu0
      %v4626 = vadd.f32 %v4537, %v4625
      %4627 = vmatmul.bf16.gmra.mxu0 %v4350
      %v4628 = vpop.f32.mrf.mxu0
      %v4629 = vadd.f32 %v4540, %v4628
      %v4630 = vpop.f32.mrf.mxu0
      %v4631 = vadd.f32 %v4542, %v4630
      %4632 = vmatmul.bf16.gmra.mxu0 %v4352
      %v4633 = vpop.f32.mrf.mxu0
      %v4634 = vadd.f32 %v4545, %v4633
      %v4635 = vpop.f32.mrf.mxu0
      %v4636 = vadd.f32 %v4547, %v4635
      %4637 = vmatmul.bf16.gmra.mxu0 %v4354
      %v4638 = vpop.f32.mrf.mxu0
      %v4639 = vadd.f32 %v4550, %v4638
      %v4640 = vpop.f32.mrf.mxu0
      %v4641 = vadd.f32 %v4552, %v4640
      %4642 = vmatmul.bf16.gmra.mxu0 %v4356
      %v4643 = vpop.f32.mrf.mxu0
      %v4644 = vadd.f32 %v4555, %v4643
      %v4645 = vpop.f32.mrf.mxu0
      %v4646 = vadd.f32 %v4557, %v4645
      %4647 = vmatmul.bf16.gmra.mxu0 %v4358
      %v4648 = vpop.f32.mrf.mxu0
      %v4649 = vadd.f32 %v4560, %v4648
      %v4650 = vpop.f32.mrf.mxu0
      %v4651 = vadd.f32 %v4562, %v4650
      %4652 = vmatmul.bf16.gmra.mxu0 %v4360
      %v4653 = vpop.f32.mrf.mxu0
      %v4654 = vadd.f32 %v4565, %v4653
      %v4655 = vpop.f32.mrf.mxu0
      %v4656 = vadd.f32 %v4567, %v4655
      %4657 = vmatmul.bf16.gmra.mxu0 %v4362
      %v4658 = vpop.f32.mrf.mxu0
      %v4659 = vadd.f32 %v4570, %v4658
      %v4660 = vpop.f32.mrf.mxu0
      %v4661 = vadd.f32 %v4572, %v4660
      %4662 = vmatmul.bf16.gmra.mxu0 %v4364
      %v4663 = vpop.f32.mrf.mxu0
      %v4664 = vadd.f32 %v4575, %v4663
      %v4665 = vpop.f32.mrf.mxu0
      %v4666 = vadd.f32 %v4577, %v4665
      %4667 = vmatmul.bf16.gmra.mxu0 %v4366
      %v4668 = vpop.f32.mrf.mxu0
      %v4669 = vadd.f32 %v4580, %v4668
      %v4670 = vpop.f32.mrf.mxu0
      %v4671 = vadd.f32 %v4582, %v4670
      %4672 = vdwg.mxu0
      %v4673 = vmax.f32 %v4594, 0.0
      %v4674 = vmax.f32 %v4596, 0.0
      %v4675 = vmax.f32 %v4599, 0.0
      %v4676 = vmax.f32 %v4601, 0.0
      %v4677 = vmax.f32 %v4604, 0.0
      %v4678 = vmax.f32 %v4606, 0.0
      %v4679 = vmax.f32 %v4609, 0.0
      %v4680 = vmax.f32 %v4611, 0.0
      %v4681 = vmax.f32 %v4614, 0.0
      %v4682 = vmax.f32 %v4616, 0.0
      %v4683 = vmax.f32 %v4619, 0.0
      %v4684 = vmax.f32 %v4621, 0.0
      %v4685 = vmax.f32 %v4624, 0.0
      %v4686 = vmax.f32 %v4626, 0.0
      %v4687 = vmax.f32 %v4629, 0.0
      %v4688 = vmax.f32 %v4631, 0.0
      %v4689 = vmax.f32 %v4634, 0.0
      %v4690 = vmax.f32 %v4636, 0.0
      %v4691 = vmax.f32 %v4639, 0.0
      %v4692 = vmax.f32 %v4641, 0.0
      %v4693 = vmax.f32 %v4644, 0.0
      %v4694 = vmax.f32 %v4646, 0.0
      %v4695 = vmax.f32 %v4649, 0.0
      %v4696 = vmax.f32 %v4651, 0.0
      %v4697 = vmax.f32 %v4654, 0.0
      %v4698 = vmax.f32 %v4656, 0.0
      %v4699 = vmax.f32 %v4659, 0.0
      %v4700 = vmax.f32 %v4661, 0.0
      %v4701 = vmax.f32 %v4664, 0.0
      %v4702 = vmax.f32 %v4666, 0.0
      %v4703 = vmax.f32 %v4669, 0.0
      %v4704 = vmax.f32 %v4671, 0.0
      %v4705 = vpack.c.bf16 %v4674, %v4673
      %v4706 = vpack.c.bf16 %v4676, %v4675
      %v4707 = vpack.c.bf16 %v4678, %v4677
      %v4708 = vpack.c.bf16 %v4680, %v4679
      %v4709 = vpack.c.bf16 %v4682, %v4681
      %v4710 = vpack.c.bf16 %v4684, %v4683
      %v4711 = vpack.c.bf16 %v4686, %v4685
      %v4712 = vpack.c.bf16 %v4688, %v4687
      %v4713 = vpack.c.bf16 %v4690, %v4689
      %v4714 = vpack.c.bf16 %v4692, %v4691
      %v4715 = vpack.c.bf16 %v4694, %v4693
      %v4716 = vpack.c.bf16 %v4696, %v4695
      %v4717 = vpack.c.bf16 %v4698, %v4697
      %v4718 = vpack.c.bf16 %v4700, %v4699
      %v4719 = vpack.c.bf16 %v4702, %v4701
      %v4720 = vpack.c.bf16 %v4704, %v4703
      %v4721 = vld [vmem:[#allocation3] sm:$0xf]
      %v4722 = vld [vmem:[#allocation3 + $0x4] sm:$0xf]
      %v4723 = vld [vmem:[#allocation3 + $0x8] sm:$0xf]
      %v4724 = vld [vmem:[#allocation3 + $0xc] sm:$0xf]
      %v4725 = vld [vmem:[#allocation3 + $0x10] sm:$0xf]
      %v4726 = vld [vmem:[#allocation3 + $0x14] sm:$0xf]
      %v4727 = vld [vmem:[#allocation3 + $0x18] sm:$0xf]
      %v4728 = vld [vmem:[#allocation3 + $0x1c] sm:$0xf]
      %v4729 = vld [vmem:[#allocation3 + $0x20] sm:$0xf]
      %v4730 = vld [vmem:[#allocation3 + $0x24] sm:$0xf]
      %v4731 = vld [vmem:[#allocation3 + $0x28] sm:$0xf]
      %v4732 = vld [vmem:[#allocation3 + $0x2c] sm:$0xf]
      %v4733 = vld [vmem:[#allocation3 + $0x30] sm:$0xf]
      %v4734 = vld [vmem:[#allocation3 + $0x34] sm:$0xf]
      %v4735 = vld [vmem:[#allocation3 + $0x38] sm:$0xf]
      %v4736 = vld [vmem:[#allocation3 + $0x3c] sm:$0xf]
      %v4737 = vld [vmem:[%s3] sm:$0x1]
      %v4739 = vperm.slane %v4737, 0
      %v4757 = vunpack.c.l.b16 %v4721
      %v4758 = vunpack.c.l.b16 %v4722
      %v4759 = vunpack.c.l.b16 %v4723
      %v4760 = vunpack.c.l.b16 %v4724
      %v4761 = vunpack.c.l.b16 %v4725
      %v4762 = vunpack.c.l.b16 %v4726
      %v4763 = vunpack.c.l.b16 %v4727
      %v4764 = vunpack.c.l.b16 %v4728
      %v4765 = vunpack.c.l.b16 %v4729
      %v4766 = vunpack.c.l.b16 %v4730
      %v4767 = vunpack.c.l.b16 %v4731
      %v4768 = vunpack.c.l.b16 %v4732
      %v4769 = vunpack.c.l.b16 %v4733
      %v4770 = vunpack.c.l.b16 %v4734
      %v4771 = vunpack.c.l.b16 %v4735
      %v4772 = vunpack.c.l.b16 %v4736
      %v4773 = vpack.c.b16 %v4758, %v4757
      %v4774 = vpack.c.b16 %v4760, %v4759
      %v4775 = vpack.c.b16 %v4762, %v4761
      %v4776 = vpack.c.b16 %v4764, %v4763
      %v4777 = vpack.c.b16 %v4766, %v4765
      %v4778 = vpack.c.b16 %v4768, %v4767
      %v4779 = vpack.c.b16 %v4770, %v4769
      %v4780 = vpack.c.b16 %v4772, %v4771
      %4789 = vmatpush.bf16.msra.mxu0 %v4780
      %4790 = vmatpush.bf16.msra.mxu0 %v4779
      %4791 = vmatpush.bf16.msra.mxu0 %v4778
      %4792 = vmatpush.bf16.msra.mxu0 %v4777
      %4793 = vmatpush.bf16.msra.mxu0 %v4776
      %4794 = vmatpush.bf16.msra.mxu0 %v4775
      %4795 = vmatpush.bf16.msra.mxu0 %v4774
      %4796 = vmatpush.bf16.msra.mxu0 %v4773
      %4797 = vmatmul.bf16.gmra.mxu0 %v4705
      %v4798 = vpop.f32.mrf.mxu0
      %v4799 = vadd.f32 %v4739, %v4798
      %v4800 = vpop.f32.mrf.mxu0
      %v4801 = vadd.f32 %v4739, %v4800
      %4802 = vmatmul.bf16.gmra.mxu0 %v4706
      %v4803 = vpop.f32.mrf.mxu0
      %v4804 = vadd.f32 %v4739, %v4803
      %v4805 = vpop.f32.mrf.mxu0
      %v4806 = vadd.f32 %v4739, %v4805
      %4807 = vmatmul.bf16.gmra.mxu0 %v4707
      %v4808 = vpop.f32.mrf.mxu0
      %v4809 = vadd.f32 %v4739, %v4808
      %v4810 = vpop.f32.mrf.mxu0
      %v4811 = vadd.f32 %v4739, %v4810
      %4812 = vmatmul.bf16.gmra.mxu0 %v4708
      %v4813 = vpop.f32.mrf.mxu0
      %v4814 = vadd.f32 %v4739, %v4813
      %v4815 = vpop.f32.mrf.mxu0
      %v4816 = vadd.f32 %v4739, %v4815
      %4817 = vmatmul.bf16.gmra.mxu0 %v4709
      %v4818 = vpop.f32.mrf.mxu0
      %v4819 = vadd.f32 %v4739, %v4818
      %v4820 = vpop.f32.mrf.mxu0
      %v4821 = vadd.f32 %v4739, %v4820
      %4822 = vmatmul.bf16.gmra.mxu0 %v4710
      %v4823 = vpop.f32.mrf.mxu0
      %v4824 = vadd.f32 %v4739, %v4823
      %v4825 = vpop.f32.mrf.mxu0
      %v4826 = vadd.f32 %v4739, %v4825
      %4827 = vmatmul.bf16.gmra.mxu0 %v4711
      %v4828 = vpop.f32.mrf.mxu0
      %v4829 = vadd.f32 %v4739, %v4828
      %v4830 = vpop.f32.mrf.mxu0
      %v4831 = vadd.f32 %v4739, %v4830
      %4832 = vmatmul.bf16.gmra.mxu0 %v4712
      %v4833 = vpop.f32.mrf.mxu0
      %v4834 = vadd.f32 %v4739, %v4833
      %v4835 = vpop.f32.mrf.mxu0
      %v4836 = vadd.f32 %v4739, %v4835
      %4837 = vmatmul.bf16.gmra.mxu0 %v4713
      %v4838 = vpop.f32.mrf.mxu0
      %v4839 = vadd.f32 %v4739, %v4838
      %v4840 = vpop.f32.mrf.mxu0
      %v4841 = vadd.f32 %v4739, %v4840
      %4842 = vmatmul.bf16.gmra.mxu0 %v4714
      %v4843 = vpop.f32.mrf.mxu0
      %v4844 = vadd.f32 %v4739, %v4843
      %v4845 = vpop.f32.mrf.mxu0
      %v4846 = vadd.f32 %v4739, %v4845
      %4847 = vmatmul.bf16.gmra.mxu0 %v4715
      %v4848 = vpop.f32.mrf.mxu0
      %v4849 = vadd.f32 %v4739, %v4848
      %v4850 = vpop.f32.mrf.mxu0
      %v4851 = vadd.f32 %v4739, %v4850
      %4852 = vmatmul.bf16.gmra.mxu0 %v4716
      %v4853 = vpop.f32.mrf.mxu0
      %v4854 = vadd.f32 %v4739, %v4853
      %v4855 = vpop.f32.mrf.mxu0
      %v4856 = vadd.f32 %v4739, %v4855
      %4857 = vmatmul.bf16.gmra.mxu0 %v4717
      %v4858 = vpop.f32.mrf.mxu0
      %v4859 = vadd.f32 %v4739, %v4858
      %v4860 = vpop.f32.mrf.mxu0
      %v4861 = vadd.f32 %v4739, %v4860
      %4862 = vmatmul.bf16.gmra.mxu0 %v4718
      %v4863 = vpop.f32.mrf.mxu0
      %v4864 = vadd.f32 %v4739, %v4863
      %v4865 = vpop.f32.mrf.mxu0
      %v4866 = vadd.f32 %v4739, %v4865
      %4867 = vmatmul.bf16.gmra.mxu0 %v4719
      %v4868 = vpop.f32.mrf.mxu0
      %v4869 = vadd.f32 %v4739, %v4868
      %v4870 = vpop.f32.mrf.mxu0
      %v4871 = vadd.f32 %v4739, %v4870
      %4872 = vmatmul.bf16.gmra.mxu0 %v4720
      %v4873 = vpop.f32.mrf.mxu0
      %v4874 = vadd.f32 %v4739, %v4873
      %v4875 = vpop.f32.mrf.mxu0
      %v4876 = vadd.f32 %v4739, %v4875
      %4877 = vdwg.mxu0
      %v4878 = vmax.f32 %v4799, 0.0
      %v4879 = vmax.f32 %v4801, 0.0
      %v4880 = vmax.f32 %v4804, 0.0
      %v4881 = vmax.f32 %v4806, 0.0
      %v4882 = vmax.f32 %v4809, 0.0
      %v4883 = vmax.f32 %v4811, 0.0
      %v4884 = vmax.f32 %v4814, 0.0
      %v4885 = vmax.f32 %v4816, 0.0
      %v4886 = vmax.f32 %v4819, 0.0
      %v4887 = vmax.f32 %v4821, 0.0
      %v4888 = vmax.f32 %v4824, 0.0
      %v4889 = vmax.f32 %v4826, 0.0
      %v4890 = vmax.f32 %v4829, 0.0
      %v4891 = vmax.f32 %v4831, 0.0
      %v4892 = vmax.f32 %v4834, 0.0
      %v4893 = vmax.f32 %v4836, 0.0
      %v4894 = vmax.f32 %v4839, 0.0
      %v4895 = vmax.f32 %v4841, 0.0
      %v4896 = vmax.f32 %v4844, 0.0
      %v4897 = vmax.f32 %v4846, 0.0
      %v4898 = vmax.f32 %v4849, 0.0
      %v4899 = vmax.f32 %v4851, 0.0
      %v4900 = vmax.f32 %v4854, 0.0
      %v4901 = vmax.f32 %v4856, 0.0
      %v4902 = vmax.f32 %v4859, 0.0
      %v4903 = vmax.f32 %v4861, 0.0
      %v4904 = vmax.f32 %v4864, 0.0
      %v4905 = vmax.f32 %v4866, 0.0
      %v4906 = vmax.f32 %v4869, 0.0
      %v4907 = vmax.f32 %v4871, 0.0
      %v4908 = vmax.f32 %v4874, 0.0
      %v4909 = vmax.f32 %v4876, 0.0
      %v4910 = vpack.c.bf16 %v4878, %v4878
      %v4911 = vpack.c.bf16 %v4879, %v4879
      %v4912 = vpack.c.bf16 %v4880, %v4880
      %v4913 = vpack.c.bf16 %v4881, %v4881
      %v4914 = vpack.c.bf16 %v4882, %v4882
      %v4915 = vpack.c.bf16 %v4883, %v4883
      %v4916 = vpack.c.bf16 %v4884, %v4884
      %v4917 = vpack.c.bf16 %v4885, %v4885
      %v4918 = vpack.c.bf16 %v4886, %v4886
      %v4919 = vpack.c.bf16 %v4887, %v4887
      %v4920 = vpack.c.bf16 %v4888, %v4888
      %v4921 = vpack.c.bf16 %v4889, %v4889
      %v4922 = vpack.c.bf16 %v4890, %v4890
      %v4923 = vpack.c.bf16 %v4891, %v4891
      %v4924 = vpack.c.bf16 %v4892, %v4892
      %v4925 = vpack.c.bf16 %v4893, %v4893
      %v4926 = vpack.c.bf16 %v4894, %v4894
      %v4927 = vpack.c.bf16 %v4895, %v4895
      %v4928 = vpack.c.bf16 %v4896, %v4896
      %v4929 = vpack.c.bf16 %v4897, %v4897
      %v4930 = vpack.c.bf16 %v4898, %v4898
      %v4931 = vpack.c.bf16 %v4899, %v4899
      %v4932 = vpack.c.bf16 %v4900, %v4900
      %v4933 = vpack.c.bf16 %v4901, %v4901
      %v4934 = vpack.c.bf16 %v4902, %v4902
      %v4935 = vpack.c.bf16 %v4903, %v4903
      %v4936 = vpack.c.bf16 %v4904, %v4904
      %v4937 = vpack.c.bf16 %v4905, %v4905
      %v4938 = vpack.c.bf16 %v4906, %v4906
      %v4939 = vpack.c.bf16 %v4907, %v4907
      %v4940 = vpack.c.bf16 %v4908, %v4908
      %v4941 = vpack.c.bf16 %v4909, %v4909
      %4942 = vst [vmem:[#allocation2] sm:$0xf] %v4910
      %4943 = vst [vmem:[#allocation2 + $0x4] sm:$0xf] %v4911
      %4944 = vst [vmem:[#allocation2 + $0x8] sm:$0xf] %v4912
      %4945 = vst [vmem:[#allocation2 + $0xc] sm:$0xf] %v4913
      %4946 = vst [vmem:[#allocation2 + $0x10] sm:$0xf] %v4914
      %4947 = vst [vmem:[#allocation2 + $0x14] sm:$0xf] %v4915
      %4948 = vst [vmem:[#allocation2 + $0x18] sm:$0xf] %v4916
      %4949 = vst [vmem:[#allocation2 + $0x1c] sm:$0xf] %v4917
      %4950 = vst [vmem:[#allocation2 + $0x20] sm:$0xf] %v4918
      %4951 = vst [vmem:[#allocation2 + $0x24] sm:$0xf] %v4919
      %4952 = vst [vmem:[#allocation2 + $0x28] sm:$0xf] %v4920
      %4953 = vst [vmem:[#allocation2 + $0x2c] sm:$0xf] %v4921
      %4954 = vst [vmem:[#allocation2 + $0x30] sm:$0xf] %v4922
      %4955 = vst [vmem:[#allocation2 + $0x34] sm:$0xf] %v4923
      %4956 = vst [vmem:[#allocation2 + $0x38] sm:$0xf] %v4924
      %4957 = vst [vmem:[#allocation2 + $0x3c] sm:$0xf] %v4925
      %4958 = vst [vmem:[#allocation2 + $0x40] sm:$0xf] %v4926
      %4959 = vst [vmem:[#allocation2 + $0x44] sm:$0xf] %v4927
      %4960 = vst [vmem:[#allocation2 + $0x48] sm:$0xf] %v4928
      %4961 = vst [vmem:[#allocation2 + $0x4c] sm:$0xf] %v4929
      %4962 = vst [vmem:[#allocation2 + $0x50] sm:$0xf] %v4930
      %4963 = vst [vmem:[#allocation2 + $0x54] sm:$0xf] %v4931
      %4964 = vst [vmem:[#allocation2 + $0x58] sm:$0xf] %v4932
      %4965 = vst [vmem:[#allocation2 + $0x5c] sm:$0xf] %v4933
      %4966 = vst [vmem:[#allocation2 + $0x60] sm:$0xf] %v4934
      %4967 = vst [vmem:[#allocation2 + $0x64] sm:$0xf] %v4935
      %4968 = vst [vmem:[#allocation2 + $0x68] sm:$0xf] %v4936
      %4969 = vst [vmem:[#allocation2 + $0x6c] sm:$0xf] %v4937
      %4970 = vst [vmem:[#allocation2 + $0x70] sm:$0xf] %v4938
      %4971 = vst [vmem:[#allocation2 + $0x74] sm:$0xf] %v4939
      %4972 = vst [vmem:[#allocation2 + $0x78] sm:$0xf] %v4940
      %4973 = vst [vmem:[#allocation2 + $0x7c] sm:$0xf] %v4941
    $region33: #{tpu_custom_call.1} parent=1 // pred_fallthru
      _
    %v4974 = vld [vmem:[#allocation2] sm:$0xf]
    %v4975 = vld [vmem:[#allocation2 + $0x4] sm:$0xf]
    %v4976 = vld [vmem:[#allocation2 + $0x8] sm:$0xf]
    %v4977 = vld [vmem:[#allocation2 + $0xc] sm:$0xf]
    %v4978 = vld [vmem:[#allocation2 + $0x10] sm:$0xf]
    %v4979 = vld [vmem:[#allocation2 + $0x14] sm:$0xf]
    %v4980 = vld [vmem:[#allocation2 + $0x18] sm:$0xf]
    %v4981 = vld [vmem:[#allocation2 + $0x1c] sm:$0xf]
    %v4982 = vld [vmem:[#allocation2 + $0x20] sm:$0xf]
    %v4983 = vld [vmem:[#allocation2 + $0x24] sm:$0xf]
    %v4984 = vld [vmem:[#allocation2 + $0x28] sm:$0xf]
    %v4985 = vld [vmem:[#allocation2 + $0x2c] sm:$0xf]
    %v4986 = vld [vmem:[#allocation2 + $0x30] sm:$0xf]
    %v4987 = vld [vmem:[#allocation2 + $0x34] sm:$0xf]
    %v4988 = vld [vmem:[#allocation2 + $0x38] sm:$0xf]
    %v4989 = vld [vmem:[#allocation2 + $0x3c] sm:$0xf]
    %v4990 = vld [vmem:[#allocation2 + $0x40] sm:$0xf]
    %v4991 = vld [vmem:[#allocation2 + $0x44] sm:$0xf]
    %v4992 = vld [vmem:[#allocation2 + $0x48] sm:$0xf]
    %v4993 = vld [vmem:[#allocation2 + $0x4c] sm:$0xf]
    %v4994 = vld [vmem:[#allocation2 + $0x50] sm:$0xf]
    %v4995 = vld [vmem:[#allocation2 + $0x54] sm:$0xf]
    %v4996 = vld [vmem:[#allocation2 + $0x58] sm:$0xf]
    %v4997 = vld [vmem:[#allocation2 + $0x5c] sm:$0xf]
    %v4998 = vld [vmem:[#allocation2 + $0x60] sm:$0xf]
    %v4999 = vld [vmem:[#allocation2 + $0x64] sm:$0xf]
    %v5000 = vld [vmem:[#allocation2 + $0x68] sm:$0xf]
    %v5001 = vld [vmem:[#allocation2 + $0x6c] sm:$0xf]
    %v5002 = vld [vmem:[#allocation2 + $0x70] sm:$0xf]
    %v5003 = vld [vmem:[#allocation2 + $0x74] sm:$0xf]
    %v5004 = vld [vmem:[#allocation2 + $0x78] sm:$0xf]
    %v5005 = vld [vmem:[#allocation2 + $0x7c] sm:$0xf]
    %v5006 = vld [vmem:[%s4] sm:$0xff]
    %v5007 = vld [vmem:[%s4 + $0x8] sm:$0xff]
    %v5008 = vld [vmem:[%s4 + $0x10] sm:$0xff]
    %v5009 = vld [vmem:[%s4 + $0x18] sm:$0xff]
    %v5010 = vld [vmem:[%s4 + $0x20] sm:$0xff]
    %v5011 = vld [vmem:[%s4 + $0x28] sm:$0xff]
    %v5012 = vld [vmem:[%s4 + $0x30] sm:$0xff]
    %v5013 = vld [vmem:[%s4 + $0x38] sm:$0xff]
    %v5014 = vld [vmem:[%s4 + $0x40] sm:$0xff]
    %v5015 = vld [vmem:[%s4 + $0x48] sm:$0xff]
    %v5016 = vld [vmem:[%s4 + $0x50] sm:$0xff]
    %v5017 = vld [vmem:[%s4 + $0x58] sm:$0xff]
    %v5018 = vld [vmem:[%s4 + $0x60] sm:$0xff]
    %v5019 = vld [vmem:[%s4 + $0x68] sm:$0xff]
    %v5020 = vld [vmem:[%s4 + $0x70] sm:$0xff]
    %v5021 = vld [vmem:[%s4 + $0x78] sm:$0xff]
    %v5022 = vld [vmem:[%s5] sm:$0x3]
    %v5024 = vperm.slane %v5022, 0
    %v5025 = vperm.slane %v5022, 1
    %v5060 = vunpack.c.l.b16 %v4974
    %v5061 = vunpack.c.l.b16 %v4975
    %v5062 = vunpack.c.l.b16 %v4976
    %v5063 = vunpack.c.l.b16 %v4977
    %v5064 = vunpack.c.l.b16 %v4978
    %v5065 = vunpack.c.l.b16 %v4979
    %v5066 = vunpack.c.l.b16 %v4980
    %v5067 = vunpack.c.l.b16 %v4981
    %v5068 = vunpack.c.l.b16 %v4982
    %v5069 = vunpack.c.l.b16 %v4983
    %v5070 = vunpack.c.l.b16 %v4984
    %v5071 = vunpack.c.l.b16 %v4985
    %v5072 = vunpack.c.l.b16 %v4986
    %v5073 = vunpack.c.l.b16 %v4987
    %v5074 = vunpack.c.l.b16 %v4988
    %v5075 = vunpack.c.l.b16 %v4989
    %v5076 = vunpack.c.l.b16 %v4990
    %v5077 = vunpack.c.l.b16 %v4991
    %v5078 = vunpack.c.l.b16 %v4992
    %v5079 = vunpack.c.l.b16 %v4993
    %v5080 = vunpack.c.l.b16 %v4994
    %v5081 = vunpack.c.l.b16 %v4995
    %v5082 = vunpack.c.l.b16 %v4996
    %v5083 = vunpack.c.l.b16 %v4997
    %v5084 = vunpack.c.l.b16 %v4998
    %v5085 = vunpack.c.l.b16 %v4999
    %v5086 = vunpack.c.l.b16 %v5000
    %v5087 = vunpack.c.l.b16 %v5001
    %v5088 = vunpack.c.l.b16 %v5002
    %v5089 = vunpack.c.l.b16 %v5003
    %v5090 = vunpack.c.l.b16 %v5004
    %v5091 = vunpack.c.l.b16 %v5005
    %v5092 = vpack.c.b16 %v5061, %v5060
    %v5093 = vpack.c.b16 %v5063, %v5062
    %v5094 = vpack.c.b16 %v5065, %v5064
    %v5095 = vpack.c.b16 %v5067, %v5066
    %v5096 = vpack.c.b16 %v5069, %v5068
    %v5097 = vpack.c.b16 %v5071, %v5070
    %v5098 = vpack.c.b16 %v5073, %v5072
    %v5099 = vpack.c.b16 %v5075, %v5074
    %v5100 = vpack.c.b16 %v5077, %v5076
    %v5101 = vpack.c.b16 %v5079, %v5078
    %v5102 = vpack.c.b16 %v5081, %v5080
    %v5103 = vpack.c.b16 %v5083, %v5082
    %v5104 = vpack.c.b16 %v5085, %v5084
    %v5105 = vpack.c.b16 %v5087, %v5086
    %v5106 = vpack.c.b16 %v5089, %v5088
    %v5107 = vpack.c.b16 %v5091, %v5090
    %v5140 = vunpack.c.l.b16 %v5006
    %v5141 = vunpack.c.h.b16 %v5006
    %v5142 = vunpack.c.l.b16 %v5007
    %v5143 = vunpack.c.h.b16 %v5007
    %v5144 = vunpack.c.l.b16 %v5008
    %v5145 = vunpack.c.h.b16 %v5008
    %v5146 = vunpack.c.l.b16 %v5009
    %v5147 = vunpack.c.h.b16 %v5009
    %v5148 = vunpack.c.l.b16 %v5010
    %v5149 = vunpack.c.h.b16 %v5010
    %v5150 = vunpack.c.l.b16 %v5011
    %v5151 = vunpack.c.h.b16 %v5011
    %v5152 = vunpack.c.l.b16 %v5012
    %v5153 = vunpack.c.h.b16 %v5012
    %v5154 = vunpack.c.l.b16 %v5013
    %v5155 = vunpack.c.h.b16 %v5013
    %v5156 = vunpack.c.l.b16 %v5014
    %v5157 = vunpack.c.h.b16 %v5014
    %v5158 = vunpack.c.l.b16 %v5015
    %v5159 = vunpack.c.h.b16 %v5015
    %v5160 = vunpack.c.l.b16 %v5016
    %v5161 = vunpack.c.h.b16 %v5016
    %v5162 = vunpack.c.l.b16 %v5017
    %v5163 = vunpack.c.h.b16 %v5017
    %v5164 = vunpack.c.l.b16 %v5018
    %v5165 = vunpack.c.h.b16 %v5018
    %v5166 = vunpack.c.l.b16 %v5019
    %v5167 = vunpack.c.h.b16 %v5019
    %v5168 = vunpack.c.l.b16 %v5020
    %v5169 = vunpack.c.h.b16 %v5020
    %v5170 = vunpack.c.l.b16 %v5021
    %v5171 = vunpack.c.h.b16 %v5021
    %v5172 = vpack.c.b16 %v5142, %v5140
    %v5173 = vpack.c.b16 %v5143, %v5141
    %v5174 = vpack.c.b16 %v5146, %v5144
    %v5175 = vpack.c.b16 %v5147, %v5145
    %v5176 = vpack.c.b16 %v5150, %v5148
    %v5177 = vpack.c.b16 %v5151, %v5149
    %v5178 = vpack.c.b16 %v5154, %v5152
    %v5179 = vpack.c.b16 %v5155, %v5153
    %v5180 = vpack.c.b16 %v5158, %v5156
    %v5181 = vpack.c.b16 %v5159, %v5157
    %v5182 = vpack.c.b16 %v5162, %v5160
    %v5183 = vpack.c.b16 %v5163, %v5161
    %v5184 = vpack.c.b16 %v5166, %v5164
    %v5185 = vpack.c.b16 %v5167, %v5165
    %v5186 = vpack.c.b16 %v5170, %v5168
    %v5187 = vpack.c.b16 %v5171, %v5169
    %5204 = vmatpush.bf16.msra.mxu0 %v5186
    %5205 = vmatpush.bf16.msra.mxu0 %v5184
    %5206 = vmatpush.bf16.msra.mxu0 %v5182
    %5207 = vmatpush.bf16.msra.mxu0 %v5180
    %5208 = vmatpush.bf16.msra.mxu0 %v5178
    %5209 = vmatpush.bf16.msra.mxu0 %v5176
    %5210 = vmatpush.bf16.msra.mxu0 %v5174
    %5211 = vmatpush.bf16.msra.mxu0 %v5172
    %5212 = vmatmul.bf16.gmra.mxu0 %v5092
    %v5213 = vpop.f32.mrf.mxu0
    %v5214 = vadd.f32 %v5024, %v5213
    %v5215 = vpop.f32.mrf.mxu0
    %v5216 = vadd.f32 %v5024, %v5215
    %5217 = vmatmul.bf16.gmra.mxu0 %v5093
    %v5218 = vpop.f32.mrf.mxu0
    %v5219 = vadd.f32 %v5024, %v5218
    %v5220 = vpop.f32.mrf.mxu0
    %v5221 = vadd.f32 %v5024, %v5220
    %5222 = vmatmul.bf16.gmra.mxu0 %v5094
    %v5223 = vpop.f32.mrf.mxu0
    %v5224 = vadd.f32 %v5024, %v5223
    %v5225 = vpop.f32.mrf.mxu0
    %v5226 = vadd.f32 %v5024, %v5225
    %5227 = vmatmul.bf16.gmra.mxu0 %v5095
    %v5228 = vpop.f32.mrf.mxu0
    %v5229 = vadd.f32 %v5024, %v5228
    %v5230 = vpop.f32.mrf.mxu0
    %v5231 = vadd.f32 %v5024, %v5230
    %5232 = vmatmul.bf16.gmra.mxu0 %v5096
    %v5233 = vpop.f32.mrf.mxu0
    %v5234 = vadd.f32 %v5024, %v5233
    %v5235 = vpop.f32.mrf.mxu0
    %v5236 = vadd.f32 %v5024, %v5235
    %5237 = vmatmul.bf16.gmra.mxu0 %v5097
    %v5238 = vpop.f32.mrf.mxu0
    %v5239 = vadd.f32 %v5024, %v5238
    %v5240 = vpop.f32.mrf.mxu0
    %v5241 = vadd.f32 %v5024, %v5240
    %5242 = vmatmul.bf16.gmra.mxu0 %v5098
    %v5243 = vpop.f32.mrf.mxu0
    %v5244 = vadd.f32 %v5024, %v5243
    %v5245 = vpop.f32.mrf.mxu0
    %v5246 = vadd.f32 %v5024, %v5245
    %5247 = vmatmul.bf16.gmra.mxu0 %v5099
    %v5248 = vpop.f32.mrf.mxu0
    %v5249 = vadd.f32 %v5024, %v5248
    %v5250 = vpop.f32.mrf.mxu0
    %v5251 = vadd.f32 %v5024, %v5250
    %5252 = vmatmul.bf16.gmra.mxu0 %v5100
    %v5253 = vpop.f32.mrf.mxu0
    %v5254 = vadd.f32 %v5024, %v5253
    %v5255 = vpop.f32.mrf.mxu0
    %v5256 = vadd.f32 %v5024, %v5255
    %5257 = vmatmul.bf16.gmra.mxu0 %v5101
    %v5258 = vpop.f32.mrf.mxu0
    %v5259 = vadd.f32 %v5024, %v5258
    %v5260 = vpop.f32.mrf.mxu0
    %v5261 = vadd.f32 %v5024, %v5260
    %5262 = vmatmul.bf16.gmra.mxu0 %v5102
    %v5263 = vpop.f32.mrf.mxu0
    %v5264 = vadd.f32 %v5024, %v5263
    %v5265 = vpop.f32.mrf.mxu0
    %v5266 = vadd.f32 %v5024, %v5265
    %5267 = vmatmul.bf16.gmra.mxu0 %v5103
    %v5268 = vpop.f32.mrf.mxu0
    %v5269 = vadd.f32 %v5024, %v5268
    %v5270 = vpop.f32.mrf.mxu0
    %v5271 = vadd.f32 %v5024, %v5270
    %5272 = vmatmul.bf16.gmra.mxu0 %v5104
    %v5273 = vpop.f32.mrf.mxu0
    %v5274 = vadd.f32 %v5024, %v5273
    %v5275 = vpop.f32.mrf.mxu0
    %v5276 = vadd.f32 %v5024, %v5275
    %5277 = vmatmul.bf16.gmra.mxu0 %v5105
    %v5278 = vpop.f32.mrf.mxu0
    %v5279 = vadd.f32 %v5024, %v5278
    %v5280 = vpop.f32.mrf.mxu0
    %v5281 = vadd.f32 %v5024, %v5280
    %5282 = vmatmul.bf16.gmra.mxu0 %v5106
    %v5283 = vpop.f32.mrf.mxu0
    %v5284 = vadd.f32 %v5024, %v5283
    %v5285 = vpop.f32.mrf.mxu0
    %v5286 = vadd.f32 %v5024, %v5285
    %5287 = vmatmul.bf16.gmra.mxu0 %v5107
    %v5288 = vpop.f32.mrf.mxu0
    %v5289 = vadd.f32 %v5024, %v5288
    %v5290 = vpop.f32.mrf.mxu0
    %v5291 = vadd.f32 %v5024, %v5290
    %5292 = vdwg.mxu0
    %5293 = vmatpush.bf16.msra.mxu0 %v5187
    %5294 = vmatpush.bf16.msra.mxu0 %v5185
    %5295 = vmatpush.bf16.msra.mxu0 %v5183
    %5296 = vmatpush.bf16.msra.mxu0 %v5181
    %5297 = vmatpush.bf16.msra.mxu0 %v5179
    %5298 = vmatpush.bf16.msra.mxu0 %v5177
    %5299 = vmatpush.bf16.msra.mxu0 %v5175
    %5300 = vmatpush.bf16.msra.mxu0 %v5173
    %5301 = vmatmul.bf16.gmra.mxu0 %v5092
    %v5302 = vpop.f32.mrf.mxu0
    %v5303 = vadd.f32 %v5025, %v5302
    %v5304 = vpop.f32.mrf.mxu0
    %v5305 = vadd.f32 %v5025, %v5304
    %5306 = vmatmul.bf16.gmra.mxu0 %v5093
    %v5307 = vpop.f32.mrf.mxu0
    %v5308 = vadd.f32 %v5025, %v5307
    %v5309 = vpop.f32.mrf.mxu0
    %v5310 = vadd.f32 %v5025, %v5309
    %5311 = vmatmul.bf16.gmra.mxu0 %v5094
    %v5312 = vpop.f32.mrf.mxu0
    %v5313 = vadd.f32 %v5025, %v5312
    %v5314 = vpop.f32.mrf.mxu0
    %v5315 = vadd.f32 %v5025, %v5314
    %5316 = vmatmul.bf16.gmra.mxu0 %v5095
    %v5317 = vpop.f32.mrf.mxu0
    %v5318 = vadd.f32 %v5025, %v5317
    %v5319 = vpop.f32.mrf.mxu0
    %v5320 = vadd.f32 %v5025, %v5319
    %5321 = vmatmul.bf16.gmra.mxu0 %v5096
    %v5322 = vpop.f32.mrf.mxu0
    %v5323 = vadd.f32 %v5025, %v5322
    %v5324 = vpop.f32.mrf.mxu0
    %v5325 = vadd.f32 %v5025, %v5324
    %5326 = vmatmul.bf16.gmra.mxu0 %v5097
    %v5327 = vpop.f32.mrf.mxu0
    %v5328 = vadd.f32 %v5025, %v5327
    %v5329 = vpop.f32.mrf.mxu0
    %v5330 = vadd.f32 %v5025, %v5329
    %5331 = vmatmul.bf16.gmra.mxu0 %v5098
    %v5332 = vpop.f32.mrf.mxu0
    %v5333 = vadd.f32 %v5025, %v5332
    %v5334 = vpop.f32.mrf.mxu0
    %v5335 = vadd.f32 %v5025, %v5334
    %5336 = vmatmul.bf16.gmra.mxu0 %v5099
    %v5337 = vpop.f32.mrf.mxu0
    %v5338 = vadd.f32 %v5025, %v5337
    %v5339 = vpop.f32.mrf.mxu0
    %v5340 = vadd.f32 %v5025, %v5339
    %5341 = vmatmul.bf16.gmra.mxu0 %v5100
    %v5342 = vpop.f32.mrf.mxu0
    %v5343 = vadd.f32 %v5025, %v5342
    %v5344 = vpop.f32.mrf.mxu0
    %v5345 = vadd.f32 %v5025, %v5344
    %5346 = vmatmul.bf16.gmra.mxu0 %v5101
    %v5347 = vpop.f32.mrf.mxu0
    %v5348 = vadd.f32 %v5025, %v5347
    %v5349 = vpop.f32.mrf.mxu0
    %v5350 = vadd.f32 %v5025, %v5349
    %5351 = vmatmul.bf16.gmra.mxu0 %v5102
    %v5352 = vpop.f32.mrf.mxu0
    %v5353 = vadd.f32 %v5025, %v5352
    %v5354 = vpop.f32.mrf.mxu0
    %v5355 = vadd.f32 %v5025, %v5354
    %5356 = vmatmul.bf16.gmra.mxu0 %v5103
    %v5357 = vpop.f32.mrf.mxu0
    %v5358 = vadd.f32 %v5025, %v5357
    %v5359 = vpop.f32.mrf.mxu0
    %v5360 = vadd.f32 %v5025, %v5359
    %5361 = vmatmul.bf16.gmra.mxu0 %v5104
    %v5362 = vpop.f32.mrf.mxu0
    %v5363 = vadd.f32 %v5025, %v5362
    %v5364 = vpop.f32.mrf.mxu0
    %v5365 = vadd.f32 %v5025, %v5364
    %5366 = vmatmul.bf16.gmra.mxu0 %v5105
    %v5367 = vpop.f32.mrf.mxu0
    %v5368 = vadd.f32 %v5025, %v5367
    %v5369 = vpop.f32.mrf.mxu0
    %v5370 = vadd.f32 %v5025, %v5369
    %5371 = vmatmul.bf16.gmra.mxu0 %v5106
    %v5372 = vpop.f32.mrf.mxu0
    %v5373 = vadd.f32 %v5025, %v5372
    %v5374 = vpop.f32.mrf.mxu0
    %v5375 = vadd.f32 %v5025, %v5374
    %5376 = vmatmul.bf16.gmra.mxu0 %v5107
    %v5377 = vpop.f32.mrf.mxu0
    %v5378 = vadd.f32 %v5025, %v5377
    %v5379 = vpop.f32.mrf.mxu0
    %v5380 = vadd.f32 %v5025, %v5379
    %5381 = vdwg.mxu0
    %5382 = vst [vmem:[#allocation6] sm:$0xff] %v5214
    %5383 = vst [vmem:[#allocation6 + $0x8] sm:$0xff] %v5303
    %5384 = vst [vmem:[#allocation6 + $0x10] sm:$0xff] %v5216
    %5385 = vst [vmem:[#allocation6 + $0x18] sm:$0xff] %v5305
    %5386 = vst [vmem:[#allocation6 + $0x20] sm:$0xff] %v5219
    %5387 = vst [vmem:[#allocation6 + $0x28] sm:$0xff] %v5308
    %5388 = vst [vmem:[#allocation6 + $0x30] sm:$0xff] %v5221
    %5389 = vst [vmem:[#allocation6 + $0x38] sm:$0xff] %v5310
    %5390 = vst [vmem:[#allocation6 + $0x40] sm:$0xff] %v5224
    %5391 = vst [vmem:[#allocation6 + $0x48] sm:$0xff] %v5313
    %5392 = vst [vmem:[#allocation6 + $0x50] sm:$0xff] %v5226
    %5393 = vst [vmem:[#allocation6 + $0x58] sm:$0xff] %v5315
    %5394 = vst [vmem:[#allocation6 + $0x60] sm:$0xff] %v5229
    %5395 = vst [vmem:[#allocation6 + $0x68] sm:$0xff] %v5318
    %5396 = vst [vmem:[#allocation6 + $0x70] sm:$0xff] %v5231
    %5397 = vst [vmem:[#allocation6 + $0x78] sm:$0xff] %v5320
    %5398 = vst [vmem:[#allocation6 + $0x80] sm:$0xff] %v5234
    %5399 = vst [vmem:[#allocation6 + $0x88] sm:$0xff] %v5323
    %5400 = vst [vmem:[#allocation6 + $0x90] sm:$0xff] %v5236
    %5401 = vst [vmem:[#allocation6 + $0x98] sm:$0xff] %v5325
    %5402 = vst [vmem:[#allocation6 + $0xa0] sm:$0xff] %v5239
    %5403 = vst [vmem:[#allocation6 + $0xa8] sm:$0xff] %v5328
    %5404 = vst [vmem:[#allocation6 + $0xb0] sm:$0xff] %v5241
    %5405 = vst [vmem:[#allocation6 + $0xb8] sm:$0xff] %v5330
    %5406 = vst [vmem:[#allocation6 + $0xc0] sm:$0xff] %v5244
    %5407 = vst [vmem:[#allocation6 + $0xc8] sm:$0xff] %v5333
    %5408 = vst [vmem:[#allocation6 + $0xd0] sm:$0xff] %v5246
    %5409 = vst [vmem:[#allocation6 + $0xd8] sm:$0xff] %v5335
    %5410 = vst [vmem:[#allocation6 + $0xe0] sm:$0xff] %v5249
    %5411 = vst [vmem:[#allocation6 + $0xe8] sm:$0xff] %v5338
    %5412 = vst [vmem:[#allocation6 + $0xf0] sm:$0xff] %v5251
    %5413 = vst [vmem:[#allocation6 + $0xf8] sm:$0xff] %v5340
    %5414 = vst [vmem:[#allocation6 + $0x100] sm:$0xff] %v5254
    %5415 = vst [vmem:[#allocation6 + $0x108] sm:$0xff] %v5343
    %5416 = vst [vmem:[#allocation6 + $0x110] sm:$0xff] %v5256
    %5417 = vst [vmem:[#allocation6 + $0x118] sm:$0xff] %v5345
    %5418 = vst [vmem:[#allocation6 + $0x120] sm:$0xff] %v5259
    %5419 = vst [vmem:[#allocation6 + $0x128] sm:$0xff] %v5348
    %5420 = vst [vmem:[#allocation6 + $0x130] sm:$0xff] %v5261
    %5421 = vst [vmem:[#allocation6 + $0x138] sm:$0xff] %v5350
    %5422 = vst [vmem:[#allocation6 + $0x140] sm:$0xff] %v5264
    %5423 = vst [vmem:[#allocation6 + $0x148] sm:$0xff] %v5353
    %5424 = vst [vmem:[#allocation6 + $0x150] sm:$0xff] %v5266
    %5425 = vst [vmem:[#allocation6 + $0x158] sm:$0xff] %v5355
    %5426 = vst [vmem:[#allocation6 + $0x160] sm:$0xff] %v5269
    %5427 = vst [vmem:[#allocation6 + $0x168] sm:$0xff] %v5358
    %5428 = vst [vmem:[#allocation6 + $0x170] sm:$0xff] %v5271
    %5429 = vst [vmem:[#allocation6 + $0x178] sm:$0xff] %v5360
    %5430 = vst [vmem:[#allocation6 + $0x180] sm:$0xff] %v5274
    %5431 = vst [vmem:[#allocation6 + $0x188] sm:$0xff] %v5363
    %5432 = vst [vmem:[#allocation6 + $0x190] sm:$0xff] %v5276
    %5433 = vst [vmem:[#allocation6 + $0x198] sm:$0xff] %v5365
    %5434 = vst [vmem:[#allocation6 + $0x1a0] sm:$0xff] %v5279
    %5435 = vst [vmem:[#allocation6 + $0x1a8] sm:$0xff] %v5368
    %5436 = vst [vmem:[#allocation6 + $0x1b0] sm:$0xff] %v5281
    %5437 = vst [vmem:[#allocation6 + $0x1b8] sm:$0xff] %v5370
    %5438 = vst [vmem:[#allocation6 + $0x1c0] sm:$0xff] %v5284
    %5439 = vst [vmem:[#allocation6 + $0x1c8] sm:$0xff] %v5373
    %5440 = vst [vmem:[#allocation6 + $0x1d0] sm:$0xff] %v5286
    %5441 = vst [vmem:[#allocation6 + $0x1d8] sm:$0xff] %v5375
    %5442 = vst [vmem:[#allocation6 + $0x1e0] sm:$0xff] %v5289
    %5443 = vst [vmem:[#allocation6 + $0x1e8] sm:$0xff] %v5378
    %5444 = vst [vmem:[#allocation6 + $0x1f0] sm:$0xff] %v5291
    %5445 = vst [vmem:[#allocation6 + $0x1f8] sm:$0xff] %v5380
    // Predicated region
    $region34: #{tpu_custom_call.1} parent=1 // pred_check
      _
    $region35: #{tpu_custom_call.1} parent=1 // pred_check_branch
      %5447 = sbr.rel (0) target = $region37
    $region36: #{tpu_custom_call.1} parent=1 // pred_region
      %5449 = vsyncadd [#allocation5], 0
      %s5450 = sshll.u32 [#allocation6], 4
      %s5451 = int_to_ptr.vmem [resolvable:$true] %s5450
      %s5452 = sshll.u32 %s6, 4
      %s5453 = int_to_ptr.hbm [resolvable:$true] %s5452
      %5458 = dma.vmem_to_hbm [thread:$0]  %s5451, 8192, %s5453, [#allocation5], 256, 256, 16
    $region37: #{tpu_custom_call.1} parent=1 // pred_fallthru
      _
    // Predicated region
    $region38: #{tpu_custom_call.1} parent=1 // pred_check
      _
    $region39: #{tpu_custom_call.1} parent=1 // pred_check_branch
      %5460 = sbr.rel (0) target = $region41
    $region40: #{tpu_custom_call.1} parent=1 // pred_region
      %5462 = dma.done [#allocation5], 8192
    $region41: #{tpu_custom_call.1} parent=1 // pred_fallthru
      _
    %5463 = vsyncpa [#allocation4], 1
    %5464 = vsyncpa [#allocation5], 1

// kernel: tpu_custom_call.1
$region0: #{tpu_custom_call.1}
  #allocation0 [shape = 'u32[]', space=smem, size = 0x4, offset = 0x4, fixed_abs, tag = 'smem constant byte address 0x4 - core index']
  #allocation1 [shape = 'u32[72,128]{1,0:T(1,128)}', space=vmem, size = 0x9000, scoped, tag = 'internal scratch']
  #allocation2 [shape = 'bf16[256,128]{1,0:T(8,128)(2,1)}', space=vmem, size = 0x10000, scoped, tag = 'scratch operand']
  %s0 = inlined_call_operand.vmem [shape: s32[256,8], index: 0, kind: input, shape index: {}]
  %s1 = inlined_call_operand.vmem [shape: bf16[256,128], index: 1, kind: input, shape index: {}]
  %s2 = inlined_call_operand.hbm [shape: bf16[128,128], index: 2, kind: input, shape index: {}]
  %s3 = inlined_call_operand.vmem [shape: f32[1,128], index: 3, kind: input, shape index: {}]
  %s4 = inlined_call_operand.vmem [shape: bf16[128,256], index: 4, kind: input, shape index: {}]
  %s5 = inlined_call_operand.vmem [shape: f32[1,256], index: 5, kind: input, shape index: {}]
  %s6 = inlined_call_operand.hbm [shape: f32[256,256], index: 6, kind: output, shape index: {}]
  %s7 = sld [smem:[#allocation0]]
  $region42: #{tpu_custom_call.1} parent=0
    _
  %s9 = ssub.s32 1, %s7
  %s10 = scalar_select 0, %s9, %s7
  $region1: #{tpu_custom_call.1} parent=0
    #allocation3 [shape = 'u8[32768]{0}', space=vmem, size = 0x8000, scoped, tag = 'input window, operand 2, single buffered']
    #allocation4 [shape = 's32[1]{0}', space=sflag, size = 0x4, scoped, tag = 'scoped memory for tpu_custom_call.1']
    #allocation5 [shape = 's32[1]{0}', space=sflag, size = 0x4, scoped, tag = 'scoped memory for tpu_custom_call.1']
    #allocation6 [shape = 'u8[262144]{0}', space=vmem, size = 0x40000, scoped, tag = 'output window, operand 0, single buffered']
    %11 = vsyncpa [#allocation4], 0
    %12 = vsyncpa [#allocation5], 0
    // Predicated region
    $region2: #{tpu_custom_call.1} parent=1 // pred_check
      _
    $region3: #{tpu_custom_call.1} parent=1 // pred_check_branch
      %14 = sbr.rel (0) target = $region5
    $region4: #{tpu_custom_call.1} parent=1 // pred_region
      _
    $region5: #{tpu_custom_call.1} parent=1 // pred_fallthru
      _
    // Predicated region
    $region6: #{tpu_custom_call.1} parent=1 // pred_check
      _
    $region7: #{tpu_custom_call.1} parent=1 // pred_check_branch
      %16 = sbr.rel (0) target = $region9
    $region8: #{tpu_custom_call.1} parent=1 // pred_region
      _
    $region9: #{tpu_custom_call.1} parent=1 // pred_fallthru
      _
    // Predicated region
    $region10: #{tpu_custom_call.1} parent=1 // pred_check
      _
    $region11: #{tpu_custom_call.1} parent=1 // pred_check_branch
      %18 = sbr.rel (0) target = $region13
    $region12: #{tpu_custom_call.1} parent=1 // pred_region
      %20 = vsyncadd [#allocation4], 0
      %s21 = sshll.u32 %s2, 4
      %s22 = int_to_ptr.hbm [resolvable:$true] %s21
      %s23 = sshll.u32 [#allocation3], 4
      %s24 = int_to_ptr.vmem [resolvable:$true] %s23
      %29 = dma.hbm_to_vmem [thread:$0]  %s22, 1024, %s24, [#allocation4], 64, 64, 4
    $region13: #{tpu_custom_call.1} parent=1 // pred_fallthru
      _
    // Predicated region
    $region14: #{tpu_custom_call.1} parent=1 // pred_check
      _
    $region15: #{tpu_custom_call.1} parent=1 // pred_check_branch
      %31 = sbr.rel (0) target = $region17
    $region16: #{tpu_custom_call.1} parent=1 // pred_region
      _
    $region17: #{tpu_custom_call.1} parent=1 // pred_fallthru
      _
    // Predicated region
    $region18: #{tpu_custom_call.1} parent=1 // pred_check
      _
    $region19: #{tpu_custom_call.1} parent=1 // pred_check_branch
      %33 = sbr.rel (0) target = $region21
    $region20: #{tpu_custom_call.1} parent=1 // pred_region
      _
    $region21: #{tpu_custom_call.1} parent=1 // pred_fallthru
      _
    // Predicated region
    $region22: #{tpu_custom_call.1} parent=1 // pred_check
      _
    $region23: #{tpu_custom_call.1} parent=1 // pred_check_branch
      %35 = sbr.rel (0) target = $region25
    $region24: #{tpu_custom_call.1} parent=1 // pred_region
      _
    $region25: #{tpu_custom_call.1} parent=1 // pred_fallthru
      _
    // Predicated region
    $region26: #{tpu_custom_call.1} parent=1 // pred_check
      _
    $region27: #{tpu_custom_call.1} parent=1 // pred_check_branch
      %37 = sbr.rel (0) target = $region29
    $region28: #{tpu_custom_call.1} parent=1 // pred_region
      %39 = dma.done [#allocation4], 1024
    $region29: #{tpu_custom_call.1} parent=1 // pred_fallthru
      _
    %p40 = scmp.eq.s32.totalorder 0, 0
    // Predicated region
    $region30: #{tpu_custom_call.1} parent=1 // pred_check
      %p41 = pneg %p40
    $region31: #{tpu_custom_call.1} parent=1 // pred_check_branch
      %43 = sbr.rel (%p41) target = $region33
    $region32: #{tpu_custom_call.1} parent=1 // pred_region
      %v44 = vld [vmem:[%s0] sm:$0xff]
      %v45 = vld [vmem:[%s0 + $0x8] sm:$0xff]
      %v46 = vld [vmem:[%s0 + $0x10] sm:$0xff]
      %v47 = vld [vmem:[%s0 + $0x18] sm:$0xff]
      %v48 = vld [vmem:[%s0 + $0x20] sm:$0xff]
      %v49 = vld [vmem:[%s0 + $0x28] sm:$0xff]
      %v50 = vld [vmem:[%s0 + $0x30] sm:$0xff]
      %v51 = vld [vmem:[%s0 + $0x38] sm:$0xff]
      %v52 = vld [vmem:[%s0 + $0x40] sm:$0xff]
      %v53 = vld [vmem:[%s0 + $0x48] sm:$0xff]
      %v54 = vld [vmem:[%s0 + $0x50] sm:$0xff]
      %v55 = vld [vmem:[%s0 + $0x58] sm:$0xff]
      %v56 = vld [vmem:[%s0 + $0x60] sm:$0xff]
      %v57 = vld [vmem:[%s0 + $0x68] sm:$0xff]
      %v58 = vld [vmem:[%s0 + $0x70] sm:$0xff]
      %v59 = vld [vmem:[%s0 + $0x78] sm:$0xff]
      %v60 = vld [vmem:[%s0 + $0x80] sm:$0xff]
      %v61 = vld [vmem:[%s0 + $0x88] sm:$0xff]
      %v62 = vld [vmem:[%s0 + $0x90] sm:$0xff]
      %v63 = vld [vmem:[%s0 + $0x98] sm:$0xff]
      %v64 = vld [vmem:[%s0 + $0xa0] sm:$0xff]
      %v65 = vld [vmem:[%s0 + $0xa8] sm:$0xff]
      %v66 = vld [vmem:[%s0 + $0xb0] sm:$0xff]
      %v67 = vld [vmem:[%s0 + $0xb8] sm:$0xff]
      %v68 = vld [vmem:[%s0 + $0xc0] sm:$0xff]
      %v69 = vld [vmem:[%s0 + $0xc8] sm:$0xff]
      %v70 = vld [vmem:[%s0 + $0xd0] sm:$0xff]
      %v71 = vld [vmem:[%s0 + $0xd8] sm:$0xff]
      %v72 = vld [vmem:[%s0 + $0xe0] sm:$0xff]
      %v73 = vld [vmem:[%s0 + $0xe8] sm:$0xff]
      %v74 = vld [vmem:[%s0 + $0xf0] sm:$0xff]
      %v75 = vld [vmem:[%s0 + $0xf8] sm:$0xff]
      %v76 = vlaneseq
      %v77 = vand.u32 %v76, 127
      %v78 = vadd.s32 %v77, 128
      %79 = vset.pattern.permute.xlu0 0
      %80 = vperm.xlu0 %79, %v44
      %v81 = vpop.permute.xlu0 %80
      %82 = vset.pattern.permute.xlu0 0
      %83 = vperm.xlu0 %82, %v45
      %v84 = vpop.permute.xlu0 %83
      %85 = vset.pattern.permute.xlu0 0
      %86 = vperm.xlu0 %85, %v46
      %v87 = vpop.permute.xlu0 %86
      %88 = vset.pattern.permute.xlu0 0
      %89 = vperm.xlu0 %88, %v47
      %v90 = vpop.permute.xlu0 %89
      %91 = vset.pattern.permute.xlu0 0
      %92 = vperm.xlu0 %91, %v48
      %v93 = vpop.permute.xlu0 %92
      %94 = vset.pattern.permute.xlu0 0
      %95 = vperm.xlu0 %94, %v49
      %v96 = vpop.permute.xlu0 %95
      %97 = vset.pattern.permute.xlu0 0
      %98 = vperm.xlu0 %97, %v50
      %v99 = vpop.permute.xlu0 %98
      %100 = vset.pattern.permute.xlu0 0
      %101 = vperm.xlu0 %100, %v51
      %v102 = vpop.permute.xlu0 %101
      %103 = vset.pattern.permute.xlu0 0
      %104 = vperm.xlu0 %103, %v52
      %v105 = vpop.permute.xlu0 %104
      %106 = vset.pattern.permute.xlu0 0
      %107 = vperm.xlu0 %106, %v53
      %v108 = vpop.permute.xlu0 %107
      %109 = vset.pattern.permute.xlu0 0
      %110 = vperm.xlu0 %109, %v54
      %v111 = vpop.permute.xlu0 %110
      %112 = vset.pattern.permute.xlu0 0
      %113 = vperm.xlu0 %112, %v55
      %v114 = vpop.permute.xlu0 %113
      %115 = vset.pattern.permute.xlu0 0
      %116 = vperm.xlu0 %115, %v56
      %v117 = vpop.permute.xlu0 %116
      %118 = vset.pattern.permute.xlu0 0
      %119 = vperm.xlu0 %118, %v57
      %v120 = vpop.permute.xlu0 %119
      %121 = vset.pattern.permute.xlu0 0
      %122 = vperm.xlu0 %121, %v58
      %v123 = vpop.permute.xlu0 %122
      %124 = vset.pattern.permute.xlu0 0
      %125 = vperm.xlu0 %124, %v59
      %v126 = vpop.permute.xlu0 %125
      %127 = vset.pattern.permute.xlu0 0
      %128 = vperm.xlu0 %127, %v60
      %v129 = vpop.permute.xlu0 %128
      %130 = vset.pattern.permute.xlu0 0
      %131 = vperm.xlu0 %130, %v61
      %v132 = vpop.permute.xlu0 %131
      %133 = vset.pattern.permute.xlu0 0
      %134 = vperm.xlu0 %133, %v62
      %v135 = vpop.permute.xlu0 %134
      %136 = vset.pattern.permute.xlu0 0
      %137 = vperm.xlu0 %136, %v63
      %v138 = vpop.permute.xlu0 %137
      %139 = vset.pattern.permute.xlu0 0
      %140 = vperm.xlu0 %139, %v64
      %v141 = vpop.permute.xlu0 %140
      %142 = vset.pattern.permute.xlu0 0
      %143 = vperm.xlu0 %142, %v65
      %v144 = vpop.permute.xlu0 %143
      %145 = vset.pattern.permute.xlu0 0
      %146 = vperm.xlu0 %145, %v66
      %v147 = vpop.permute.xlu0 %146
      %148 = vset.pattern.permute.xlu0 0
      %149 = vperm.xlu0 %148, %v67
      %v150 = vpop.permute.xlu0 %149
      %151 = vset.pattern.permute.xlu0 0
      %152 = vperm.xlu0 %151, %v68
      %v153 = vpop.permute.xlu0 %152
      %154 = vset.pattern.permute.xlu0 0
      %155 = vperm.xlu0 %154, %v69
      %v156 = vpop.permute.xlu0 %155
      %157 = vset.pattern.permute.xlu0 0
      %158 = vperm.xlu0 %157, %v70
      %v159 = vpop.permute.xlu0 %158
      %160 = vset.pattern.permute.xlu0 0
      %161 = vperm.xlu0 %160, %v71
      %v162 = vpop.permute.xlu0 %161
      %163 = vset.pattern.permute.xlu0 0
      %164 = vperm.xlu0 %163, %v72
      %v165 = vpop.permute.xlu0 %164
      %166 = vset.pattern.permute.xlu0 0
      %167 = vperm.xlu0 %166, %v73
      %v168 = vpop.permute.xlu0 %167
      %169 = vset.pattern.permute.xlu0 0
      %170 = vperm.xlu0 %169, %v74
      %v171 = vpop.permute.xlu0 %170
      %172 = vset.pattern.permute.xlu0 0
      %173 = vperm.xlu0 %172, %v75
      %v174 = vpop.permute.xlu0 %173
      %vm175 = vcmp.eq.s32.totalorder %v81, %v77
      %vm176 = vcmp.eq.s32.totalorder %v81, %v78
      %vm177 = vcmp.eq.s32.totalorder %v84, %v77
      %vm178 = vcmp.eq.s32.totalorder %v84, %v78
      %vm179 = vcmp.eq.s32.totalorder %v87, %v77
      %vm180 = vcmp.eq.s32.totalorder %v87, %v78
      %vm181 = vcmp.eq.s32.totalorder %v90, %v77
      %vm182 = vcmp.eq.s32.totalorder %v90, %v78
      %vm183 = vcmp.eq.s32.totalorder %v93, %v77
      %vm184 = vcmp.eq.s32.totalorder %v93, %v78
      %vm185 = vcmp.eq.s32.totalorder %v96, %v77
      %vm186 = vcmp.eq.s32.totalorder %v96, %v78
      %vm187 = vcmp.eq.s32.totalorder %v99, %v77
      %vm188 = vcmp.eq.s32.totalorder %v99, %v78
      %vm189 = vcmp.eq.s32.totalorder %v102, %v77
      %vm190 = vcmp.eq.s32.totalorder %v102, %v78
      %vm191 = vcmp.eq.s32.totalorder %v105, %v77
      %vm192 = vcmp.eq.s32.totalorder %v105, %v78
      %vm193 = vcmp.eq.s32.totalorder %v108, %v77
      %vm194 = vcmp.eq.s32.totalorder %v108, %v78
      %vm195 = vcmp.eq.s32.totalorder %v111, %v77
      %vm196 = vcmp.eq.s32.totalorder %v111, %v78
      %vm197 = vcmp.eq.s32.totalorder %v114, %v77
      %vm198 = vcmp.eq.s32.totalorder %v114, %v78
      %vm199 = vcmp.eq.s32.totalorder %v117, %v77
      %vm200 = vcmp.eq.s32.totalorder %v117, %v78
      %vm201 = vcmp.eq.s32.totalorder %v120, %v77
      %vm202 = vcmp.eq.s32.totalorder %v120, %v78
      %vm203 = vcmp.eq.s32.totalorder %v123, %v77
      %vm204 = vcmp.eq.s32.totalorder %v123, %v78
      %vm205 = vcmp.eq.s32.totalorder %v126, %v77
      %vm206 = vcmp.eq.s32.totalorder %v126, %v78
      %vm207 = vcmp.eq.s32.totalorder %v129, %v77
      %vm208 = vcmp.eq.s32.totalorder %v129, %v78
      %vm209 = vcmp.eq.s32.totalorder %v132, %v77
      %vm210 = vcmp.eq.s32.totalorder %v132, %v78
      %vm211 = vcmp.eq.s32.totalorder %v135, %v77
      %vm212 = vcmp.eq.s32.totalorder %v135, %v78
      %vm213 = vcmp.eq.s32.totalorder %v138, %v77
      %vm214 = vcmp.eq.s32.totalorder %v138, %v78
      %vm215 = vcmp.eq.s32.totalorder %v141, %v77
      %vm216 = vcmp.eq.s32.totalorder %v141, %v78
      %vm217 = vcmp.eq.s32.totalorder %v144, %v77
      %vm218 = vcmp.eq.s32.totalorder %v144, %v78
      %vm219 = vcmp.eq.s32.totalorder %v147, %v77
      %vm220 = vcmp.eq.s32.totalorder %v147, %v78
      %vm221 = vcmp.eq.s32.totalorder %v150, %v77
      %vm222 = vcmp.eq.s32.totalorder %v150, %v78
      %vm223 = vcmp.eq.s32.totalorder %v153, %v77
      %vm224 = vcmp.eq.s32.totalorder %v153, %v78
      %vm225 = vcmp.eq.s32.totalorder %v156, %v77
      %vm226 = vcmp.eq.s32.totalorder %v156, %v78
      %vm227 = vcmp.eq.s32.totalorder %v159, %v77
      %vm228 = vcmp.eq.s32.totalorder %v159, %v78
      %vm229 = vcmp.eq.s32.totalorder %v162, %v77
      %vm230 = vcmp.eq.s32.totalorder %v162, %v78
      %vm231 = vcmp.eq.s32.totalorder %v165, %v77
      %vm232 = vcmp.eq.s32.totalorder %v165, %v78
      %vm233 = vcmp.eq.s32.totalorder %v168, %v77
      %vm234 = vcmp.eq.s32.totalorder %v168, %v78
      %vm235 = vcmp.eq.s32.totalorder %v171, %v77
      %vm236 = vcmp.eq.s32.totalorder %v171, %v78
      %vm237 = vcmp.eq.s32.totalorder %v174, %v77
      %vm238 = vcmp.eq.s32.totalorder %v174, %v78
      %v239 = vsel %vm175, 1, 0
      %v240 = vsel %vm176, 1, 0
      %v241 = vsel %vm177, 1, 0
      %v242 = vsel %vm178, 1, 0
      %v243 = vsel %vm179, 1, 0
      %v244 = vsel %vm180, 1, 0
      %v245 = vsel %vm181, 1, 0
      %v246 = vsel %vm182, 1, 0
      %v247 = vsel %vm183, 1, 0
      %v248 = vsel %vm184, 1, 0
      %v249 = vsel %vm185, 1, 0
      %v250 = vsel %vm186, 1, 0
      %v251 = vsel %vm187, 1, 0
      %v252 = vsel %vm188, 1, 0
      %v253 = vsel %vm189, 1, 0
      %v254 = vsel %vm190, 1, 0
      %v255 = vsel %vm191, 1, 0
      %v256 = vsel %vm192, 1, 0
      %v257 = vsel %vm193, 1, 0
      %v258 = vsel %vm194, 1, 0
      %v259 = vsel %vm195, 1, 0
      %v260 = vsel %vm196, 1, 0
      %v261 = vsel %vm197, 1, 0
      %v262 = vsel %vm198, 1, 0
      %v263 = vsel %vm199, 1, 0
      %v264 = vsel %vm200, 1, 0
      %v265 = vsel %vm201, 1, 0
      %v266 = vsel %vm202, 1, 0
      %v267 = vsel %vm203, 1, 0
      %v268 = vsel %vm204, 1, 0
      %v269 = vsel %vm205, 1, 0
      %v270 = vsel %vm206, 1, 0
      %v271 = vsel %vm207, 1, 0
      %v272 = vsel %vm208, 1, 0
      %v273 = vsel %vm209, 1, 0
      %v274 = vsel %vm210, 1, 0
      %v275 = vsel %vm211, 1, 0
      %v276 = vsel %vm212, 1, 0
      %v277 = vsel %vm213, 1, 0
      %v278 = vsel %vm214, 1, 0
      %v279 = vsel %vm215, 1, 0
      %v280 = vsel %vm216, 1, 0
      %v281 = vsel %vm217, 1, 0
      %v282 = vsel %vm218, 1, 0
      %v283 = vsel %vm219, 1, 0
      %v284 = vsel %vm220, 1, 0
      %v285 = vsel %vm221, 1, 0
      %v286 = vsel %vm222, 1, 0
      %v287 = vsel %vm223, 1, 0
      %v288 = vsel %vm224, 1, 0
      %v289 = vsel %vm225, 1, 0
      %v290 = vsel %vm226, 1, 0
      %v291 = vsel %vm227, 1, 0
      %v292 = vsel %vm228, 1, 0
      %v293 = vsel %vm229, 1, 0
      %v294 = vsel %vm230, 1, 0
      %v295 = vsel %vm231, 1, 0
      %v296 = vsel %vm232, 1, 0
      %v297 = vsel %vm233, 1, 0
      %v298 = vsel %vm234, 1, 0
      %v299 = vsel %vm235, 1, 0
      %v300 = vsel %vm236, 1, 0
      %v301 = vsel %vm237, 1, 0
      %v302 = vsel %vm238, 1, 0
      %v303 = vcvt.s32.f32 %v239
      %v304 = vcvt.s32.f32 %v240
      %v305 = vcvt.s32.f32 %v241
      %v306 = vcvt.s32.f32 %v242
      %v307 = vcvt.s32.f32 %v243
      %v308 = vcvt.s32.f32 %v244
      %v309 = vcvt.s32.f32 %v245
      %v310 = vcvt.s32.f32 %v246
      %v311 = vcvt.s32.f32 %v247
      %v312 = vcvt.s32.f32 %v248
      %v313 = vcvt.s32.f32 %v249
      %v314 = vcvt.s32.f32 %v250
      %v315 = vcvt.s32.f32 %v251
      %v316 = vcvt.s32.f32 %v252
      %v317 = vcvt.s32.f32 %v253
      %v318 = vcvt.s32.f32 %v254
      %v319 = vcvt.s32.f32 %v255
      %v320 = vcvt.s32.f32 %v256
      %v321 = vcvt.s32.f32 %v257
      %v322 = vcvt.s32.f32 %v258
      %v323 = vcvt.s32.f32 %v259
      %v324 = vcvt.s32.f32 %v260
      %v325 = vcvt.s32.f32 %v261
      %v326 = vcvt.s32.f32 %v262
      %v327 = vcvt.s32.f32 %v263
      %v328 = vcvt.s32.f32 %v264
      %v329 = vcvt.s32.f32 %v265
      %v330 = vcvt.s32.f32 %v266
      %v331 = vcvt.s32.f32 %v267
      %v332 = vcvt.s32.f32 %v268
      %v333 = vcvt.s32.f32 %v269
      %v334 = vcvt.s32.f32 %v270
      %v335 = vcvt.s32.f32 %v271
      %v336 = vcvt.s32.f32 %v272
      %v337 = vcvt.s32.f32 %v273
      %v338 = vcvt.s32.f32 %v274
      %v339 = vcvt.s32.f32 %v275
      %v340 = vcvt.s32.f32 %v276
      %v341 = vcvt.s32.f32 %v277
      %v342 = vcvt.s32.f32 %v278
      %v343 = vcvt.s32.f32 %v279
      %v344 = vcvt.s32.f32 %v280
      %v345 = vcvt.s32.f32 %v281
      %v346 = vcvt.s32.f32 %v282
      %v347 = vcvt.s32.f32 %v283
      %v348 = vcvt.s32.f32 %v284
      %v349 = vcvt.s32.f32 %v285
      %v350 = vcvt.s32.f32 %v286
      %v351 = vcvt.s32.f32 %v287
      %v352 = vcvt.s32.f32 %v288
      %v353 = vcvt.s32.f32 %v289
      %v354 = vcvt.s32.f32 %v290
      %v355 = vcvt.s32.f32 %v291
      %v356 = vcvt.s32.f32 %v292
      %v357 = vcvt.s32.f32 %v293
      %v358 = vcvt.s32.f32 %v294
      %v359 = vcvt.s32.f32 %v295
      %v360 = vcvt.s32.f32 %v296
      %v361 = vcvt.s32.f32 %v297
      %v362 = vcvt.s32.f32 %v298
      %v363 = vcvt.s32.f32 %v299
      %v364 = vcvt.s32.f32 %v300
      %v365 = vcvt.s32.f32 %v301
      %v366 = vcvt.s32.f32 %v302
      %v367 = vpack.c.bf16 %v304, %v303
      %v368 = vpack.c.bf16 %v306, %v305
      %v369 = vpack.c.bf16 %v308, %v307
      %v370 = vpack.c.bf16 %v310, %v309
      %v371 = vpack.c.bf16 %v312, %v311
      %v372 = vpack.c.bf16 %v314, %v313
      %v373 = vpack.c.bf16 %v316, %v315
      %v374 = vpack.c.bf16 %v318, %v317
      %v375 = vpack.c.bf16 %v320, %v319
      %v376 = vpack.c.bf16 %v322, %v321
      %v377 = vpack.c.bf16 %v324, %v323
      %v378 = vpack.c.bf16 %v326, %v325
      %v379 = vpack.c.bf16 %v328, %v327
      %v380 = vpack.c.bf16 %v330, %v329
      %v381 = vpack.c.bf16 %v332, %v331
      %v382 = vpack.c.bf16 %v334, %v333
      %v383 = vpack.c.bf16 %v336, %v335
      %v384 = vpack.c.bf16 %v338, %v337
      %v385 = vpack.c.bf16 %v340, %v339
      %v386 = vpack.c.bf16 %v342, %v341
      %v387 = vpack.c.bf16 %v344, %v343
      %v388 = vpack.c.bf16 %v346, %v345
      %v389 = vpack.c.bf16 %v348, %v347
      %v390 = vpack.c.bf16 %v350, %v349
      %v391 = vpack.c.bf16 %v352, %v351
      %v392 = vpack.c.bf16 %v354, %v353
      %v393 = vpack.c.bf16 %v356, %v355
      %v394 = vpack.c.bf16 %v358, %v357
      %v395 = vpack.c.bf16 %v360, %v359
      %v396 = vpack.c.bf16 %v362, %v361
      %v397 = vpack.c.bf16 %v364, %v363
      %v398 = vpack.c.bf16 %v366, %v365
      %v399 = vunpack.c.l.bf16 %v367
      %v400 = vunpack.c.h.bf16 %v367
      %v401 = vunpack.c.l.bf16 %v368
      %v402 = vunpack.c.h.bf16 %v368
      %v403 = vunpack.c.l.bf16 %v369
      %v404 = vunpack.c.h.bf16 %v369
      %v405 = vunpack.c.l.bf16 %v370
      %v406 = vunpack.c.h.bf16 %v370
      %v407 = vunpack.c.l.bf16 %v371
      %v408 = vunpack.c.h.bf16 %v371
      %v409 = vunpack.c.l.bf16 %v372
      %v410 = vunpack.c.h.bf16 %v372
      %v411 = vunpack.c.l.bf16 %v373
      %v412 = vunpack.c.h.bf16 %v373
      %v413 = vunpack.c.l.bf16 %v374
      %v414 = vunpack.c.h.bf16 %v374
      %v415 = vunpack.c.l.bf16 %v375
      %v416 = vunpack.c.h.bf16 %v375
      %v417 = vunpack.c.l.bf16 %v376
      %v418 = vunpack.c.h.bf16 %v376
      %v419 = vunpack.c.l.bf16 %v377
      %v420 = vunpack.c.h.bf16 %v377
      %v421 = vunpack.c.l.bf16 %v378
      %v422 = vunpack.c.h.bf16 %v378
      %v423 = vunpack.c.l.bf16 %v379
      %v424 = vunpack.c.h.bf16 %v379
      %v425 = vunpack.c.l.bf16 %v380
      %v426 = vunpack.c.h.bf16 %v380
      %v427 = vunpack.c.l.bf16 %v381
      %v428 = vunpack.c.h.bf16 %v381
      %v429 = vunpack.c.l.bf16 %v382
      %v430 = vunpack.c.h.bf16 %v382
      %v431 = vunpack.c.l.bf16 %v383
      %v432 = vunpack.c.h.bf16 %v383
      %v433 = vunpack.c.l.bf16 %v384
      %v434 = vunpack.c.h.bf16 %v384
      %v435 = vunpack.c.l.bf16 %v385
      %v436 = vunpack.c.h.bf16 %v385
      %v437 = vunpack.c.l.bf16 %v386
      %v438 = vunpack.c.h.bf16 %v386
      %v439 = vunpack.c.l.bf16 %v387
      %v440 = vunpack.c.h.bf16 %v387
      %v441 = vunpack.c.l.bf16 %v388
      %v442 = vunpack.c.h.bf16 %v388
      %v443 = vunpack.c.l.bf16 %v389
      %v444 = vunpack.c.h.bf16 %v389
      %v445 = vunpack.c.l.bf16 %v390
      %v446 = vunpack.c.h.bf16 %v390
      %v447 = vunpack.c.l.bf16 %v391
      %v448 = vunpack.c.h.bf16 %v391
      %v449 = vunpack.c.l.bf16 %v392
      %v450 = vunpack.c.h.bf16 %v392
      %v451 = vunpack.c.l.bf16 %v393
      %v452 = vunpack.c.h.bf16 %v393
      %v453 = vunpack.c.l.bf16 %v394
      %v454 = vunpack.c.h.bf16 %v394
      %v455 = vunpack.c.l.bf16 %v395
      %v456 = vunpack.c.h.bf16 %v395
      %v457 = vunpack.c.l.bf16 %v396
      %v458 = vunpack.c.h.bf16 %v396
      %v459 = vunpack.c.l.bf16 %v397
      %v460 = vunpack.c.h.bf16 %v397
      %v461 = vunpack.c.l.bf16 %v398
      %v462 = vunpack.c.h.bf16 %v398
      %v463 = vadd.f32 %v399, 0.0
      %v464 = vadd.f32 %v400, 0.0
      %v465 = vadd.f32 %v401, 0.0
      %v466 = vadd.f32 %v402, 0.0
      %v467 = vadd.f32 %v403, 0.0
      %v468 = vadd.f32 %v404, 0.0
      %v469 = vadd.f32 %v405, 0.0
      %v470 = vadd.f32 %v406, 0.0
      %v471 = vadd.f32 %v407, 0.0
      %v472 = vadd.f32 %v408, 0.0
      %v473 = vadd.f32 %v409, 0.0
      %v474 = vadd.f32 %v410, 0.0
      %v475 = vadd.f32 %v411, 0.0
      %v476 = vadd.f32 %v412, 0.0
      %v477 = vadd.f32 %v413, 0.0
      %v478 = vadd.f32 %v414, 0.0
      %v479 = vadd.f32 %v415, 0.0
      %v480 = vadd.f32 %v416, 0.0
      %v481 = vadd.f32 %v417, 0.0
      %v482 = vadd.f32 %v418, 0.0
      %v483 = vadd.f32 %v419, 0.0
      %v484 = vadd.f32 %v420, 0.0
      %v485 = vadd.f32 %v421, 0.0
      %v486 = vadd.f32 %v422, 0.0
      %v487 = vadd.f32 %v423, 0.0
      %v488 = vadd.f32 %v424, 0.0
      %v489 = vadd.f32 %v425, 0.0
      %v490 = vadd.f32 %v426, 0.0
      %v491 = vadd.f32 %v427, 0.0
      %v492 = vadd.f32 %v428, 0.0
      %v493 = vadd.f32 %v429, 0.0
      %v494 = vadd.f32 %v430, 0.0
      %v495 = vadd.f32 %v431, 0.0
      %v496 = vadd.f32 %v432, 0.0
      %v497 = vadd.f32 %v433, 0.0
      %v498 = vadd.f32 %v434, 0.0
      %v499 = vadd.f32 %v435, 0.0
      %v500 = vadd.f32 %v436, 0.0
      %v501 = vadd.f32 %v437, 0.0
      %v502 = vadd.f32 %v438, 0.0
      %v503 = vadd.f32 %v439, 0.0
      %v504 = vadd.f32 %v440, 0.0
      %v505 = vadd.f32 %v441, 0.0
      %v506 = vadd.f32 %v442, 0.0
      %v507 = vadd.f32 %v443, 0.0
      %v508 = vadd.f32 %v444, 0.0
      %v509 = vadd.f32 %v445, 0.0
      %v510 = vadd.f32 %v446, 0.0
      %v511 = vadd.f32 %v447, 0.0
      %v512 = vadd.f32 %v448, 0.0
      %v513 = vadd.f32 %v449, 0.0
      %v514 = vadd.f32 %v450, 0.0
      %v515 = vadd.f32 %v451, 0.0
      %v516 = vadd.f32 %v452, 0.0
      %v517 = vadd.f32 %v453, 0.0
      %v518 = vadd.f32 %v454, 0.0
      %v519 = vadd.f32 %v455, 0.0
      %v520 = vadd.f32 %v456, 0.0
      %v521 = vadd.f32 %v457, 0.0
      %v522 = vadd.f32 %v458, 0.0
      %v523 = vadd.f32 %v459, 0.0
      %v524 = vadd.f32 %v460, 0.0
      %v525 = vadd.f32 %v461, 0.0
      %v526 = vadd.f32 %v462, 0.0
      %v527 = vpack.c.bf16 %v464, %v463
      %v528 = vpack.c.bf16 %v466, %v465
      %v529 = vpack.c.bf16 %v468, %v467
      %v530 = vpack.c.bf16 %v470, %v469
      %v531 = vpack.c.bf16 %v472, %v471
      %v532 = vpack.c.bf16 %v474, %v473
      %v533 = vpack.c.bf16 %v476, %v475
      %v534 = vpack.c.bf16 %v478, %v477
      %v535 = vpack.c.bf16 %v480, %v479
      %v536 = vpack.c.bf16 %v482, %v481
      %v537 = vpack.c.bf16 %v484, %v483
      %v538 = vpack.c.bf16 %v486, %v485
      %v539 = vpack.c.bf16 %v488, %v487
      %v540 = vpack.c.bf16 %v490, %v489
      %v541 = vpack.c.bf16 %v492, %v491
      %v542 = vpack.c.bf16 %v494, %v493
      %v543 = vpack.c.bf16 %v496, %v495
      %v544 = vpack.c.bf16 %v498, %v497
      %v545 = vpack.c.bf16 %v500, %v499
      %v546 = vpack.c.bf16 %v502, %v501
      %v547 = vpack.c.bf16 %v504, %v503
      %v548 = vpack.c.bf16 %v506, %v505
      %v549 = vpack.c.bf16 %v508, %v507
      %v550 = vpack.c.bf16 %v510, %v509
      %v551 = vpack.c.bf16 %v512, %v511
      %v552 = vpack.c.bf16 %v514, %v513
      %v553 = vpack.c.bf16 %v516, %v515
      %v554 = vpack.c.bf16 %v518, %v517
      %v555 = vpack.c.bf16 %v520, %v519
      %v556 = vpack.c.bf16 %v522, %v521
      %v557 = vpack.c.bf16 %v524, %v523
      %v558 = vpack.c.bf16 %v526, %v525
      %559 = vset.pattern.permute.xlu0 1
      %560 = vperm.xlu0 %559, %v44
      %v561 = vpop.permute.xlu0 %560
      %562 = vset.pattern.permute.xlu0 1
      %563 = vperm.xlu0 %562, %v45
      %v564 = vpop.permute.xlu0 %563
      %565 = vset.pattern.permute.xlu0 1
      %566 = vperm.xlu0 %565, %v46
      %v567 = vpop.permute.xlu0 %566
      %568 = vset.pattern.permute.xlu0 1
      %569 = vperm.xlu0 %568, %v47
      %v570 = vpop.permute.xlu0 %569
      %571 = vset.pattern.permute.xlu0 1
      %572 = vperm.xlu0 %571, %v48
      %v573 = vpop.permute.xlu0 %572
      %574 = vset.pattern.permute.xlu0 1
      %575 = vperm.xlu0 %574, %v49
      %v576 = vpop.permute.xlu0 %575
      %577 = vset.pattern.permute.xlu0 1
      %578 = vperm.xlu0 %577, %v50
      %v579 = vpop.permute.xlu0 %578
      %580 = vset.pattern.permute.xlu0 1
      %581 = vperm.xlu0 %580, %v51
      %v582 = vpop.permute.xlu0 %581
      %583 = vset.pattern.permute.xlu0 1
      %584 = vperm.xlu0 %583, %v52
      %v585 = vpop.permute.xlu0 %584
      %586 = vset.pattern.permute.xlu0 1
      %587 = vperm.xlu0 %586, %v53
      %v588 = vpop.permute.xlu0 %587
      %589 = vset.pattern.permute.xlu0 1
      %590 = vperm.xlu0 %589, %v54
      %v591 = vpop.permute.xlu0 %590
      %592 = vset.pattern.permute.xlu0 1
      %593 = vperm.xlu0 %592, %v55
      %v594 = vpop.permute.xlu0 %593
      %595 = vset.pattern.permute.xlu0 1
      %596 = vperm.xlu0 %595, %v56
      %v597 = vpop.permute.xlu0 %596
      %598 = vset.pattern.permute.xlu0 1
      %599 = vperm.xlu0 %598, %v57
      %v600 = vpop.permute.xlu0 %599
      %601 = vset.pattern.permute.xlu0 1
      %602 = vperm.xlu0 %601, %v58
      %v603 = vpop.permute.xlu0 %602
      %604 = vset.pattern.permute.xlu0 1
      %605 = vperm.xlu0 %604, %v59
      %v606 = vpop.permute.xlu0 %605
      %607 = vset.pattern.permute.xlu0 1
      %608 = vperm.xlu0 %607, %v60
      %v609 = vpop.permute.xlu0 %608
      %610 = vset.pattern.permute.xlu0 1
      %611 = vperm.xlu0 %610, %v61
      %v612 = vpop.permute.xlu0 %611
      %613 = vset.pattern.permute.xlu0 1
      %614 = vperm.xlu0 %613, %v62
      %v615 = vpop.permute.xlu0 %614
      %616 = vset.pattern.permute.xlu0 1
      %617 = vperm.xlu0 %616, %v63
      %v618 = vpop.permute.xlu0 %617
      %619 = vset.pattern.permute.xlu0 1
      %620 = vperm.xlu0 %619, %v64
      %v621 = vpop.permute.xlu0 %620
      %622 = vset.pattern.permute.xlu0 1
      %623 = vperm.xlu0 %622, %v65
      %v624 = vpop.permute.xlu0 %623
      %625 = vset.pattern.permute.xlu0 1
      %626 = vperm.xlu0 %625, %v66
      %v627 = vpop.permute.xlu0 %626
      %628 = vset.pattern.permute.xlu0 1
      %629 = vperm.xlu0 %628, %v67
      %v630 = vpop.permute.xlu0 %629
      %631 = vset.pattern.permute.xlu0 1
      %632 = vperm.xlu0 %631, %v68
      %v633 = vpop.permute.xlu0 %632
      %634 = vset.pattern.permute.xlu0 1
      %635 = vperm.xlu0 %634, %v69
      %v636 = vpop.permute.xlu0 %635
      %637 = vset.pattern.permute.xlu0 1
      %638 = vperm.xlu0 %637, %v70
      %v639 = vpop.permute.xlu0 %638
      %640 = vset.pattern.permute.xlu0 1
      %641 = vperm.xlu0 %640, %v71
      %v642 = vpop.permute.xlu0 %641
      %643 = vset.pattern.permute.xlu0 1
      %644 = vperm.xlu0 %643, %v72
      %v645 = vpop.permute.xlu0 %644
      %646 = vset.pattern.permute.xlu0 1
      %647 = vperm.xlu0 %646, %v73
      %v648 = vpop.permute.xlu0 %647
      %649 = vset.pattern.permute.xlu0 1
      %650 = vperm.xlu0 %649, %v74
      %v651 = vpop.permute.xlu0 %650
      %652 = vset.pattern.permute.xlu0 1
      %653 = vperm.xlu0 %652, %v75
      %v654 = vpop.permute.xlu0 %653
      %vm655 = vcmp.eq.s32.totalorder %v561, %v77
      %vm656 = vcmp.eq.s32.totalorder %v561, %v78
      %vm657 = vcmp.eq.s32.totalorder %v564, %v77
      %vm658 = vcmp.eq.s32.totalorder %v564, %v78
      %vm659 = vcmp.eq.s32.totalorder %v567, %v77
      %vm660 = vcmp.eq.s32.totalorder %v567, %v78
      %vm661 = vcmp.eq.s32.totalorder %v570, %v77
      %vm662 = vcmp.eq.s32.totalorder %v570, %v78
      %vm663 = vcmp.eq.s32.totalorder %v573, %v77
      %vm664 = vcmp.eq.s32.totalorder %v573, %v78
      %vm665 = vcmp.eq.s32.totalorder %v576, %v77
      %vm666 = vcmp.eq.s32.totalorder %v576, %v78
      %vm667 = vcmp.eq.s32.totalorder %v579, %v77
      %vm668 = vcmp.eq.s32.totalorder %v579, %v78
      %vm669 = vcmp.eq.s32.totalorder %v582, %v77
      %vm670 = vcmp.eq.s32.totalorder %v582, %v78
      %vm671 = vcmp.eq.s32.totalorder %v585, %v77
      %vm672 = vcmp.eq.s32.totalorder %v585, %v78
      %vm673 = vcmp.eq.s32.totalorder %v588, %v77
      %vm674 = vcmp.eq.s32.totalorder %v588, %v78
      %vm675 = vcmp.eq.s32.totalorder %v591, %v77
      %vm676 = vcmp.eq.s32.totalorder %v591, %v78
      %vm677 = vcmp.eq.s32.totalorder %v594, %v77
      %vm678 = vcmp.eq.s32.totalorder %v594, %v78
      %vm679 = vcmp.eq.s32.totalorder %v597, %v77
      %vm680 = vcmp.eq.s32.totalorder %v597, %v78
      %vm681 = vcmp.eq.s32.totalorder %v600, %v77
      %vm682 = vcmp.eq.s32.totalorder %v600, %v78
      %vm683 = vcmp.eq.s32.totalorder %v603, %v77
      %vm684 = vcmp.eq.s32.totalorder %v603, %v78
      %vm685 = vcmp.eq.s32.totalorder %v606, %v77
      %vm686 = vcmp.eq.s32.totalorder %v606, %v78
      %vm687 = vcmp.eq.s32.totalorder %v609, %v77
      %vm688 = vcmp.eq.s32.totalorder %v609, %v78
      %vm689 = vcmp.eq.s32.totalorder %v612, %v77
      %vm690 = vcmp.eq.s32.totalorder %v612, %v78
      %vm691 = vcmp.eq.s32.totalorder %v615, %v77
      %vm692 = vcmp.eq.s32.totalorder %v615, %v78
      %vm693 = vcmp.eq.s32.totalorder %v618, %v77
      %vm694 = vcmp.eq.s32.totalorder %v618, %v78
      %vm695 = vcmp.eq.s32.totalorder %v621, %v77
      %vm696 = vcmp.eq.s32.totalorder %v621, %v78
      %vm697 = vcmp.eq.s32.totalorder %v624, %v77
      %vm698 = vcmp.eq.s32.totalorder %v624, %v78
      %vm699 = vcmp.eq.s32.totalorder %v627, %v77
      %vm700 = vcmp.eq.s32.totalorder %v627, %v78
      %vm701 = vcmp.eq.s32.totalorder %v630, %v77
      %vm702 = vcmp.eq.s32.totalorder %v630, %v78
      %vm703 = vcmp.eq.s32.totalorder %v633, %v77
      %vm704 = vcmp.eq.s32.totalorder %v633, %v78
      %vm705 = vcmp.eq.s32.totalorder %v636, %v77
      %vm706 = vcmp.eq.s32.totalorder %v636, %v78
      %vm707 = vcmp.eq.s32.totalorder %v639, %v77
      %vm708 = vcmp.eq.s32.totalorder %v639, %v78
      %vm709 = vcmp.eq.s32.totalorder %v642, %v77
      %vm710 = vcmp.eq.s32.totalorder %v642, %v78
      %vm711 = vcmp.eq.s32.totalorder %v645, %v77
      %vm712 = vcmp.eq.s32.totalorder %v645, %v78
      %vm713 = vcmp.eq.s32.totalorder %v648, %v77
      %vm714 = vcmp.eq.s32.totalorder %v648, %v78
      %vm715 = vcmp.eq.s32.totalorder %v651, %v77
      %vm716 = vcmp.eq.s32.totalorder %v651, %v78
      %vm717 = vcmp.eq.s32.totalorder %v654, %v77
      %vm718 = vcmp.eq.s32.totalorder %v654, %v78
      %v719 = vsel %vm655, 1, 0
      %v720 = vsel %vm656, 1, 0
      %v721 = vsel %vm657, 1, 0
      %v722 = vsel %vm658, 1, 0
      %v723 = vsel %vm659, 1, 0
      %v724 = vsel %vm660, 1, 0
      %v725 = vsel %vm661, 1, 0
      %v726 = vsel %vm662, 1, 0
      %v727 = vsel %vm663, 1, 0
      %v728 = vsel %vm664, 1, 0
      %v729 = vsel %vm665, 1, 0
      %v730 = vsel %vm666, 1, 0
      %v731 = vsel %vm667, 1, 0
      %v732 = vsel %vm668, 1, 0
      %v733 = vsel %vm669, 1, 0
      %v734 = vsel %vm670, 1, 0
      %v735 = vsel %vm671, 1, 0
      %v736 = vsel %vm672, 1, 0
      %v737 = vsel %vm673, 1, 0
      %v738 = vsel %vm674, 1, 0
      %v739 = vsel %vm675, 1, 0
      %v740 = vsel %vm676, 1, 0
      %v741 = vsel %vm677, 1, 0
      %v742 = vsel %vm678, 1, 0
      %v743 = vsel %vm679, 1, 0
      %v744 = vsel %vm680, 1, 0
      %v745 = vsel %vm681, 1, 0
      %v746 = vsel %vm682, 1, 0
      %v747 = vsel %vm683, 1, 0
      %v748 = vsel %vm684, 1, 0
      %v749 = vsel %vm685, 1, 0
      %v750 = vsel %vm686, 1, 0
      %v751 = vsel %vm687, 1, 0
      %v752 = vsel %vm688, 1, 0
      %v753 = vsel %vm689, 1, 0
      %v754 = vsel %vm690, 1, 0
      %v755 = vsel %vm691, 1, 0
      %v756 = vsel %vm692, 1, 0
      %v757 = vsel %vm693, 1, 0
      %v758 = vsel %vm694, 1, 0
      %v759 = vsel %vm695, 1, 0
      %v760 = vsel %vm696, 1, 0
      %v761 = vsel %vm697, 1, 0
      %v762 = vsel %vm698, 1, 0
      %v763 = vsel %vm699, 1, 0
      %v764 = vsel %vm700, 1, 0
      %v765 = vsel %vm701, 1, 0
      %v766 = vsel %vm702, 1, 0
      %v767 = vsel %vm703, 1, 0
      %v768 = vsel %vm704, 1, 0
      %v769 = vsel %vm705, 1, 0
      %v770 = vsel %vm706, 1, 0
      %v771 = vsel %vm707, 1, 0
      %v772 = vsel %vm708, 1, 0
      %v773 = vsel %vm709, 1, 0
      %v774 = vsel %vm710, 1, 0
      %v775 = vsel %vm711, 1, 0
      %v776 = vsel %vm712, 1, 0
      %v777 = vsel %vm713, 1, 0
      %v778 = vsel %vm714, 1, 0
      %v779 = vsel %vm715, 1, 0
      %v780 = vsel %vm716, 1, 0
      %v781 = vsel %vm717, 1, 0
      %v782 = vsel %vm718, 1, 0
      %v783 = vcvt.s32.f32 %v719
      %v784 = vcvt.s32.f32 %v720
      %v785 = vcvt.s32.f32 %v721
      %v786 = vcvt.s32.f32 %v722
      %v787 = vcvt.s32.f32 %v723
      %v788 = vcvt.s32.f32 %v724
      %v789 = vcvt.s32.f32 %v725
      %v790 = vcvt.s32.f32 %v726
      %v791 = vcvt.s32.f32 %v727
      %v792 = vcvt.s32.f32 %v728
      %v793 = vcvt.s32.f32 %v729
      %v794 = vcvt.s32.f32 %v730
      %v795 = vcvt.s32.f32 %v731
      %v796 = vcvt.s32.f32 %v732
      %v797 = vcvt.s32.f32 %v733
      %v798 = vcvt.s32.f32 %v734
      %v799 = vcvt.s32.f32 %v735
      %v800 = vcvt.s32.f32 %v736
      %v801 = vcvt.s32.f32 %v737
      %v802 = vcvt.s32.f32 %v738
      %v803 = vcvt.s32.f32 %v739
      %v804 = vcvt.s32.f32 %v740
      %v805 = vcvt.s32.f32 %v741
      %v806 = vcvt.s32.f32 %v742
      %v807 = vcvt.s32.f32 %v743
      %v808 = vcvt.s32.f32 %v744
      %v809 = vcvt.s32.f32 %v745
      %v810 = vcvt.s32.f32 %v746
      %v811 = vcvt.s32.f32 %v747
      %v812 = vcvt.s32.f32 %v748
      %v813 = vcvt.s32.f32 %v749
      %v814 = vcvt.s32.f32 %v750
      %v815 = vcvt.s32.f32 %v751
      %v816 = vcvt.s32.f32 %v752
      %v817 = vcvt.s32.f32 %v753
      %v818 = vcvt.s32.f32 %v754
      %v819 = vcvt.s32.f32 %v755
      %v820 = vcvt.s32.f32 %v756
      %v821 = vcvt.s32.f32 %v757
      %v822 = vcvt.s32.f32 %v758
      %v823 = vcvt.s32.f32 %v759
      %v824 = vcvt.s32.f32 %v760
      %v825 = vcvt.s32.f32 %v761
      %v826 = vcvt.s32.f32 %v762
      %v827 = vcvt.s32.f32 %v763
      %v828 = vcvt.s32.f32 %v764
      %v829 = vcvt.s32.f32 %v765
      %v830 = vcvt.s32.f32 %v766
      %v831 = vcvt.s32.f32 %v767
      %v832 = vcvt.s32.f32 %v768
      %v833 = vcvt.s32.f32 %v769
      %v834 = vcvt.s32.f32 %v770
      %v835 = vcvt.s32.f32 %v771
      %v836 = vcvt.s32.f32 %v772
      %v837 = vcvt.s32.f32 %v773
      %v838 = vcvt.s32.f32 %v774
      %v839 = vcvt.s32.f32 %v775
      %v840 = vcvt.s32.f32 %v776
      %v841 = vcvt.s32.f32 %v777
      %v842 = vcvt.s32.f32 %v778
      %v843 = vcvt.s32.f32 %v779
      %v844 = vcvt.s32.f32 %v780
      %v845 = vcvt.s32.f32 %v781
      %v846 = vcvt.s32.f32 %v782
      %v847 = vpack.c.bf16 %v784, %v783
      %v848 = vpack.c.bf16 %v786, %v785
      %v849 = vpack.c.bf16 %v788, %v787
      %v850 = vpack.c.bf16 %v790, %v789
      %v851 = vpack.c.bf16 %v792, %v791
      %v852 = vpack.c.bf16 %v794, %v793
      %v853 = vpack.c.bf16 %v796, %v795
      %v854 = vpack.c.bf16 %v798, %v797
      %v855 = vpack.c.bf16 %v800, %v799
      %v856 = vpack.c.bf16 %v802, %v801
      %v857 = vpack.c.bf16 %v804, %v803
      %v858 = vpack.c.bf16 %v806, %v805
      %v859 = vpack.c.bf16 %v808, %v807
      %v860 = vpack.c.bf16 %v810, %v809
      %v861 = vpack.c.bf16 %v812, %v811
      %v862 = vpack.c.bf16 %v814, %v813
      %v863 = vpack.c.bf16 %v816, %v815
      %v864 = vpack.c.bf16 %v818, %v817
      %v865 = vpack.c.bf16 %v820, %v819
      %v866 = vpack.c.bf16 %v822, %v821
      %v867 = vpack.c.bf16 %v824, %v823
      %v868 = vpack.c.bf16 %v826, %v825
      %v869 = vpack.c.bf16 %v828, %v827
      %v870 = vpack.c.bf16 %v830, %v829
      %v871 = vpack.c.bf16 %v832, %v831
      %v872 = vpack.c.bf16 %v834, %v833
      %v873 = vpack.c.bf16 %v836, %v835
      %v874 = vpack.c.bf16 %v838, %v837
      %v875 = vpack.c.bf16 %v840, %v839
      %v876 = vpack.c.bf16 %v842, %v841
      %v877 = vpack.c.bf16 %v844, %v843
      %v878 = vpack.c.bf16 %v846, %v845
      %v879 = vunpack.c.l.bf16 %v527
      %v880 = vunpack.c.h.bf16 %v527
      %v881 = vunpack.c.l.bf16 %v528
      %v882 = vunpack.c.h.bf16 %v528
      %v883 = vunpack.c.l.bf16 %v529
      %v884 = vunpack.c.h.bf16 %v529
      %v885 = vunpack.c.l.bf16 %v530
      %v886 = vunpack.c.h.bf16 %v530
      %v887 = vunpack.c.l.bf16 %v531
      %v888 = vunpack.c.h.bf16 %v531
      %v889 = vunpack.c.l.bf16 %v532
      %v890 = vunpack.c.h.bf16 %v532
      %v891 = vunpack.c.l.bf16 %v533
      %v892 = vunpack.c.h.bf16 %v533
      %v893 = vunpack.c.l.bf16 %v534
      %v894 = vunpack.c.h.bf16 %v534
      %v895 = vunpack.c.l.bf16 %v535
      %v896 = vunpack.c.h.bf16 %v535
      %v897 = vunpack.c.l.bf16 %v536
      %v898 = vunpack.c.h.bf16 %v536
      %v899 = vunpack.c.l.bf16 %v537
      %v900 = vunpack.c.h.bf16 %v537
      %v901 = vunpack.c.l.bf16 %v538
      %v902 = vunpack.c.h.bf16 %v538
      %v903 = vunpack.c.l.bf16 %v539
      %v904 = vunpack.c.h.bf16 %v539
      %v905 = vunpack.c.l.bf16 %v540
      %v906 = vunpack.c.h.bf16 %v540
      %v907 = vunpack.c.l.bf16 %v541
      %v908 = vunpack.c.h.bf16 %v541
      %v909 = vunpack.c.l.bf16 %v542
      %v910 = vunpack.c.h.bf16 %v542
      %v911 = vunpack.c.l.bf16 %v543
      %v912 = vunpack.c.h.bf16 %v543
      %v913 = vunpack.c.l.bf16 %v544
      %v914 = vunpack.c.h.bf16 %v544
      %v915 = vunpack.c.l.bf16 %v545
      %v916 = vunpack.c.h.bf16 %v545
      %v917 = vunpack.c.l.bf16 %v546
      %v918 = vunpack.c.h.bf16 %v546
      %v919 = vunpack.c.l.bf16 %v547
      %v920 = vunpack.c.h.bf16 %v547
      %v921 = vunpack.c.l.bf16 %v548
      %v922 = vunpack.c.h.bf16 %v548
      %v923 = vunpack.c.l.bf16 %v549
      %v924 = vunpack.c.h.bf16 %v549
      %v925 = vunpack.c.l.bf16 %v550
      %v926 = vunpack.c.h.bf16 %v550
      %v927 = vunpack.c.l.bf16 %v551
      %v928 = vunpack.c.h.bf16 %v551
      %v929 = vunpack.c.l.bf16 %v552
      %v930 = vunpack.c.h.bf16 %v552
      %v931 = vunpack.c.l.bf16 %v553
      %v932 = vunpack.c.h.bf16 %v553
      %v933 = vunpack.c.l.bf16 %v554
      %v934 = vunpack.c.h.bf16 %v554
      %v935 = vunpack.c.l.bf16 %v555
      %v936 = vunpack.c.h.bf16 %v555
      %v937 = vunpack.c.l.bf16 %v556
      %v938 = vunpack.c.h.bf16 %v556
      %v939 = vunpack.c.l.bf16 %v557
      %v940 = vunpack.c.h.bf16 %v557
      %v941 = vunpack.c.l.bf16 %v558
      %v942 = vunpack.c.h.bf16 %v558
      %v943 = vunpack.c.l.bf16 %v847
      %v944 = vunpack.c.h.bf16 %v847
      %v945 = vunpack.c.l.bf16 %v848
      %v946 = vunpack.c.h.bf16 %v848
      %v947 = vunpack.c.l.bf16 %v849
      %v948 = vunpack.c.h.bf16 %v849
      %v949 = vunpack.c.l.bf16 %v850
      %v950 = vunpack.c.h.bf16 %v850
      %v951 = vunpack.c.l.bf16 %v851
      %v952 = vunpack.c.h.bf16 %v851
      %v953 = vunpack.c.l.bf16 %v852
      %v954 = vunpack.c.h.bf16 %v852
      %v955 = vunpack.c.l.bf16 %v853
      %v956 = vunpack.c.h.bf16 %v853
      %v957 = vunpack.c.l.bf16 %v854
      %v958 = vunpack.c.h.bf16 %v854
      %v959 = vunpack.c.l.bf16 %v855
      %v960 = vunpack.c.h.bf16 %v855
      %v961 = vunpack.c.l.bf16 %v856
      %v962 = vunpack.c.h.bf16 %v856
      %v963 = vunpack.c.l.bf16 %v857
      %v964 = vunpack.c.h.bf16 %v857
      %v965 = vunpack.c.l.bf16 %v858
      %v966 = vunpack.c.h.bf16 %v858
      %v967 = vunpack.c.l.bf16 %v859
      %v968 = vunpack.c.h.bf16 %v859
      %v969 = vunpack.c.l.bf16 %v860
      %v970 = vunpack.c.h.bf16 %v860
      %v971 = vunpack.c.l.bf16 %v861
      %v972 = vunpack.c.h.bf16 %v861
      %v973 = vunpack.c.l.bf16 %v862
      %v974 = vunpack.c.h.bf16 %v862
      %v975 = vunpack.c.l.bf16 %v863
      %v976 = vunpack.c.h.bf16 %v863
      %v977 = vunpack.c.l.bf16 %v864
      %v978 = vunpack.c.h.bf16 %v864
      %v979 = vunpack.c.l.bf16 %v865
      %v980 = vunpack.c.h.bf16 %v865
      %v981 = vunpack.c.l.bf16 %v866
      %v982 = vunpack.c.h.bf16 %v866
      %v983 = vunpack.c.l.bf16 %v867
      %v984 = vunpack.c.h.bf16 %v867
      %v985 = vunpack.c.l.bf16 %v868
      %v986 = vunpack.c.h.bf16 %v868
      %v987 = vunpack.c.l.bf16 %v869
      %v988 = vunpack.c.h.bf16 %v869
      %v989 = vunpack.c.l.bf16 %v870
      %v990 = vunpack.c.h.bf16 %v870
      %v991 = vunpack.c.l.bf16 %v871
      %v992 = vunpack.c.h.bf16 %v871
      %v993 = vunpack.c.l.bf16 %v872
      %v994 = vunpack.c.h.bf16 %v872
      %v995 = vunpack.c.l.bf16 %v873
      %v996 = vunpack.c.h.bf16 %v873
      %v997 = vunpack.c.l.bf16 %v874
      %v998 = vunpack.c.h.bf16 %v874
      %v999 = vunpack.c.l.bf16 %v875
      %v1000 = vunpack.c.h.bf16 %v875
      %v1001 = vunpack.c.l.bf16 %v876
      %v1002 = vunpack.c.h.bf16 %v876
      %v1003 = vunpack.c.l.bf16 %v877
      %v1004 = vunpack.c.h.bf16 %v877
      %v1005 = vunpack.c.l.bf16 %v878
      %v1006 = vunpack.c.h.bf16 %v878
      %v1007 = vadd.f32 %v879, %v943
      %v1008 = vadd.f32 %v880, %v944
      %v1009 = vadd.f32 %v881, %v945
      %v1010 = vadd.f32 %v882, %v946
      %v1011 = vadd.f32 %v883, %v947
      %v1012 = vadd.f32 %v884, %v948
      %v1013 = vadd.f32 %v885, %v949
      %v1014 = vadd.f32 %v886, %v950
      %v1015 = vadd.f32 %v887, %v951
      %v1016 = vadd.f32 %v888, %v952
      %v1017 = vadd.f32 %v889, %v953
      %v1018 = vadd.f32 %v890, %v954
      %v1019 = vadd.f32 %v891, %v955
      %v1020 = vadd.f32 %v892, %v956
      %v1021 = vadd.f32 %v893, %v957
      %v1022 = vadd.f32 %v894, %v958
      %v1023 = vadd.f32 %v895, %v959
      %v1024 = vadd.f32 %v896, %v960
      %v1025 = vadd.f32 %v897, %v961
      %v1026 = vadd.f32 %v898, %v962
      %v1027 = vadd.f32 %v899, %v963
      %v1028 = vadd.f32 %v900, %v964
      %v1029 = vadd.f32 %v901, %v965
      %v1030 = vadd.f32 %v902, %v966
      %v1031 = vadd.f32 %v903, %v967
      %v1032 = vadd.f32 %v904, %v968
      %v1033 = vadd.f32 %v905, %v969
      %v1034 = vadd.f32 %v906, %v970
      %v1035 = vadd.f32 %v907, %v971
      %v1036 = vadd.f32 %v908, %v972
      %v1037 = vadd.f32 %v909, %v973
      %v1038 = vadd.f32 %v910, %v974
      %v1039 = vadd.f32 %v911, %v975
      %v1040 = vadd.f32 %v912, %v976
      %v1041 = vadd.f32 %v913, %v977
      %v1042 = vadd.f32 %v914, %v978
      %v1043 = vadd.f32 %v915, %v979
      %v1044 = vadd.f32 %v916, %v980
      %v1045 = vadd.f32 %v917, %v981
      %v1046 = vadd.f32 %v918, %v982
      %v1047 = vadd.f32 %v919, %v983
      %v1048 = vadd.f32 %v920, %v984
      %v1049 = vadd.f32 %v921, %v985
      %v1050 = vadd.f32 %v922, %v986
      %v1051 = vadd.f32 %v923, %v987
      %v1052 = vadd.f32 %v924, %v988
      %v1053 = vadd.f32 %v925, %v989
      %v1054 = vadd.f32 %v926, %v990
      %v1055 = vadd.f32 %v927, %v991
      %v1056 = vadd.f32 %v928, %v992
      %v1057 = vadd.f32 %v929, %v993
      %v1058 = vadd.f32 %v930, %v994
      %v1059 = vadd.f32 %v931, %v995
      %v1060 = vadd.f32 %v932, %v996
      %v1061 = vadd.f32 %v933, %v997
      %v1062 = vadd.f32 %v934, %v998
      %v1063 = vadd.f32 %v935, %v999
      %v1064 = vadd.f32 %v936, %v1000
      %v1065 = vadd.f32 %v937, %v1001
      %v1066 = vadd.f32 %v938, %v1002
      %v1067 = vadd.f32 %v939, %v1003
      %v1068 = vadd.f32 %v940, %v1004
      %v1069 = vadd.f32 %v941, %v1005
      %v1070 = vadd.f32 %v942, %v1006
      %v1071 = vpack.c.bf16 %v1008, %v1007
      %v1072 = vpack.c.bf16 %v1010, %v1009
      %v1073 = vpack.c.bf16 %v1012, %v1011
      %v1074 = vpack.c.bf16 %v1014, %v1013
      %v1075 = vpack.c.bf16 %v1016, %v1015
      %v1076 = vpack.c.bf16 %v1018, %v1017
      %v1077 = vpack.c.bf16 %v1020, %v1019
      %v1078 = vpack.c.bf16 %v1022, %v1021
      %v1079 = vpack.c.bf16 %v1024, %v1023
      %v1080 = vpack.c.bf16 %v1026, %v1025
      %v1081 = vpack.c.bf16 %v1028, %v1027
      %v1082 = vpack.c.bf16 %v1030, %v1029
      %v1083 = vpack.c.bf16 %v1032, %v1031
      %v1084 = vpack.c.bf16 %v1034, %v1033
      %v1085 = vpack.c.bf16 %v1036, %v1035
      %v1086 = vpack.c.bf16 %v1038, %v1037
      %v1087 = vpack.c.bf16 %v1040, %v1039
      %v1088 = vpack.c.bf16 %v1042, %v1041
      %v1089 = vpack.c.bf16 %v1044, %v1043
      %v1090 = vpack.c.bf16 %v1046, %v1045
      %v1091 = vpack.c.bf16 %v1048, %v1047
      %v1092 = vpack.c.bf16 %v1050, %v1049
      %v1093 = vpack.c.bf16 %v1052, %v1051
      %v1094 = vpack.c.bf16 %v1054, %v1053
      %v1095 = vpack.c.bf16 %v1056, %v1055
      %v1096 = vpack.c.bf16 %v1058, %v1057
      %v1097 = vpack.c.bf16 %v1060, %v1059
      %v1098 = vpack.c.bf16 %v1062, %v1061
      %v1099 = vpack.c.bf16 %v1064, %v1063
      %v1100 = vpack.c.bf16 %v1066, %v1065
      %v1101 = vpack.c.bf16 %v1068, %v1067
      %v1102 = vpack.c.bf16 %v1070, %v1069
      %1103 = vset.pattern.permute.xlu0 2
      %1104 = vperm.xlu0 %1103, %v44
      %v1105 = vpop.permute.xlu0 %1104
      %1106 = vset.pattern.permute.xlu0 2
      %1107 = vperm.xlu0 %1106, %v45
      %v1108 = vpop.permute.xlu0 %1107
      %1109 = vset.pattern.permute.xlu0 2
      %1110 = vperm.xlu0 %1109, %v46
      %v1111 = vpop.permute.xlu0 %1110
      %1112 = vset.pattern.permute.xlu0 2
      %1113 = vperm.xlu0 %1112, %v47
      %v1114 = vpop.permute.xlu0 %1113
      %1115 = vset.pattern.permute.xlu0 2
      %1116 = vperm.xlu0 %1115, %v48
      %v1117 = vpop.permute.xlu0 %1116
      %1118 = vset.pattern.permute.xlu0 2
      %1119 = vperm.xlu0 %1118, %v49
      %v1120 = vpop.permute.xlu0 %1119
      %1121 = vset.pattern.permute.xlu0 2
      %1122 = vperm.xlu0 %1121, %v50
      %v1123 = vpop.permute.xlu0 %1122
      %1124 = vset.pattern.permute.xlu0 2
      %1125 = vperm.xlu0 %1124, %v51
      %v1126 = vpop.permute.xlu0 %1125
      %1127 = vset.pattern.permute.xlu0 2
      %1128 = vperm.xlu0 %1127, %v52
      %v1129 = vpop.permute.xlu0 %1128
      %1130 = vset.pattern.permute.xlu0 2
      %1131 = vperm.xlu0 %1130, %v53
      %v1132 = vpop.permute.xlu0 %1131
      %1133 = vset.pattern.permute.xlu0 2
      %1134 = vperm.xlu0 %1133, %v54
      %v1135 = vpop.permute.xlu0 %1134
      %1136 = vset.pattern.permute.xlu0 2
      %1137 = vperm.xlu0 %1136, %v55
      %v1138 = vpop.permute.xlu0 %1137
      %1139 = vset.pattern.permute.xlu0 2
      %1140 = vperm.xlu0 %1139, %v56
      %v1141 = vpop.permute.xlu0 %1140
      %1142 = vset.pattern.permute.xlu0 2
      %1143 = vperm.xlu0 %1142, %v57
      %v1144 = vpop.permute.xlu0 %1143
      %1145 = vset.pattern.permute.xlu0 2
      %1146 = vperm.xlu0 %1145, %v58
      %v1147 = vpop.permute.xlu0 %1146
      %1148 = vset.pattern.permute.xlu0 2
      %1149 = vperm.xlu0 %1148, %v59
      %v1150 = vpop.permute.xlu0 %1149
      %1151 = vset.pattern.permute.xlu0 2
      %1152 = vperm.xlu0 %1151, %v60
      %v1153 = vpop.permute.xlu0 %1152
      %1154 = vset.pattern.permute.xlu0 2
      %1155 = vperm.xlu0 %1154, %v61
      %v1156 = vpop.permute.xlu0 %1155
      %1157 = vset.pattern.permute.xlu0 2
      %1158 = vperm.xlu0 %1157, %v62
      %v1159 = vpop.permute.xlu0 %1158
      %1160 = vset.pattern.permute.xlu0 2
      %1161 = vperm.xlu0 %1160, %v63
      %v1162 = vpop.permute.xlu0 %1161
      %1163 = vset.pattern.permute.xlu0 2
      %1164 = vperm.xlu0 %1163, %v64
      %v1165 = vpop.permute.xlu0 %1164
      %1166 = vset.pattern.permute.xlu0 2
      %1167 = vperm.xlu0 %1166, %v65
      %v1168 = vpop.permute.xlu0 %1167
      %1169 = vset.pattern.permute.xlu0 2
      %1170 = vperm.xlu0 %1169, %v66
      %v1171 = vpop.permute.xlu0 %1170
      %1172 = vset.pattern.permute.xlu0 2
      %1173 = vperm.xlu0 %1172, %v67
      %v1174 = vpop.permute.xlu0 %1173
      %1175 = vset.pattern.permute.xlu0 2
      %1176 = vperm.xlu0 %1175, %v68
      %v1177 = vpop.permute.xlu0 %1176
      %1178 = vset.pattern.permute.xlu0 2
      %1179 = vperm.xlu0 %1178, %v69
      %v1180 = vpop.permute.xlu0 %1179
      %1181 = vset.pattern.permute.xlu0 2
      %1182 = vperm.xlu0 %1181, %v70
      %v1183 = vpop.permute.xlu0 %1182
      %1184 = vset.pattern.permute.xlu0 2
      %1185 = vperm.xlu0 %1184, %v71
      %v1186 = vpop.permute.xlu0 %1185
      %1187 = vset.pattern.permute.xlu0 2
      %1188 = vperm.xlu0 %1187, %v72
      %v1189 = vpop.permute.xlu0 %1188
      %1190 = vset.pattern.permute.xlu0 2
      %1191 = vperm.xlu0 %1190, %v73
      %v1192 = vpop.permute.xlu0 %1191
      %1193 = vset.pattern.permute.xlu0 2
      %1194 = vperm.xlu0 %1193, %v74
      %v1195 = vpop.permute.xlu0 %1194
      %1196 = vset.pattern.permute.xlu0 2
      %1197 = vperm.xlu0 %1196, %v75
      %v1198 = vpop.permute.xlu0 %1197
      %vm1199 = vcmp.eq.s32.totalorder %v1105, %v77
      %vm1200 = vcmp.eq.s32.totalorder %v1105, %v78
      %vm1201 = vcmp.eq.s32.totalorder %v1108, %v77
      %vm1202 = vcmp.eq.s32.totalorder %v1108, %v78
      %vm1203 = vcmp.eq.s32.totalorder %v1111, %v77
      %vm1204 = vcmp.eq.s32.totalorder %v1111, %v78
      %vm1205 = vcmp.eq.s32.totalorder %v1114, %v77
      %vm1206 = vcmp.eq.s32.totalorder %v1114, %v78
      %vm1207 = vcmp.eq.s32.totalorder %v1117, %v77
      %vm1208 = vcmp.eq.s32.totalorder %v1117, %v78
      %vm1209 = vcmp.eq.s32.totalorder %v1120, %v77
      %vm1210 = vcmp.eq.s32.totalorder %v1120, %v78
      %vm1211 = vcmp.eq.s32.totalorder %v1123, %v77
      %vm1212 = vcmp.eq.s32.totalorder %v1123, %v78
      %vm1213 = vcmp.eq.s32.totalorder %v1126, %v77
      %vm1214 = vcmp.eq.s32.totalorder %v1126, %v78
      %vm1215 = vcmp.eq.s32.totalorder %v1129, %v77
      %vm1216 = vcmp.eq.s32.totalorder %v1129, %v78
      %vm1217 = vcmp.eq.s32.totalorder %v1132, %v77
      %vm1218 = vcmp.eq.s32.totalorder %v1132, %v78
      %vm1219 = vcmp.eq.s32.totalorder %v1135, %v77
      %vm1220 = vcmp.eq.s32.totalorder %v1135, %v78
      %vm1221 = vcmp.eq.s32.totalorder %v1138, %v77
      %vm1222 = vcmp.eq.s32.totalorder %v1138, %v78
      %vm1223 = vcmp.eq.s32.totalorder %v1141, %v77
      %vm1224 = vcmp.eq.s32.totalorder %v1141, %v78
      %vm1225 = vcmp.eq.s32.totalorder %v1144, %v77
      %vm1226 = vcmp.eq.s32.totalorder %v1144, %v78
      %vm1227 = vcmp.eq.s32.totalorder %v1147, %v77
      %vm1228 = vcmp.eq.s32.totalorder %v1147, %v78
      %vm1229 = vcmp.eq.s32.totalorder %v1150, %v77
      %vm1230 = vcmp.eq.s32.totalorder %v1150, %v78
      %vm1231 = vcmp.eq.s32.totalorder %v1153, %v77
      %vm1232 = vcmp.eq.s32.totalorder %v1153, %v78
      %vm1233 = vcmp.eq.s32.totalorder %v1156, %v77
      %vm1234 = vcmp.eq.s32.totalorder %v1156, %v78
      %vm1235 = vcmp.eq.s32.totalorder %v1159, %v77
      %vm1236 = vcmp.eq.s32.totalorder %v1159, %v78
      %vm1237 = vcmp.eq.s32.totalorder %v1162, %v77
      %vm1238 = vcmp.eq.s32.totalorder %v1162, %v78
      %vm1239 = vcmp.eq.s32.totalorder %v1165, %v77
      %vm1240 = vcmp.eq.s32.totalorder %v1165, %v78
      %vm1241 = vcmp.eq.s32.totalorder %v1168, %v77
      %vm1242 = vcmp.eq.s32.totalorder %v1168, %v78
      %vm1243 = vcmp.eq.s32.totalorder %v1171, %v77
      %vm1244 = vcmp.eq.s32.totalorder %v1171, %v78
      %vm1245 = vcmp.eq.s32.totalorder %v1174, %v77
      %vm1246 = vcmp.eq.s32.totalorder %v1174, %v78
      %vm1247 = vcmp.eq.s32.totalorder %v1177, %v77
      %vm1248 = vcmp.eq.s32.totalorder %v1177, %v78
      %vm1249 = vcmp.eq.s32.totalorder %v1180, %v77
      %vm1250 = vcmp.eq.s32.totalorder %v1180, %v78
      %vm1251 = vcmp.eq.s32.totalorder %v1183, %v77
      %vm1252 = vcmp.eq.s32.totalorder %v1183, %v78
      %vm1253 = vcmp.eq.s32.totalorder %v1186, %v77
      %vm1254 = vcmp.eq.s32.totalorder %v1186, %v78
      %vm1255 = vcmp.eq.s32.totalorder %v1189, %v77
      %vm1256 = vcmp.eq.s32.totalorder %v1189, %v78
      %vm1257 = vcmp.eq.s32.totalorder %v1192, %v77
      %vm1258 = vcmp.eq.s32.totalorder %v1192, %v78
      %vm1259 = vcmp.eq.s32.totalorder %v1195, %v77
      %vm1260 = vcmp.eq.s32.totalorder %v1195, %v78
      %vm1261 = vcmp.eq.s32.totalorder %v1198, %v77
      %vm1262 = vcmp.eq.s32.totalorder %v1198, %v78
      %v1263 = vsel %vm1199, 1, 0
      %v1264 = vsel %vm1200, 1, 0
      %v1265 = vsel %vm1201, 1, 0
      %v1266 = vsel %vm1202, 1, 0
      %v1267 = vsel %vm1203, 1, 0
      %v1268 = vsel %vm1204, 1, 0
      %v1269 = vsel %vm1205, 1, 0
      %v1270 = vsel %vm1206, 1, 0
      %v1271 = vsel %vm1207, 1, 0
      %v1272 = vsel %vm1208, 1, 0
      %v1273 = vsel %vm1209, 1, 0
      %v1274 = vsel %vm1210, 1, 0
      %v1275 = vsel %vm1211, 1, 0
      %v1276 = vsel %vm1212, 1, 0
      %v1277 = vsel %vm1213, 1, 0
      %v1278 = vsel %vm1214, 1, 0
      %v1279 = vsel %vm1215, 1, 0
      %v1280 = vsel %vm1216, 1, 0
      %v1281 = vsel %vm1217, 1, 0
      %v1282 = vsel %vm1218, 1, 0
      %v1283 = vsel %vm1219, 1, 0
      %v1284 = vsel %vm1220, 1, 0
      %v1285 = vsel %vm1221, 1, 0
      %v1286 = vsel %vm1222, 1, 0
      %v1287 = vsel %vm1223, 1, 0
      %v1288 = vsel %vm1224, 1, 0
      %v1289 = vsel %vm1225, 1, 0
      %v1290 = vsel %vm1226, 1, 0
      %v1291 = vsel %vm1227, 1, 0
      %v1292 = vsel %vm1228, 1, 0
      %v1293 = vsel %vm1229, 1, 0
      %v1294 = vsel %vm1230, 1, 0
      %v1295 = vsel %vm1231, 1, 0
      %v1296 = vsel %vm1232, 1, 0
      %v1297 = vsel %vm1233, 1, 0
      %v1298 = vsel %vm1234, 1, 0
      %v1299 = vsel %vm1235, 1, 0
      %v1300 = vsel %vm1236, 1, 0
      %v1301 = vsel %vm1237, 1, 0
      %v1302 = vsel %vm1238, 1, 0
      %v1303 = vsel %vm1239, 1, 0
      %v1304 = vsel %vm1240, 1, 0
      %v1305 = vsel %vm1241, 1, 0
      %v1306 = vsel %vm1242, 1, 0
      %v1307 = vsel %vm1243, 1, 0
      %v1308 = vsel %vm1244, 1, 0
      %v1309 = vsel %vm1245, 1, 0
      %v1310 = vsel %vm1246, 1, 0
      %v1311 = vsel %vm1247, 1, 0
      %v1312 = vsel %vm1248, 1, 0
      %v1313 = vsel %vm1249, 1, 0
      %v1314 = vsel %vm1250, 1, 0
      %v1315 = vsel %vm1251, 1, 0
      %v1316 = vsel %vm1252, 1, 0
      %v1317 = vsel %vm1253, 1, 0
      %v1318 = vsel %vm1254, 1, 0
      %v1319 = vsel %vm1255, 1, 0
      %v1320 = vsel %vm1256, 1, 0
      %v1321 = vsel %vm1257, 1, 0
      %v1322 = vsel %vm1258, 1, 0
      %v1323 = vsel %vm1259, 1, 0
      %v1324 = vsel %vm1260, 1, 0
      %v1325 = vsel %vm1261, 1, 0
      %v1326 = vsel %vm1262, 1, 0
      %v1327 = vcvt.s32.f32 %v1263
      %v1328 = vcvt.s32.f32 %v1264
      %v1329 = vcvt.s32.f32 %v1265
      %v1330 = vcvt.s32.f32 %v1266
      %v1331 = vcvt.s32.f32 %v1267
      %v1332 = vcvt.s32.f32 %v1268
      %v1333 = vcvt.s32.f32 %v1269
      %v1334 = vcvt.s32.f32 %v1270
      %v1335 = vcvt.s32.f32 %v1271
      %v1336 = vcvt.s32.f32 %v1272
      %v1337 = vcvt.s32.f32 %v1273
      %v1338 = vcvt.s32.f32 %v1274
      %v1339 = vcvt.s32.f32 %v1275
      %v1340 = vcvt.s32.f32 %v1276
      %v1341 = vcvt.s32.f32 %v1277
      %v1342 = vcvt.s32.f32 %v1278
      %v1343 = vcvt.s32.f32 %v1279
      %v1344 = vcvt.s32.f32 %v1280
      %v1345 = vcvt.s32.f32 %v1281
      %v1346 = vcvt.s32.f32 %v1282
      %v1347 = vcvt.s32.f32 %v1283
      %v1348 = vcvt.s32.f32 %v1284
      %v1349 = vcvt.s32.f32 %v1285
      %v1350 = vcvt.s32.f32 %v1286
      %v1351 = vcvt.s32.f32 %v1287
      %v1352 = vcvt.s32.f32 %v1288
      %v1353 = vcvt.s32.f32 %v1289
      %v1354 = vcvt.s32.f32 %v1290
      %v1355 = vcvt.s32.f32 %v1291
      %v1356 = vcvt.s32.f32 %v1292
      %v1357 = vcvt.s32.f32 %v1293
      %v1358 = vcvt.s32.f32 %v1294
      %v1359 = vcvt.s32.f32 %v1295
      %v1360 = vcvt.s32.f32 %v1296
      %v1361 = vcvt.s32.f32 %v1297
      %v1362 = vcvt.s32.f32 %v1298
      %v1363 = vcvt.s32.f32 %v1299
      %v1364 = vcvt.s32.f32 %v1300
      %v1365 = vcvt.s32.f32 %v1301
      %v1366 = vcvt.s32.f32 %v1302
      %v1367 = vcvt.s32.f32 %v1303
      %v1368 = vcvt.s32.f32 %v1304
      %v1369 = vcvt.s32.f32 %v1305
      %v1370 = vcvt.s32.f32 %v1306
      %v1371 = vcvt.s32.f32 %v1307
      %v1372 = vcvt.s32.f32 %v1308
      %v1373 = vcvt.s32.f32 %v1309
      %v1374 = vcvt.s32.f32 %v1310
      %v1375 = vcvt.s32.f32 %v1311
      %v1376 = vcvt.s32.f32 %v1312
      %v1377 = vcvt.s32.f32 %v1313
      %v1378 = vcvt.s32.f32 %v1314
      %v1379 = vcvt.s32.f32 %v1315
      %v1380 = vcvt.s32.f32 %v1316
      %v1381 = vcvt.s32.f32 %v1317
      %v1382 = vcvt.s32.f32 %v1318
      %v1383 = vcvt.s32.f32 %v1319
      %v1384 = vcvt.s32.f32 %v1320
      %v1385 = vcvt.s32.f32 %v1321
      %v1386 = vcvt.s32.f32 %v1322
      %v1387 = vcvt.s32.f32 %v1323
      %v1388 = vcvt.s32.f32 %v1324
      %v1389 = vcvt.s32.f32 %v1325
      %v1390 = vcvt.s32.f32 %v1326
      %v1391 = vpack.c.bf16 %v1328, %v1327
      %v1392 = vpack.c.bf16 %v1330, %v1329
      %v1393 = vpack.c.bf16 %v1332, %v1331
      %v1394 = vpack.c.bf16 %v1334, %v1333
      %v1395 = vpack.c.bf16 %v1336, %v1335
      %v1396 = vpack.c.bf16 %v1338, %v1337
      %v1397 = vpack.c.bf16 %v1340, %v1339
      %v1398 = vpack.c.bf16 %v1342, %v1341
      %v1399 = vpack.c.bf16 %v1344, %v1343
      %v1400 = vpack.c.bf16 %v1346, %v1345
      %v1401 = vpack.c.bf16 %v1348, %v1347
      %v1402 = vpack.c.bf16 %v1350, %v1349
      %v1403 = vpack.c.bf16 %v1352, %v1351
      %v1404 = vpack.c.bf16 %v1354, %v1353
      %v1405 = vpack.c.bf16 %v1356, %v1355
      %v1406 = vpack.c.bf16 %v1358, %v1357
      %v1407 = vpack.c.bf16 %v1360, %v1359
      %v1408 = vpack.c.bf16 %v1362, %v1361
      %v1409 = vpack.c.bf16 %v1364, %v1363
      %v1410 = vpack.c.bf16 %v1366, %v1365
      %v1411 = vpack.c.bf16 %v1368, %v1367
      %v1412 = vpack.c.bf16 %v1370, %v1369
      %v1413 = vpack.c.bf16 %v1372, %v1371
      %v1414 = vpack.c.bf16 %v1374, %v1373
      %v1415 = vpack.c.bf16 %v1376, %v1375
      %v1416 = vpack.c.bf16 %v1378, %v1377
      %v1417 = vpack.c.bf16 %v1380, %v1379
      %v1418 = vpack.c.bf16 %v1382, %v1381
      %v1419 = vpack.c.bf16 %v1384, %v1383
      %v1420 = vpack.c.bf16 %v1386, %v1385
      %v1421 = vpack.c.bf16 %v1388, %v1387
      %v1422 = vpack.c.bf16 %v1390, %v1389
      %v1423 = vunpack.c.l.bf16 %v1071
      %v1424 = vunpack.c.h.bf16 %v1071
      %v1425 = vunpack.c.l.bf16 %v1072
      %v1426 = vunpack.c.h.bf16 %v1072
      %v1427 = vunpack.c.l.bf16 %v1073
      %v1428 = vunpack.c.h.bf16 %v1073
      %v1429 = vunpack.c.l.bf16 %v1074
      %v1430 = vunpack.c.h.bf16 %v1074
      %v1431 = vunpack.c.l.bf16 %v1075
      %v1432 = vunpack.c.h.bf16 %v1075
      %v1433 = vunpack.c.l.bf16 %v1076
      %v1434 = vunpack.c.h.bf16 %v1076
      %v1435 = vunpack.c.l.bf16 %v1077
      %v1436 = vunpack.c.h.bf16 %v1077
      %v1437 = vunpack.c.l.bf16 %v1078
      %v1438 = vunpack.c.h.bf16 %v1078
      %v1439 = vunpack.c.l.bf16 %v1079
      %v1440 = vunpack.c.h.bf16 %v1079
      %v1441 = vunpack.c.l.bf16 %v1080
      %v1442 = vunpack.c.h.bf16 %v1080
      %v1443 = vunpack.c.l.bf16 %v1081
      %v1444 = vunpack.c.h.bf16 %v1081
      %v1445 = vunpack.c.l.bf16 %v1082
      %v1446 = vunpack.c.h.bf16 %v1082
      %v1447 = vunpack.c.l.bf16 %v1083
      %v1448 = vunpack.c.h.bf16 %v1083
      %v1449 = vunpack.c.l.bf16 %v1084
      %v1450 = vunpack.c.h.bf16 %v1084
      %v1451 = vunpack.c.l.bf16 %v1085
      %v1452 = vunpack.c.h.bf16 %v1085
      %v1453 = vunpack.c.l.bf16 %v1086
      %v1454 = vunpack.c.h.bf16 %v1086
      %v1455 = vunpack.c.l.bf16 %v1087
      %v1456 = vunpack.c.h.bf16 %v1087
      %v1457 = vunpack.c.l.bf16 %v1088
      %v1458 = vunpack.c.h.bf16 %v1088
      %v1459 = vunpack.c.l.bf16 %v1089
      %v1460 = vunpack.c.h.bf16 %v1089
      %v1461 = vunpack.c.l.bf16 %v1090
      %v1462 = vunpack.c.h.bf16 %v1090
      %v1463 = vunpack.c.l.bf16 %v1091
      %v1464 = vunpack.c.h.bf16 %v1091
      %v1465 = vunpack.c.l.bf16 %v1092
      %v1466 = vunpack.c.h.bf16 %v1092
      %v1467 = vunpack.c.l.bf16 %v1093
      %v1468 = vunpack.c.h.bf16 %v1093
      %v1469 = vunpack.c.l.bf16 %v1094
      %v1470 = vunpack.c.h.bf16 %v1094
      %v1471 = vunpack.c.l.bf16 %v1095
      %v1472 = vunpack.c.h.bf16 %v1095
      %v1473 = vunpack.c.l.bf16 %v1096
      %v1474 = vunpack.c.h.bf16 %v1096
      %v1475 = vunpack.c.l.bf16 %v1097
      %v1476 = vunpack.c.h.bf16 %v1097
      %v1477 = vunpack.c.l.bf16 %v1098
      %v1478 = vunpack.c.h.bf16 %v1098
      %v1479 = vunpack.c.l.bf16 %v1099
      %v1480 = vunpack.c.h.bf16 %v1099
      %v1481 = vunpack.c.l.bf16 %v1100
      %v1482 = vunpack.c.h.bf16 %v1100
      %v1483 = vunpack.c.l.bf16 %v1101
      %v1484 = vunpack.c.h.bf16 %v1101
      %v1485 = vunpack.c.l.bf16 %v1102
      %v1486 = vunpack.c.h.bf16 %v1102
      %v1487 = vunpack.c.l.bf16 %v1391
      %v1488 = vunpack.c.h.bf16 %v1391
      %v1489 = vunpack.c.l.bf16 %v1392
      %v1490 = vunpack.c.h.bf16 %v1392
      %v1491 = vunpack.c.l.bf16 %v1393
      %v1492 = vunpack.c.h.bf16 %v1393
      %v1493 = vunpack.c.l.bf16 %v1394
      %v1494 = vunpack.c.h.bf16 %v1394
      %v1495 = vunpack.c.l.bf16 %v1395
      %v1496 = vunpack.c.h.bf16 %v1395
      %v1497 = vunpack.c.l.bf16 %v1396
      %v1498 = vunpack.c.h.bf16 %v1396
      %v1499 = vunpack.c.l.bf16 %v1397
      %v1500 = vunpack.c.h.bf16 %v1397
      %v1501 = vunpack.c.l.bf16 %v1398
      %v1502 = vunpack.c.h.bf16 %v1398
      %v1503 = vunpack.c.l.bf16 %v1399
      %v1504 = vunpack.c.h.bf16 %v1399
      %v1505 = vunpack.c.l.bf16 %v1400
      %v1506 = vunpack.c.h.bf16 %v1400
      %v1507 = vunpack.c.l.bf16 %v1401
      %v1508 = vunpack.c.h.bf16 %v1401
      %v1509 = vunpack.c.l.bf16 %v1402
      %v1510 = vunpack.c.h.bf16 %v1402
      %v1511 = vunpack.c.l.bf16 %v1403
      %v1512 = vunpack.c.h.bf16 %v1403
      %v1513 = vunpack.c.l.bf16 %v1404
      %v1514 = vunpack.c.h.bf16 %v1404
      %v1515 = vunpack.c.l.bf16 %v1405
      %v1516 = vunpack.c.h.bf16 %v1405
      %v1517 = vunpack.c.l.bf16 %v1406
      %v1518 = vunpack.c.h.bf16 %v1406
      %v1519 = vunpack.c.l.bf16 %v1407
      %v1520 = vunpack.c.h.bf16 %v1407
      %v1521 = vunpack.c.l.bf16 %v1408
      %v1522 = vunpack.c.h.bf16 %v1408
      %v1523 = vunpack.c.l.bf16 %v1409
      %v1524 = vunpack.c.h.bf16 %v1409
      %v1525 = vunpack.c.l.bf16 %v1410
      %v1526 = vunpack.c.h.bf16 %v1410
      %v1527 = vunpack.c.l.bf16 %v1411
      %v1528 = vunpack.c.h.bf16 %v1411
      %v1529 = vunpack.c.l.bf16 %v1412
      %v1530 = vunpack.c.h.bf16 %v1412
      %v1531 = vunpack.c.l.bf16 %v1413
      %v1532 = vunpack.c.h.bf16 %v1413
      %v1533 = vunpack.c.l.bf16 %v1414
      %v1534 = vunpack.c.h.bf16 %v1414
      %v1535 = vunpack.c.l.bf16 %v1415
      %v1536 = vunpack.c.h.bf16 %v1415
      %v1537 = vunpack.c.l.bf16 %v1416
      %v1538 = vunpack.c.h.bf16 %v1416
      %v1539 = vunpack.c.l.bf16 %v1417
      %v1540 = vunpack.c.h.bf16 %v1417
      %v1541 = vunpack.c.l.bf16 %v1418
      %v1542 = vunpack.c.h.bf16 %v1418
      %v1543 = vunpack.c.l.bf16 %v1419
      %v1544 = vunpack.c.h.bf16 %v1419
      %v1545 = vunpack.c.l.bf16 %v1420
      %v1546 = vunpack.c.h.bf16 %v1420
      %v1547 = vunpack.c.l.bf16 %v1421
      %v1548 = vunpack.c.h.bf16 %v1421
      %v1549 = vunpack.c.l.bf16 %v1422
      %v1550 = vunpack.c.h.bf16 %v1422
      %v1551 = vadd.f32 %v1423, %v1487
      %v1552 = vadd.f32 %v1424, %v1488
      %v1553 = vadd.f32 %v1425, %v1489
      %v1554 = vadd.f32 %v1426, %v1490
      %v1555 = vadd.f32 %v1427, %v1491
      %v1556 = vadd.f32 %v1428, %v1492
      %v1557 = vadd.f32 %v1429, %v1493
      %v1558 = vadd.f32 %v1430, %v1494
      %v1559 = vadd.f32 %v1431, %v1495
      %v1560 = vadd.f32 %v1432, %v1496
      %v1561 = vadd.f32 %v1433, %v1497
      %v1562 = vadd.f32 %v1434, %v1498
      %v1563 = vadd.f32 %v1435, %v1499
      %v1564 = vadd.f32 %v1436, %v1500
      %v1565 = vadd.f32 %v1437, %v1501
      %v1566 = vadd.f32 %v1438, %v1502
      %v1567 = vadd.f32 %v1439, %v1503
      %v1568 = vadd.f32 %v1440, %v1504
      %v1569 = vadd.f32 %v1441, %v1505
      %v1570 = vadd.f32 %v1442, %v1506
      %v1571 = vadd.f32 %v1443, %v1507
      %v1572 = vadd.f32 %v1444, %v1508
      %v1573 = vadd.f32 %v1445, %v1509
      %v1574 = vadd.f32 %v1446, %v1510
      %v1575 = vadd.f32 %v1447, %v1511
      %v1576 = vadd.f32 %v1448, %v1512
      %v1577 = vadd.f32 %v1449, %v1513
      %v1578 = vadd.f32 %v1450, %v1514
      %v1579 = vadd.f32 %v1451, %v1515
      %v1580 = vadd.f32 %v1452, %v1516
      %v1581 = vadd.f32 %v1453, %v1517
      %v1582 = vadd.f32 %v1454, %v1518
      %v1583 = vadd.f32 %v1455, %v1519
      %v1584 = vadd.f32 %v1456, %v1520
      %v1585 = vadd.f32 %v1457, %v1521
      %v1586 = vadd.f32 %v1458, %v1522
      %v1587 = vadd.f32 %v1459, %v1523
      %v1588 = vadd.f32 %v1460, %v1524
      %v1589 = vadd.f32 %v1461, %v1525
      %v1590 = vadd.f32 %v1462, %v1526
      %v1591 = vadd.f32 %v1463, %v1527
      %v1592 = vadd.f32 %v1464, %v1528
      %v1593 = vadd.f32 %v1465, %v1529
      %v1594 = vadd.f32 %v1466, %v1530
      %v1595 = vadd.f32 %v1467, %v1531
      %v1596 = vadd.f32 %v1468, %v1532
      %v1597 = vadd.f32 %v1469, %v1533
      %v1598 = vadd.f32 %v1470, %v1534
      %v1599 = vadd.f32 %v1471, %v1535
      %v1600 = vadd.f32 %v1472, %v1536
      %v1601 = vadd.f32 %v1473, %v1537
      %v1602 = vadd.f32 %v1474, %v1538
      %v1603 = vadd.f32 %v1475, %v1539
      %v1604 = vadd.f32 %v1476, %v1540
      %v1605 = vadd.f32 %v1477, %v1541
      %v1606 = vadd.f32 %v1478, %v1542
      %v1607 = vadd.f32 %v1479, %v1543
      %v1608 = vadd.f32 %v1480, %v1544
      %v1609 = vadd.f32 %v1481, %v1545
      %v1610 = vadd.f32 %v1482, %v1546
      %v1611 = vadd.f32 %v1483, %v1547
      %v1612 = vadd.f32 %v1484, %v1548
      %v1613 = vadd.f32 %v1485, %v1549
      %v1614 = vadd.f32 %v1486, %v1550
      %v1615 = vpack.c.bf16 %v1552, %v1551
      %v1616 = vpack.c.bf16 %v1554, %v1553
      %v1617 = vpack.c.bf16 %v1556, %v1555
      %v1618 = vpack.c.bf16 %v1558, %v1557
      %v1619 = vpack.c.bf16 %v1560, %v1559
      %v1620 = vpack.c.bf16 %v1562, %v1561
      %v1621 = vpack.c.bf16 %v1564, %v1563
      %v1622 = vpack.c.bf16 %v1566, %v1565
      %v1623 = vpack.c.bf16 %v1568, %v1567
      %v1624 = vpack.c.bf16 %v1570, %v1569
      %v1625 = vpack.c.bf16 %v1572, %v1571
      %v1626 = vpack.c.bf16 %v1574, %v1573
      %v1627 = vpack.c.bf16 %v1576, %v1575
      %v1628 = vpack.c.bf16 %v1578, %v1577
      %v1629 = vpack.c.bf16 %v1580, %v1579
      %v1630 = vpack.c.bf16 %v1582, %v1581
      %v1631 = vpack.c.bf16 %v1584, %v1583
      %v1632 = vpack.c.bf16 %v1586, %v1585
      %v1633 = vpack.c.bf16 %v1588, %v1587
      %v1634 = vpack.c.bf16 %v1590, %v1589
      %v1635 = vpack.c.bf16 %v1592, %v1591
      %v1636 = vpack.c.bf16 %v1594, %v1593
      %v1637 = vpack.c.bf16 %v1596, %v1595
      %v1638 = vpack.c.bf16 %v1598, %v1597
      %v1639 = vpack.c.bf16 %v1600, %v1599
      %v1640 = vpack.c.bf16 %v1602, %v1601
      %v1641 = vpack.c.bf16 %v1604, %v1603
      %v1642 = vpack.c.bf16 %v1606, %v1605
      %v1643 = vpack.c.bf16 %v1608, %v1607
      %v1644 = vpack.c.bf16 %v1610, %v1609
      %v1645 = vpack.c.bf16 %v1612, %v1611
      %v1646 = vpack.c.bf16 %v1614, %v1613
      %1647 = vset.pattern.permute.xlu0 3
      %1648 = vperm.xlu0 %1647, %v44
      %v1649 = vpop.permute.xlu0 %1648
      %1650 = vset.pattern.permute.xlu0 3
      %1651 = vperm.xlu0 %1650, %v45
      %v1652 = vpop.permute.xlu0 %1651
      %1653 = vset.pattern.permute.xlu0 3
      %1654 = vperm.xlu0 %1653, %v46
      %v1655 = vpop.permute.xlu0 %1654
      %1656 = vset.pattern.permute.xlu0 3
      %1657 = vperm.xlu0 %1656, %v47
      %v1658 = vpop.permute.xlu0 %1657
      %1659 = vset.pattern.permute.xlu0 3
      %1660 = vperm.xlu0 %1659, %v48
      %v1661 = vpop.permute.xlu0 %1660
      %1662 = vset.pattern.permute.xlu0 3
      %1663 = vperm.xlu0 %1662, %v49
      %v1664 = vpop.permute.xlu0 %1663
      %1665 = vset.pattern.permute.xlu0 3
      %1666 = vperm.xlu0 %1665, %v50
      %v1667 = vpop.permute.xlu0 %1666
      %1668 = vset.pattern.permute.xlu0 3
      %1669 = vperm.xlu0 %1668, %v51
      %v1670 = vpop.permute.xlu0 %1669
      %1671 = vset.pattern.permute.xlu0 3
      %1672 = vperm.xlu0 %1671, %v52
      %v1673 = vpop.permute.xlu0 %1672
      %1674 = vset.pattern.permute.xlu0 3
      %1675 = vperm.xlu0 %1674, %v53
      %v1676 = vpop.permute.xlu0 %1675
      %1677 = vset.pattern.permute.xlu0 3
      %1678 = vperm.xlu0 %1677, %v54
      %v1679 = vpop.permute.xlu0 %1678
      %1680 = vset.pattern.permute.xlu0 3
      %1681 = vperm.xlu0 %1680, %v55
      %v1682 = vpop.permute.xlu0 %1681
      %1683 = vset.pattern.permute.xlu0 3
      %1684 = vperm.xlu0 %1683, %v56
      %v1685 = vpop.permute.xlu0 %1684
      %1686 = vset.pattern.permute.xlu0 3
      %1687 = vperm.xlu0 %1686, %v57
      %v1688 = vpop.permute.xlu0 %1687
      %1689 = vset.pattern.permute.xlu0 3
      %1690 = vperm.xlu0 %1689, %v58
      %v1691 = vpop.permute.xlu0 %1690
      %1692 = vset.pattern.permute.xlu0 3
      %1693 = vperm.xlu0 %1692, %v59
      %v1694 = vpop.permute.xlu0 %1693
      %1695 = vset.pattern.permute.xlu0 3
      %1696 = vperm.xlu0 %1695, %v60
      %v1697 = vpop.permute.xlu0 %1696
      %1698 = vset.pattern.permute.xlu0 3
      %1699 = vperm.xlu0 %1698, %v61
      %v1700 = vpop.permute.xlu0 %1699
      %1701 = vset.pattern.permute.xlu0 3
      %1702 = vperm.xlu0 %1701, %v62
      %v1703 = vpop.permute.xlu0 %1702
      %1704 = vset.pattern.permute.xlu0 3
      %1705 = vperm.xlu0 %1704, %v63
      %v1706 = vpop.permute.xlu0 %1705
      %1707 = vset.pattern.permute.xlu0 3
      %1708 = vperm.xlu0 %1707, %v64
      %v1709 = vpop.permute.xlu0 %1708
      %1710 = vset.pattern.permute.xlu0 3
      %1711 = vperm.xlu0 %1710, %v65
      %v1712 = vpop.permute.xlu0 %1711
      %1713 = vset.pattern.permute.xlu0 3
      %1714 = vperm.xlu0 %1713, %v66
      %v1715 = vpop.permute.xlu0 %1714
      %1716 = vset.pattern.permute.xlu0 3
      %1717 = vperm.xlu0 %1716, %v67
      %v1718 = vpop.permute.xlu0 %1717
      %1719 = vset.pattern.permute.xlu0 3
      %1720 = vperm.xlu0 %1719, %v68
      %v1721 = vpop.permute.xlu0 %1720
      %1722 = vset.pattern.permute.xlu0 3
      %1723 = vperm.xlu0 %1722, %v69
      %v1724 = vpop.permute.xlu0 %1723
      %1725 = vset.pattern.permute.xlu0 3
      %1726 = vperm.xlu0 %1725, %v70
      %v1727 = vpop.permute.xlu0 %1726
      %1728 = vset.pattern.permute.xlu0 3
      %1729 = vperm.xlu0 %1728, %v71
      %v1730 = vpop.permute.xlu0 %1729
      %1731 = vset.pattern.permute.xlu0 3
      %1732 = vperm.xlu0 %1731, %v72
      %v1733 = vpop.permute.xlu0 %1732
      %1734 = vset.pattern.permute.xlu0 3
      %1735 = vperm.xlu0 %1734, %v73
      %v1736 = vpop.permute.xlu0 %1735
      %1737 = vset.pattern.permute.xlu0 3
      %1738 = vperm.xlu0 %1737, %v74
      %v1739 = vpop.permute.xlu0 %1738
      %1740 = vset.pattern.permute.xlu0 3
      %1741 = vperm.xlu0 %1740, %v75
      %v1742 = vpop.permute.xlu0 %1741
      %vm1743 = vcmp.eq.s32.totalorder %v1649, %v77
      %vm1744 = vcmp.eq.s32.totalorder %v1649, %v78
      %vm1745 = vcmp.eq.s32.totalorder %v1652, %v77
      %vm1746 = vcmp.eq.s32.totalorder %v1652, %v78
      %vm1747 = vcmp.eq.s32.totalorder %v1655, %v77
      %vm1748 = vcmp.eq.s32.totalorder %v1655, %v78
      %vm1749 = vcmp.eq.s32.totalorder %v1658, %v77
      %vm1750 = vcmp.eq.s32.totalorder %v1658, %v78
      %vm1751 = vcmp.eq.s32.totalorder %v1661, %v77
      %vm1752 = vcmp.eq.s32.totalorder %v1661, %v78
      %vm1753 = vcmp.eq.s32.totalorder %v1664, %v77
      %vm1754 = vcmp.eq.s32.totalorder %v1664, %v78
      %vm1755 = vcmp.eq.s32.totalorder %v1667, %v77
      %vm1756 = vcmp.eq.s32.totalorder %v1667, %v78
      %vm1757 = vcmp.eq.s32.totalorder %v1670, %v77
      %vm1758 = vcmp.eq.s32.totalorder %v1670, %v78
      %vm1759 = vcmp.eq.s32.totalorder %v1673, %v77
      %vm1760 = vcmp.eq.s32.totalorder %v1673, %v78
      %vm1761 = vcmp.eq.s32.totalorder %v1676, %v77
      %vm1762 = vcmp.eq.s32.totalorder %v1676, %v78
      %vm1763 = vcmp.eq.s32.totalorder %v1679, %v77
      %vm1764 = vcmp.eq.s32.totalorder %v1679, %v78
      %vm1765 = vcmp.eq.s32.totalorder %v1682, %v77
      %vm1766 = vcmp.eq.s32.totalorder %v1682, %v78
      %vm1767 = vcmp.eq.s32.totalorder %v1685, %v77
      %vm1768 = vcmp.eq.s32.totalorder %v1685, %v78
      %vm1769 = vcmp.eq.s32.totalorder %v1688, %v77
      %vm1770 = vcmp.eq.s32.totalorder %v1688, %v78
      %vm1771 = vcmp.eq.s32.totalorder %v1691, %v77
      %vm1772 = vcmp.eq.s32.totalorder %v1691, %v78
      %vm1773 = vcmp.eq.s32.totalorder %v1694, %v77
      %vm1774 = vcmp.eq.s32.totalorder %v1694, %v78
      %vm1775 = vcmp.eq.s32.totalorder %v1697, %v77
      %vm1776 = vcmp.eq.s32.totalorder %v1697, %v78
      %vm1777 = vcmp.eq.s32.totalorder %v1700, %v77
      %vm1778 = vcmp.eq.s32.totalorder %v1700, %v78
      %vm1779 = vcmp.eq.s32.totalorder %v1703, %v77
      %vm1780 = vcmp.eq.s32.totalorder %v1703, %v78
      %vm1781 = vcmp.eq.s32.totalorder %v1706, %v77
      %vm1782 = vcmp.eq.s32.totalorder %v1706, %v78
      %vm1783 = vcmp.eq.s32.totalorder %v1709, %v77
      %vm1784 = vcmp.eq.s32.totalorder %v1709, %v78
      %vm1785 = vcmp.eq.s32.totalorder %v1712, %v77
      %vm1786 = vcmp.eq.s32.totalorder %v1712, %v78
      %vm1787 = vcmp.eq.s32.totalorder %v1715, %v77
      %vm1788 = vcmp.eq.s32.totalorder %v1715, %v78
      %vm1789 = vcmp.eq.s32.totalorder %v1718, %v77
      %vm1790 = vcmp.eq.s32.totalorder %v1718, %v78
      %vm1791 = vcmp.eq.s32.totalorder %v1721, %v77
      %vm1792 = vcmp.eq.s32.totalorder %v1721, %v78
      %vm1793 = vcmp.eq.s32.totalorder %v1724, %v77
      %vm1794 = vcmp.eq.s32.totalorder %v1724, %v78
      %vm1795 = vcmp.eq.s32.totalorder %v1727, %v77
      %vm1796 = vcmp.eq.s32.totalorder %v1727, %v78
      %vm1797 = vcmp.eq.s32.totalorder %v1730, %v77
      %vm1798 = vcmp.eq.s32.totalorder %v1730, %v78
      %vm1799 = vcmp.eq.s32.totalorder %v1733, %v77
      %vm1800 = vcmp.eq.s32.totalorder %v1733, %v78
      %vm1801 = vcmp.eq.s32.totalorder %v1736, %v77
      %vm1802 = vcmp.eq.s32.totalorder %v1736, %v78
      %vm1803 = vcmp.eq.s32.totalorder %v1739, %v77
      %vm1804 = vcmp.eq.s32.totalorder %v1739, %v78
      %vm1805 = vcmp.eq.s32.totalorder %v1742, %v77
      %vm1806 = vcmp.eq.s32.totalorder %v1742, %v78
      %v1807 = vsel %vm1743, 1, 0
      %v1808 = vsel %vm1744, 1, 0
      %v1809 = vsel %vm1745, 1, 0
      %v1810 = vsel %vm1746, 1, 0
      %v1811 = vsel %vm1747, 1, 0
      %v1812 = vsel %vm1748, 1, 0
      %v1813 = vsel %vm1749, 1, 0
      %v1814 = vsel %vm1750, 1, 0
      %v1815 = vsel %vm1751, 1, 0
      %v1816 = vsel %vm1752, 1, 0
      %v1817 = vsel %vm1753, 1, 0
      %v1818 = vsel %vm1754, 1, 0
      %v1819 = vsel %vm1755, 1, 0
      %v1820 = vsel %vm1756, 1, 0
      %v1821 = vsel %vm1757, 1, 0
      %v1822 = vsel %vm1758, 1, 0
      %v1823 = vsel %vm1759, 1, 0
      %v1824 = vsel %vm1760, 1, 0
      %v1825 = vsel %vm1761, 1, 0
      %v1826 = vsel %vm1762, 1, 0
      %v1827 = vsel %vm1763, 1, 0
      %v1828 = vsel %vm1764, 1, 0
      %v1829 = vsel %vm1765, 1, 0
      %v1830 = vsel %vm1766, 1, 0
      %v1831 = vsel %vm1767, 1, 0
      %v1832 = vsel %vm1768, 1, 0
      %v1833 = vsel %vm1769, 1, 0
      %v1834 = vsel %vm1770, 1, 0
      %v1835 = vsel %vm1771, 1, 0
      %v1836 = vsel %vm1772, 1, 0
      %v1837 = vsel %vm1773, 1, 0
      %v1838 = vsel %vm1774, 1, 0
      %v1839 = vsel %vm1775, 1, 0
      %v1840 = vsel %vm1776, 1, 0
      %v1841 = vsel %vm1777, 1, 0
      %v1842 = vsel %vm1778, 1, 0
      %v1843 = vsel %vm1779, 1, 0
      %v1844 = vsel %vm1780, 1, 0
      %v1845 = vsel %vm1781, 1, 0
      %v1846 = vsel %vm1782, 1, 0
      %v1847 = vsel %vm1783, 1, 0
      %v1848 = vsel %vm1784, 1, 0
      %v1849 = vsel %vm1785, 1, 0
      %v1850 = vsel %vm1786, 1, 0
      %v1851 = vsel %vm1787, 1, 0
      %v1852 = vsel %vm1788, 1, 0
      %v1853 = vsel %vm1789, 1, 0
      %v1854 = vsel %vm1790, 1, 0
      %v1855 = vsel %vm1791, 1, 0
      %v1856 = vsel %vm1792, 1, 0
      %v1857 = vsel %vm1793, 1, 0
      %v1858 = vsel %vm1794, 1, 0
      %v1859 = vsel %vm1795, 1, 0
      %v1860 = vsel %vm1796, 1, 0
      %v1861 = vsel %vm1797, 1, 0
      %v1862 = vsel %vm1798, 1, 0
      %v1863 = vsel %vm1799, 1, 0
      %v1864 = vsel %vm1800, 1, 0
      %v1865 = vsel %vm1801, 1, 0
      %v1866 = vsel %vm1802, 1, 0
      %v1867 = vsel %vm1803, 1, 0
      %v1868 = vsel %vm1804, 1, 0
      %v1869 = vsel %vm1805, 1, 0
      %v1870 = vsel %vm1806, 1, 0
      %v1871 = vcvt.s32.f32 %v1807
      %v1872 = vcvt.s32.f32 %v1808
      %v1873 = vcvt.s32.f32 %v1809
      %v1874 = vcvt.s32.f32 %v1810
      %v1875 = vcvt.s32.f32 %v1811
      %v1876 = vcvt.s32.f32 %v1812
      %v1877 = vcvt.s32.f32 %v1813
      %v1878 = vcvt.s32.f32 %v1814
      %v1879 = vcvt.s32.f32 %v1815
      %v1880 = vcvt.s32.f32 %v1816
      %v1881 = vcvt.s32.f32 %v1817
      %v1882 = vcvt.s32.f32 %v1818
      %v1883 = vcvt.s32.f32 %v1819
      %v1884 = vcvt.s32.f32 %v1820
      %v1885 = vcvt.s32.f32 %v1821
      %v1886 = vcvt.s32.f32 %v1822
      %v1887 = vcvt.s32.f32 %v1823
      %v1888 = vcvt.s32.f32 %v1824
      %v1889 = vcvt.s32.f32 %v1825
      %v1890 = vcvt.s32.f32 %v1826
      %v1891 = vcvt.s32.f32 %v1827
      %v1892 = vcvt.s32.f32 %v1828
      %v1893 = vcvt.s32.f32 %v1829
      %v1894 = vcvt.s32.f32 %v1830
      %v1895 = vcvt.s32.f32 %v1831
      %v1896 = vcvt.s32.f32 %v1832
      %v1897 = vcvt.s32.f32 %v1833
      %v1898 = vcvt.s32.f32 %v1834
      %v1899 = vcvt.s32.f32 %v1835
      %v1900 = vcvt.s32.f32 %v1836
      %v1901 = vcvt.s32.f32 %v1837
      %v1902 = vcvt.s32.f32 %v1838
      %v1903 = vcvt.s32.f32 %v1839
      %v1904 = vcvt.s32.f32 %v1840
      %v1905 = vcvt.s32.f32 %v1841
      %v1906 = vcvt.s32.f32 %v1842
      %v1907 = vcvt.s32.f32 %v1843
      %v1908 = vcvt.s32.f32 %v1844
      %v1909 = vcvt.s32.f32 %v1845
      %v1910 = vcvt.s32.f32 %v1846
      %v1911 = vcvt.s32.f32 %v1847
      %v1912 = vcvt.s32.f32 %v1848
      %v1913 = vcvt.s32.f32 %v1849
      %v1914 = vcvt.s32.f32 %v1850
      %v1915 = vcvt.s32.f32 %v1851
      %v1916 = vcvt.s32.f32 %v1852
      %v1917 = vcvt.s32.f32 %v1853
      %v1918 = vcvt.s32.f32 %v1854
      %v1919 = vcvt.s32.f32 %v1855
      %v1920 = vcvt.s32.f32 %v1856
      %v1921 = vcvt.s32.f32 %v1857
      %v1922 = vcvt.s32.f32 %v1858
      %v1923 = vcvt.s32.f32 %v1859
      %v1924 = vcvt.s32.f32 %v1860
      %v1925 = vcvt.s32.f32 %v1861
      %v1926 = vcvt.s32.f32 %v1862
      %v1927 = vcvt.s32.f32 %v1863
      %v1928 = vcvt.s32.f32 %v1864
      %v1929 = vcvt.s32.f32 %v1865
      %v1930 = vcvt.s32.f32 %v1866
      %v1931 = vcvt.s32.f32 %v1867
      %v1932 = vcvt.s32.f32 %v1868
      %v1933 = vcvt.s32.f32 %v1869
      %v1934 = vcvt.s32.f32 %v1870
      %v1935 = vpack.c.bf16 %v1872, %v1871
      %v1936 = vpack.c.bf16 %v1874, %v1873
      %v1937 = vpack.c.bf16 %v1876, %v1875
      %v1938 = vpack.c.bf16 %v1878, %v1877
      %v1939 = vpack.c.bf16 %v1880, %v1879
      %v1940 = vpack.c.bf16 %v1882, %v1881
      %v1941 = vpack.c.bf16 %v1884, %v1883
      %v1942 = vpack.c.bf16 %v1886, %v1885
      %v1943 = vpack.c.bf16 %v1888, %v1887
      %v1944 = vpack.c.bf16 %v1890, %v1889
      %v1945 = vpack.c.bf16 %v1892, %v1891
      %v1946 = vpack.c.bf16 %v1894, %v1893
      %v1947 = vpack.c.bf16 %v1896, %v1895
      %v1948 = vpack.c.bf16 %v1898, %v1897
      %v1949 = vpack.c.bf16 %v1900, %v1899
      %v1950 = vpack.c.bf16 %v1902, %v1901
      %v1951 = vpack.c.bf16 %v1904, %v1903
      %v1952 = vpack.c.bf16 %v1906, %v1905
      %v1953 = vpack.c.bf16 %v1908, %v1907
      %v1954 = vpack.c.bf16 %v1910, %v1909
      %v1955 = vpack.c.bf16 %v1912, %v1911
      %v1956 = vpack.c.bf16 %v1914, %v1913
      %v1957 = vpack.c.bf16 %v1916, %v1915
      %v1958 = vpack.c.bf16 %v1918, %v1917
      %v1959 = vpack.c.bf16 %v1920, %v1919
      %v1960 = vpack.c.bf16 %v1922, %v1921
      %v1961 = vpack.c.bf16 %v1924, %v1923
      %v1962 = vpack.c.bf16 %v1926, %v1925
      %v1963 = vpack.c.bf16 %v1928, %v1927
      %v1964 = vpack.c.bf16 %v1930, %v1929
      %v1965 = vpack.c.bf16 %v1932, %v1931
      %v1966 = vpack.c.bf16 %v1934, %v1933
      %v1967 = vunpack.c.l.bf16 %v1615
      %v1968 = vunpack.c.h.bf16 %v1615
      %v1969 = vunpack.c.l.bf16 %v1616
      %v1970 = vunpack.c.h.bf16 %v1616
      %v1971 = vunpack.c.l.bf16 %v1617
      %v1972 = vunpack.c.h.bf16 %v1617
      %v1973 = vunpack.c.l.bf16 %v1618
      %v1974 = vunpack.c.h.bf16 %v1618
      %v1975 = vunpack.c.l.bf16 %v1619
      %v1976 = vunpack.c.h.bf16 %v1619
      %v1977 = vunpack.c.l.bf16 %v1620
      %v1978 = vunpack.c.h.bf16 %v1620
      %v1979 = vunpack.c.l.bf16 %v1621
      %v1980 = vunpack.c.h.bf16 %v1621
      %v1981 = vunpack.c.l.bf16 %v1622
      %v1982 = vunpack.c.h.bf16 %v1622
      %v1983 = vunpack.c.l.bf16 %v1623
      %v1984 = vunpack.c.h.bf16 %v1623
      %v1985 = vunpack.c.l.bf16 %v1624
      %v1986 = vunpack.c.h.bf16 %v1624
      %v1987 = vunpack.c.l.bf16 %v1625
      %v1988 = vunpack.c.h.bf16 %v1625
      %v1989 = vunpack.c.l.bf16 %v1626
      %v1990 = vunpack.c.h.bf16 %v1626
      %v1991 = vunpack.c.l.bf16 %v1627
      %v1992 = vunpack.c.h.bf16 %v1627
      %v1993 = vunpack.c.l.bf16 %v1628
      %v1994 = vunpack.c.h.bf16 %v1628
      %v1995 = vunpack.c.l.bf16 %v1629
      %v1996 = vunpack.c.h.bf16 %v1629
      %v1997 = vunpack.c.l.bf16 %v1630
      %v1998 = vunpack.c.h.bf16 %v1630
      %v1999 = vunpack.c.l.bf16 %v1631
      %v2000 = vunpack.c.h.bf16 %v1631
      %v2001 = vunpack.c.l.bf16 %v1632
      %v2002 = vunpack.c.h.bf16 %v1632
      %v2003 = vunpack.c.l.bf16 %v1633
      %v2004 = vunpack.c.h.bf16 %v1633
      %v2005 = vunpack.c.l.bf16 %v1634
      %v2006 = vunpack.c.h.bf16 %v1634
      %v2007 = vunpack.c.l.bf16 %v1635
      %v2008 = vunpack.c.h.bf16 %v1635
      %v2009 = vunpack.c.l.bf16 %v1636
      %v2010 = vunpack.c.h.bf16 %v1636
      %v2011 = vunpack.c.l.bf16 %v1637
      %v2012 = vunpack.c.h.bf16 %v1637
      %v2013 = vunpack.c.l.bf16 %v1638
      %v2014 = vunpack.c.h.bf16 %v1638
      %v2015 = vunpack.c.l.bf16 %v1639
      %v2016 = vunpack.c.h.bf16 %v1639
      %v2017 = vunpack.c.l.bf16 %v1640
      %v2018 = vunpack.c.h.bf16 %v1640
      %v2019 = vunpack.c.l.bf16 %v1641
      %v2020 = vunpack.c.h.bf16 %v1641
      %v2021 = vunpack.c.l.bf16 %v1642
      %v2022 = vunpack.c.h.bf16 %v1642
      %v2023 = vunpack.c.l.bf16 %v1643
      %v2024 = vunpack.c.h.bf16 %v1643
      %v2025 = vunpack.c.l.bf16 %v1644
      %v2026 = vunpack.c.h.bf16 %v1644
      %v2027 = vunpack.c.l.bf16 %v1645
      %v2028 = vunpack.c.h.bf16 %v1645
      %v2029 = vunpack.c.l.bf16 %v1646
      %v2030 = vunpack.c.h.bf16 %v1646
      %v2031 = vunpack.c.l.bf16 %v1935
      %v2032 = vunpack.c.h.bf16 %v1935
      %v2033 = vunpack.c.l.bf16 %v1936
      %v2034 = vunpack.c.h.bf16 %v1936
      %v2035 = vunpack.c.l.bf16 %v1937
      %v2036 = vunpack.c.h.bf16 %v1937
      %v2037 = vunpack.c.l.bf16 %v1938
      %v2038 = vunpack.c.h.bf16 %v1938
      %v2039 = vunpack.c.l.bf16 %v1939
      %v2040 = vunpack.c.h.bf16 %v1939
      %v2041 = vunpack.c.l.bf16 %v1940
      %v2042 = vunpack.c.h.bf16 %v1940
      %v2043 = vunpack.c.l.bf16 %v1941
      %v2044 = vunpack.c.h.bf16 %v1941
      %v2045 = vunpack.c.l.bf16 %v1942
      %v2046 = vunpack.c.h.bf16 %v1942
      %v2047 = vunpack.c.l.bf16 %v1943
      %v2048 = vunpack.c.h.bf16 %v1943
      %v2049 = vunpack.c.l.bf16 %v1944
      %v2050 = vunpack.c.h.bf16 %v1944
      %v2051 = vunpack.c.l.bf16 %v1945
      %v2052 = vunpack.c.h.bf16 %v1945
      %v2053 = vunpack.c.l.bf16 %v1946
      %v2054 = vunpack.c.h.bf16 %v1946
      %v2055 = vunpack.c.l.bf16 %v1947
      %v2056 = vunpack.c.h.bf16 %v1947
      %v2057 = vunpack.c.l.bf16 %v1948
      %v2058 = vunpack.c.h.bf16 %v1948
      %v2059 = vunpack.c.l.bf16 %v1949
      %v2060 = vunpack.c.h.bf16 %v1949
      %v2061 = vunpack.c.l.bf16 %v1950
      %v2062 = vunpack.c.h.bf16 %v1950
      %v2063 = vunpack.c.l.bf16 %v1951
      %v2064 = vunpack.c.h.bf16 %v1951
      %v2065 = vunpack.c.l.bf16 %v1952
      %v2066 = vunpack.c.h.bf16 %v1952
      %v2067 = vunpack.c.l.bf16 %v1953
      %v2068 = vunpack.c.h.bf16 %v1953
      %v2069 = vunpack.c.l.bf16 %v1954
      %v2070 = vunpack.c.h.bf16 %v1954
      %v2071 = vunpack.c.l.bf16 %v1955
      %v2072 = vunpack.c.h.bf16 %v1955
      %v2073 = vunpack.c.l.bf16 %v1956
      %v2074 = vunpack.c.h.bf16 %v1956
      %v2075 = vunpack.c.l.bf16 %v1957
      %v2076 = vunpack.c.h.bf16 %v1957
      %v2077 = vunpack.c.l.bf16 %v1958
      %v2078 = vunpack.c.h.bf16 %v1958
      %v2079 = vunpack.c.l.bf16 %v1959
      %v2080 = vunpack.c.h.bf16 %v1959
      %v2081 = vunpack.c.l.bf16 %v1960
      %v2082 = vunpack.c.h.bf16 %v1960
      %v2083 = vunpack.c.l.bf16 %v1961
      %v2084 = vunpack.c.h.bf16 %v1961
      %v2085 = vunpack.c.l.bf16 %v1962
      %v2086 = vunpack.c.h.bf16 %v1962
      %v2087 = vunpack.c.l.bf16 %v1963
      %v2088 = vunpack.c.h.bf16 %v1963
      %v2089 = vunpack.c.l.bf16 %v1964
      %v2090 = vunpack.c.h.bf16 %v1964
      %v2091 = vunpack.c.l.bf16 %v1965
      %v2092 = vunpack.c.h.bf16 %v1965
      %v2093 = vunpack.c.l.bf16 %v1966
      %v2094 = vunpack.c.h.bf16 %v1966
      %v2095 = vadd.f32 %v1967, %v2031
      %v2096 = vadd.f32 %v1968, %v2032
      %v2097 = vadd.f32 %v1969, %v2033
      %v2098 = vadd.f32 %v1970, %v2034
      %v2099 = vadd.f32 %v1971, %v2035
      %v2100 = vadd.f32 %v1972, %v2036
      %v2101 = vadd.f32 %v1973, %v2037
      %v2102 = vadd.f32 %v1974, %v2038
      %v2103 = vadd.f32 %v1975, %v2039
      %v2104 = vadd.f32 %v1976, %v2040
      %v2105 = vadd.f32 %v1977, %v2041
      %v2106 = vadd.f32 %v1978, %v2042
      %v2107 = vadd.f32 %v1979, %v2043
      %v2108 = vadd.f32 %v1980, %v2044
      %v2109 = vadd.f32 %v1981, %v2045
      %v2110 = vadd.f32 %v1982, %v2046
      %v2111 = vadd.f32 %v1983, %v2047
      %v2112 = vadd.f32 %v1984, %v2048
      %v2113 = vadd.f32 %v1985, %v2049
      %v2114 = vadd.f32 %v1986, %v2050
      %v2115 = vadd.f32 %v1987, %v2051
      %v2116 = vadd.f32 %v1988, %v2052
      %v2117 = vadd.f32 %v1989, %v2053
      %v2118 = vadd.f32 %v1990, %v2054
      %v2119 = vadd.f32 %v1991, %v2055
      %v2120 = vadd.f32 %v1992, %v2056
      %v2121 = vadd.f32 %v1993, %v2057
      %v2122 = vadd.f32 %v1994, %v2058
      %v2123 = vadd.f32 %v1995, %v2059
      %v2124 = vadd.f32 %v1996, %v2060
      %v2125 = vadd.f32 %v1997, %v2061
      %v2126 = vadd.f32 %v1998, %v2062
      %v2127 = vadd.f32 %v1999, %v2063
      %v2128 = vadd.f32 %v2000, %v2064
      %v2129 = vadd.f32 %v2001, %v2065
      %v2130 = vadd.f32 %v2002, %v2066
      %v2131 = vadd.f32 %v2003, %v2067
      %v2132 = vadd.f32 %v2004, %v2068
      %v2133 = vadd.f32 %v2005, %v2069
      %v2134 = vadd.f32 %v2006, %v2070
      %v2135 = vadd.f32 %v2007, %v2071
      %v2136 = vadd.f32 %v2008, %v2072
      %v2137 = vadd.f32 %v2009, %v2073
      %v2138 = vadd.f32 %v2010, %v2074
      %v2139 = vadd.f32 %v2011, %v2075
      %v2140 = vadd.f32 %v2012, %v2076
      %v2141 = vadd.f32 %v2013, %v2077
      %v2142 = vadd.f32 %v2014, %v2078
      %v2143 = vadd.f32 %v2015, %v2079
      %v2144 = vadd.f32 %v2016, %v2080
      %v2145 = vadd.f32 %v2017, %v2081
      %v2146 = vadd.f32 %v2018, %v2082
      %v2147 = vadd.f32 %v2019, %v2083
      %v2148 = vadd.f32 %v2020, %v2084
      %v2149 = vadd.f32 %v2021, %v2085
      %v2150 = vadd.f32 %v2022, %v2086
      %v2151 = vadd.f32 %v2023, %v2087
      %v2152 = vadd.f32 %v2024, %v2088
      %v2153 = vadd.f32 %v2025, %v2089
      %v2154 = vadd.f32 %v2026, %v2090
      %v2155 = vadd.f32 %v2027, %v2091
      %v2156 = vadd.f32 %v2028, %v2092
      %v2157 = vadd.f32 %v2029, %v2093
      %v2158 = vadd.f32 %v2030, %v2094
      %v2159 = vpack.c.bf16 %v2096, %v2095
      %v2160 = vpack.c.bf16 %v2098, %v2097
      %v2161 = vpack.c.bf16 %v2100, %v2099
      %v2162 = vpack.c.bf16 %v2102, %v2101
      %v2163 = vpack.c.bf16 %v2104, %v2103
      %v2164 = vpack.c.bf16 %v2106, %v2105
      %v2165 = vpack.c.bf16 %v2108, %v2107
      %v2166 = vpack.c.bf16 %v2110, %v2109
      %v2167 = vpack.c.bf16 %v2112, %v2111
      %v2168 = vpack.c.bf16 %v2114, %v2113
      %v2169 = vpack.c.bf16 %v2116, %v2115
      %v2170 = vpack.c.bf16 %v2118, %v2117
      %v2171 = vpack.c.bf16 %v2120, %v2119
      %v2172 = vpack.c.bf16 %v2122, %v2121
      %v2173 = vpack.c.bf16 %v2124, %v2123
      %v2174 = vpack.c.bf16 %v2126, %v2125
      %v2175 = vpack.c.bf16 %v2128, %v2127
      %v2176 = vpack.c.bf16 %v2130, %v2129
      %v2177 = vpack.c.bf16 %v2132, %v2131
      %v2178 = vpack.c.bf16 %v2134, %v2133
      %v2179 = vpack.c.bf16 %v2136, %v2135
      %v2180 = vpack.c.bf16 %v2138, %v2137
      %v2181 = vpack.c.bf16 %v2140, %v2139
      %v2182 = vpack.c.bf16 %v2142, %v2141
      %v2183 = vpack.c.bf16 %v2144, %v2143
      %v2184 = vpack.c.bf16 %v2146, %v2145
      %v2185 = vpack.c.bf16 %v2148, %v2147
      %v2186 = vpack.c.bf16 %v2150, %v2149
      %v2187 = vpack.c.bf16 %v2152, %v2151
      %v2188 = vpack.c.bf16 %v2154, %v2153
      %v2189 = vpack.c.bf16 %v2156, %v2155
      %v2190 = vpack.c.bf16 %v2158, %v2157
      %2191 = vset.pattern.permute.xlu0 4
      %2192 = vperm.xlu0 %2191, %v44
      %v2193 = vpop.permute.xlu0 %2192
      %2194 = vset.pattern.permute.xlu0 4
      %2195 = vperm.xlu0 %2194, %v45
      %v2196 = vpop.permute.xlu0 %2195
      %2197 = vset.pattern.permute.xlu0 4
      %2198 = vperm.xlu0 %2197, %v46
      %v2199 = vpop.permute.xlu0 %2198
      %2200 = vset.pattern.permute.xlu0 4
      %2201 = vperm.xlu0 %2200, %v47
      %v2202 = vpop.permute.xlu0 %2201
      %2203 = vset.pattern.permute.xlu0 4
      %2204 = vperm.xlu0 %2203, %v48
      %v2205 = vpop.permute.xlu0 %2204
      %2206 = vset.pattern.permute.xlu0 4
      %2207 = vperm.xlu0 %2206, %v49
      %v2208 = vpop.permute.xlu0 %2207
      %2209 = vset.pattern.permute.xlu0 4
      %2210 = vperm.xlu0 %2209, %v50
      %v2211 = vpop.permute.xlu0 %2210
      %2212 = vset.pattern.permute.xlu0 4
      %2213 = vperm.xlu0 %2212, %v51
      %v2214 = vpop.permute.xlu0 %2213
      %2215 = vset.pattern.permute.xlu0 4
      %2216 = vperm.xlu0 %2215, %v52
      %v2217 = vpop.permute.xlu0 %2216
      %2218 = vset.pattern.permute.xlu0 4
      %2219 = vperm.xlu0 %2218, %v53
      %v2220 = vpop.permute.xlu0 %2219
      %2221 = vset.pattern.permute.xlu0 4
      %2222 = vperm.xlu0 %2221, %v54
      %v2223 = vpop.permute.xlu0 %2222
      %2224 = vset.pattern.permute.xlu0 4
      %2225 = vperm.xlu0 %2224, %v55
      %v2226 = vpop.permute.xlu0 %2225
      %2227 = vset.pattern.permute.xlu0 4
      %2228 = vperm.xlu0 %2227, %v56
      %v2229 = vpop.permute.xlu0 %2228
      %2230 = vset.pattern.permute.xlu0 4
      %2231 = vperm.xlu0 %2230, %v57
      %v2232 = vpop.permute.xlu0 %2231
      %2233 = vset.pattern.permute.xlu0 4
      %2234 = vperm.xlu0 %2233, %v58
      %v2235 = vpop.permute.xlu0 %2234
      %2236 = vset.pattern.permute.xlu0 4
      %2237 = vperm.xlu0 %2236, %v59
      %v2238 = vpop.permute.xlu0 %2237
      %2239 = vset.pattern.permute.xlu0 4
      %2240 = vperm.xlu0 %2239, %v60
      %v2241 = vpop.permute.xlu0 %2240
      %2242 = vset.pattern.permute.xlu0 4
      %2243 = vperm.xlu0 %2242, %v61
      %v2244 = vpop.permute.xlu0 %2243
      %2245 = vset.pattern.permute.xlu0 4
      %2246 = vperm.xlu0 %2245, %v62
      %v2247 = vpop.permute.xlu0 %2246
      %2248 = vset.pattern.permute.xlu0 4
      %2249 = vperm.xlu0 %2248, %v63
      %v2250 = vpop.permute.xlu0 %2249
      %2251 = vset.pattern.permute.xlu0 4
      %2252 = vperm.xlu0 %2251, %v64
      %v2253 = vpop.permute.xlu0 %2252
      %2254 = vset.pattern.permute.xlu0 4
      %2255 = vperm.xlu0 %2254, %v65
      %v2256 = vpop.permute.xlu0 %2255
      %2257 = vset.pattern.permute.xlu0 4
      %2258 = vperm.xlu0 %2257, %v66
      %v2259 = vpop.permute.xlu0 %2258
      %2260 = vset.pattern.permute.xlu0 4
      %2261 = vperm.xlu0 %2260, %v67
      %v2262 = vpop.permute.xlu0 %2261
      %2263 = vset.pattern.permute.xlu0 4
      %2264 = vperm.xlu0 %2263, %v68
      %v2265 = vpop.permute.xlu0 %2264
      %2266 = vset.pattern.permute.xlu0 4
      %2267 = vperm.xlu0 %2266, %v69
      %v2268 = vpop.permute.xlu0 %2267
      %2269 = vset.pattern.permute.xlu0 4
      %2270 = vperm.xlu0 %2269, %v70
      %v2271 = vpop.permute.xlu0 %2270
      %2272 = vset.pattern.permute.xlu0 4
      %2273 = vperm.xlu0 %2272, %v71
      %v2274 = vpop.permute.xlu0 %2273
      %2275 = vset.pattern.permute.xlu0 4
      %2276 = vperm.xlu0 %2275, %v72
      %v2277 = vpop.permute.xlu0 %2276
      %2278 = vset.pattern.permute.xlu0 4
      %2279 = vperm.xlu0 %2278, %v73
      %v2280 = vpop.permute.xlu0 %2279
      %2281 = vset.pattern.permute.xlu0 4
      %2282 = vperm.xlu0 %2281, %v74
      %v2283 = vpop.permute.xlu0 %2282
      %2284 = vset.pattern.permute.xlu0 4
      %2285 = vperm.xlu0 %2284, %v75
      %v2286 = vpop.permute.xlu0 %2285
      %vm2287 = vcmp.eq.s32.totalorder %v2193, %v77
      %vm2288 = vcmp.eq.s32.totalorder %v2193, %v78
      %vm2289 = vcmp.eq.s32.totalorder %v2196, %v77
      %vm2290 = vcmp.eq.s32.totalorder %v2196, %v78
      %vm2291 = vcmp.eq.s32.totalorder %v2199, %v77
      %vm2292 = vcmp.eq.s32.totalorder %v2199, %v78
      %vm2293 = vcmp.eq.s32.totalorder %v2202, %v77
      %vm2294 = vcmp.eq.s32.totalorder %v2202, %v78
      %vm2295 = vcmp.eq.s32.totalorder %v2205, %v77
      %vm2296 = vcmp.eq.s32.totalorder %v2205, %v78
      %vm2297 = vcmp.eq.s32.totalorder %v2208, %v77
      %vm2298 = vcmp.eq.s32.totalorder %v2208, %v78
      %vm2299 = vcmp.eq.s32.totalorder %v2211, %v77
      %vm2300 = vcmp.eq.s32.totalorder %v2211, %v78
      %vm2301 = vcmp.eq.s32.totalorder %v2214, %v77
      %vm2302 = vcmp.eq.s32.totalorder %v2214, %v78
      %vm2303 = vcmp.eq.s32.totalorder %v2217, %v77
      %vm2304 = vcmp.eq.s32.totalorder %v2217, %v78
      %vm2305 = vcmp.eq.s32.totalorder %v2220, %v77
      %vm2306 = vcmp.eq.s32.totalorder %v2220, %v78
      %vm2307 = vcmp.eq.s32.totalorder %v2223, %v77
      %vm2308 = vcmp.eq.s32.totalorder %v2223, %v78
      %vm2309 = vcmp.eq.s32.totalorder %v2226, %v77
      %vm2310 = vcmp.eq.s32.totalorder %v2226, %v78
      %vm2311 = vcmp.eq.s32.totalorder %v2229, %v77
      %vm2312 = vcmp.eq.s32.totalorder %v2229, %v78
      %vm2313 = vcmp.eq.s32.totalorder %v2232, %v77
      %vm2314 = vcmp.eq.s32.totalorder %v2232, %v78
      %vm2315 = vcmp.eq.s32.totalorder %v2235, %v77
      %vm2316 = vcmp.eq.s32.totalorder %v2235, %v78
      %vm2317 = vcmp.eq.s32.totalorder %v2238, %v77
      %vm2318 = vcmp.eq.s32.totalorder %v2238, %v78
      %vm2319 = vcmp.eq.s32.totalorder %v2241, %v77
      %vm2320 = vcmp.eq.s32.totalorder %v2241, %v78
      %vm2321 = vcmp.eq.s32.totalorder %v2244, %v77
      %vm2322 = vcmp.eq.s32.totalorder %v2244, %v78
      %vm2323 = vcmp.eq.s32.totalorder %v2247, %v77
      %vm2324 = vcmp.eq.s32.totalorder %v2247, %v78
      %vm2325 = vcmp.eq.s32.totalorder %v2250, %v77
      %vm2326 = vcmp.eq.s32.totalorder %v2250, %v78
      %vm2327 = vcmp.eq.s32.totalorder %v2253, %v77
      %vm2328 = vcmp.eq.s32.totalorder %v2253, %v78
      %vm2329 = vcmp.eq.s32.totalorder %v2256, %v77
      %vm2330 = vcmp.eq.s32.totalorder %v2256, %v78
      %vm2331 = vcmp.eq.s32.totalorder %v2259, %v77
      %vm2332 = vcmp.eq.s32.totalorder %v2259, %v78
      %vm2333 = vcmp.eq.s32.totalorder %v2262, %v77
      %vm2334 = vcmp.eq.s32.totalorder %v2262, %v78
      %vm2335 = vcmp.eq.s32.totalorder %v2265, %v77
      %vm2336 = vcmp.eq.s32.totalorder %v2265, %v78
      %vm2337 = vcmp.eq.s32.totalorder %v2268, %v77
      %vm2338 = vcmp.eq.s32.totalorder %v2268, %v78
      %vm2339 = vcmp.eq.s32.totalorder %v2271, %v77
      %vm2340 = vcmp.eq.s32.totalorder %v2271, %v78
      %vm2341 = vcmp.eq.s32.totalorder %v2274, %v77
      %vm2342 = vcmp.eq.s32.totalorder %v2274, %v78
      %vm2343 = vcmp.eq.s32.totalorder %v2277, %v77
      %vm2344 = vcmp.eq.s32.totalorder %v2277, %v78
      %vm2345 = vcmp.eq.s32.totalorder %v2280, %v77
      %vm2346 = vcmp.eq.s32.totalorder %v2280, %v78
      %vm2347 = vcmp.eq.s32.totalorder %v2283, %v77
      %vm2348 = vcmp.eq.s32.totalorder %v2283, %v78
      %vm2349 = vcmp.eq.s32.totalorder %v2286, %v77
      %vm2350 = vcmp.eq.s32.totalorder %v2286, %v78
      %v2351 = vsel %vm2287, 1, 0
      %v2352 = vsel %vm2288, 1, 0
      %v2353 = vsel %vm2289, 1, 0
      %v2354 = vsel %vm2290, 1, 0
      %v2355 = vsel %vm2291, 1, 0
      %v2356 = vsel %vm2292, 1, 0
      %v2357 = vsel %vm2293, 1, 0
      %v2358 = vsel %vm2294, 1, 0
      %v2359 = vsel %vm2295, 1, 0
      %v2360 = vsel %vm2296, 1, 0
      %v2361 = vsel %vm2297, 1, 0
      %v2362 = vsel %vm2298, 1, 0
      %v2363 = vsel %vm2299, 1, 0
      %v2364 = vsel %vm2300, 1, 0
      %v2365 = vsel %vm2301, 1, 0
      %v2366 = vsel %vm2302, 1, 0
      %v2367 = vsel %vm2303, 1, 0
      %v2368 = vsel %vm2304, 1, 0
      %v2369 = vsel %vm2305, 1, 0
      %v2370 = vsel %vm2306, 1, 0
      %v2371 = vsel %vm2307, 1, 0
      %v2372 = vsel %vm2308, 1, 0
      %v2373 = vsel %vm2309, 1, 0
      %v2374 = vsel %vm2310, 1, 0
      %v2375 = vsel %vm2311, 1, 0
      %v2376 = vsel %vm2312, 1, 0
      %v2377 = vsel %vm2313, 1, 0
      %v2378 = vsel %vm2314, 1, 0
      %v2379 = vsel %vm2315, 1, 0
      %v2380 = vsel %vm2316, 1, 0
      %v2381 = vsel %vm2317, 1, 0
      %v2382 = vsel %vm2318, 1, 0
      %v2383 = vsel %vm2319, 1, 0
      %v2384 = vsel %vm2320, 1, 0
      %v2385 = vsel %vm2321, 1, 0
      %v2386 = vsel %vm2322, 1, 0
      %v2387 = vsel %vm2323, 1, 0
      %v2388 = vsel %vm2324, 1, 0
      %v2389 = vsel %vm2325, 1, 0
      %v2390 = vsel %vm2326, 1, 0
      %v2391 = vsel %vm2327, 1, 0
      %v2392 = vsel %vm2328, 1, 0
      %v2393 = vsel %vm2329, 1, 0
      %v2394 = vsel %vm2330, 1, 0
      %v2395 = vsel %vm2331, 1, 0
      %v2396 = vsel %vm2332, 1, 0
      %v2397 = vsel %vm2333, 1, 0
      %v2398 = vsel %vm2334, 1, 0
      %v2399 = vsel %vm2335, 1, 0
      %v2400 = vsel %vm2336, 1, 0
      %v2401 = vsel %vm2337, 1, 0
      %v2402 = vsel %vm2338, 1, 0
      %v2403 = vsel %vm2339, 1, 0
      %v2404 = vsel %vm2340, 1, 0
      %v2405 = vsel %vm2341, 1, 0
      %v2406 = vsel %vm2342, 1, 0
      %v2407 = vsel %vm2343, 1, 0
      %v2408 = vsel %vm2344, 1, 0
      %v2409 = vsel %vm2345, 1, 0
      %v2410 = vsel %vm2346, 1, 0
      %v2411 = vsel %vm2347, 1, 0
      %v2412 = vsel %vm2348, 1, 0
      %v2413 = vsel %vm2349, 1, 0
      %v2414 = vsel %vm2350, 1, 0
      %v2415 = vcvt.s32.f32 %v2351
      %v2416 = vcvt.s32.f32 %v2352
      %v2417 = vcvt.s32.f32 %v2353
      %v2418 = vcvt.s32.f32 %v2354
      %v2419 = vcvt.s32.f32 %v2355
      %v2420 = vcvt.s32.f32 %v2356
      %v2421 = vcvt.s32.f32 %v2357
      %v2422 = vcvt.s32.f32 %v2358
      %v2423 = vcvt.s32.f32 %v2359
      %v2424 = vcvt.s32.f32 %v2360
      %v2425 = vcvt.s32.f32 %v2361
      %v2426 = vcvt.s32.f32 %v2362
      %v2427 = vcvt.s32.f32 %v2363
      %v2428 = vcvt.s32.f32 %v2364
      %v2429 = vcvt.s32.f32 %v2365
      %v2430 = vcvt.s32.f32 %v2366
      %v2431 = vcvt.s32.f32 %v2367
      %v2432 = vcvt.s32.f32 %v2368
      %v2433 = vcvt.s32.f32 %v2369
      %v2434 = vcvt.s32.f32 %v2370
      %v2435 = vcvt.s32.f32 %v2371
      %v2436 = vcvt.s32.f32 %v2372
      %v2437 = vcvt.s32.f32 %v2373
      %v2438 = vcvt.s32.f32 %v2374
      %v2439 = vcvt.s32.f32 %v2375
      %v2440 = vcvt.s32.f32 %v2376
      %v2441 = vcvt.s32.f32 %v2377
      %v2442 = vcvt.s32.f32 %v2378
      %v2443 = vcvt.s32.f32 %v2379
      %v2444 = vcvt.s32.f32 %v2380
      %v2445 = vcvt.s32.f32 %v2381
      %v2446 = vcvt.s32.f32 %v2382
      %v2447 = vcvt.s32.f32 %v2383
      %v2448 = vcvt.s32.f32 %v2384
      %v2449 = vcvt.s32.f32 %v2385
      %v2450 = vcvt.s32.f32 %v2386
      %v2451 = vcvt.s32.f32 %v2387
      %v2452 = vcvt.s32.f32 %v2388
      %v2453 = vcvt.s32.f32 %v2389
      %v2454 = vcvt.s32.f32 %v2390
      %v2455 = vcvt.s32.f32 %v2391
      %v2456 = vcvt.s32.f32 %v2392
      %v2457 = vcvt.s32.f32 %v2393
      %v2458 = vcvt.s32.f32 %v2394
      %v2459 = vcvt.s32.f32 %v2395
      %v2460 = vcvt.s32.f32 %v2396
      %v2461 = vcvt.s32.f32 %v2397
      %v2462 = vcvt.s32.f32 %v2398
      %v2463 = vcvt.s32.f32 %v2399
      %v2464 = vcvt.s32.f32 %v2400
      %v2465 = vcvt.s32.f32 %v2401
      %v2466 = vcvt.s32.f32 %v2402
      %v2467 = vcvt.s32.f32 %v2403
      %v2468 = vcvt.s32.f32 %v2404
      %v2469 = vcvt.s32.f32 %v2405
      %v2470 = vcvt.s32.f32 %v2406
      %v2471 = vcvt.s32.f32 %v2407
      %v2472 = vcvt.s32.f32 %v2408
      %v2473 = vcvt.s32.f32 %v2409
      %v2474 = vcvt.s32.f32 %v2410
      %v2475 = vcvt.s32.f32 %v2411
      %v2476 = vcvt.s32.f32 %v2412
      %v2477 = vcvt.s32.f32 %v2413
      %v2478 = vcvt.s32.f32 %v2414
      %v2479 = vpack.c.bf16 %v2416, %v2415
      %v2480 = vpack.c.bf16 %v2418, %v2417
      %v2481 = vpack.c.bf16 %v2420, %v2419
      %v2482 = vpack.c.bf16 %v2422, %v2421
      %v2483 = vpack.c.bf16 %v2424, %v2423
      %v2484 = vpack.c.bf16 %v2426, %v2425
      %v2485 = vpack.c.bf16 %v2428, %v2427
      %v2486 = vpack.c.bf16 %v2430, %v2429
      %v2487 = vpack.c.bf16 %v2432, %v2431
      %v2488 = vpack.c.bf16 %v2434, %v2433
      %v2489 = vpack.c.bf16 %v2436, %v2435
      %v2490 = vpack.c.bf16 %v2438, %v2437
      %v2491 = vpack.c.bf16 %v2440, %v2439
      %v2492 = vpack.c.bf16 %v2442, %v2441
      %v2493 = vpack.c.bf16 %v2444, %v2443
      %v2494 = vpack.c.bf16 %v2446, %v2445
      %v2495 = vpack.c.bf16 %v2448, %v2447
      %v2496 = vpack.c.bf16 %v2450, %v2449
      %v2497 = vpack.c.bf16 %v2452, %v2451
      %v2498 = vpack.c.bf16 %v2454, %v2453
      %v2499 = vpack.c.bf16 %v2456, %v2455
      %v2500 = vpack.c.bf16 %v2458, %v2457
      %v2501 = vpack.c.bf16 %v2460, %v2459
      %v2502 = vpack.c.bf16 %v2462, %v2461
      %v2503 = vpack.c.bf16 %v2464, %v2463
      %v2504 = vpack.c.bf16 %v2466, %v2465
      %v2505 = vpack.c.bf16 %v2468, %v2467
      %v2506 = vpack.c.bf16 %v2470, %v2469
      %v2507 = vpack.c.bf16 %v2472, %v2471
      %v2508 = vpack.c.bf16 %v2474, %v2473
      %v2509 = vpack.c.bf16 %v2476, %v2475
      %v2510 = vpack.c.bf16 %v2478, %v2477
      %v2511 = vunpack.c.l.bf16 %v2159
      %v2512 = vunpack.c.h.bf16 %v2159
      %v2513 = vunpack.c.l.bf16 %v2160
      %v2514 = vunpack.c.h.bf16 %v2160
      %v2515 = vunpack.c.l.bf16 %v2161
      %v2516 = vunpack.c.h.bf16 %v2161
      %v2517 = vunpack.c.l.bf16 %v2162
      %v2518 = vunpack.c.h.bf16 %v2162
      %v2519 = vunpack.c.l.bf16 %v2163
      %v2520 = vunpack.c.h.bf16 %v2163
      %v2521 = vunpack.c.l.bf16 %v2164
      %v2522 = vunpack.c.h.bf16 %v2164
      %v2523 = vunpack.c.l.bf16 %v2165
      %v2524 = vunpack.c.h.bf16 %v2165
      %v2525 = vunpack.c.l.bf16 %v2166
      %v2526 = vunpack.c.h.bf16 %v2166
      %v2527 = vunpack.c.l.bf16 %v2167
      %v2528 = vunpack.c.h.bf16 %v2167
      %v2529 = vunpack.c.l.bf16 %v2168
      %v2530 = vunpack.c.h.bf16 %v2168
      %v2531 = vunpack.c.l.bf16 %v2169
      %v2532 = vunpack.c.h.bf16 %v2169
      %v2533 = vunpack.c.l.bf16 %v2170
      %v2534 = vunpack.c.h.bf16 %v2170
      %v2535 = vunpack.c.l.bf16 %v2171
      %v2536 = vunpack.c.h.bf16 %v2171
      %v2537 = vunpack.c.l.bf16 %v2172
      %v2538 = vunpack.c.h.bf16 %v2172
      %v2539 = vunpack.c.l.bf16 %v2173
      %v2540 = vunpack.c.h.bf16 %v2173
      %v2541 = vunpack.c.l.bf16 %v2174
      %v2542 = vunpack.c.h.bf16 %v2174
      %v2543 = vunpack.c.l.bf16 %v2175
      %v2544 = vunpack.c.h.bf16 %v2175
      %v2545 = vunpack.c.l.bf16 %v2176
      %v2546 = vunpack.c.h.bf16 %v2176
      %v2547 = vunpack.c.l.bf16 %v2177
      %v2548 = vunpack.c.h.bf16 %v2177
      %v2549 = vunpack.c.l.bf16 %v2178
      %v2550 = vunpack.c.h.bf16 %v2178
      %v2551 = vunpack.c.l.bf16 %v2179
      %v2552 = vunpack.c.h.bf16 %v2179
      %v2553 = vunpack.c.l.bf16 %v2180
      %v2554 = vunpack.c.h.bf16 %v2180
      %v2555 = vunpack.c.l.bf16 %v2181
      %v2556 = vunpack.c.h.bf16 %v2181
      %v2557 = vunpack.c.l.bf16 %v2182
      %v2558 = vunpack.c.h.bf16 %v2182
      %v2559 = vunpack.c.l.bf16 %v2183
      %v2560 = vunpack.c.h.bf16 %v2183
      %v2561 = vunpack.c.l.bf16 %v2184
      %v2562 = vunpack.c.h.bf16 %v2184
      %v2563 = vunpack.c.l.bf16 %v2185
      %v2564 = vunpack.c.h.bf16 %v2185
      %v2565 = vunpack.c.l.bf16 %v2186
      %v2566 = vunpack.c.h.bf16 %v2186
      %v2567 = vunpack.c.l.bf16 %v2187
      %v2568 = vunpack.c.h.bf16 %v2187
      %v2569 = vunpack.c.l.bf16 %v2188
      %v2570 = vunpack.c.h.bf16 %v2188
      %v2571 = vunpack.c.l.bf16 %v2189
      %v2572 = vunpack.c.h.bf16 %v2189
      %v2573 = vunpack.c.l.bf16 %v2190
      %v2574 = vunpack.c.h.bf16 %v2190
      %v2575 = vunpack.c.l.bf16 %v2479
      %v2576 = vunpack.c.h.bf16 %v2479
      %v2577 = vunpack.c.l.bf16 %v2480
      %v2578 = vunpack.c.h.bf16 %v2480
      %v2579 = vunpack.c.l.bf16 %v2481
      %v2580 = vunpack.c.h.bf16 %v2481
      %v2581 = vunpack.c.l.bf16 %v2482
      %v2582 = vunpack.c.h.bf16 %v2482
      %v2583 = vunpack.c.l.bf16 %v2483
      %v2584 = vunpack.c.h.bf16 %v2483
      %v2585 = vunpack.c.l.bf16 %v2484
      %v2586 = vunpack.c.h.bf16 %v2484
      %v2587 = vunpack.c.l.bf16 %v2485
      %v2588 = vunpack.c.h.bf16 %v2485
      %v2589 = vunpack.c.l.bf16 %v2486
      %v2590 = vunpack.c.h.bf16 %v2486
      %v2591 = vunpack.c.l.bf16 %v2487
      %v2592 = vunpack.c.h.bf16 %v2487
      %v2593 = vunpack.c.l.bf16 %v2488
      %v2594 = vunpack.c.h.bf16 %v2488
      %v2595 = vunpack.c.l.bf16 %v2489
      %v2596 = vunpack.c.h.bf16 %v2489
      %v2597 = vunpack.c.l.bf16 %v2490
      %v2598 = vunpack.c.h.bf16 %v2490
      %v2599 = vunpack.c.l.bf16 %v2491
      %v2600 = vunpack.c.h.bf16 %v2491
      %v2601 = vunpack.c.l.bf16 %v2492
      %v2602 = vunpack.c.h.bf16 %v2492
      %v2603 = vunpack.c.l.bf16 %v2493
      %v2604 = vunpack.c.h.bf16 %v2493
      %v2605 = vunpack.c.l.bf16 %v2494
      %v2606 = vunpack.c.h.bf16 %v2494
      %v2607 = vunpack.c.l.bf16 %v2495
      %v2608 = vunpack.c.h.bf16 %v2495
      %v2609 = vunpack.c.l.bf16 %v2496
      %v2610 = vunpack.c.h.bf16 %v2496
      %v2611 = vunpack.c.l.bf16 %v2497
      %v2612 = vunpack.c.h.bf16 %v2497
      %v2613 = vunpack.c.l.bf16 %v2498
      %v2614 = vunpack.c.h.bf16 %v2498
      %v2615 = vunpack.c.l.bf16 %v2499
      %v2616 = vunpack.c.h.bf16 %v2499
      %v2617 = vunpack.c.l.bf16 %v2500
      %v2618 = vunpack.c.h.bf16 %v2500
      %v2619 = vunpack.c.l.bf16 %v2501
      %v2620 = vunpack.c.h.bf16 %v2501
      %v2621 = vunpack.c.l.bf16 %v2502
      %v2622 = vunpack.c.h.bf16 %v2502
      %v2623 = vunpack.c.l.bf16 %v2503
      %v2624 = vunpack.c.h.bf16 %v2503
      %v2625 = vunpack.c.l.bf16 %v2504
      %v2626 = vunpack.c.h.bf16 %v2504
      %v2627 = vunpack.c.l.bf16 %v2505
      %v2628 = vunpack.c.h.bf16 %v2505
      %v2629 = vunpack.c.l.bf16 %v2506
      %v2630 = vunpack.c.h.bf16 %v2506
      %v2631 = vunpack.c.l.bf16 %v2507
      %v2632 = vunpack.c.h.bf16 %v2507
      %v2633 = vunpack.c.l.bf16 %v2508
      %v2634 = vunpack.c.h.bf16 %v2508
      %v2635 = vunpack.c.l.bf16 %v2509
      %v2636 = vunpack.c.h.bf16 %v2509
      %v2637 = vunpack.c.l.bf16 %v2510
      %v2638 = vunpack.c.h.bf16 %v2510
      %v2639 = vadd.f32 %v2511, %v2575
      %v2640 = vadd.f32 %v2512, %v2576
      %v2641 = vadd.f32 %v2513, %v2577
      %v2642 = vadd.f32 %v2514, %v2578
      %v2643 = vadd.f32 %v2515, %v2579
      %v2644 = vadd.f32 %v2516, %v2580
      %v2645 = vadd.f32 %v2517, %v2581
      %v2646 = vadd.f32 %v2518, %v2582
      %v2647 = vadd.f32 %v2519, %v2583
      %v2648 = vadd.f32 %v2520, %v2584
      %v2649 = vadd.f32 %v2521, %v2585
      %v2650 = vadd.f32 %v2522, %v2586
      %v2651 = vadd.f32 %v2523, %v2587
      %v2652 = vadd.f32 %v2524, %v2588
      %v2653 = vadd.f32 %v2525, %v2589
      %v2654 = vadd.f32 %v2526, %v2590
      %v2655 = vadd.f32 %v2527, %v2591
      %v2656 = vadd.f32 %v2528, %v2592
      %v2657 = vadd.f32 %v2529, %v2593
      %v2658 = vadd.f32 %v2530, %v2594
      %v2659 = vadd.f32 %v2531, %v2595
      %v2660 = vadd.f32 %v2532, %v2596
      %v2661 = vadd.f32 %v2533, %v2597
      %v2662 = vadd.f32 %v2534, %v2598
      %v2663 = vadd.f32 %v2535, %v2599
      %v2664 = vadd.f32 %v2536, %v2600
      %v2665 = vadd.f32 %v2537, %v2601
      %v2666 = vadd.f32 %v2538, %v2602
      %v2667 = vadd.f32 %v2539, %v2603
      %v2668 = vadd.f32 %v2540, %v2604
      %v2669 = vadd.f32 %v2541, %v2605
      %v2670 = vadd.f32 %v2542, %v2606
      %v2671 = vadd.f32 %v2543, %v2607
      %v2672 = vadd.f32 %v2544, %v2608
      %v2673 = vadd.f32 %v2545, %v2609
      %v2674 = vadd.f32 %v2546, %v2610
      %v2675 = vadd.f32 %v2547, %v2611
      %v2676 = vadd.f32 %v2548, %v2612
      %v2677 = vadd.f32 %v2549, %v2613
      %v2678 = vadd.f32 %v2550, %v2614
      %v2679 = vadd.f32 %v2551, %v2615
      %v2680 = vadd.f32 %v2552, %v2616
      %v2681 = vadd.f32 %v2553, %v2617
      %v2682 = vadd.f32 %v2554, %v2618
      %v2683 = vadd.f32 %v2555, %v2619
      %v2684 = vadd.f32 %v2556, %v2620
      %v2685 = vadd.f32 %v2557, %v2621
      %v2686 = vadd.f32 %v2558, %v2622
      %v2687 = vadd.f32 %v2559, %v2623
      %v2688 = vadd.f32 %v2560, %v2624
      %v2689 = vadd.f32 %v2561, %v2625
      %v2690 = vadd.f32 %v2562, %v2626
      %v2691 = vadd.f32 %v2563, %v2627
      %v2692 = vadd.f32 %v2564, %v2628
      %v2693 = vadd.f32 %v2565, %v2629
      %v2694 = vadd.f32 %v2566, %v2630
      %v2695 = vadd.f32 %v2567, %v2631
      %v2696 = vadd.f32 %v2568, %v2632
      %v2697 = vadd.f32 %v2569, %v2633
      %v2698 = vadd.f32 %v2570, %v2634
      %v2699 = vadd.f32 %v2571, %v2635
      %v2700 = vadd.f32 %v2572, %v2636
      %v2701 = vadd.f32 %v2573, %v2637
      %v2702 = vadd.f32 %v2574, %v2638
      %v2703 = vpack.c.bf16 %v2640, %v2639
      %v2704 = vpack.c.bf16 %v2642, %v2641
      %v2705 = vpack.c.bf16 %v2644, %v2643
      %v2706 = vpack.c.bf16 %v2646, %v2645
      %v2707 = vpack.c.bf16 %v2648, %v2647
      %v2708 = vpack.c.bf16 %v2650, %v2649
      %v2709 = vpack.c.bf16 %v2652, %v2651
      %v2710 = vpack.c.bf16 %v2654, %v2653
      %v2711 = vpack.c.bf16 %v2656, %v2655
      %v2712 = vpack.c.bf16 %v2658, %v2657
      %v2713 = vpack.c.bf16 %v2660, %v2659
      %v2714 = vpack.c.bf16 %v2662, %v2661
      %v2715 = vpack.c.bf16 %v2664, %v2663
      %v2716 = vpack.c.bf16 %v2666, %v2665
      %v2717 = vpack.c.bf16 %v2668, %v2667
      %v2718 = vpack.c.bf16 %v2670, %v2669
      %v2719 = vpack.c.bf16 %v2672, %v2671
      %v2720 = vpack.c.bf16 %v2674, %v2673
      %v2721 = vpack.c.bf16 %v2676, %v2675
      %v2722 = vpack.c.bf16 %v2678, %v2677
      %v2723 = vpack.c.bf16 %v2680, %v2679
      %v2724 = vpack.c.bf16 %v2682, %v2681
      %v2725 = vpack.c.bf16 %v2684, %v2683
      %v2726 = vpack.c.bf16 %v2686, %v2685
      %v2727 = vpack.c.bf16 %v2688, %v2687
      %v2728 = vpack.c.bf16 %v2690, %v2689
      %v2729 = vpack.c.bf16 %v2692, %v2691
      %v2730 = vpack.c.bf16 %v2694, %v2693
      %v2731 = vpack.c.bf16 %v2696, %v2695
      %v2732 = vpack.c.bf16 %v2698, %v2697
      %v2733 = vpack.c.bf16 %v2700, %v2699
      %v2734 = vpack.c.bf16 %v2702, %v2701
      %2735 = vset.pattern.permute.xlu0 5
      %2736 = vperm.xlu0 %2735, %v44
      %v2737 = vpop.permute.xlu0 %2736
      %2738 = vset.pattern.permute.xlu0 5
      %2739 = vperm.xlu0 %2738, %v45
      %v2740 = vpop.permute.xlu0 %2739
      %2741 = vset.pattern.permute.xlu0 5
      %2742 = vperm.xlu0 %2741, %v46
      %v2743 = vpop.permute.xlu0 %2742
      %2744 = vset.pattern.permute.xlu0 5
      %2745 = vperm.xlu0 %2744, %v47
      %v2746 = vpop.permute.xlu0 %2745
      %2747 = vset.pattern.permute.xlu0 5
      %2748 = vperm.xlu0 %2747, %v48
      %v2749 = vpop.permute.xlu0 %2748
      %2750 = vset.pattern.permute.xlu0 5
      %2751 = vperm.xlu0 %2750, %v49
      %v2752 = vpop.permute.xlu0 %2751
      %2753 = vset.pattern.permute.xlu0 5
      %2754 = vperm.xlu0 %2753, %v50
      %v2755 = vpop.permute.xlu0 %2754
      %2756 = vset.pattern.permute.xlu0 5
      %2757 = vperm.xlu0 %2756, %v51
      %v2758 = vpop.permute.xlu0 %2757
      %2759 = vset.pattern.permute.xlu0 5
      %2760 = vperm.xlu0 %2759, %v52
      %v2761 = vpop.permute.xlu0 %2760
      %2762 = vset.pattern.permute.xlu0 5
      %2763 = vperm.xlu0 %2762, %v53
      %v2764 = vpop.permute.xlu0 %2763
      %2765 = vset.pattern.permute.xlu0 5
      %2766 = vperm.xlu0 %2765, %v54
      %v2767 = vpop.permute.xlu0 %2766
      %2768 = vset.pattern.permute.xlu0 5
      %2769 = vperm.xlu0 %2768, %v55
      %v2770 = vpop.permute.xlu0 %2769
      %2771 = vset.pattern.permute.xlu0 5
      %2772 = vperm.xlu0 %2771, %v56
      %v2773 = vpop.permute.xlu0 %2772
      %2774 = vset.pattern.permute.xlu0 5
      %2775 = vperm.xlu0 %2774, %v57
      %v2776 = vpop.permute.xlu0 %2775
      %2777 = vset.pattern.permute.xlu0 5
      %2778 = vperm.xlu0 %2777, %v58
      %v2779 = vpop.permute.xlu0 %2778
      %2780 = vset.pattern.permute.xlu0 5
      %2781 = vperm.xlu0 %2780, %v59
      %v2782 = vpop.permute.xlu0 %2781
      %2783 = vset.pattern.permute.xlu0 5
      %2784 = vperm.xlu0 %2783, %v60
      %v2785 = vpop.permute.xlu0 %2784
      %2786 = vset.pattern.permute.xlu0 5
      %2787 = vperm.xlu0 %2786, %v61
      %v2788 = vpop.permute.xlu0 %2787
      %2789 = vset.pattern.permute.xlu0 5
      %2790 = vperm.xlu0 %2789, %v62
      %v2791 = vpop.permute.xlu0 %2790
      %2792 = vset.pattern.permute.xlu0 5
      %2793 = vperm.xlu0 %2792, %v63
      %v2794 = vpop.permute.xlu0 %2793
      %2795 = vset.pattern.permute.xlu0 5
      %2796 = vperm.xlu0 %2795, %v64
      %v2797 = vpop.permute.xlu0 %2796
      %2798 = vset.pattern.permute.xlu0 5
      %2799 = vperm.xlu0 %2798, %v65
      %v2800 = vpop.permute.xlu0 %2799
      %2801 = vset.pattern.permute.xlu0 5
      %2802 = vperm.xlu0 %2801, %v66
      %v2803 = vpop.permute.xlu0 %2802
      %2804 = vset.pattern.permute.xlu0 5
      %2805 = vperm.xlu0 %2804, %v67
      %v2806 = vpop.permute.xlu0 %2805
      %2807 = vset.pattern.permute.xlu0 5
      %2808 = vperm.xlu0 %2807, %v68
      %v2809 = vpop.permute.xlu0 %2808
      %2810 = vset.pattern.permute.xlu0 5
      %2811 = vperm.xlu0 %2810, %v69
      %v2812 = vpop.permute.xlu0 %2811
      %2813 = vset.pattern.permute.xlu0 5
      %2814 = vperm.xlu0 %2813, %v70
      %v2815 = vpop.permute.xlu0 %2814
      %2816 = vset.pattern.permute.xlu0 5
      %2817 = vperm.xlu0 %2816, %v71
      %v2818 = vpop.permute.xlu0 %2817
      %2819 = vset.pattern.permute.xlu0 5
      %2820 = vperm.xlu0 %2819, %v72
      %v2821 = vpop.permute.xlu0 %2820
      %2822 = vset.pattern.permute.xlu0 5
      %2823 = vperm.xlu0 %2822, %v73
      %v2824 = vpop.permute.xlu0 %2823
      %2825 = vset.pattern.permute.xlu0 5
      %2826 = vperm.xlu0 %2825, %v74
      %v2827 = vpop.permute.xlu0 %2826
      %2828 = vset.pattern.permute.xlu0 5
      %2829 = vperm.xlu0 %2828, %v75
      %v2830 = vpop.permute.xlu0 %2829
      %vm2831 = vcmp.eq.s32.totalorder %v2737, %v77
      %vm2832 = vcmp.eq.s32.totalorder %v2737, %v78
      %vm2833 = vcmp.eq.s32.totalorder %v2740, %v77
      %vm2834 = vcmp.eq.s32.totalorder %v2740, %v78
      %vm2835 = vcmp.eq.s32.totalorder %v2743, %v77
      %vm2836 = vcmp.eq.s32.totalorder %v2743, %v78
      %vm2837 = vcmp.eq.s32.totalorder %v2746, %v77
      %vm2838 = vcmp.eq.s32.totalorder %v2746, %v78
      %vm2839 = vcmp.eq.s32.totalorder %v2749, %v77
      %vm2840 = vcmp.eq.s32.totalorder %v2749, %v78
      %vm2841 = vcmp.eq.s32.totalorder %v2752, %v77
      %vm2842 = vcmp.eq.s32.totalorder %v2752, %v78
      %vm2843 = vcmp.eq.s32.totalorder %v2755, %v77
      %vm2844 = vcmp.eq.s32.totalorder %v2755, %v78
      %vm2845 = vcmp.eq.s32.totalorder %v2758, %v77
      %vm2846 = vcmp.eq.s32.totalorder %v2758, %v78
      %vm2847 = vcmp.eq.s32.totalorder %v2761, %v77
      %vm2848 = vcmp.eq.s32.totalorder %v2761, %v78
      %vm2849 = vcmp.eq.s32.totalorder %v2764, %v77
      %vm2850 = vcmp.eq.s32.totalorder %v2764, %v78
      %vm2851 = vcmp.eq.s32.totalorder %v2767, %v77
      %vm2852 = vcmp.eq.s32.totalorder %v2767, %v78
      %vm2853 = vcmp.eq.s32.totalorder %v2770, %v77
      %vm2854 = vcmp.eq.s32.totalorder %v2770, %v78
      %vm2855 = vcmp.eq.s32.totalorder %v2773, %v77
      %vm2856 = vcmp.eq.s32.totalorder %v2773, %v78
      %vm2857 = vcmp.eq.s32.totalorder %v2776, %v77
      %vm2858 = vcmp.eq.s32.totalorder %v2776, %v78
      %vm2859 = vcmp.eq.s32.totalorder %v2779, %v77
      %vm2860 = vcmp.eq.s32.totalorder %v2779, %v78
      %vm2861 = vcmp.eq.s32.totalorder %v2782, %v77
      %vm2862 = vcmp.eq.s32.totalorder %v2782, %v78
      %vm2863 = vcmp.eq.s32.totalorder %v2785, %v77
      %vm2864 = vcmp.eq.s32.totalorder %v2785, %v78
      %vm2865 = vcmp.eq.s32.totalorder %v2788, %v77
      %vm2866 = vcmp.eq.s32.totalorder %v2788, %v78
      %vm2867 = vcmp.eq.s32.totalorder %v2791, %v77
      %vm2868 = vcmp.eq.s32.totalorder %v2791, %v78
      %vm2869 = vcmp.eq.s32.totalorder %v2794, %v77
      %vm2870 = vcmp.eq.s32.totalorder %v2794, %v78
      %vm2871 = vcmp.eq.s32.totalorder %v2797, %v77
      %vm2872 = vcmp.eq.s32.totalorder %v2797, %v78
      %vm2873 = vcmp.eq.s32.totalorder %v2800, %v77
      %vm2874 = vcmp.eq.s32.totalorder %v2800, %v78
      %vm2875 = vcmp.eq.s32.totalorder %v2803, %v77
      %vm2876 = vcmp.eq.s32.totalorder %v2803, %v78
      %vm2877 = vcmp.eq.s32.totalorder %v2806, %v77
      %vm2878 = vcmp.eq.s32.totalorder %v2806, %v78
      %vm2879 = vcmp.eq.s32.totalorder %v2809, %v77
      %vm2880 = vcmp.eq.s32.totalorder %v2809, %v78
      %vm2881 = vcmp.eq.s32.totalorder %v2812, %v77
      %vm2882 = vcmp.eq.s32.totalorder %v2812, %v78
      %vm2883 = vcmp.eq.s32.totalorder %v2815, %v77
      %vm2884 = vcmp.eq.s32.totalorder %v2815, %v78
      %vm2885 = vcmp.eq.s32.totalorder %v2818, %v77
      %vm2886 = vcmp.eq.s32.totalorder %v2818, %v78
      %vm2887 = vcmp.eq.s32.totalorder %v2821, %v77
      %vm2888 = vcmp.eq.s32.totalorder %v2821, %v78
      %vm2889 = vcmp.eq.s32.totalorder %v2824, %v77
      %vm2890 = vcmp.eq.s32.totalorder %v2824, %v78
      %vm2891 = vcmp.eq.s32.totalorder %v2827, %v77
      %vm2892 = vcmp.eq.s32.totalorder %v2827, %v78
      %vm2893 = vcmp.eq.s32.totalorder %v2830, %v77
      %vm2894 = vcmp.eq.s32.totalorder %v2830, %v78
      %v2895 = vsel %vm2831, 1, 0
      %v2896 = vsel %vm2832, 1, 0
      %v2897 = vsel %vm2833, 1, 0
      %v2898 = vsel %vm2834, 1, 0
      %v2899 = vsel %vm2835, 1, 0
      %v2900 = vsel %vm2836, 1, 0
      %v2901 = vsel %vm2837, 1, 0
      %v2902 = vsel %vm2838, 1, 0
      %v2903 = vsel %vm2839, 1, 0
      %v2904 = vsel %vm2840, 1, 0
      %v2905 = vsel %vm2841, 1, 0
      %v2906 = vsel %vm2842, 1, 0
      %v2907 = vsel %vm2843, 1, 0
      %v2908 = vsel %vm2844, 1, 0
      %v2909 = vsel %vm2845, 1, 0
      %v2910 = vsel %vm2846, 1, 0
      %v2911 = vsel %vm2847, 1, 0
      %v2912 = vsel %vm2848, 1, 0
      %v2913 = vsel %vm2849, 1, 0
      %v2914 = vsel %vm2850, 1, 0
      %v2915 = vsel %vm2851, 1, 0
      %v2916 = vsel %vm2852, 1, 0
      %v2917 = vsel %vm2853, 1, 0
      %v2918 = vsel %vm2854, 1, 0
      %v2919 = vsel %vm2855, 1, 0
      %v2920 = vsel %vm2856, 1, 0
      %v2921 = vsel %vm2857, 1, 0
      %v2922 = vsel %vm2858, 1, 0
      %v2923 = vsel %vm2859, 1, 0
      %v2924 = vsel %vm2860, 1, 0
      %v2925 = vsel %vm2861, 1, 0
      %v2926 = vsel %vm2862, 1, 0
      %v2927 = vsel %vm2863, 1, 0
      %v2928 = vsel %vm2864, 1, 0
      %v2929 = vsel %vm2865, 1, 0
      %v2930 = vsel %vm2866, 1, 0
      %v2931 = vsel %vm2867, 1, 0
      %v2932 = vsel %vm2868, 1, 0
      %v2933 = vsel %vm2869, 1, 0
      %v2934 = vsel %vm2870, 1, 0
      %v2935 = vsel %vm2871, 1, 0
      %v2936 = vsel %vm2872, 1, 0
      %v2937 = vsel %vm2873, 1, 0
      %v2938 = vsel %vm2874, 1, 0
      %v2939 = vsel %vm2875, 1, 0
      %v2940 = vsel %vm2876, 1, 0
      %v2941 = vsel %vm2877, 1, 0
      %v2942 = vsel %vm2878, 1, 0
      %v2943 = vsel %vm2879, 1, 0
      %v2944 = vsel %vm2880, 1, 0
      %v2945 = vsel %vm2881, 1, 0
      %v2946 = vsel %vm2882, 1, 0
      %v2947 = vsel %vm2883, 1, 0
      %v2948 = vsel %vm2884, 1, 0
      %v2949 = vsel %vm2885, 1, 0
      %v2950 = vsel %vm2886, 1, 0
      %v2951 = vsel %vm2887, 1, 0
      %v2952 = vsel %vm2888, 1, 0
      %v2953 = vsel %vm2889, 1, 0
      %v2954 = vsel %vm2890, 1, 0
      %v2955 = vsel %vm2891, 1, 0
      %v2956 = vsel %vm2892, 1, 0
      %v2957 = vsel %vm2893, 1, 0
      %v2958 = vsel %vm2894, 1, 0
      %v2959 = vcvt.s32.f32 %v2895
      %v2960 = vcvt.s32.f32 %v2896
      %v2961 = vcvt.s32.f32 %v2897
      %v2962 = vcvt.s32.f32 %v2898
      %v2963 = vcvt.s32.f32 %v2899
      %v2964 = vcvt.s32.f32 %v2900
      %v2965 = vcvt.s32.f32 %v2901
      %v2966 = vcvt.s32.f32 %v2902
      %v2967 = vcvt.s32.f32 %v2903
      %v2968 = vcvt.s32.f32 %v2904
      %v2969 = vcvt.s32.f32 %v2905
      %v2970 = vcvt.s32.f32 %v2906
      %v2971 = vcvt.s32.f32 %v2907
      %v2972 = vcvt.s32.f32 %v2908
      %v2973 = vcvt.s32.f32 %v2909
      %v2974 = vcvt.s32.f32 %v2910
      %v2975 = vcvt.s32.f32 %v2911
      %v2976 = vcvt.s32.f32 %v2912
      %v2977 = vcvt.s32.f32 %v2913
      %v2978 = vcvt.s32.f32 %v2914
      %v2979 = vcvt.s32.f32 %v2915
      %v2980 = vcvt.s32.f32 %v2916
      %v2981 = vcvt.s32.f32 %v2917
      %v2982 = vcvt.s32.f32 %v2918
      %v2983 = vcvt.s32.f32 %v2919
      %v2984 = vcvt.s32.f32 %v2920
      %v2985 = vcvt.s32.f32 %v2921
      %v2986 = vcvt.s32.f32 %v2922
      %v2987 = vcvt.s32.f32 %v2923
      %v2988 = vcvt.s32.f32 %v2924
      %v2989 = vcvt.s32.f32 %v2925
      %v2990 = vcvt.s32.f32 %v2926
      %v2991 = vcvt.s32.f32 %v2927
      %v2992 = vcvt.s32.f32 %v2928
      %v2993 = vcvt.s32.f32 %v2929
      %v2994 = vcvt.s32.f32 %v2930
      %v2995 = vcvt.s32.f32 %v2931
      %v2996 = vcvt.s32.f32 %v2932
      %v2997 = vcvt.s32.f32 %v2933
      %v2998 = vcvt.s32.f32 %v2934
      %v2999 = vcvt.s32.f32 %v2935
      %v3000 = vcvt.s32.f32 %v2936
      %v3001 = vcvt.s32.f32 %v2937
      %v3002 = vcvt.s32.f32 %v2938
      %v3003 = vcvt.s32.f32 %v2939
      %v3004 = vcvt.s32.f32 %v2940
      %v3005 = vcvt.s32.f32 %v2941
      %v3006 = vcvt.s32.f32 %v2942
      %v3007 = vcvt.s32.f32 %v2943
      %v3008 = vcvt.s32.f32 %v2944
      %v3009 = vcvt.s32.f32 %v2945
      %v3010 = vcvt.s32.f32 %v2946
      %v3011 = vcvt.s32.f32 %v2947
      %v3012 = vcvt.s32.f32 %v2948
      %v3013 = vcvt.s32.f32 %v2949
      %v3014 = vcvt.s32.f32 %v2950
      %v3015 = vcvt.s32.f32 %v2951
      %v3016 = vcvt.s32.f32 %v2952
      %v3017 = vcvt.s32.f32 %v2953
      %v3018 = vcvt.s32.f32 %v2954
      %v3019 = vcvt.s32.f32 %v2955
      %v3020 = vcvt.s32.f32 %v2956
      %v3021 = vcvt.s32.f32 %v2957
      %v3022 = vcvt.s32.f32 %v2958
      %v3023 = vpack.c.bf16 %v2960, %v2959
      %v3024 = vpack.c.bf16 %v2962, %v2961
      %v3025 = vpack.c.bf16 %v2964, %v2963
      %v3026 = vpack.c.bf16 %v2966, %v2965
      %v3027 = vpack.c.bf16 %v2968, %v2967
      %v3028 = vpack.c.bf16 %v2970, %v2969
      %v3029 = vpack.c.bf16 %v2972, %v2971
      %v3030 = vpack.c.bf16 %v2974, %v2973
      %v3031 = vpack.c.bf16 %v2976, %v2975
      %v3032 = vpack.c.bf16 %v2978, %v2977
      %v3033 = vpack.c.bf16 %v2980, %v2979
      %v3034 = vpack.c.bf16 %v2982, %v2981
      %v3035 = vpack.c.bf16 %v2984, %v2983
      %v3036 = vpack.c.bf16 %v2986, %v2985
      %v3037 = vpack.c.bf16 %v2988, %v2987
      %v3038 = vpack.c.bf16 %v2990, %v2989
      %v3039 = vpack.c.bf16 %v2992, %v2991
      %v3040 = vpack.c.bf16 %v2994, %v2993
      %v3041 = vpack.c.bf16 %v2996, %v2995
      %v3042 = vpack.c.bf16 %v2998, %v2997
      %v3043 = vpack.c.bf16 %v3000, %v2999
      %v3044 = vpack.c.bf16 %v3002, %v3001
      %v3045 = vpack.c.bf16 %v3004, %v3003
      %v3046 = vpack.c.bf16 %v3006, %v3005
      %v3047 = vpack.c.bf16 %v3008, %v3007
      %v3048 = vpack.c.bf16 %v3010, %v3009
      %v3049 = vpack.c.bf16 %v3012, %v3011
      %v3050 = vpack.c.bf16 %v3014, %v3013
      %v3051 = vpack.c.bf16 %v3016, %v3015
      %v3052 = vpack.c.bf16 %v3018, %v3017
      %v3053 = vpack.c.bf16 %v3020, %v3019
      %v3054 = vpack.c.bf16 %v3022, %v3021
      %v3055 = vunpack.c.l.bf16 %v2703
      %v3056 = vunpack.c.h.bf16 %v2703
      %v3057 = vunpack.c.l.bf16 %v2704
      %v3058 = vunpack.c.h.bf16 %v2704
      %v3059 = vunpack.c.l.bf16 %v2705
      %v3060 = vunpack.c.h.bf16 %v2705
      %v3061 = vunpack.c.l.bf16 %v2706
      %v3062 = vunpack.c.h.bf16 %v2706
      %v3063 = vunpack.c.l.bf16 %v2707
      %v3064 = vunpack.c.h.bf16 %v2707
      %v3065 = vunpack.c.l.bf16 %v2708
      %v3066 = vunpack.c.h.bf16 %v2708
      %v3067 = vunpack.c.l.bf16 %v2709
      %v3068 = vunpack.c.h.bf16 %v2709
      %v3069 = vunpack.c.l.bf16 %v2710
      %v3070 = vunpack.c.h.bf16 %v2710
      %v3071 = vunpack.c.l.bf16 %v2711
      %v3072 = vunpack.c.h.bf16 %v2711
      %v3073 = vunpack.c.l.bf16 %v2712
      %v3074 = vunpack.c.h.bf16 %v2712
      %v3075 = vunpack.c.l.bf16 %v2713
      %v3076 = vunpack.c.h.bf16 %v2713
      %v3077 = vunpack.c.l.bf16 %v2714
      %v3078 = vunpack.c.h.bf16 %v2714
      %v3079 = vunpack.c.l.bf16 %v2715
      %v3080 = vunpack.c.h.bf16 %v2715
      %v3081 = vunpack.c.l.bf16 %v2716
      %v3082 = vunpack.c.h.bf16 %v2716
      %v3083 = vunpack.c.l.bf16 %v2717
      %v3084 = vunpack.c.h.bf16 %v2717
      %v3085 = vunpack.c.l.bf16 %v2718
      %v3086 = vunpack.c.h.bf16 %v2718
      %v3087 = vunpack.c.l.bf16 %v2719
      %v3088 = vunpack.c.h.bf16 %v2719
      %v3089 = vunpack.c.l.bf16 %v2720
      %v3090 = vunpack.c.h.bf16 %v2720
      %v3091 = vunpack.c.l.bf16 %v2721
      %v3092 = vunpack.c.h.bf16 %v2721
      %v3093 = vunpack.c.l.bf16 %v2722
      %v3094 = vunpack.c.h.bf16 %v2722
      %v3095 = vunpack.c.l.bf16 %v2723
      %v3096 = vunpack.c.h.bf16 %v2723
      %v3097 = vunpack.c.l.bf16 %v2724
      %v3098 = vunpack.c.h.bf16 %v2724
      %v3099 = vunpack.c.l.bf16 %v2725
      %v3100 = vunpack.c.h.bf16 %v2725
      %v3101 = vunpack.c.l.bf16 %v2726
      %v3102 = vunpack.c.h.bf16 %v2726
      %v3103 = vunpack.c.l.bf16 %v2727
      %v3104 = vunpack.c.h.bf16 %v2727
      %v3105 = vunpack.c.l.bf16 %v2728
      %v3106 = vunpack.c.h.bf16 %v2728
      %v3107 = vunpack.c.l.bf16 %v2729
      %v3108 = vunpack.c.h.bf16 %v2729
      %v3109 = vunpack.c.l.bf16 %v2730
      %v3110 = vunpack.c.h.bf16 %v2730
      %v3111 = vunpack.c.l.bf16 %v2731
      %v3112 = vunpack.c.h.bf16 %v2731
      %v3113 = vunpack.c.l.bf16 %v2732
      %v3114 = vunpack.c.h.bf16 %v2732
      %v3115 = vunpack.c.l.bf16 %v2733
      %v3116 = vunpack.c.h.bf16 %v2733
      %v3117 = vunpack.c.l.bf16 %v2734
      %v3118 = vunpack.c.h.bf16 %v2734
      %v3119 = vunpack.c.l.bf16 %v3023
      %v3120 = vunpack.c.h.bf16 %v3023
      %v3121 = vunpack.c.l.bf16 %v3024
      %v3122 = vunpack.c.h.bf16 %v3024
      %v3123 = vunpack.c.l.bf16 %v3025
      %v3124 = vunpack.c.h.bf16 %v3025
      %v3125 = vunpack.c.l.bf16 %v3026
      %v3126 = vunpack.c.h.bf16 %v3026
      %v3127 = vunpack.c.l.bf16 %v3027
      %v3128 = vunpack.c.h.bf16 %v3027
      %v3129 = vunpack.c.l.bf16 %v3028
      %v3130 = vunpack.c.h.bf16 %v3028
      %v3131 = vunpack.c.l.bf16 %v3029
      %v3132 = vunpack.c.h.bf16 %v3029
      %v3133 = vunpack.c.l.bf16 %v3030
      %v3134 = vunpack.c.h.bf16 %v3030
      %v3135 = vunpack.c.l.bf16 %v3031
      %v3136 = vunpack.c.h.bf16 %v3031
      %v3137 = vunpack.c.l.bf16 %v3032
      %v3138 = vunpack.c.h.bf16 %v3032
      %v3139 = vunpack.c.l.bf16 %v3033
      %v3140 = vunpack.c.h.bf16 %v3033
      %v3141 = vunpack.c.l.bf16 %v3034
      %v3142 = vunpack.c.h.bf16 %v3034
      %v3143 = vunpack.c.l.bf16 %v3035
      %v3144 = vunpack.c.h.bf16 %v3035
      %v3145 = vunpack.c.l.bf16 %v3036
      %v3146 = vunpack.c.h.bf16 %v3036
      %v3147 = vunpack.c.l.bf16 %v3037
      %v3148 = vunpack.c.h.bf16 %v3037
      %v3149 = vunpack.c.l.bf16 %v3038
      %v3150 = vunpack.c.h.bf16 %v3038
      %v3151 = vunpack.c.l.bf16 %v3039
      %v3152 = vunpack.c.h.bf16 %v3039
      %v3153 = vunpack.c.l.bf16 %v3040
      %v3154 = vunpack.c.h.bf16 %v3040
      %v3155 = vunpack.c.l.bf16 %v3041
      %v3156 = vunpack.c.h.bf16 %v3041
      %v3157 = vunpack.c.l.bf16 %v3042
      %v3158 = vunpack.c.h.bf16 %v3042
      %v3159 = vunpack.c.l.bf16 %v3043
      %v3160 = vunpack.c.h.bf16 %v3043
      %v3161 = vunpack.c.l.bf16 %v3044
      %v3162 = vunpack.c.h.bf16 %v3044
      %v3163 = vunpack.c.l.bf16 %v3045
      %v3164 = vunpack.c.h.bf16 %v3045
      %v3165 = vunpack.c.l.bf16 %v3046
      %v3166 = vunpack.c.h.bf16 %v3046
      %v3167 = vunpack.c.l.bf16 %v3047
      %v3168 = vunpack.c.h.bf16 %v3047
      %v3169 = vunpack.c.l.bf16 %v3048
      %v3170 = vunpack.c.h.bf16 %v3048
      %v3171 = vunpack.c.l.bf16 %v3049
      %v3172 = vunpack.c.h.bf16 %v3049
      %v3173 = vunpack.c.l.bf16 %v3050
      %v3174 = vunpack.c.h.bf16 %v3050
      %v3175 = vunpack.c.l.bf16 %v3051
      %v3176 = vunpack.c.h.bf16 %v3051
      %v3177 = vunpack.c.l.bf16 %v3052
      %v3178 = vunpack.c.h.bf16 %v3052
      %v3179 = vunpack.c.l.bf16 %v3053
      %v3180 = vunpack.c.h.bf16 %v3053
      %v3181 = vunpack.c.l.bf16 %v3054
      %v3182 = vunpack.c.h.bf16 %v3054
      %v3183 = vadd.f32 %v3055, %v3119
      %v3184 = vadd.f32 %v3056, %v3120
      %v3185 = vadd.f32 %v3057, %v3121
      %v3186 = vadd.f32 %v3058, %v3122
      %v3187 = vadd.f32 %v3059, %v3123
      %v3188 = vadd.f32 %v3060, %v3124
      %v3189 = vadd.f32 %v3061, %v3125
      %v3190 = vadd.f32 %v3062, %v3126
      %v3191 = vadd.f32 %v3063, %v3127
      %v3192 = vadd.f32 %v3064, %v3128
      %v3193 = vadd.f32 %v3065, %v3129
      %v3194 = vadd.f32 %v3066, %v3130
      %v3195 = vadd.f32 %v3067, %v3131
      %v3196 = vadd.f32 %v3068, %v3132
      %v3197 = vadd.f32 %v3069, %v3133
      %v3198 = vadd.f32 %v3070, %v3134
      %v3199 = vadd.f32 %v3071, %v3135
      %v3200 = vadd.f32 %v3072, %v3136
      %v3201 = vadd.f32 %v3073, %v3137
      %v3202 = vadd.f32 %v3074, %v3138
      %v3203 = vadd.f32 %v3075, %v3139
      %v3204 = vadd.f32 %v3076, %v3140
      %v3205 = vadd.f32 %v3077, %v3141
      %v3206 = vadd.f32 %v3078, %v3142
      %v3207 = vadd.f32 %v3079, %v3143
      %v3208 = vadd.f32 %v3080, %v3144
      %v3209 = vadd.f32 %v3081, %v3145
      %v3210 = vadd.f32 %v3082, %v3146
      %v3211 = vadd.f32 %v3083, %v3147
      %v3212 = vadd.f32 %v3084, %v3148
      %v3213 = vadd.f32 %v3085, %v3149
      %v3214 = vadd.f32 %v3086, %v3150
      %v3215 = vadd.f32 %v3087, %v3151
      %v3216 = vadd.f32 %v3088, %v3152
      %v3217 = vadd.f32 %v3089, %v3153
      %v3218 = vadd.f32 %v3090, %v3154
      %v3219 = vadd.f32 %v3091, %v3155
      %v3220 = vadd.f32 %v3092, %v3156
      %v3221 = vadd.f32 %v3093, %v3157
      %v3222 = vadd.f32 %v3094, %v3158
      %v3223 = vadd.f32 %v3095, %v3159
      %v3224 = vadd.f32 %v3096, %v3160
      %v3225 = vadd.f32 %v3097, %v3161
      %v3226 = vadd.f32 %v3098, %v3162
      %v3227 = vadd.f32 %v3099, %v3163
      %v3228 = vadd.f32 %v3100, %v3164
      %v3229 = vadd.f32 %v3101, %v3165
      %v3230 = vadd.f32 %v3102, %v3166
      %v3231 = vadd.f32 %v3103, %v3167
      %v3232 = vadd.f32 %v3104, %v3168
      %v3233 = vadd.f32 %v3105, %v3169
      %v3234 = vadd.f32 %v3106, %v3170
      %v3235 = vadd.f32 %v3107, %v3171
      %v3236 = vadd.f32 %v3108, %v3172
      %v3237 = vadd.f32 %v3109, %v3173
      %v3238 = vadd.f32 %v3110, %v3174
      %v3239 = vadd.f32 %v3111, %v3175
      %v3240 = vadd.f32 %v3112, %v3176
      %v3241 = vadd.f32 %v3113, %v3177
      %v3242 = vadd.f32 %v3114, %v3178
      %v3243 = vadd.f32 %v3115, %v3179
      %v3244 = vadd.f32 %v3116, %v3180
      %v3245 = vadd.f32 %v3117, %v3181
      %v3246 = vadd.f32 %v3118, %v3182
      %v3247 = vpack.c.bf16 %v3184, %v3183
      %v3248 = vpack.c.bf16 %v3186, %v3185
      %v3249 = vpack.c.bf16 %v3188, %v3187
      %v3250 = vpack.c.bf16 %v3190, %v3189
      %v3251 = vpack.c.bf16 %v3192, %v3191
      %v3252 = vpack.c.bf16 %v3194, %v3193
      %v3253 = vpack.c.bf16 %v3196, %v3195
      %v3254 = vpack.c.bf16 %v3198, %v3197
      %v3255 = vpack.c.bf16 %v3200, %v3199
      %v3256 = vpack.c.bf16 %v3202, %v3201
      %v3257 = vpack.c.bf16 %v3204, %v3203
      %v3258 = vpack.c.bf16 %v3206, %v3205
      %v3259 = vpack.c.bf16 %v3208, %v3207
      %v3260 = vpack.c.bf16 %v3210, %v3209
      %v3261 = vpack.c.bf16 %v3212, %v3211
      %v3262 = vpack.c.bf16 %v3214, %v3213
      %v3263 = vpack.c.bf16 %v3216, %v3215
      %v3264 = vpack.c.bf16 %v3218, %v3217
      %v3265 = vpack.c.bf16 %v3220, %v3219
      %v3266 = vpack.c.bf16 %v3222, %v3221
      %v3267 = vpack.c.bf16 %v3224, %v3223
      %v3268 = vpack.c.bf16 %v3226, %v3225
      %v3269 = vpack.c.bf16 %v3228, %v3227
      %v3270 = vpack.c.bf16 %v3230, %v3229
      %v3271 = vpack.c.bf16 %v3232, %v3231
      %v3272 = vpack.c.bf16 %v3234, %v3233
      %v3273 = vpack.c.bf16 %v3236, %v3235
      %v3274 = vpack.c.bf16 %v3238, %v3237
      %v3275 = vpack.c.bf16 %v3240, %v3239
      %v3276 = vpack.c.bf16 %v3242, %v3241
      %v3277 = vpack.c.bf16 %v3244, %v3243
      %v3278 = vpack.c.bf16 %v3246, %v3245
      %3279 = vset.pattern.permute.xlu0 6
      %3280 = vperm.xlu0 %3279, %v44
      %v3281 = vpop.permute.xlu0 %3280
      %3282 = vset.pattern.permute.xlu0 6
      %3283 = vperm.xlu0 %3282, %v45
      %v3284 = vpop.permute.xlu0 %3283
      %3285 = vset.pattern.permute.xlu0 6
      %3286 = vperm.xlu0 %3285, %v46
      %v3287 = vpop.permute.xlu0 %3286
      %3288 = vset.pattern.permute.xlu0 6
      %3289 = vperm.xlu0 %3288, %v47
      %v3290 = vpop.permute.xlu0 %3289
      %3291 = vset.pattern.permute.xlu0 6
      %3292 = vperm.xlu0 %3291, %v48
      %v3293 = vpop.permute.xlu0 %3292
      %3294 = vset.pattern.permute.xlu0 6
      %3295 = vperm.xlu0 %3294, %v49
      %v3296 = vpop.permute.xlu0 %3295
      %3297 = vset.pattern.permute.xlu0 6
      %3298 = vperm.xlu0 %3297, %v50
      %v3299 = vpop.permute.xlu0 %3298
      %3300 = vset.pattern.permute.xlu0 6
      %3301 = vperm.xlu0 %3300, %v51
      %v3302 = vpop.permute.xlu0 %3301
      %3303 = vset.pattern.permute.xlu0 6
      %3304 = vperm.xlu0 %3303, %v52
      %v3305 = vpop.permute.xlu0 %3304
      %3306 = vset.pattern.permute.xlu0 6
      %3307 = vperm.xlu0 %3306, %v53
      %v3308 = vpop.permute.xlu0 %3307
      %3309 = vset.pattern.permute.xlu0 6
      %3310 = vperm.xlu0 %3309, %v54
      %v3311 = vpop.permute.xlu0 %3310
      %3312 = vset.pattern.permute.xlu0 6
      %3313 = vperm.xlu0 %3312, %v55
      %v3314 = vpop.permute.xlu0 %3313
      %3315 = vset.pattern.permute.xlu0 6
      %3316 = vperm.xlu0 %3315, %v56
      %v3317 = vpop.permute.xlu0 %3316
      %3318 = vset.pattern.permute.xlu0 6
      %3319 = vperm.xlu0 %3318, %v57
      %v3320 = vpop.permute.xlu0 %3319
      %3321 = vset.pattern.permute.xlu0 6
      %3322 = vperm.xlu0 %3321, %v58
      %v3323 = vpop.permute.xlu0 %3322
      %3324 = vset.pattern.permute.xlu0 6
      %3325 = vperm.xlu0 %3324, %v59
      %v3326 = vpop.permute.xlu0 %3325
      %3327 = vset.pattern.permute.xlu0 6
      %3328 = vperm.xlu0 %3327, %v60
      %v3329 = vpop.permute.xlu0 %3328
      %3330 = vset.pattern.permute.xlu0 6
      %3331 = vperm.xlu0 %3330, %v61
      %v3332 = vpop.permute.xlu0 %3331
      %3333 = vset.pattern.permute.xlu0 6
      %3334 = vperm.xlu0 %3333, %v62
      %v3335 = vpop.permute.xlu0 %3334
      %3336 = vset.pattern.permute.xlu0 6
      %3337 = vperm.xlu0 %3336, %v63
      %v3338 = vpop.permute.xlu0 %3337
      %3339 = vset.pattern.permute.xlu0 6
      %3340 = vperm.xlu0 %3339, %v64
      %v3341 = vpop.permute.xlu0 %3340
      %3342 = vset.pattern.permute.xlu0 6
      %3343 = vperm.xlu0 %3342, %v65
      %v3344 = vpop.permute.xlu0 %3343
      %3345 = vset.pattern.permute.xlu0 6
      %3346 = vperm.xlu0 %3345, %v66
      %v3347 = vpop.permute.xlu0 %3346
      %3348 = vset.pattern.permute.xlu0 6
      %3349 = vperm.xlu0 %3348, %v67
      %v3350 = vpop.permute.xlu0 %3349
      %3351 = vset.pattern.permute.xlu0 6
      %3352 = vperm.xlu0 %3351, %v68
      %v3353 = vpop.permute.xlu0 %3352
      %3354 = vset.pattern.permute.xlu0 6
      %3355 = vperm.xlu0 %3354, %v69
      %v3356 = vpop.permute.xlu0 %3355
      %3357 = vset.pattern.permute.xlu0 6
      %3358 = vperm.xlu0 %3357, %v70
      %v3359 = vpop.permute.xlu0 %3358
      %3360 = vset.pattern.permute.xlu0 6
      %3361 = vperm.xlu0 %3360, %v71
      %v3362 = vpop.permute.xlu0 %3361
      %3363 = vset.pattern.permute.xlu0 6
      %3364 = vperm.xlu0 %3363, %v72
      %v3365 = vpop.permute.xlu0 %3364
      %3366 = vset.pattern.permute.xlu0 6
      %3367 = vperm.xlu0 %3366, %v73
      %v3368 = vpop.permute.xlu0 %3367
      %3369 = vset.pattern.permute.xlu0 6
      %3370 = vperm.xlu0 %3369, %v74
      %v3371 = vpop.permute.xlu0 %3370
      %3372 = vset.pattern.permute.xlu0 6
      %3373 = vperm.xlu0 %3372, %v75
      %v3374 = vpop.permute.xlu0 %3373
      %vm3375 = vcmp.eq.s32.totalorder %v3281, %v77
      %vm3376 = vcmp.eq.s32.totalorder %v3281, %v78
      %vm3377 = vcmp.eq.s32.totalorder %v3284, %v77
      %vm3378 = vcmp.eq.s32.totalorder %v3284, %v78
      %vm3379 = vcmp.eq.s32.totalorder %v3287, %v77
      %vm3380 = vcmp.eq.s32.totalorder %v3287, %v78
      %vm3381 = vcmp.eq.s32.totalorder %v3290, %v77
      %vm3382 = vcmp.eq.s32.totalorder %v3290, %v78
      %vm3383 = vcmp.eq.s32.totalorder %v3293, %v77
      %vm3384 = vcmp.eq.s32.totalorder %v3293, %v78
      %vm3385 = vcmp.eq.s32.totalorder %v3296, %v77
      %vm3386 = vcmp.eq.s32.totalorder %v3296, %v78
      %vm3387 = vcmp.eq.s32.totalorder %v3299, %v77
      %vm3388 = vcmp.eq.s32.totalorder %v3299, %v78
      %vm3389 = vcmp.eq.s32.totalorder %v3302, %v77
      %vm3390 = vcmp.eq.s32.totalorder %v3302, %v78
      %vm3391 = vcmp.eq.s32.totalorder %v3305, %v77
      %vm3392 = vcmp.eq.s32.totalorder %v3305, %v78
      %vm3393 = vcmp.eq.s32.totalorder %v3308, %v77
      %vm3394 = vcmp.eq.s32.totalorder %v3308, %v78
      %vm3395 = vcmp.eq.s32.totalorder %v3311, %v77
      %vm3396 = vcmp.eq.s32.totalorder %v3311, %v78
      %vm3397 = vcmp.eq.s32.totalorder %v3314, %v77
      %vm3398 = vcmp.eq.s32.totalorder %v3314, %v78
      %vm3399 = vcmp.eq.s32.totalorder %v3317, %v77
      %vm3400 = vcmp.eq.s32.totalorder %v3317, %v78
      %vm3401 = vcmp.eq.s32.totalorder %v3320, %v77
      %vm3402 = vcmp.eq.s32.totalorder %v3320, %v78
      %vm3403 = vcmp.eq.s32.totalorder %v3323, %v77
      %vm3404 = vcmp.eq.s32.totalorder %v3323, %v78
      %vm3405 = vcmp.eq.s32.totalorder %v3326, %v77
      %vm3406 = vcmp.eq.s32.totalorder %v3326, %v78
      %vm3407 = vcmp.eq.s32.totalorder %v3329, %v77
      %vm3408 = vcmp.eq.s32.totalorder %v3329, %v78
      %vm3409 = vcmp.eq.s32.totalorder %v3332, %v77
      %vm3410 = vcmp.eq.s32.totalorder %v3332, %v78
      %vm3411 = vcmp.eq.s32.totalorder %v3335, %v77
      %vm3412 = vcmp.eq.s32.totalorder %v3335, %v78
      %vm3413 = vcmp.eq.s32.totalorder %v3338, %v77
      %vm3414 = vcmp.eq.s32.totalorder %v3338, %v78
      %vm3415 = vcmp.eq.s32.totalorder %v3341, %v77
      %vm3416 = vcmp.eq.s32.totalorder %v3341, %v78
      %vm3417 = vcmp.eq.s32.totalorder %v3344, %v77
      %vm3418 = vcmp.eq.s32.totalorder %v3344, %v78
      %vm3419 = vcmp.eq.s32.totalorder %v3347, %v77
      %vm3420 = vcmp.eq.s32.totalorder %v3347, %v78
      %vm3421 = vcmp.eq.s32.totalorder %v3350, %v77
      %vm3422 = vcmp.eq.s32.totalorder %v3350, %v78
      %vm3423 = vcmp.eq.s32.totalorder %v3353, %v77
      %vm3424 = vcmp.eq.s32.totalorder %v3353, %v78
      %vm3425 = vcmp.eq.s32.totalorder %v3356, %v77
      %vm3426 = vcmp.eq.s32.totalorder %v3356, %v78
      %vm3427 = vcmp.eq.s32.totalorder %v3359, %v77
      %vm3428 = vcmp.eq.s32.totalorder %v3359, %v78
      %vm3429 = vcmp.eq.s32.totalorder %v3362, %v77
      %vm3430 = vcmp.eq.s32.totalorder %v3362, %v78
      %vm3431 = vcmp.eq.s32.totalorder %v3365, %v77
      %vm3432 = vcmp.eq.s32.totalorder %v3365, %v78
      %vm3433 = vcmp.eq.s32.totalorder %v3368, %v77
      %vm3434 = vcmp.eq.s32.totalorder %v3368, %v78
      %vm3435 = vcmp.eq.s32.totalorder %v3371, %v77
      %vm3436 = vcmp.eq.s32.totalorder %v3371, %v78
      %vm3437 = vcmp.eq.s32.totalorder %v3374, %v77
      %vm3438 = vcmp.eq.s32.totalorder %v3374, %v78
      %v3439 = vsel %vm3375, 1, 0
      %v3440 = vsel %vm3376, 1, 0
      %v3441 = vsel %vm3377, 1, 0
      %v3442 = vsel %vm3378, 1, 0
      %v3443 = vsel %vm3379, 1, 0
      %v3444 = vsel %vm3380, 1, 0
      %v3445 = vsel %vm3381, 1, 0
      %v3446 = vsel %vm3382, 1, 0
      %v3447 = vsel %vm3383, 1, 0
      %v3448 = vsel %vm3384, 1, 0
      %v3449 = vsel %vm3385, 1, 0
      %v3450 = vsel %vm3386, 1, 0
      %v3451 = vsel %vm3387, 1, 0
      %v3452 = vsel %vm3388, 1, 0
      %v3453 = vsel %vm3389, 1, 0
      %v3454 = vsel %vm3390, 1, 0
      %v3455 = vsel %vm3391, 1, 0
      %v3456 = vsel %vm3392, 1, 0
      %v3457 = vsel %vm3393, 1, 0
      %v3458 = vsel %vm3394, 1, 0
      %v3459 = vsel %vm3395, 1, 0
      %v3460 = vsel %vm3396, 1, 0
      %v3461 = vsel %vm3397, 1, 0
      %v3462 = vsel %vm3398, 1, 0
      %v3463 = vsel %vm3399, 1, 0
      %v3464 = vsel %vm3400, 1, 0
      %v3465 = vsel %vm3401, 1, 0
      %v3466 = vsel %vm3402, 1, 0
      %v3467 = vsel %vm3403, 1, 0
      %v3468 = vsel %vm3404, 1, 0
      %v3469 = vsel %vm3405, 1, 0
      %v3470 = vsel %vm3406, 1, 0
      %v3471 = vsel %vm3407, 1, 0
      %v3472 = vsel %vm3408, 1, 0
      %v3473 = vsel %vm3409, 1, 0
      %v3474 = vsel %vm3410, 1, 0
      %v3475 = vsel %vm3411, 1, 0
      %v3476 = vsel %vm3412, 1, 0
      %v3477 = vsel %vm3413, 1, 0
      %v3478 = vsel %vm3414, 1, 0
      %v3479 = vsel %vm3415, 1, 0
      %v3480 = vsel %vm3416, 1, 0
      %v3481 = vsel %vm3417, 1, 0
      %v3482 = vsel %vm3418, 1, 0
      %v3483 = vsel %vm3419, 1, 0
      %v3484 = vsel %vm3420, 1, 0
      %v3485 = vsel %vm3421, 1, 0
      %v3486 = vsel %vm3422, 1, 0
      %v3487 = vsel %vm3423, 1, 0
      %v3488 = vsel %vm3424, 1, 0
      %v3489 = vsel %vm3425, 1, 0
      %v3490 = vsel %vm3426, 1, 0
      %v3491 = vsel %vm3427, 1, 0
      %v3492 = vsel %vm3428, 1, 0
      %v3493 = vsel %vm3429, 1, 0
      %v3494 = vsel %vm3430, 1, 0
      %v3495 = vsel %vm3431, 1, 0
      %v3496 = vsel %vm3432, 1, 0
      %v3497 = vsel %vm3433, 1, 0
      %v3498 = vsel %vm3434, 1, 0
      %v3499 = vsel %vm3435, 1, 0
      %v3500 = vsel %vm3436, 1, 0
      %v3501 = vsel %vm3437, 1, 0
      %v3502 = vsel %vm3438, 1, 0
      %v3503 = vcvt.s32.f32 %v3439
      %v3504 = vcvt.s32.f32 %v3440
      %v3505 = vcvt.s32.f32 %v3441
      %v3506 = vcvt.s32.f32 %v3442
      %v3507 = vcvt.s32.f32 %v3443
      %v3508 = vcvt.s32.f32 %v3444
      %v3509 = vcvt.s32.f32 %v3445
      %v3510 = vcvt.s32.f32 %v3446
      %v3511 = vcvt.s32.f32 %v3447
      %v3512 = vcvt.s32.f32 %v3448
      %v3513 = vcvt.s32.f32 %v3449
      %v3514 = vcvt.s32.f32 %v3450
      %v3515 = vcvt.s32.f32 %v3451
      %v3516 = vcvt.s32.f32 %v3452
      %v3517 = vcvt.s32.f32 %v3453
      %v3518 = vcvt.s32.f32 %v3454
      %v3519 = vcvt.s32.f32 %v3455
      %v3520 = vcvt.s32.f32 %v3456
      %v3521 = vcvt.s32.f32 %v3457
      %v3522 = vcvt.s32.f32 %v3458
      %v3523 = vcvt.s32.f32 %v3459
      %v3524 = vcvt.s32.f32 %v3460
      %v3525 = vcvt.s32.f32 %v3461
      %v3526 = vcvt.s32.f32 %v3462
      %v3527 = vcvt.s32.f32 %v3463
      %v3528 = vcvt.s32.f32 %v3464
      %v3529 = vcvt.s32.f32 %v3465
      %v3530 = vcvt.s32.f32 %v3466
      %v3531 = vcvt.s32.f32 %v3467
      %v3532 = vcvt.s32.f32 %v3468
      %v3533 = vcvt.s32.f32 %v3469
      %v3534 = vcvt.s32.f32 %v3470
      %v3535 = vcvt.s32.f32 %v3471
      %v3536 = vcvt.s32.f32 %v3472
      %v3537 = vcvt.s32.f32 %v3473
      %v3538 = vcvt.s32.f32 %v3474
      %v3539 = vcvt.s32.f32 %v3475
      %v3540 = vcvt.s32.f32 %v3476
      %v3541 = vcvt.s32.f32 %v3477
      %v3542 = vcvt.s32.f32 %v3478
      %v3543 = vcvt.s32.f32 %v3479
      %v3544 = vcvt.s32.f32 %v3480
      %v3545 = vcvt.s32.f32 %v3481
      %v3546 = vcvt.s32.f32 %v3482
      %v3547 = vcvt.s32.f32 %v3483
      %v3548 = vcvt.s32.f32 %v3484
      %v3549 = vcvt.s32.f32 %v3485
      %v3550 = vcvt.s32.f32 %v3486
      %v3551 = vcvt.s32.f32 %v3487
      %v3552 = vcvt.s32.f32 %v3488
      %v3553 = vcvt.s32.f32 %v3489
      %v3554 = vcvt.s32.f32 %v3490
      %v3555 = vcvt.s32.f32 %v3491
      %v3556 = vcvt.s32.f32 %v3492
      %v3557 = vcvt.s32.f32 %v3493
      %v3558 = vcvt.s32.f32 %v3494
      %v3559 = vcvt.s32.f32 %v3495
      %v3560 = vcvt.s32.f32 %v3496
      %v3561 = vcvt.s32.f32 %v3497
      %v3562 = vcvt.s32.f32 %v3498
      %v3563 = vcvt.s32.f32 %v3499
      %v3564 = vcvt.s32.f32 %v3500
      %v3565 = vcvt.s32.f32 %v3501
      %v3566 = vcvt.s32.f32 %v3502
      %v3567 = vpack.c.bf16 %v3504, %v3503
      %v3568 = vpack.c.bf16 %v3506, %v3505
      %v3569 = vpack.c.bf16 %v3508, %v3507
      %v3570 = vpack.c.bf16 %v3510, %v3509
      %v3571 = vpack.c.bf16 %v3512, %v3511
      %v3572 = vpack.c.bf16 %v3514, %v3513
      %v3573 = vpack.c.bf16 %v3516, %v3515
      %v3574 = vpack.c.bf16 %v3518, %v3517
      %v3575 = vpack.c.bf16 %v3520, %v3519
      %v3576 = vpack.c.bf16 %v3522, %v3521
      %v3577 = vpack.c.bf16 %v3524, %v3523
      %v3578 = vpack.c.bf16 %v3526, %v3525
      %v3579 = vpack.c.bf16 %v3528, %v3527
      %v3580 = vpack.c.bf16 %v3530, %v3529
      %v3581 = vpack.c.bf16 %v3532, %v3531
      %v3582 = vpack.c.bf16 %v3534, %v3533
      %v3583 = vpack.c.bf16 %v3536, %v3535
      %v3584 = vpack.c.bf16 %v3538, %v3537
      %v3585 = vpack.c.bf16 %v3540, %v3539
      %v3586 = vpack.c.bf16 %v3542, %v3541
      %v3587 = vpack.c.bf16 %v3544, %v3543
      %v3588 = vpack.c.bf16 %v3546, %v3545
      %v3589 = vpack.c.bf16 %v3548, %v3547
      %v3590 = vpack.c.bf16 %v3550, %v3549
      %v3591 = vpack.c.bf16 %v3552, %v3551
      %v3592 = vpack.c.bf16 %v3554, %v3553
      %v3593 = vpack.c.bf16 %v3556, %v3555
      %v3594 = vpack.c.bf16 %v3558, %v3557
      %v3595 = vpack.c.bf16 %v3560, %v3559
      %v3596 = vpack.c.bf16 %v3562, %v3561
      %v3597 = vpack.c.bf16 %v3564, %v3563
      %v3598 = vpack.c.bf16 %v3566, %v3565
      %v3599 = vunpack.c.l.bf16 %v3247
      %v3600 = vunpack.c.h.bf16 %v3247
      %v3601 = vunpack.c.l.bf16 %v3248
      %v3602 = vunpack.c.h.bf16 %v3248
      %v3603 = vunpack.c.l.bf16 %v3249
      %v3604 = vunpack.c.h.bf16 %v3249
      %v3605 = vunpack.c.l.bf16 %v3250
      %v3606 = vunpack.c.h.bf16 %v3250
      %v3607 = vunpack.c.l.bf16 %v3251
      %v3608 = vunpack.c.h.bf16 %v3251
      %v3609 = vunpack.c.l.bf16 %v3252
      %v3610 = vunpack.c.h.bf16 %v3252
      %v3611 = vunpack.c.l.bf16 %v3253
      %v3612 = vunpack.c.h.bf16 %v3253
      %v3613 = vunpack.c.l.bf16 %v3254
      %v3614 = vunpack.c.h.bf16 %v3254
      %v3615 = vunpack.c.l.bf16 %v3255
      %v3616 = vunpack.c.h.bf16 %v3255
      %v3617 = vunpack.c.l.bf16 %v3256
      %v3618 = vunpack.c.h.bf16 %v3256
      %v3619 = vunpack.c.l.bf16 %v3257
      %v3620 = vunpack.c.h.bf16 %v3257
      %v3621 = vunpack.c.l.bf16 %v3258
      %v3622 = vunpack.c.h.bf16 %v3258
      %v3623 = vunpack.c.l.bf16 %v3259
      %v3624 = vunpack.c.h.bf16 %v3259
      %v3625 = vunpack.c.l.bf16 %v3260
      %v3626 = vunpack.c.h.bf16 %v3260
      %v3627 = vunpack.c.l.bf16 %v3261
      %v3628 = vunpack.c.h.bf16 %v3261
      %v3629 = vunpack.c.l.bf16 %v3262
      %v3630 = vunpack.c.h.bf16 %v3262
      %v3631 = vunpack.c.l.bf16 %v3263
      %v3632 = vunpack.c.h.bf16 %v3263
      %v3633 = vunpack.c.l.bf16 %v3264
      %v3634 = vunpack.c.h.bf16 %v3264
      %v3635 = vunpack.c.l.bf16 %v3265
      %v3636 = vunpack.c.h.bf16 %v3265
      %v3637 = vunpack.c.l.bf16 %v3266
      %v3638 = vunpack.c.h.bf16 %v3266
      %v3639 = vunpack.c.l.bf16 %v3267
      %v3640 = vunpack.c.h.bf16 %v3267
      %v3641 = vunpack.c.l.bf16 %v3268
      %v3642 = vunpack.c.h.bf16 %v3268
      %v3643 = vunpack.c.l.bf16 %v3269
      %v3644 = vunpack.c.h.bf16 %v3269
      %v3645 = vunpack.c.l.bf16 %v3270
      %v3646 = vunpack.c.h.bf16 %v3270
      %v3647 = vunpack.c.l.bf16 %v3271
      %v3648 = vunpack.c.h.bf16 %v3271
      %v3649 = vunpack.c.l.bf16 %v3272
      %v3650 = vunpack.c.h.bf16 %v3272
      %v3651 = vunpack.c.l.bf16 %v3273
      %v3652 = vunpack.c.h.bf16 %v3273
      %v3653 = vunpack.c.l.bf16 %v3274
      %v3654 = vunpack.c.h.bf16 %v3274
      %v3655 = vunpack.c.l.bf16 %v3275
      %v3656 = vunpack.c.h.bf16 %v3275
      %v3657 = vunpack.c.l.bf16 %v3276
      %v3658 = vunpack.c.h.bf16 %v3276
      %v3659 = vunpack.c.l.bf16 %v3277
      %v3660 = vunpack.c.h.bf16 %v3277
      %v3661 = vunpack.c.l.bf16 %v3278
      %v3662 = vunpack.c.h.bf16 %v3278
      %v3663 = vunpack.c.l.bf16 %v3567
      %v3664 = vunpack.c.h.bf16 %v3567
      %v3665 = vunpack.c.l.bf16 %v3568
      %v3666 = vunpack.c.h.bf16 %v3568
      %v3667 = vunpack.c.l.bf16 %v3569
      %v3668 = vunpack.c.h.bf16 %v3569
      %v3669 = vunpack.c.l.bf16 %v3570
      %v3670 = vunpack.c.h.bf16 %v3570
      %v3671 = vunpack.c.l.bf16 %v3571
      %v3672 = vunpack.c.h.bf16 %v3571
      %v3673 = vunpack.c.l.bf16 %v3572
      %v3674 = vunpack.c.h.bf16 %v3572
      %v3675 = vunpack.c.l.bf16 %v3573
      %v3676 = vunpack.c.h.bf16 %v3573
      %v3677 = vunpack.c.l.bf16 %v3574
      %v3678 = vunpack.c.h.bf16 %v3574
      %v3679 = vunpack.c.l.bf16 %v3575
      %v3680 = vunpack.c.h.bf16 %v3575
      %v3681 = vunpack.c.l.bf16 %v3576
      %v3682 = vunpack.c.h.bf16 %v3576
      %v3683 = vunpack.c.l.bf16 %v3577
      %v3684 = vunpack.c.h.bf16 %v3577
      %v3685 = vunpack.c.l.bf16 %v3578
      %v3686 = vunpack.c.h.bf16 %v3578
      %v3687 = vunpack.c.l.bf16 %v3579
      %v3688 = vunpack.c.h.bf16 %v3579
      %v3689 = vunpack.c.l.bf16 %v3580
      %v3690 = vunpack.c.h.bf16 %v3580
      %v3691 = vunpack.c.l.bf16 %v3581
      %v3692 = vunpack.c.h.bf16 %v3581
      %v3693 = vunpack.c.l.bf16 %v3582
      %v3694 = vunpack.c.h.bf16 %v3582
      %v3695 = vunpack.c.l.bf16 %v3583
      %v3696 = vunpack.c.h.bf16 %v3583
      %v3697 = vunpack.c.l.bf16 %v3584
      %v3698 = vunpack.c.h.bf16 %v3584
      %v3699 = vunpack.c.l.bf16 %v3585
      %v3700 = vunpack.c.h.bf16 %v3585
      %v3701 = vunpack.c.l.bf16 %v3586
      %v3702 = vunpack.c.h.bf16 %v3586
      %v3703 = vunpack.c.l.bf16 %v3587
      %v3704 = vunpack.c.h.bf16 %v3587
      %v3705 = vunpack.c.l.bf16 %v3588
      %v3706 = vunpack.c.h.bf16 %v3588
      %v3707 = vunpack.c.l.bf16 %v3589
      %v3708 = vunpack.c.h.bf16 %v3589
      %v3709 = vunpack.c.l.bf16 %v3590
      %v3710 = vunpack.c.h.bf16 %v3590
      %v3711 = vunpack.c.l.bf16 %v3591
      %v3712 = vunpack.c.h.bf16 %v3591
      %v3713 = vunpack.c.l.bf16 %v3592
      %v3714 = vunpack.c.h.bf16 %v3592
      %v3715 = vunpack.c.l.bf16 %v3593
      %v3716 = vunpack.c.h.bf16 %v3593
      %v3717 = vunpack.c.l.bf16 %v3594
      %v3718 = vunpack.c.h.bf16 %v3594
      %v3719 = vunpack.c.l.bf16 %v3595
      %v3720 = vunpack.c.h.bf16 %v3595
      %v3721 = vunpack.c.l.bf16 %v3596
      %v3722 = vunpack.c.h.bf16 %v3596
      %v3723 = vunpack.c.l.bf16 %v3597
      %v3724 = vunpack.c.h.bf16 %v3597
      %v3725 = vunpack.c.l.bf16 %v3598
      %v3726 = vunpack.c.h.bf16 %v3598
      %v3727 = vadd.f32 %v3599, %v3663
      %v3728 = vadd.f32 %v3600, %v3664
      %v3729 = vadd.f32 %v3601, %v3665
      %v3730 = vadd.f32 %v3602, %v3666
      %v3731 = vadd.f32 %v3603, %v3667
      %v3732 = vadd.f32 %v3604, %v3668
      %v3733 = vadd.f32 %v3605, %v3669
      %v3734 = vadd.f32 %v3606, %v3670
      %v3735 = vadd.f32 %v3607, %v3671
      %v3736 = vadd.f32 %v3608, %v3672
      %v3737 = vadd.f32 %v3609, %v3673
      %v3738 = vadd.f32 %v3610, %v3674
      %v3739 = vadd.f32 %v3611, %v3675
      %v3740 = vadd.f32 %v3612, %v3676
      %v3741 = vadd.f32 %v3613, %v3677
      %v3742 = vadd.f32 %v3614, %v3678
      %v3743 = vadd.f32 %v3615, %v3679
      %v3744 = vadd.f32 %v3616, %v3680
      %v3745 = vadd.f32 %v3617, %v3681
      %v3746 = vadd.f32 %v3618, %v3682
      %v3747 = vadd.f32 %v3619, %v3683
      %v3748 = vadd.f32 %v3620, %v3684
      %v3749 = vadd.f32 %v3621, %v3685
      %v3750 = vadd.f32 %v3622, %v3686
      %v3751 = vadd.f32 %v3623, %v3687
      %v3752 = vadd.f32 %v3624, %v3688
      %v3753 = vadd.f32 %v3625, %v3689
      %v3754 = vadd.f32 %v3626, %v3690
      %v3755 = vadd.f32 %v3627, %v3691
      %v3756 = vadd.f32 %v3628, %v3692
      %v3757 = vadd.f32 %v3629, %v3693
      %v3758 = vadd.f32 %v3630, %v3694
      %v3759 = vadd.f32 %v3631, %v3695
      %v3760 = vadd.f32 %v3632, %v3696
      %v3761 = vadd.f32 %v3633, %v3697
      %v3762 = vadd.f32 %v3634, %v3698
      %v3763 = vadd.f32 %v3635, %v3699
      %v3764 = vadd.f32 %v3636, %v3700
      %v3765 = vadd.f32 %v3637, %v3701
      %v3766 = vadd.f32 %v3638, %v3702
      %v3767 = vadd.f32 %v3639, %v3703
      %v3768 = vadd.f32 %v3640, %v3704
      %v3769 = vadd.f32 %v3641, %v3705
      %v3770 = vadd.f32 %v3642, %v3706
      %v3771 = vadd.f32 %v3643, %v3707
      %v3772 = vadd.f32 %v3644, %v3708
      %v3773 = vadd.f32 %v3645, %v3709
      %v3774 = vadd.f32 %v3646, %v3710
      %v3775 = vadd.f32 %v3647, %v3711
      %v3776 = vadd.f32 %v3648, %v3712
      %v3777 = vadd.f32 %v3649, %v3713
      %v3778 = vadd.f32 %v3650, %v3714
      %v3779 = vadd.f32 %v3651, %v3715
      %v3780 = vadd.f32 %v3652, %v3716
      %v3781 = vadd.f32 %v3653, %v3717
      %v3782 = vadd.f32 %v3654, %v3718
      %v3783 = vadd.f32 %v3655, %v3719
      %v3784 = vadd.f32 %v3656, %v3720
      %v3785 = vadd.f32 %v3657, %v3721
      %v3786 = vadd.f32 %v3658, %v3722
      %v3787 = vadd.f32 %v3659, %v3723
      %v3788 = vadd.f32 %v3660, %v3724
      %v3789 = vadd.f32 %v3661, %v3725
      %v3790 = vadd.f32 %v3662, %v3726
      %v3791 = vpack.c.bf16 %v3728, %v3727
      %v3792 = vpack.c.bf16 %v3730, %v3729
      %v3793 = vpack.c.bf16 %v3732, %v3731
      %v3794 = vpack.c.bf16 %v3734, %v3733
      %v3795 = vpack.c.bf16 %v3736, %v3735
      %v3796 = vpack.c.bf16 %v3738, %v3737
      %v3797 = vpack.c.bf16 %v3740, %v3739
      %v3798 = vpack.c.bf16 %v3742, %v3741
      %v3799 = vpack.c.bf16 %v3744, %v3743
      %v3800 = vpack.c.bf16 %v3746, %v3745
      %v3801 = vpack.c.bf16 %v3748, %v3747
      %v3802 = vpack.c.bf16 %v3750, %v3749
      %v3803 = vpack.c.bf16 %v3752, %v3751
      %v3804 = vpack.c.bf16 %v3754, %v3753
      %v3805 = vpack.c.bf16 %v3756, %v3755
      %v3806 = vpack.c.bf16 %v3758, %v3757
      %v3807 = vpack.c.bf16 %v3760, %v3759
      %v3808 = vpack.c.bf16 %v3762, %v3761
      %v3809 = vpack.c.bf16 %v3764, %v3763
      %v3810 = vpack.c.bf16 %v3766, %v3765
      %v3811 = vpack.c.bf16 %v3768, %v3767
      %v3812 = vpack.c.bf16 %v3770, %v3769
      %v3813 = vpack.c.bf16 %v3772, %v3771
      %v3814 = vpack.c.bf16 %v3774, %v3773
      %v3815 = vpack.c.bf16 %v3776, %v3775
      %v3816 = vpack.c.bf16 %v3778, %v3777
      %v3817 = vpack.c.bf16 %v3780, %v3779
      %v3818 = vpack.c.bf16 %v3782, %v3781
      %v3819 = vpack.c.bf16 %v3784, %v3783
      %v3820 = vpack.c.bf16 %v3786, %v3785
      %v3821 = vpack.c.bf16 %v3788, %v3787
      %v3822 = vpack.c.bf16 %v3790, %v3789
      %3823 = vset.pattern.permute.xlu0 7
      %3824 = vperm.xlu0 %3823, %v44
      %v3825 = vpop.permute.xlu0 %3824
      %3826 = vset.pattern.permute.xlu0 7
      %3827 = vperm.xlu0 %3826, %v45
      %v3828 = vpop.permute.xlu0 %3827
      %3829 = vset.pattern.permute.xlu0 7
      %3830 = vperm.xlu0 %3829, %v46
      %v3831 = vpop.permute.xlu0 %3830
      %3832 = vset.pattern.permute.xlu0 7
      %3833 = vperm.xlu0 %3832, %v47
      %v3834 = vpop.permute.xlu0 %3833
      %3835 = vset.pattern.permute.xlu0 7
      %3836 = vperm.xlu0 %3835, %v48
      %v3837 = vpop.permute.xlu0 %3836
      %3838 = vset.pattern.permute.xlu0 7
      %3839 = vperm.xlu0 %3838, %v49
      %v3840 = vpop.permute.xlu0 %3839
      %3841 = vset.pattern.permute.xlu0 7
      %3842 = vperm.xlu0 %3841, %v50
      %v3843 = vpop.permute.xlu0 %3842
      %3844 = vset.pattern.permute.xlu0 7
      %3845 = vperm.xlu0 %3844, %v51
      %v3846 = vpop.permute.xlu0 %3845
      %3847 = vset.pattern.permute.xlu0 7
      %3848 = vperm.xlu0 %3847, %v52
      %v3849 = vpop.permute.xlu0 %3848
      %3850 = vset.pattern.permute.xlu0 7
      %3851 = vperm.xlu0 %3850, %v53
      %v3852 = vpop.permute.xlu0 %3851
      %3853 = vset.pattern.permute.xlu0 7
      %3854 = vperm.xlu0 %3853, %v54
      %v3855 = vpop.permute.xlu0 %3854
      %3856 = vset.pattern.permute.xlu0 7
      %3857 = vperm.xlu0 %3856, %v55
      %v3858 = vpop.permute.xlu0 %3857
      %3859 = vset.pattern.permute.xlu0 7
      %3860 = vperm.xlu0 %3859, %v56
      %v3861 = vpop.permute.xlu0 %3860
      %3862 = vset.pattern.permute.xlu0 7
      %3863 = vperm.xlu0 %3862, %v57
      %v3864 = vpop.permute.xlu0 %3863
      %3865 = vset.pattern.permute.xlu0 7
      %3866 = vperm.xlu0 %3865, %v58
      %v3867 = vpop.permute.xlu0 %3866
      %3868 = vset.pattern.permute.xlu0 7
      %3869 = vperm.xlu0 %3868, %v59
      %v3870 = vpop.permute.xlu0 %3869
      %3871 = vset.pattern.permute.xlu0 7
      %3872 = vperm.xlu0 %3871, %v60
      %v3873 = vpop.permute.xlu0 %3872
      %3874 = vset.pattern.permute.xlu0 7
      %3875 = vperm.xlu0 %3874, %v61
      %v3876 = vpop.permute.xlu0 %3875
      %3877 = vset.pattern.permute.xlu0 7
      %3878 = vperm.xlu0 %3877, %v62
      %v3879 = vpop.permute.xlu0 %3878
      %3880 = vset.pattern.permute.xlu0 7
      %3881 = vperm.xlu0 %3880, %v63
      %v3882 = vpop.permute.xlu0 %3881
      %3883 = vset.pattern.permute.xlu0 7
      %3884 = vperm.xlu0 %3883, %v64
      %v3885 = vpop.permute.xlu0 %3884
      %3886 = vset.pattern.permute.xlu0 7
      %3887 = vperm.xlu0 %3886, %v65
      %v3888 = vpop.permute.xlu0 %3887
      %3889 = vset.pattern.permute.xlu0 7
      %3890 = vperm.xlu0 %3889, %v66
      %v3891 = vpop.permute.xlu0 %3890
      %3892 = vset.pattern.permute.xlu0 7
      %3893 = vperm.xlu0 %3892, %v67
      %v3894 = vpop.permute.xlu0 %3893
      %3895 = vset.pattern.permute.xlu0 7
      %3896 = vperm.xlu0 %3895, %v68
      %v3897 = vpop.permute.xlu0 %3896
      %3898 = vset.pattern.permute.xlu0 7
      %3899 = vperm.xlu0 %3898, %v69
      %v3900 = vpop.permute.xlu0 %3899
      %3901 = vset.pattern.permute.xlu0 7
      %3902 = vperm.xlu0 %3901, %v70
      %v3903 = vpop.permute.xlu0 %3902
      %3904 = vset.pattern.permute.xlu0 7
      %3905 = vperm.xlu0 %3904, %v71
      %v3906 = vpop.permute.xlu0 %3905
      %3907 = vset.pattern.permute.xlu0 7
      %3908 = vperm.xlu0 %3907, %v72
      %v3909 = vpop.permute.xlu0 %3908
      %3910 = vset.pattern.permute.xlu0 7
      %3911 = vperm.xlu0 %3910, %v73
      %v3912 = vpop.permute.xlu0 %3911
      %3913 = vset.pattern.permute.xlu0 7
      %3914 = vperm.xlu0 %3913, %v74
      %v3915 = vpop.permute.xlu0 %3914
      %3916 = vset.pattern.permute.xlu0 7
      %3917 = vperm.xlu0 %3916, %v75
      %v3918 = vpop.permute.xlu0 %3917
      %vm3919 = vcmp.eq.s32.totalorder %v3825, %v77
      %vm3920 = vcmp.eq.s32.totalorder %v3825, %v78
      %vm3921 = vcmp.eq.s32.totalorder %v3828, %v77
      %vm3922 = vcmp.eq.s32.totalorder %v3828, %v78
      %vm3923 = vcmp.eq.s32.totalorder %v3831, %v77
      %vm3924 = vcmp.eq.s32.totalorder %v3831, %v78
      %vm3925 = vcmp.eq.s32.totalorder %v3834, %v77
      %vm3926 = vcmp.eq.s32.totalorder %v3834, %v78
      %vm3927 = vcmp.eq.s32.totalorder %v3837, %v77
      %vm3928 = vcmp.eq.s32.totalorder %v3837, %v78
      %vm3929 = vcmp.eq.s32.totalorder %v3840, %v77
      %vm3930 = vcmp.eq.s32.totalorder %v3840, %v78
      %vm3931 = vcmp.eq.s32.totalorder %v3843, %v77
      %vm3932 = vcmp.eq.s32.totalorder %v3843, %v78
      %vm3933 = vcmp.eq.s32.totalorder %v3846, %v77
      %vm3934 = vcmp.eq.s32.totalorder %v3846, %v78
      %vm3935 = vcmp.eq.s32.totalorder %v3849, %v77
      %vm3936 = vcmp.eq.s32.totalorder %v3849, %v78
      %vm3937 = vcmp.eq.s32.totalorder %v3852, %v77
      %vm3938 = vcmp.eq.s32.totalorder %v3852, %v78
      %vm3939 = vcmp.eq.s32.totalorder %v3855, %v77
      %vm3940 = vcmp.eq.s32.totalorder %v3855, %v78
      %vm3941 = vcmp.eq.s32.totalorder %v3858, %v77
      %vm3942 = vcmp.eq.s32.totalorder %v3858, %v78
      %vm3943 = vcmp.eq.s32.totalorder %v3861, %v77
      %vm3944 = vcmp.eq.s32.totalorder %v3861, %v78
      %vm3945 = vcmp.eq.s32.totalorder %v3864, %v77
      %vm3946 = vcmp.eq.s32.totalorder %v3864, %v78
      %vm3947 = vcmp.eq.s32.totalorder %v3867, %v77
      %vm3948 = vcmp.eq.s32.totalorder %v3867, %v78
      %vm3949 = vcmp.eq.s32.totalorder %v3870, %v77
      %vm3950 = vcmp.eq.s32.totalorder %v3870, %v78
      %vm3951 = vcmp.eq.s32.totalorder %v3873, %v77
      %vm3952 = vcmp.eq.s32.totalorder %v3873, %v78
      %vm3953 = vcmp.eq.s32.totalorder %v3876, %v77
      %vm3954 = vcmp.eq.s32.totalorder %v3876, %v78
      %vm3955 = vcmp.eq.s32.totalorder %v3879, %v77
      %vm3956 = vcmp.eq.s32.totalorder %v3879, %v78
      %vm3957 = vcmp.eq.s32.totalorder %v3882, %v77
      %vm3958 = vcmp.eq.s32.totalorder %v3882, %v78
      %vm3959 = vcmp.eq.s32.totalorder %v3885, %v77
      %vm3960 = vcmp.eq.s32.totalorder %v3885, %v78
      %vm3961 = vcmp.eq.s32.totalorder %v3888, %v77
      %vm3962 = vcmp.eq.s32.totalorder %v3888, %v78
      %vm3963 = vcmp.eq.s32.totalorder %v3891, %v77
      %vm3964 = vcmp.eq.s32.totalorder %v3891, %v78
      %vm3965 = vcmp.eq.s32.totalorder %v3894, %v77
      %vm3966 = vcmp.eq.s32.totalorder %v3894, %v78
      %vm3967 = vcmp.eq.s32.totalorder %v3897, %v77
      %vm3968 = vcmp.eq.s32.totalorder %v3897, %v78
      %vm3969 = vcmp.eq.s32.totalorder %v3900, %v77
      %vm3970 = vcmp.eq.s32.totalorder %v3900, %v78
      %vm3971 = vcmp.eq.s32.totalorder %v3903, %v77
      %vm3972 = vcmp.eq.s32.totalorder %v3903, %v78
      %vm3973 = vcmp.eq.s32.totalorder %v3906, %v77
      %vm3974 = vcmp.eq.s32.totalorder %v3906, %v78
      %vm3975 = vcmp.eq.s32.totalorder %v3909, %v77
      %vm3976 = vcmp.eq.s32.totalorder %v3909, %v78
      %vm3977 = vcmp.eq.s32.totalorder %v3912, %v77
      %vm3978 = vcmp.eq.s32.totalorder %v3912, %v78
      %vm3979 = vcmp.eq.s32.totalorder %v3915, %v77
      %vm3980 = vcmp.eq.s32.totalorder %v3915, %v78
      %vm3981 = vcmp.eq.s32.totalorder %v3918, %v77
      %vm3982 = vcmp.eq.s32.totalorder %v3918, %v78
      %v3983 = vsel %vm3919, 1, 0
      %v3984 = vsel %vm3920, 1, 0
      %v3985 = vsel %vm3921, 1, 0
      %v3986 = vsel %vm3922, 1, 0
      %v3987 = vsel %vm3923, 1, 0
      %v3988 = vsel %vm3924, 1, 0
      %v3989 = vsel %vm3925, 1, 0
      %v3990 = vsel %vm3926, 1, 0
      %v3991 = vsel %vm3927, 1, 0
      %v3992 = vsel %vm3928, 1, 0
      %v3993 = vsel %vm3929, 1, 0
      %v3994 = vsel %vm3930, 1, 0
      %v3995 = vsel %vm3931, 1, 0
      %v3996 = vsel %vm3932, 1, 0
      %v3997 = vsel %vm3933, 1, 0
      %v3998 = vsel %vm3934, 1, 0
      %v3999 = vsel %vm3935, 1, 0
      %v4000 = vsel %vm3936, 1, 0
      %v4001 = vsel %vm3937, 1, 0
      %v4002 = vsel %vm3938, 1, 0
      %v4003 = vsel %vm3939, 1, 0
      %v4004 = vsel %vm3940, 1, 0
      %v4005 = vsel %vm3941, 1, 0
      %v4006 = vsel %vm3942, 1, 0
      %v4007 = vsel %vm3943, 1, 0
      %v4008 = vsel %vm3944, 1, 0
      %v4009 = vsel %vm3945, 1, 0
      %v4010 = vsel %vm3946, 1, 0
      %v4011 = vsel %vm3947, 1, 0
      %v4012 = vsel %vm3948, 1, 0
      %v4013 = vsel %vm3949, 1, 0
      %v4014 = vsel %vm3950, 1, 0
      %v4015 = vsel %vm3951, 1, 0
      %v4016 = vsel %vm3952, 1, 0
      %v4017 = vsel %vm3953, 1, 0
      %v4018 = vsel %vm3954, 1, 0
      %v4019 = vsel %vm3955, 1, 0
      %v4020 = vsel %vm3956, 1, 0
      %v4021 = vsel %vm3957, 1, 0
      %v4022 = vsel %vm3958, 1, 0
      %v4023 = vsel %vm3959, 1, 0
      %v4024 = vsel %vm3960, 1, 0
      %v4025 = vsel %vm3961, 1, 0
      %v4026 = vsel %vm3962, 1, 0
      %v4027 = vsel %vm3963, 1, 0
      %v4028 = vsel %vm3964, 1, 0
      %v4029 = vsel %vm3965, 1, 0
      %v4030 = vsel %vm3966, 1, 0
      %v4031 = vsel %vm3967, 1, 0
      %v4032 = vsel %vm3968, 1, 0
      %v4033 = vsel %vm3969, 1, 0
      %v4034 = vsel %vm3970, 1, 0
      %v4035 = vsel %vm3971, 1, 0
      %v4036 = vsel %vm3972, 1, 0
      %v4037 = vsel %vm3973, 1, 0
      %v4038 = vsel %vm3974, 1, 0
      %v4039 = vsel %vm3975, 1, 0
      %v4040 = vsel %vm3976, 1, 0
      %v4041 = vsel %vm3977, 1, 0
      %v4042 = vsel %vm3978, 1, 0
      %v4043 = vsel %vm3979, 1, 0
      %v4044 = vsel %vm3980, 1, 0
      %v4045 = vsel %vm3981, 1, 0
      %v4046 = vsel %vm3982, 1, 0
      %v4047 = vcvt.s32.f32 %v3983
      %v4048 = vcvt.s32.f32 %v3984
      %v4049 = vcvt.s32.f32 %v3985
      %v4050 = vcvt.s32.f32 %v3986
      %v4051 = vcvt.s32.f32 %v3987
      %v4052 = vcvt.s32.f32 %v3988
      %v4053 = vcvt.s32.f32 %v3989
      %v4054 = vcvt.s32.f32 %v3990
      %v4055 = vcvt.s32.f32 %v3991
      %v4056 = vcvt.s32.f32 %v3992
      %v4057 = vcvt.s32.f32 %v3993
      %v4058 = vcvt.s32.f32 %v3994
      %v4059 = vcvt.s32.f32 %v3995
      %v4060 = vcvt.s32.f32 %v3996
      %v4061 = vcvt.s32.f32 %v3997
      %v4062 = vcvt.s32.f32 %v3998
      %v4063 = vcvt.s32.f32 %v3999
      %v4064 = vcvt.s32.f32 %v4000
      %v4065 = vcvt.s32.f32 %v4001
      %v4066 = vcvt.s32.f32 %v4002
      %v4067 = vcvt.s32.f32 %v4003
      %v4068 = vcvt.s32.f32 %v4004
      %v4069 = vcvt.s32.f32 %v4005
      %v4070 = vcvt.s32.f32 %v4006
      %v4071 = vcvt.s32.f32 %v4007
      %v4072 = vcvt.s32.f32 %v4008
      %v4073 = vcvt.s32.f32 %v4009
      %v4074 = vcvt.s32.f32 %v4010
      %v4075 = vcvt.s32.f32 %v4011
      %v4076 = vcvt.s32.f32 %v4012
      %v4077 = vcvt.s32.f32 %v4013
      %v4078 = vcvt.s32.f32 %v4014
      %v4079 = vcvt.s32.f32 %v4015
      %v4080 = vcvt.s32.f32 %v4016
      %v4081 = vcvt.s32.f32 %v4017
      %v4082 = vcvt.s32.f32 %v4018
      %v4083 = vcvt.s32.f32 %v4019
      %v4084 = vcvt.s32.f32 %v4020
      %v4085 = vcvt.s32.f32 %v4021
      %v4086 = vcvt.s32.f32 %v4022
      %v4087 = vcvt.s32.f32 %v4023
      %v4088 = vcvt.s32.f32 %v4024
      %v4089 = vcvt.s32.f32 %v4025
      %v4090 = vcvt.s32.f32 %v4026
      %v4091 = vcvt.s32.f32 %v4027
      %v4092 = vcvt.s32.f32 %v4028
      %v4093 = vcvt.s32.f32 %v4029
      %v4094 = vcvt.s32.f32 %v4030
      %v4095 = vcvt.s32.f32 %v4031
      %v4096 = vcvt.s32.f32 %v4032
      %v4097 = vcvt.s32.f32 %v4033
      %v4098 = vcvt.s32.f32 %v4034
      %v4099 = vcvt.s32.f32 %v4035
      %v4100 = vcvt.s32.f32 %v4036
      %v4101 = vcvt.s32.f32 %v4037
      %v4102 = vcvt.s32.f32 %v4038
      %v4103 = vcvt.s32.f32 %v4039
      %v4104 = vcvt.s32.f32 %v4040
      %v4105 = vcvt.s32.f32 %v4041
      %v4106 = vcvt.s32.f32 %v4042
      %v4107 = vcvt.s32.f32 %v4043
      %v4108 = vcvt.s32.f32 %v4044
      %v4109 = vcvt.s32.f32 %v4045
      %v4110 = vcvt.s32.f32 %v4046
      %v4111 = vpack.c.bf16 %v4048, %v4047
      %v4112 = vpack.c.bf16 %v4050, %v4049
      %v4113 = vpack.c.bf16 %v4052, %v4051
      %v4114 = vpack.c.bf16 %v4054, %v4053
      %v4115 = vpack.c.bf16 %v4056, %v4055
      %v4116 = vpack.c.bf16 %v4058, %v4057
      %v4117 = vpack.c.bf16 %v4060, %v4059
      %v4118 = vpack.c.bf16 %v4062, %v4061
      %v4119 = vpack.c.bf16 %v4064, %v4063
      %v4120 = vpack.c.bf16 %v4066, %v4065
      %v4121 = vpack.c.bf16 %v4068, %v4067
      %v4122 = vpack.c.bf16 %v4070, %v4069
      %v4123 = vpack.c.bf16 %v4072, %v4071
      %v4124 = vpack.c.bf16 %v4074, %v4073
      %v4125 = vpack.c.bf16 %v4076, %v4075
      %v4126 = vpack.c.bf16 %v4078, %v4077
      %v4127 = vpack.c.bf16 %v4080, %v4079
      %v4128 = vpack.c.bf16 %v4082, %v4081
      %v4129 = vpack.c.bf16 %v4084, %v4083
      %v4130 = vpack.c.bf16 %v4086, %v4085
      %v4131 = vpack.c.bf16 %v4088, %v4087
      %v4132 = vpack.c.bf16 %v4090, %v4089
      %v4133 = vpack.c.bf16 %v4092, %v4091
      %v4134 = vpack.c.bf16 %v4094, %v4093
      %v4135 = vpack.c.bf16 %v4096, %v4095
      %v4136 = vpack.c.bf16 %v4098, %v4097
      %v4137 = vpack.c.bf16 %v4100, %v4099
      %v4138 = vpack.c.bf16 %v4102, %v4101
      %v4139 = vpack.c.bf16 %v4104, %v4103
      %v4140 = vpack.c.bf16 %v4106, %v4105
      %v4141 = vpack.c.bf16 %v4108, %v4107
      %v4142 = vpack.c.bf16 %v4110, %v4109
      %v4143 = vunpack.c.l.bf16 %v3791
      %v4144 = vunpack.c.h.bf16 %v3791
      %v4145 = vunpack.c.l.bf16 %v3792
      %v4146 = vunpack.c.h.bf16 %v3792
      %v4147 = vunpack.c.l.bf16 %v3793
      %v4148 = vunpack.c.h.bf16 %v3793
      %v4149 = vunpack.c.l.bf16 %v3794
      %v4150 = vunpack.c.h.bf16 %v3794
      %v4151 = vunpack.c.l.bf16 %v3795
      %v4152 = vunpack.c.h.bf16 %v3795
      %v4153 = vunpack.c.l.bf16 %v3796
      %v4154 = vunpack.c.h.bf16 %v3796
      %v4155 = vunpack.c.l.bf16 %v3797
      %v4156 = vunpack.c.h.bf16 %v3797
      %v4157 = vunpack.c.l.bf16 %v3798
      %v4158 = vunpack.c.h.bf16 %v3798
      %v4159 = vunpack.c.l.bf16 %v3799
      %v4160 = vunpack.c.h.bf16 %v3799
      %v4161 = vunpack.c.l.bf16 %v3800
      %v4162 = vunpack.c.h.bf16 %v3800
      %v4163 = vunpack.c.l.bf16 %v3801
      %v4164 = vunpack.c.h.bf16 %v3801
      %v4165 = vunpack.c.l.bf16 %v3802
      %v4166 = vunpack.c.h.bf16 %v3802
      %v4167 = vunpack.c.l.bf16 %v3803
      %v4168 = vunpack.c.h.bf16 %v3803
      %v4169 = vunpack.c.l.bf16 %v3804
      %v4170 = vunpack.c.h.bf16 %v3804
      %v4171 = vunpack.c.l.bf16 %v3805
      %v4172 = vunpack.c.h.bf16 %v3805
      %v4173 = vunpack.c.l.bf16 %v3806
      %v4174 = vunpack.c.h.bf16 %v3806
      %v4175 = vunpack.c.l.bf16 %v3807
      %v4176 = vunpack.c.h.bf16 %v3807
      %v4177 = vunpack.c.l.bf16 %v3808
      %v4178 = vunpack.c.h.bf16 %v3808
      %v4179 = vunpack.c.l.bf16 %v3809
      %v4180 = vunpack.c.h.bf16 %v3809
      %v4181 = vunpack.c.l.bf16 %v3810
      %v4182 = vunpack.c.h.bf16 %v3810
      %v4183 = vunpack.c.l.bf16 %v3811
      %v4184 = vunpack.c.h.bf16 %v3811
      %v4185 = vunpack.c.l.bf16 %v3812
      %v4186 = vunpack.c.h.bf16 %v3812
      %v4187 = vunpack.c.l.bf16 %v3813
      %v4188 = vunpack.c.h.bf16 %v3813
      %v4189 = vunpack.c.l.bf16 %v3814
      %v4190 = vunpack.c.h.bf16 %v3814
      %v4191 = vunpack.c.l.bf16 %v3815
      %v4192 = vunpack.c.h.bf16 %v3815
      %v4193 = vunpack.c.l.bf16 %v3816
      %v4194 = vunpack.c.h.bf16 %v3816
      %v4195 = vunpack.c.l.bf16 %v3817
      %v4196 = vunpack.c.h.bf16 %v3817
      %v4197 = vunpack.c.l.bf16 %v3818
      %v4198 = vunpack.c.h.bf16 %v3818
      %v4199 = vunpack.c.l.bf16 %v3819
      %v4200 = vunpack.c.h.bf16 %v3819
      %v4201 = vunpack.c.l.bf16 %v3820
      %v4202 = vunpack.c.h.bf16 %v3820
      %v4203 = vunpack.c.l.bf16 %v3821
      %v4204 = vunpack.c.h.bf16 %v3821
      %v4205 = vunpack.c.l.bf16 %v3822
      %v4206 = vunpack.c.h.bf16 %v3822
      %v4207 = vunpack.c.l.bf16 %v4111
      %v4208 = vunpack.c.h.bf16 %v4111
      %v4209 = vunpack.c.l.bf16 %v4112
      %v4210 = vunpack.c.h.bf16 %v4112
      %v4211 = vunpack.c.l.bf16 %v4113
      %v4212 = vunpack.c.h.bf16 %v4113
      %v4213 = vunpack.c.l.bf16 %v4114
      %v4214 = vunpack.c.h.bf16 %v4114
      %v4215 = vunpack.c.l.bf16 %v4115
      %v4216 = vunpack.c.h.bf16 %v4115
      %v4217 = vunpack.c.l.bf16 %v4116
      %v4218 = vunpack.c.h.bf16 %v4116
      %v4219 = vunpack.c.l.bf16 %v4117
      %v4220 = vunpack.c.h.bf16 %v4117
      %v4221 = vunpack.c.l.bf16 %v4118
      %v4222 = vunpack.c.h.bf16 %v4118
      %v4223 = vunpack.c.l.bf16 %v4119
      %v4224 = vunpack.c.h.bf16 %v4119
      %v4225 = vunpack.c.l.bf16 %v4120
      %v4226 = vunpack.c.h.bf16 %v4120
      %v4227 = vunpack.c.l.bf16 %v4121
      %v4228 = vunpack.c.h.bf16 %v4121
      %v4229 = vunpack.c.l.bf16 %v4122
      %v4230 = vunpack.c.h.bf16 %v4122
      %v4231 = vunpack.c.l.bf16 %v4123
      %v4232 = vunpack.c.h.bf16 %v4123
      %v4233 = vunpack.c.l.bf16 %v4124
      %v4234 = vunpack.c.h.bf16 %v4124
      %v4235 = vunpack.c.l.bf16 %v4125
      %v4236 = vunpack.c.h.bf16 %v4125
      %v4237 = vunpack.c.l.bf16 %v4126
      %v4238 = vunpack.c.h.bf16 %v4126
      %v4239 = vunpack.c.l.bf16 %v4127
      %v4240 = vunpack.c.h.bf16 %v4127
      %v4241 = vunpack.c.l.bf16 %v4128
      %v4242 = vunpack.c.h.bf16 %v4128
      %v4243 = vunpack.c.l.bf16 %v4129
      %v4244 = vunpack.c.h.bf16 %v4129
      %v4245 = vunpack.c.l.bf16 %v4130
      %v4246 = vunpack.c.h.bf16 %v4130
      %v4247 = vunpack.c.l.bf16 %v4131
      %v4248 = vunpack.c.h.bf16 %v4131
      %v4249 = vunpack.c.l.bf16 %v4132
      %v4250 = vunpack.c.h.bf16 %v4132
      %v4251 = vunpack.c.l.bf16 %v4133
      %v4252 = vunpack.c.h.bf16 %v4133
      %v4253 = vunpack.c.l.bf16 %v4134
      %v4254 = vunpack.c.h.bf16 %v4134
      %v4255 = vunpack.c.l.bf16 %v4135
      %v4256 = vunpack.c.h.bf16 %v4135
      %v4257 = vunpack.c.l.bf16 %v4136
      %v4258 = vunpack.c.h.bf16 %v4136
      %v4259 = vunpack.c.l.bf16 %v4137
      %v4260 = vunpack.c.h.bf16 %v4137
      %v4261 = vunpack.c.l.bf16 %v4138
      %v4262 = vunpack.c.h.bf16 %v4138
      %v4263 = vunpack.c.l.bf16 %v4139
      %v4264 = vunpack.c.h.bf16 %v4139
      %v4265 = vunpack.c.l.bf16 %v4140
      %v4266 = vunpack.c.h.bf16 %v4140
      %v4267 = vunpack.c.l.bf16 %v4141
      %v4268 = vunpack.c.h.bf16 %v4141
      %v4269 = vunpack.c.l.bf16 %v4142
      %v4270 = vunpack.c.h.bf16 %v4142
      %v4271 = vadd.f32 %v4143, %v4207
      %v4272 = vadd.f32 %v4144, %v4208
      %v4273 = vadd.f32 %v4145, %v4209
      %v4274 = vadd.f32 %v4146, %v4210
      %v4275 = vadd.f32 %v4147, %v4211
      %v4276 = vadd.f32 %v4148, %v4212
      %v4277 = vadd.f32 %v4149, %v4213
      %v4278 = vadd.f32 %v4150, %v4214
      %v4279 = vadd.f32 %v4151, %v4215
      %v4280 = vadd.f32 %v4152, %v4216
      %v4281 = vadd.f32 %v4153, %v4217
      %v4282 = vadd.f32 %v4154, %v4218
      %v4283 = vadd.f32 %v4155, %v4219
      %v4284 = vadd.f32 %v4156, %v4220
      %v4285 = vadd.f32 %v4157, %v4221
      %v4286 = vadd.f32 %v4158, %v4222
      %v4287 = vadd.f32 %v4159, %v4223
      %v4288 = vadd.f32 %v4160, %v4224
      %v4289 = vadd.f32 %v4161, %v4225
      %v4290 = vadd.f32 %v4162, %v4226
      %v4291 = vadd.f32 %v4163, %v4227
      %v4292 = vadd.f32 %v4164, %v4228
      %v4293 = vadd.f32 %v4165, %v4229
      %v4294 = vadd.f32 %v4166, %v4230
      %v4295 = vadd.f32 %v4167, %v4231
      %v4296 = vadd.f32 %v4168, %v4232
      %v4297 = vadd.f32 %v4169, %v4233
      %v4298 = vadd.f32 %v4170, %v4234
      %v4299 = vadd.f32 %v4171, %v4235
      %v4300 = vadd.f32 %v4172, %v4236
      %v4301 = vadd.f32 %v4173, %v4237
      %v4302 = vadd.f32 %v4174, %v4238
      %v4303 = vadd.f32 %v4175, %v4239
      %v4304 = vadd.f32 %v4176, %v4240
      %v4305 = vadd.f32 %v4177, %v4241
      %v4306 = vadd.f32 %v4178, %v4242
      %v4307 = vadd.f32 %v4179, %v4243
      %v4308 = vadd.f32 %v4180, %v4244
      %v4309 = vadd.f32 %v4181, %v4245
      %v4310 = vadd.f32 %v4182, %v4246
      %v4311 = vadd.f32 %v4183, %v4247
      %v4312 = vadd.f32 %v4184, %v4248
      %v4313 = vadd.f32 %v4185, %v4249
      %v4314 = vadd.f32 %v4186, %v4250
      %v4315 = vadd.f32 %v4187, %v4251
      %v4316 = vadd.f32 %v4188, %v4252
      %v4317 = vadd.f32 %v4189, %v4253
      %v4318 = vadd.f32 %v4190, %v4254
      %v4319 = vadd.f32 %v4191, %v4255
      %v4320 = vadd.f32 %v4192, %v4256
      %v4321 = vadd.f32 %v4193, %v4257
      %v4322 = vadd.f32 %v4194, %v4258
      %v4323 = vadd.f32 %v4195, %v4259
      %v4324 = vadd.f32 %v4196, %v4260
      %v4325 = vadd.f32 %v4197, %v4261
      %v4326 = vadd.f32 %v4198, %v4262
      %v4327 = vadd.f32 %v4199, %v4263
      %v4328 = vadd.f32 %v4200, %v4264
      %v4329 = vadd.f32 %v4201, %v4265
      %v4330 = vadd.f32 %v4202, %v4266
      %v4331 = vadd.f32 %v4203, %v4267
      %v4332 = vadd.f32 %v4204, %v4268
      %v4333 = vadd.f32 %v4205, %v4269
      %v4334 = vadd.f32 %v4206, %v4270
      %v4335 = vpack.c.bf16 %v4273, %v4271
      %v4336 = vpack.c.bf16 %v4274, %v4272
      %v4337 = vpack.c.bf16 %v4277, %v4275
      %v4338 = vpack.c.bf16 %v4278, %v4276
      %v4339 = vpack.c.bf16 %v4281, %v4279
      %v4340 = vpack.c.bf16 %v4282, %v4280
      %v4341 = vpack.c.bf16 %v4285, %v4283
      %v4342 = vpack.c.bf16 %v4286, %v4284
      %v4343 = vpack.c.bf16 %v4289, %v4287
      %v4344 = vpack.c.bf16 %v4290, %v4288
      %v4345 = vpack.c.bf16 %v4293, %v4291
      %v4346 = vpack.c.bf16 %v4294, %v4292
      %v4347 = vpack.c.bf16 %v4297, %v4295
      %v4348 = vpack.c.bf16 %v4298, %v4296
      %v4349 = vpack.c.bf16 %v4301, %v4299
      %v4350 = vpack.c.bf16 %v4302, %v4300
      %v4351 = vpack.c.bf16 %v4305, %v4303
      %v4352 = vpack.c.bf16 %v4306, %v4304
      %v4353 = vpack.c.bf16 %v4309, %v4307
      %v4354 = vpack.c.bf16 %v4310, %v4308
      %v4355 = vpack.c.bf16 %v4313, %v4311
      %v4356 = vpack.c.bf16 %v4314, %v4312
      %v4357 = vpack.c.bf16 %v4317, %v4315
      %v4358 = vpack.c.bf16 %v4318, %v4316
      %v4359 = vpack.c.bf16 %v4321, %v4319
      %v4360 = vpack.c.bf16 %v4322, %v4320
      %v4361 = vpack.c.bf16 %v4325, %v4323
      %v4362 = vpack.c.bf16 %v4326, %v4324
      %v4363 = vpack.c.bf16 %v4329, %v4327
      %v4364 = vpack.c.bf16 %v4330, %v4328
      %v4365 = vpack.c.bf16 %v4333, %v4331
      %v4366 = vpack.c.bf16 %v4334, %v4332
      %v4367 = vld [vmem:[%s1] sm:$0xf]
      %v4368 = vld [vmem:[%s1 + $0x4] sm:$0xf]
      %v4369 = vld [vmem:[%s1 + $0x8] sm:$0xf]
      %v4370 = vld [vmem:[%s1 + $0xc] sm:$0xf]
      %v4371 = vld [vmem:[%s1 + $0x10] sm:$0xf]
      %v4372 = vld [vmem:[%s1 + $0x14] sm:$0xf]
      %v4373 = vld [vmem:[%s1 + $0x18] sm:$0xf]
      %v4374 = vld [vmem:[%s1 + $0x1c] sm:$0xf]
      %v4375 = vld [vmem:[%s1 + $0x20] sm:$0xf]
      %v4376 = vld [vmem:[%s1 + $0x24] sm:$0xf]
      %v4377 = vld [vmem:[%s1 + $0x28] sm:$0xf]
      %v4378 = vld [vmem:[%s1 + $0x2c] sm:$0xf]
      %v4379 = vld [vmem:[%s1 + $0x30] sm:$0xf]
      %v4380 = vld [vmem:[%s1 + $0x34] sm:$0xf]
      %v4381 = vld [vmem:[%s1 + $0x38] sm:$0xf]
      %v4382 = vld [vmem:[%s1 + $0x3c] sm:$0xf]
      %v4383 = vld [vmem:[%s1 + $0x40] sm:$0xf]
      %v4384 = vld [vmem:[%s1 + $0x44] sm:$0xf]
      %v4385 = vld [vmem:[%s1 + $0x48] sm:$0xf]
      %v4386 = vld [vmem:[%s1 + $0x4c] sm:$0xf]
      %v4387 = vld [vmem:[%s1 + $0x50] sm:$0xf]
      %v4388 = vld [vmem:[%s1 + $0x54] sm:$0xf]
      %v4389 = vld [vmem:[%s1 + $0x58] sm:$0xf]
      %v4390 = vld [vmem:[%s1 + $0x5c] sm:$0xf]
      %v4391 = vld [vmem:[%s1 + $0x60] sm:$0xf]
      %v4392 = vld [vmem:[%s1 + $0x64] sm:$0xf]
      %v4393 = vld [vmem:[%s1 + $0x68] sm:$0xf]
      %v4394 = vld [vmem:[%s1 + $0x6c] sm:$0xf]
      %v4395 = vld [vmem:[%s1 + $0x70] sm:$0xf]
      %v4396 = vld [vmem:[%s1 + $0x74] sm:$0xf]
      %v4397 = vld [vmem:[%s1 + $0x78] sm:$0xf]
      %v4398 = vld [vmem:[%s1 + $0x7c] sm:$0xf]
      %v4431 = vunpack.c.l.b16 %v4367
      %v4432 = vunpack.c.l.b16 %v4368
      %v4433 = vunpack.c.l.b16 %v4369
      %v4434 = vunpack.c.l.b16 %v4370
      %v4435 = vunpack.c.l.b16 %v4371
      %v4436 = vunpack.c.l.b16 %v4372
      %v4437 = vunpack.c.l.b16 %v4373
      %v4438 = vunpack.c.l.b16 %v4374
      %v4439 = vunpack.c.l.b16 %v4375
      %v4440 = vunpack.c.l.b16 %v4376
      %v4441 = vunpack.c.l.b16 %v4377
      %v4442 = vunpack.c.l.b16 %v4378
      %v4443 = vunpack.c.l.b16 %v4379
      %v4444 = vunpack.c.l.b16 %v4380
      %v4445 = vunpack.c.l.b16 %v4381
      %v4446 = vunpack.c.l.b16 %v4382
      %v4447 = vunpack.c.l.b16 %v4383
      %v4448 = vunpack.c.l.b16 %v4384
      %v4449 = vunpack.c.l.b16 %v4385
      %v4450 = vunpack.c.l.b16 %v4386
      %v4451 = vunpack.c.l.b16 %v4387
      %v4452 = vunpack.c.l.b16 %v4388
      %v4453 = vunpack.c.l.b16 %v4389
      %v4454 = vunpack.c.l.b16 %v4390
      %v4455 = vunpack.c.l.b16 %v4391
      %v4456 = vunpack.c.l.b16 %v4392
      %v4457 = vunpack.c.l.b16 %v4393
      %v4458 = vunpack.c.l.b16 %v4394
      %v4459 = vunpack.c.l.b16 %v4395
      %v4460 = vunpack.c.l.b16 %v4396
      %v4461 = vunpack.c.l.b16 %v4397
      %v4462 = vunpack.c.l.b16 %v4398
      %v4463 = vpack.c.b16 %v4432, %v4431
      %v4464 = vpack.c.b16 %v4434, %v4433
      %v4465 = vpack.c.b16 %v4436, %v4435
      %v4466 = vpack.c.b16 %v4438, %v4437
      %v4467 = vpack.c.b16 %v4440, %v4439
      %v4468 = vpack.c.b16 %v4442, %v4441
      %v4469 = vpack.c.b16 %v4444, %v4443
      %v4470 = vpack.c.b16 %v4446, %v4445
      %v4471 = vpack.c.b16 %v4448, %v4447
      %v4472 = vpack.c.b16 %v4450, %v4449
      %v4473 = vpack.c.b16 %v4452, %v4451
      %v4474 = vpack.c.b16 %v4454, %v4453
      %v4475 = vpack.c.b16 %v4456, %v4455
      %v4476 = vpack.c.b16 %v4458, %v4457
      %v4477 = vpack.c.b16 %v4460, %v4459
      %v4478 = vpack.c.b16 %v4462, %v4461
      %4495 = vmatpush.bf16.msra.mxu0 %v4470
      %4496 = vmatpush.bf16.msra.mxu0 %v4469
      %4497 = vmatpush.bf16.msra.mxu0 %v4468
      %4498 = vmatpush.bf16.msra.mxu0 %v4467
      %4499 = vmatpush.bf16.msra.mxu0 %v4466
      %4500 = vmatpush.bf16.msra.mxu0 %v4465
      %4501 = vmatpush.bf16.msra.mxu0 %v4464
      %4502 = vmatpush.bf16.msra.mxu0 %v4463
      %4503 = vmatmul.bf16.gmra.mxu0 %v4335
      %v4504 = vpop.f32.mrf.mxu0
      %v4505 = vadd.f32 0.0, %v4504
      %v4506 = vpop.f32.mrf.mxu0
      %v4507 = vadd.f32 0.0, %v4506
      %4508 = vmatmul.bf16.gmra.mxu0 %v4337
      %v4509 = vpop.f32.mrf.mxu0
      %v4510 = vadd.f32 0.0, %v4509
      %v4511 = vpop.f32.mrf.mxu0
      %v4512 = vadd.f32 0.0, %v4511
      %4513 = vmatmul.bf16.gmra.mxu0 %v4339
      %v4514 = vpop.f32.mrf.mxu0
      %v4515 = vadd.f32 0.0, %v4514
      %v4516 = vpop.f32.mrf.mxu0
      %v4517 = vadd.f32 0.0, %v4516
      %4518 = vmatmul.bf16.gmra.mxu0 %v4341
      %v4519 = vpop.f32.mrf.mxu0
      %v4520 = vadd.f32 0.0, %v4519
      %v4521 = vpop.f32.mrf.mxu0
      %v4522 = vadd.f32 0.0, %v4521
      %4523 = vmatmul.bf16.gmra.mxu0 %v4343
      %v4524 = vpop.f32.mrf.mxu0
      %v4525 = vadd.f32 0.0, %v4524
      %v4526 = vpop.f32.mrf.mxu0
      %v4527 = vadd.f32 0.0, %v4526
      %4528 = vmatmul.bf16.gmra.mxu0 %v4345
      %v4529 = vpop.f32.mrf.mxu0
      %v4530 = vadd.f32 0.0, %v4529
      %v4531 = vpop.f32.mrf.mxu0
      %v4532 = vadd.f32 0.0, %v4531
      %4533 = vmatmul.bf16.gmra.mxu0 %v4347
      %v4534 = vpop.f32.mrf.mxu0
      %v4535 = vadd.f32 0.0, %v4534
      %v4536 = vpop.f32.mrf.mxu0
      %v4537 = vadd.f32 0.0, %v4536
      %4538 = vmatmul.bf16.gmra.mxu0 %v4349
      %v4539 = vpop.f32.mrf.mxu0
      %v4540 = vadd.f32 0.0, %v4539
      %v4541 = vpop.f32.mrf.mxu0
      %v4542 = vadd.f32 0.0, %v4541
      %4543 = vmatmul.bf16.gmra.mxu0 %v4351
      %v4544 = vpop.f32.mrf.mxu0
      %v4545 = vadd.f32 0.0, %v4544
      %v4546 = vpop.f32.mrf.mxu0
      %v4547 = vadd.f32 0.0, %v4546
      %4548 = vmatmul.bf16.gmra.mxu0 %v4353
      %v4549 = vpop.f32.mrf.mxu0
      %v4550 = vadd.f32 0.0, %v4549
      %v4551 = vpop.f32.mrf.mxu0
      %v4552 = vadd.f32 0.0, %v4551
      %4553 = vmatmul.bf16.gmra.mxu0 %v4355
      %v4554 = vpop.f32.mrf.mxu0
      %v4555 = vadd.f32 0.0, %v4554
      %v4556 = vpop.f32.mrf.mxu0
      %v4557 = vadd.f32 0.0, %v4556
      %4558 = vmatmul.bf16.gmra.mxu0 %v4357
      %v4559 = vpop.f32.mrf.mxu0
      %v4560 = vadd.f32 0.0, %v4559
      %v4561 = vpop.f32.mrf.mxu0
      %v4562 = vadd.f32 0.0, %v4561
      %4563 = vmatmul.bf16.gmra.mxu0 %v4359
      %v4564 = vpop.f32.mrf.mxu0
      %v4565 = vadd.f32 0.0, %v4564
      %v4566 = vpop.f32.mrf.mxu0
      %v4567 = vadd.f32 0.0, %v4566
      %4568 = vmatmul.bf16.gmra.mxu0 %v4361
      %v4569 = vpop.f32.mrf.mxu0
      %v4570 = vadd.f32 0.0, %v4569
      %v4571 = vpop.f32.mrf.mxu0
      %v4572 = vadd.f32 0.0, %v4571
      %4573 = vmatmul.bf16.gmra.mxu0 %v4363
      %v4574 = vpop.f32.mrf.mxu0
      %v4575 = vadd.f32 0.0, %v4574
      %v4576 = vpop.f32.mrf.mxu0
      %v4577 = vadd.f32 0.0, %v4576
      %4578 = vmatmul.bf16.gmra.mxu0 %v4365
      %v4579 = vpop.f32.mrf.mxu0
      %v4580 = vadd.f32 0.0, %v4579
      %v4581 = vpop.f32.mrf.mxu0
      %v4582 = vadd.f32 0.0, %v4581
      %4583 = vdwg.mxu0
      %4584 = vmatpush.bf16.msra.mxu0 %v4478
      %4585 = vmatpush.bf16.msra.mxu0 %v4477
      %4586 = vmatpush.bf16.msra.mxu0 %v4476
      %4587 = vmatpush.bf16.msra.mxu0 %v4475
      %4588 = vmatpush.bf16.msra.mxu0 %v4474
      %4589 = vmatpush.bf16.msra.mxu0 %v4473
      %4590 = vmatpush.bf16.msra.mxu0 %v4472
      %4591 = vmatpush.bf16.msra.mxu0 %v4471
      %4592 = vmatmul.bf16.gmra.mxu0 %v4336
      %v4593 = vpop.f32.mrf.mxu0
      %v4594 = vadd.f32 %v4505, %v4593
      %v4595 = vpop.f32.mrf.mxu0
      %v4596 = vadd.f32 %v4507, %v4595
      %4597 = vmatmul.bf16.gmra.mxu0 %v4338
      %v4598 = vpop.f32.mrf.mxu0
      %v4599 = vadd.f32 %v4510, %v4598
      %v4600 = vpop.f32.mrf.mxu0
      %v4601 = vadd.f32 %v4512, %v4600
      %4602 = vmatmul.bf16.gmra.mxu0 %v4340
      %v4603 = vpop.f32.mrf.mxu0
      %v4604 = vadd.f32 %v4515, %v4603
      %v4605 = vpop.f32.mrf.mxu0
      %v4606 = vadd.f32 %v4517, %v4605
      %4607 = vmatmul.bf16.gmra.mxu0 %v4342
      %v4608 = vpop.f32.mrf.mxu0
      %v4609 = vadd.f32 %v4520, %v4608
      %v4610 = vpop.f32.mrf.mxu0
      %v4611 = vadd.f32 %v4522, %v4610
      %4612 = vmatmul.bf16.gmra.mxu0 %v4344
      %v4613 = vpop.f32.mrf.mxu0
      %v4614 = vadd.f32 %v4525, %v4613
      %v4615 = vpop.f32.mrf.mxu0
      %v4616 = vadd.f32 %v4527, %v4615
      %4617 = vmatmul.bf16.gmra.mxu0 %v4346
      %v4618 = vpop.f32.mrf.mxu0
      %v4619 = vadd.f32 %v4530, %v4618
      %v4620 = vpop.f32.mrf.mxu0
      %v4621 = vadd.f32 %v4532, %v4620
      %4622 = vmatmul.bf16.gmra.mxu0 %v4348
      %v4623 = vpop.f32.mrf.mxu0
      %v4624 = vadd.f32 %v4535, %v4623
      %v4625 = vpop.f32.mrf.mxu0
      %v4626 = vadd.f32 %v4537, %v4625
      %4627 = vmatmul.bf16.gmra.mxu0 %v4350
      %v4628 = vpop.f32.mrf.mxu0
      %v4629 = vadd.f32 %v4540, %v4628
      %v4630 = vpop.f32.mrf.mxu0
      %v4631 = vadd.f32 %v4542, %v4630
      %4632 = vmatmul.bf16.gmra.mxu0 %v4352
      %v4633 = vpop.f32.mrf.mxu0
      %v4634 = vadd.f32 %v4545, %v4633
      %v4635 = vpop.f32.mrf.mxu0
      %v4636 = vadd.f32 %v4547, %v4635
      %4637 = vmatmul.bf16.gmra.mxu0 %v4354
      %v4638 = vpop.f32.mrf.mxu0
      %v4639 = vadd.f32 %v4550, %v4638
      %v4640 = vpop.f32.mrf.mxu0
      %v4641 = vadd.f32 %v4552, %v4640
      %4642 = vmatmul.bf16.gmra.mxu0 %v4356
      %v4643 = vpop.f32.mrf.mxu0
      %v4644 = vadd.f32 %v4555, %v4643
      %v4645 = vpop.f32.mrf.mxu0
      %v4646 = vadd.f32 %v4557, %v4645
      %4647 = vmatmul.bf16.gmra.mxu0 %v4358
      %v4648 = vpop.f32.mrf.mxu0
      %v4649 = vadd.f32 %v4560, %v4648
      %v4650 = vpop.f32.mrf.mxu0
      %v4651 = vadd.f32 %v4562, %v4650
      %4652 = vmatmul.bf16.gmra.mxu0 %v4360
      %v4653 = vpop.f32.mrf.mxu0
      %v4654 = vadd.f32 %v4565, %v4653
      %v4655 = vpop.f32.mrf.mxu0
      %v4656 = vadd.f32 %v4567, %v4655
      %4657 = vmatmul.bf16.gmra.mxu0 %v4362
      %v4658 = vpop.f32.mrf.mxu0
      %v4659 = vadd.f32 %v4570, %v4658
      %v4660 = vpop.f32.mrf.mxu0
      %v4661 = vadd.f32 %v4572, %v4660
      %4662 = vmatmul.bf16.gmra.mxu0 %v4364
      %v4663 = vpop.f32.mrf.mxu0
      %v4664 = vadd.f32 %v4575, %v4663
      %v4665 = vpop.f32.mrf.mxu0
      %v4666 = vadd.f32 %v4577, %v4665
      %4667 = vmatmul.bf16.gmra.mxu0 %v4366
      %v4668 = vpop.f32.mrf.mxu0
      %v4669 = vadd.f32 %v4580, %v4668
      %v4670 = vpop.f32.mrf.mxu0
      %v4671 = vadd.f32 %v4582, %v4670
      %4672 = vdwg.mxu0
      %v4673 = vmax.f32 %v4594, 0.0
      %v4674 = vmax.f32 %v4596, 0.0
      %v4675 = vmax.f32 %v4599, 0.0
      %v4676 = vmax.f32 %v4601, 0.0
      %v4677 = vmax.f32 %v4604, 0.0
      %v4678 = vmax.f32 %v4606, 0.0
      %v4679 = vmax.f32 %v4609, 0.0
      %v4680 = vmax.f32 %v4611, 0.0
      %v4681 = vmax.f32 %v4614, 0.0
      %v4682 = vmax.f32 %v4616, 0.0
      %v4683 = vmax.f32 %v4619, 0.0
      %v4684 = vmax.f32 %v4621, 0.0
      %v4685 = vmax.f32 %v4624, 0.0
      %v4686 = vmax.f32 %v4626, 0.0
      %v4687 = vmax.f32 %v4629, 0.0
      %v4688 = vmax.f32 %v4631, 0.0
      %v4689 = vmax.f32 %v4634, 0.0
      %v4690 = vmax.f32 %v4636, 0.0
      %v4691 = vmax.f32 %v4639, 0.0
      %v4692 = vmax.f32 %v4641, 0.0
      %v4693 = vmax.f32 %v4644, 0.0
      %v4694 = vmax.f32 %v4646, 0.0
      %v4695 = vmax.f32 %v4649, 0.0
      %v4696 = vmax.f32 %v4651, 0.0
      %v4697 = vmax.f32 %v4654, 0.0
      %v4698 = vmax.f32 %v4656, 0.0
      %v4699 = vmax.f32 %v4659, 0.0
      %v4700 = vmax.f32 %v4661, 0.0
      %v4701 = vmax.f32 %v4664, 0.0
      %v4702 = vmax.f32 %v4666, 0.0
      %v4703 = vmax.f32 %v4669, 0.0
      %v4704 = vmax.f32 %v4671, 0.0
      %v4705 = vpack.c.bf16 %v4674, %v4673
      %v4706 = vpack.c.bf16 %v4676, %v4675
      %v4707 = vpack.c.bf16 %v4678, %v4677
      %v4708 = vpack.c.bf16 %v4680, %v4679
      %v4709 = vpack.c.bf16 %v4682, %v4681
      %v4710 = vpack.c.bf16 %v4684, %v4683
      %v4711 = vpack.c.bf16 %v4686, %v4685
      %v4712 = vpack.c.bf16 %v4688, %v4687
      %v4713 = vpack.c.bf16 %v4690, %v4689
      %v4714 = vpack.c.bf16 %v4692, %v4691
      %v4715 = vpack.c.bf16 %v4694, %v4693
      %v4716 = vpack.c.bf16 %v4696, %v4695
      %v4717 = vpack.c.bf16 %v4698, %v4697
      %v4718 = vpack.c.bf16 %v4700, %v4699
      %v4719 = vpack.c.bf16 %v4702, %v4701
      %v4720 = vpack.c.bf16 %v4704, %v4703
      %v4721 = vld [vmem:[#allocation3] sm:$0xf]
      %v4722 = vld [vmem:[#allocation3 + $0x4] sm:$0xf]
      %v4723 = vld [vmem:[#allocation3 + $0x8] sm:$0xf]
      %v4724 = vld [vmem:[#allocation3 + $0xc] sm:$0xf]
      %v4725 = vld [vmem:[#allocation3 + $0x10] sm:$0xf]
      %v4726 = vld [vmem:[#allocation3 + $0x14] sm:$0xf]
      %v4727 = vld [vmem:[#allocation3 + $0x18] sm:$0xf]
      %v4728 = vld [vmem:[#allocation3 + $0x1c] sm:$0xf]
      %v4729 = vld [vmem:[#allocation3 + $0x20] sm:$0xf]
      %v4730 = vld [vmem:[#allocation3 + $0x24] sm:$0xf]
      %v4731 = vld [vmem:[#allocation3 + $0x28] sm:$0xf]
      %v4732 = vld [vmem:[#allocation3 + $0x2c] sm:$0xf]
      %v4733 = vld [vmem:[#allocation3 + $0x30] sm:$0xf]
      %v4734 = vld [vmem:[#allocation3 + $0x34] sm:$0xf]
      %v4735 = vld [vmem:[#allocation3 + $0x38] sm:$0xf]
      %v4736 = vld [vmem:[#allocation3 + $0x3c] sm:$0xf]
      %v4737 = vld [vmem:[%s3] sm:$0x1]
      %v4739 = vperm.slane %v4737, 0
      %v4757 = vunpack.c.l.b16 %v4721
      %v4758 = vunpack.c.l.b16 %v4722
      %v4759 = vunpack.c.l.b16 %v4723
      %v4760 = vunpack.c.l.b16 %v4724
      %v4761 = vunpack.c.l.b16 %v4725
      %v4762 = vunpack.c.l.b16 %v4726
      %v4763 = vunpack.c.l.b16 %v4727
      %v4764 = vunpack.c.l.b16 %v4728
      %v4765 = vunpack.c.l.b16 %v4729
      %v4766 = vunpack.c.l.b16 %v4730
      %v4767 = vunpack.c.l.b16 %v4731
      %v4768 = vunpack.c.l.b16 %v4732
      %v4769 = vunpack.c.l.b16 %v4733
      %v4770 = vunpack.c.l.b16 %v4734
      %v4771 = vunpack.c.l.b16 %v4735
      %v4772 = vunpack.c.l.b16 %v4736
      %v4773 = vpack.c.b16 %v4758, %v4757
      %v4774 = vpack.c.b16 %v4760, %v4759
      %v4775 = vpack.c.b16 %v4762, %v4761
      %v4776 = vpack.c.b16 %v4764, %v4763
      %v4777 = vpack.c.b16 %v4766, %v4765
      %v4778 = vpack.c.b16 %v4768, %v4767
      %v4779 = vpack.c.b16 %v4770, %v4769
      %v4780 = vpack.c.b16 %v4772, %v4771
      %4789 = vmatpush.bf16.msra.mxu0 %v4780
      %4790 = vmatpush.bf16.msra.mxu0 %v4779
      %4791 = vmatpush.bf16.msra.mxu0 %v4778
      %4792 = vmatpush.bf16.msra.mxu0 %v4777
      %4793 = vmatpush.bf16.msra.mxu0 %v4776
      %4794 = vmatpush.bf16.msra.mxu0 %v4775
      %4795 = vmatpush.bf16.msra.mxu0 %v4774
      %4796 = vmatpush.bf16.msra.mxu0 %v4773
      %4797 = vmatmul.bf16.gmra.mxu0 %v4705
      %v4798 = vpop.f32.mrf.mxu0
      %v4799 = vadd.f32 %v4739, %v4798
      %v4800 = vpop.f32.mrf.mxu0
      %v4801 = vadd.f32 %v4739, %v4800
      %4802 = vmatmul.bf16.gmra.mxu0 %v4706
      %v4803 = vpop.f32.mrf.mxu0
      %v4804 = vadd.f32 %v4739, %v4803
      %v4805 = vpop.f32.mrf.mxu0
      %v4806 = vadd.f32 %v4739, %v4805
      %4807 = vmatmul.bf16.gmra.mxu0 %v4707
      %v4808 = vpop.f32.mrf.mxu0
      %v4809 = vadd.f32 %v4739, %v4808
      %v4810 = vpop.f32.mrf.mxu0
      %v4811 = vadd.f32 %v4739, %v4810
      %4812 = vmatmul.bf16.gmra.mxu0 %v4708
      %v4813 = vpop.f32.mrf.mxu0
      %v4814 = vadd.f32 %v4739, %v4813
      %v4815 = vpop.f32.mrf.mxu0
      %v4816 = vadd.f32 %v4739, %v4815
      %4817 = vmatmul.bf16.gmra.mxu0 %v4709
      %v4818 = vpop.f32.mrf.mxu0
      %v4819 = vadd.f32 %v4739, %v4818
      %v4820 = vpop.f32.mrf.mxu0
      %v4821 = vadd.f32 %v4739, %v4820
      %4822 = vmatmul.bf16.gmra.mxu0 %v4710
      %v4823 = vpop.f32.mrf.mxu0
      %v4824 = vadd.f32 %v4739, %v4823
      %v4825 = vpop.f32.mrf.mxu0
      %v4826 = vadd.f32 %v4739, %v4825
      %4827 = vmatmul.bf16.gmra.mxu0 %v4711
      %v4828 = vpop.f32.mrf.mxu0
      %v4829 = vadd.f32 %v4739, %v4828
      %v4830 = vpop.f32.mrf.mxu0
      %v4831 = vadd.f32 %v4739, %v4830
      %4832 = vmatmul.bf16.gmra.mxu0 %v4712
      %v4833 = vpop.f32.mrf.mxu0
      %v4834 = vadd.f32 %v4739, %v4833
      %v4835 = vpop.f32.mrf.mxu0
      %v4836 = vadd.f32 %v4739, %v4835
      %4837 = vmatmul.bf16.gmra.mxu0 %v4713
      %v4838 = vpop.f32.mrf.mxu0
      %v4839 = vadd.f32 %v4739, %v4838
      %v4840 = vpop.f32.mrf.mxu0
      %v4841 = vadd.f32 %v4739, %v4840
      %4842 = vmatmul.bf16.gmra.mxu0 %v4714
      %v4843 = vpop.f32.mrf.mxu0
      %v4844 = vadd.f32 %v4739, %v4843
      %v4845 = vpop.f32.mrf.mxu0
      %v4846 = vadd.f32 %v4739, %v4845
      %4847 = vmatmul.bf16.gmra.mxu0 %v4715
      %v4848 = vpop.f32.mrf.mxu0
      %v4849 = vadd.f32 %v4739, %v4848
      %v4850 = vpop.f32.mrf.mxu0
      %v4851 = vadd.f32 %v4739, %v4850
      %4852 = vmatmul.bf16.gmra.mxu0 %v4716
      %v4853 = vpop.f32.mrf.mxu0
      %v4854 = vadd.f32 %v4739, %v4853
      %v4855 = vpop.f32.mrf.mxu0
      %v4856 = vadd.f32 %v4739, %v4855
      %4857 = vmatmul.bf16.gmra.mxu0 %v4717
      %v4858 = vpop.f32.mrf.mxu0
      %v4859 = vadd.f32 %v4739, %v4858
      %v4860 = vpop.f32.mrf.mxu0
      %v4861 = vadd.f32 %v4739, %v4860
      %4862 = vmatmul.bf16.gmra.mxu0 %v4718
      %v4863 = vpop.f32.mrf.mxu0
      %v4864 = vadd.f32 %v4739, %v4863
      %v4865 = vpop.f32.mrf.mxu0
      %v4866 = vadd.f32 %v4739, %v4865
      %4867 = vmatmul.bf16.gmra.mxu0 %v4719
      %v4868 = vpop.f32.mrf.mxu0
      %v4869 = vadd.f32 %v4739, %v4868
      %v4870 = vpop.f32.mrf.mxu0
      %v4871 = vadd.f32 %v4739, %v4870
      %4872 = vmatmul.bf16.gmra.mxu0 %v4720
      %v4873 = vpop.f32.mrf.mxu0
      %v4874 = vadd.f32 %v4739, %v4873
      %v4875 = vpop.f32.mrf.mxu0
      %v4876 = vadd.f32 %v4739, %v4875
      %4877 = vdwg.mxu0
      %v4878 = vmax.f32 %v4799, 0.0
      %v4879 = vmax.f32 %v4801, 0.0
      %v4880 = vmax.f32 %v4804, 0.0
      %v4881 = vmax.f32 %v4806, 0.0
      %v4882 = vmax.f32 %v4809, 0.0
      %v4883 = vmax.f32 %v4811, 0.0
      %v4884 = vmax.f32 %v4814, 0.0
      %v4885 = vmax.f32 %v4816, 0.0
      %v4886 = vmax.f32 %v4819, 0.0
      %v4887 = vmax.f32 %v4821, 0.0
      %v4888 = vmax.f32 %v4824, 0.0
      %v4889 = vmax.f32 %v4826, 0.0
      %v4890 = vmax.f32 %v4829, 0.0
      %v4891 = vmax.f32 %v4831, 0.0
      %v4892 = vmax.f32 %v4834, 0.0
      %v4893 = vmax.f32 %v4836, 0.0
      %v4894 = vmax.f32 %v4839, 0.0
      %v4895 = vmax.f32 %v4841, 0.0
      %v4896 = vmax.f32 %v4844, 0.0
      %v4897 = vmax.f32 %v4846, 0.0
      %v4898 = vmax.f32 %v4849, 0.0
      %v4899 = vmax.f32 %v4851, 0.0
      %v4900 = vmax.f32 %v4854, 0.0
      %v4901 = vmax.f32 %v4856, 0.0
      %v4902 = vmax.f32 %v4859, 0.0
      %v4903 = vmax.f32 %v4861, 0.0
      %v4904 = vmax.f32 %v4864, 0.0
      %v4905 = vmax.f32 %v4866, 0.0
      %v4906 = vmax.f32 %v4869, 0.0
      %v4907 = vmax.f32 %v4871, 0.0
      %v4908 = vmax.f32 %v4874, 0.0
      %v4909 = vmax.f32 %v4876, 0.0
      %v4910 = vpack.c.bf16 %v4878, %v4878
      %v4911 = vpack.c.bf16 %v4879, %v4879
      %v4912 = vpack.c.bf16 %v4880, %v4880
      %v4913 = vpack.c.bf16 %v4881, %v4881
      %v4914 = vpack.c.bf16 %v4882, %v4882
      %v4915 = vpack.c.bf16 %v4883, %v4883
      %v4916 = vpack.c.bf16 %v4884, %v4884
      %v4917 = vpack.c.bf16 %v4885, %v4885
      %v4918 = vpack.c.bf16 %v4886, %v4886
      %v4919 = vpack.c.bf16 %v4887, %v4887
      %v4920 = vpack.c.bf16 %v4888, %v4888
      %v4921 = vpack.c.bf16 %v4889, %v4889
      %v4922 = vpack.c.bf16 %v4890, %v4890
      %v4923 = vpack.c.bf16 %v4891, %v4891
      %v4924 = vpack.c.bf16 %v4892, %v4892
      %v4925 = vpack.c.bf16 %v4893, %v4893
      %v4926 = vpack.c.bf16 %v4894, %v4894
      %v4927 = vpack.c.bf16 %v4895, %v4895
      %v4928 = vpack.c.bf16 %v4896, %v4896
      %v4929 = vpack.c.bf16 %v4897, %v4897
      %v4930 = vpack.c.bf16 %v4898, %v4898
      %v4931 = vpack.c.bf16 %v4899, %v4899
      %v4932 = vpack.c.bf16 %v4900, %v4900
      %v4933 = vpack.c.bf16 %v4901, %v4901
      %v4934 = vpack.c.bf16 %v4902, %v4902
      %v4935 = vpack.c.bf16 %v4903, %v4903
      %v4936 = vpack.c.bf16 %v4904, %v4904
      %v4937 = vpack.c.bf16 %v4905, %v4905
      %v4938 = vpack.c.bf16 %v4906, %v4906
      %v4939 = vpack.c.bf16 %v4907, %v4907
      %v4940 = vpack.c.bf16 %v4908, %v4908
      %v4941 = vpack.c.bf16 %v4909, %v4909
      %4942 = vst [vmem:[#allocation2] sm:$0xf] %v4910
      %4943 = vst [vmem:[#allocation2 + $0x4] sm:$0xf] %v4911
      %4944 = vst [vmem:[#allocation2 + $0x8] sm:$0xf] %v4912
      %4945 = vst [vmem:[#allocation2 + $0xc] sm:$0xf] %v4913
      %4946 = vst [vmem:[#allocation2 + $0x10] sm:$0xf] %v4914
      %4947 = vst [vmem:[#allocation2 + $0x14] sm:$0xf] %v4915
      %4948 = vst [vmem:[#allocation2 + $0x18] sm:$0xf] %v4916
      %4949 = vst [vmem:[#allocation2 + $0x1c] sm:$0xf] %v4917
      %4950 = vst [vmem:[#allocation2 + $0x20] sm:$0xf] %v4918
      %4951 = vst [vmem:[#allocation2 + $0x24] sm:$0xf] %v4919
      %4952 = vst [vmem:[#allocation2 + $0x28] sm:$0xf] %v4920
      %4953 = vst [vmem:[#allocation2 + $0x2c] sm:$0xf] %v4921
      %4954 = vst [vmem:[#allocation2 + $0x30] sm:$0xf] %v4922
      %4955 = vst [vmem:[#allocation2 + $0x34] sm:$0xf] %v4923
      %4956 = vst [vmem:[#allocation2 + $0x38] sm:$0xf] %v4924
      %4957 = vst [vmem:[#allocation2 + $0x3c] sm:$0xf] %v4925
      %4958 = vst [vmem:[#allocation2 + $0x40] sm:$0xf] %v4926
      %4959 = vst [vmem:[#allocation2 + $0x44] sm:$0xf] %v4927
      %4960 = vst [vmem:[#allocation2 + $0x48] sm:$0xf] %v4928
      %4961 = vst [vmem:[#allocation2 + $0x4c] sm:$0xf] %v4929
      %4962 = vst [vmem:[#allocation2 + $0x50] sm:$0xf] %v4930
      %4963 = vst [vmem:[#allocation2 + $0x54] sm:$0xf] %v4931
      %4964 = vst [vmem:[#allocation2 + $0x58] sm:$0xf] %v4932
      %4965 = vst [vmem:[#allocation2 + $0x5c] sm:$0xf] %v4933
      %4966 = vst [vmem:[#allocation2 + $0x60] sm:$0xf] %v4934
      %4967 = vst [vmem:[#allocation2 + $0x64] sm:$0xf] %v4935
      %4968 = vst [vmem:[#allocation2 + $0x68] sm:$0xf] %v4936
      %4969 = vst [vmem:[#allocation2 + $0x6c] sm:$0xf] %v4937
      %4970 = vst [vmem:[#allocation2 + $0x70] sm:$0xf] %v4938
      %4971 = vst [vmem:[#allocation2 + $0x74] sm:$0xf] %v4939
      %4972 = vst [vmem:[#allocation2 + $0x78] sm:$0xf] %v4940
      %4973 = vst [vmem:[#allocation2 + $0x7c] sm:$0xf] %v4941
    $region33: #{tpu_custom_call.1} parent=1 // pred_fallthru
      _
    %v4974 = vld [vmem:[#allocation2] sm:$0xf]
    %v4975 = vld [vmem:[#allocation2 + $0x4] sm:$0xf]
    %v4976 = vld [vmem:[#allocation2 + $0x8] sm:$0xf]
    %v4977 = vld [vmem:[#allocation2 + $0xc] sm:$0xf]
    %v4978 = vld [vmem:[#allocation2 + $0x10] sm:$0xf]
    %v4979 = vld [vmem:[#allocation2 + $0x14] sm:$0xf]
    %v4980 = vld [vmem:[#allocation2 + $0x18] sm:$0xf]
    %v4981 = vld [vmem:[#allocation2 + $0x1c] sm:$0xf]
    %v4982 = vld [vmem:[#allocation2 + $0x20] sm:$0xf]
    %v4983 = vld [vmem:[#allocation2 + $0x24] sm:$0xf]
    %v4984 = vld [vmem:[#allocation2 + $0x28] sm:$0xf]
    %v4985 = vld [vmem:[#allocation2 + $0x2c] sm:$0xf]
    %v4986 = vld [vmem:[#allocation2 + $0x30] sm:$0xf]
    %v4987 = vld [vmem:[#allocation2 + $0x34] sm:$0xf]
    %v4988 = vld [vmem:[#allocation2 + $0x38] sm:$0xf]
    %v4989 = vld [vmem:[#allocation2 + $0x3c] sm:$0xf]
    %v4990 = vld [vmem:[#allocation2 + $0x40] sm:$0xf]
    %v4991 = vld [vmem:[#allocation2 + $0x44] sm:$0xf]
    %v4992 = vld [vmem:[#allocation2 + $0x48] sm:$0xf]
    %v4993 = vld [vmem:[#allocation2 + $0x4c] sm:$0xf]
    %v4994 = vld [vmem:[#allocation2 + $0x50] sm:$0xf]
    %v4995 = vld [vmem:[#allocation2 + $0x54] sm:$0xf]
    %v4996 = vld [vmem:[#allocation2 + $0x58] sm:$0xf]
    %v4997 = vld [vmem:[#allocation2 + $0x5c] sm:$0xf]
    %v4998 = vld [vmem:[#allocation2 + $0x60] sm:$0xf]
    %v4999 = vld [vmem:[#allocation2 + $0x64] sm:$0xf]
    %v5000 = vld [vmem:[#allocation2 + $0x68] sm:$0xf]
    %v5001 = vld [vmem:[#allocation2 + $0x6c] sm:$0xf]
    %v5002 = vld [vmem:[#allocation2 + $0x70] sm:$0xf]
    %v5003 = vld [vmem:[#allocation2 + $0x74] sm:$0xf]
    %v5004 = vld [vmem:[#allocation2 + $0x78] sm:$0xf]
    %v5005 = vld [vmem:[#allocation2 + $0x7c] sm:$0xf]
    %v5006 = vld [vmem:[%s4] sm:$0xff]
    %v5007 = vld [vmem:[%s4 + $0x8] sm:$0xff]
    %v5008 = vld [vmem:[%s4 + $0x10] sm:$0xff]
    %v5009 = vld [vmem:[%s4 + $0x18] sm:$0xff]
    %v5010 = vld [vmem:[%s4 + $0x20] sm:$0xff]
    %v5011 = vld [vmem:[%s4 + $0x28] sm:$0xff]
    %v5012 = vld [vmem:[%s4 + $0x30] sm:$0xff]
    %v5013 = vld [vmem:[%s4 + $0x38] sm:$0xff]
    %v5014 = vld [vmem:[%s4 + $0x40] sm:$0xff]
    %v5015 = vld [vmem:[%s4 + $0x48] sm:$0xff]
    %v5016 = vld [vmem:[%s4 + $0x50] sm:$0xff]
    %v5017 = vld [vmem:[%s4 + $0x58] sm:$0xff]
    %v5018 = vld [vmem:[%s4 + $0x60] sm:$0xff]
    %v5019 = vld [vmem:[%s4 + $0x68] sm:$0xff]
    %v5020 = vld [vmem:[%s4 + $0x70] sm:$0xff]
    %v5021 = vld [vmem:[%s4 + $0x78] sm:$0xff]
    %v5022 = vld [vmem:[%s5] sm:$0x3]
    %v5024 = vperm.slane %v5022, 0
    %v5025 = vperm.slane %v5022, 1
    %v5060 = vunpack.c.l.b16 %v4974
    %v5061 = vunpack.c.l.b16 %v4975
    %v5062 = vunpack.c.l.b16 %v4976
    %v5063 = vunpack.c.l.b16 %v4977
    %v5064 = vunpack.c.l.b16 %v4978
    %v5065 = vunpack.c.l.b16 %v4979
    %v5066 = vunpack.c.l.b16 %v4980
    %v5067 = vunpack.c.l.b16 %v4981
    %v5068 = vunpack.c.l.b16 %v4982
    %v5069 = vunpack.c.l.b16 %v4983
    %v5070 = vunpack.c.l.b16 %v4984
    %v5071 = vunpack.c.l.b16 %v4985
    %v5072 = vunpack.c.l.b16 %v4986
    %v5073 = vunpack.c.l.b16 %v4987
    %v5074 = vunpack.c.l.b16 %v4988
    %v5075 = vunpack.c.l.b16 %v4989
    %v5076 = vunpack.c.l.b16 %v4990
    %v5077 = vunpack.c.l.b16 %v4991
    %v5078 = vunpack.c.l.b16 %v4992
    %v5079 = vunpack.c.l.b16 %v4993
    %v5080 = vunpack.c.l.b16 %v4994
    %v5081 = vunpack.c.l.b16 %v4995
    %v5082 = vunpack.c.l.b16 %v4996
    %v5083 = vunpack.c.l.b16 %v4997
    %v5084 = vunpack.c.l.b16 %v4998
    %v5085 = vunpack.c.l.b16 %v4999
    %v5086 = vunpack.c.l.b16 %v5000
    %v5087 = vunpack.c.l.b16 %v5001
    %v5088 = vunpack.c.l.b16 %v5002
    %v5089 = vunpack.c.l.b16 %v5003
    %v5090 = vunpack.c.l.b16 %v5004
    %v5091 = vunpack.c.l.b16 %v5005
    %v5092 = vpack.c.b16 %v5061, %v5060
    %v5093 = vpack.c.b16 %v5063, %v5062
    %v5094 = vpack.c.b16 %v5065, %v5064
    %v5095 = vpack.c.b16 %v5067, %v5066
    %v5096 = vpack.c.b16 %v5069, %v5068
    %v5097 = vpack.c.b16 %v5071, %v5070
    %v5098 = vpack.c.b16 %v5073, %v5072
    %v5099 = vpack.c.b16 %v5075, %v5074
    %v5100 = vpack.c.b16 %v5077, %v5076
    %v5101 = vpack.c.b16 %v5079, %v5078
    %v5102 = vpack.c.b16 %v5081, %v5080
    %v5103 = vpack.c.b16 %v5083, %v5082
    %v5104 = vpack.c.b16 %v5085, %v5084
    %v5105 = vpack.c.b16 %v5087, %v5086
    %v5106 = vpack.c.b16 %v5089, %v5088
    %v5107 = vpack.c.b16 %v5091, %v5090
    %v5140 = vunpack.c.l.b16 %v5006
    %v5141 = vunpack.c.h.b16 %v5006
    %v5142 = vunpack.c.l.b16 %v5007
    %v5143 = vunpack.c.h.b16 %v5007
    %v5144 = vunpack.c.l.b16 %v5008
    %v5145 = vunpack.c.h.b16 %v5008
    %v5146 = vunpack.c.l.b16 %v5009
    %v5147 = vunpack.c.h.b16 %v5009
    %v5148 = vunpack.c.l.b16 %v5010
    %v5149 = vunpack.c.h.b16 %v5010
    %v5150 = vunpack.c.l.b16 %v5011
    %v5151 = vunpack.c.h.b16 %v5011
    %v5152 = vunpack.c.l.b16 %v5012
    %v5153 = vunpack.c.h.b16 %v5012
    %v5154 = vunpack.c.l.b16 %v5013
    %v5155 = vunpack.c.h.b16 %v5013
    %v5156 = vunpack.c.l.b16 %v5014
    %v5157 = vunpack.c.h.b16 %v5014
    %v5158 = vunpack.c.l.b16 %v5015
    %v5159 = vunpack.c.h.b16 %v5015
    %v5160 = vunpack.c.l.b16 %v5016
    %v5161 = vunpack.c.h.b16 %v5016
    %v5162 = vunpack.c.l.b16 %v5017
    %v5163 = vunpack.c.h.b16 %v5017
    %v5164 = vunpack.c.l.b16 %v5018
    %v5165 = vunpack.c.h.b16 %v5018
    %v5166 = vunpack.c.l.b16 %v5019
    %v5167 = vunpack.c.h.b16 %v5019
    %v5168 = vunpack.c.l.b16 %v5020
    %v5169 = vunpack.c.h.b16 %v5020
    %v5170 = vunpack.c.l.b16 %v5021
    %v5171 = vunpack.c.h.b16 %v5021
    %v5172 = vpack.c.b16 %v5142, %v5140
    %v5173 = vpack.c.b16 %v5143, %v5141
    %v5174 = vpack.c.b16 %v5146, %v5144
    %v5175 = vpack.c.b16 %v5147, %v5145
    %v5176 = vpack.c.b16 %v5150, %v5148
    %v5177 = vpack.c.b16 %v5151, %v5149
    %v5178 = vpack.c.b16 %v5154, %v5152
    %v5179 = vpack.c.b16 %v5155, %v5153
    %v5180 = vpack.c.b16 %v5158, %v5156
    %v5181 = vpack.c.b16 %v5159, %v5157
    %v5182 = vpack.c.b16 %v5162, %v5160
    %v5183 = vpack.c.b16 %v5163, %v5161
    %v5184 = vpack.c.b16 %v5166, %v5164
    %v5185 = vpack.c.b16 %v5167, %v5165
    %v5186 = vpack.c.b16 %v5170, %v5168
    %v5187 = vpack.c.b16 %v5171, %v5169
    %5204 = vmatpush.bf16.msra.mxu0 %v5186
    %5205 = vmatpush.bf16.msra.mxu0 %v5184
    %5206 = vmatpush.bf16.msra.mxu0 %v5182
    %5207 = vmatpush.bf16.msra.mxu0 %v5180
    %5208 = vmatpush.bf16.msra.mxu0 %v5178
    %5209 = vmatpush.bf16.msra.mxu0 %v5176
    %5210 = vmatpush.bf16.msra.mxu0 %v5174
    %5211 = vmatpush.bf16.msra.mxu0 %v5172
    %5212 = vmatmul.bf16.gmra.mxu0 %v5092
    %v5213 = vpop.f32.mrf.mxu0
    %v5214 = vadd.f32 %v5024, %v5213
    %v5215 = vpop.f32.mrf.mxu0
    %v5216 = vadd.f32 %v5024, %v5215
    %5217 = vmatmul.bf16.gmra.mxu0 %v5093
    %v5218 = vpop.f32.mrf.mxu0
    %v5219 = vadd.f32 %v5024, %v5218
    %v5220 = vpop.f32.mrf.mxu0
    %v5221 = vadd.f32 %v5024, %v5220
    %5222 = vmatmul.bf16.gmra.mxu0 %v5094
    %v5223 = vpop.f32.mrf.mxu0
    %v5224 = vadd.f32 %v5024, %v5223
    %v5225 = vpop.f32.mrf.mxu0
    %v5226 = vadd.f32 %v5024, %v5225
    %5227 = vmatmul.bf16.gmra.mxu0 %v5095
    %v5228 = vpop.f32.mrf.mxu0
    %v5229 = vadd.f32 %v5024, %v5228
    %v5230 = vpop.f32.mrf.mxu0
    %v5231 = vadd.f32 %v5024, %v5230
    %5232 = vmatmul.bf16.gmra.mxu0 %v5096
    %v5233 = vpop.f32.mrf.mxu0
    %v5234 = vadd.f32 %v5024, %v5233
    %v5235 = vpop.f32.mrf.mxu0
    %v5236 = vadd.f32 %v5024, %v5235
    %5237 = vmatmul.bf16.gmra.mxu0 %v5097
    %v5238 = vpop.f32.mrf.mxu0
    %v5239 = vadd.f32 %v5024, %v5238
    %v5240 = vpop.f32.mrf.mxu0
    %v5241 = vadd.f32 %v5024, %v5240
    %5242 = vmatmul.bf16.gmra.mxu0 %v5098
    %v5243 = vpop.f32.mrf.mxu0
    %v5244 = vadd.f32 %v5024, %v5243
    %v5245 = vpop.f32.mrf.mxu0
    %v5246 = vadd.f32 %v5024, %v5245
    %5247 = vmatmul.bf16.gmra.mxu0 %v5099
    %v5248 = vpop.f32.mrf.mxu0
    %v5249 = vadd.f32 %v5024, %v5248
    %v5250 = vpop.f32.mrf.mxu0
    %v5251 = vadd.f32 %v5024, %v5250
    %5252 = vmatmul.bf16.gmra.mxu0 %v5100
    %v5253 = vpop.f32.mrf.mxu0
    %v5254 = vadd.f32 %v5024, %v5253
    %v5255 = vpop.f32.mrf.mxu0
    %v5256 = vadd.f32 %v5024, %v5255
    %5257 = vmatmul.bf16.gmra.mxu0 %v5101
    %v5258 = vpop.f32.mrf.mxu0
    %v5259 = vadd.f32 %v5024, %v5258
    %v5260 = vpop.f32.mrf.mxu0
    %v5261 = vadd.f32 %v5024, %v5260
    %5262 = vmatmul.bf16.gmra.mxu0 %v5102
    %v5263 = vpop.f32.mrf.mxu0
    %v5264 = vadd.f32 %v5024, %v5263
    %v5265 = vpop.f32.mrf.mxu0
    %v5266 = vadd.f32 %v5024, %v5265
    %5267 = vmatmul.bf16.gmra.mxu0 %v5103
    %v5268 = vpop.f32.mrf.mxu0
    %v5269 = vadd.f32 %v5024, %v5268
    %v5270 = vpop.f32.mrf.mxu0
    %v5271 = vadd.f32 %v5024, %v5270
    %5272 = vmatmul.bf16.gmra.mxu0 %v5104
    %v5273 = vpop.f32.mrf.mxu0
    %v5274 = vadd.f32 %v5024, %v5273
    %v5275 = vpop.f32.mrf.mxu0
    %v5276 = vadd.f32 %v5024, %v5275
    %5277 = vmatmul.bf16.gmra.mxu0 %v5105
    %v5278 = vpop.f32.mrf.mxu0
    %v5279 = vadd.f32 %v5024, %v5278
    %v5280 = vpop.f32.mrf.mxu0
    %v5281 = vadd.f32 %v5024, %v5280
    %5282 = vmatmul.bf16.gmra.mxu0 %v5106
    %v5283 = vpop.f32.mrf.mxu0
    %v5284 = vadd.f32 %v5024, %v5283
    %v5285 = vpop.f32.mrf.mxu0
    %v5286 = vadd.f32 %v5024, %v5285
    %5287 = vmatmul.bf16.gmra.mxu0 %v5107
    %v5288 = vpop.f32.mrf.mxu0
    %v5289 = vadd.f32 %v5024, %v5288
    %v5290 = vpop.f32.mrf.mxu0
    %v5291 = vadd.f32 %v5024, %v5290
    %5292 = vdwg.mxu0
    %5293 = vmatpush.bf16.msra.mxu0 %v5187
    %5294 = vmatpush.bf16.msra.mxu0 %v5185
    %5295 = vmatpush.bf16.msra.mxu0 %v5183
    %5296 = vmatpush.bf16.msra.mxu0 %v5181
    %5297 = vmatpush.bf16.msra.mxu0 %v5179
    %5298 = vmatpush.bf16.msra.mxu0 %v5177
    %5299 = vmatpush.bf16.msra.mxu0 %v5175
    %5300 = vmatpush.bf16.msra.mxu0 %v5173
    %5301 = vmatmul.bf16.gmra.mxu0 %v5092
    %v5302 = vpop.f32.mrf.mxu0
    %v5303 = vadd.f32 %v5025, %v5302
    %v5304 = vpop.f32.mrf.mxu0
    %v5305 = vadd.f32 %v5025, %v5304
    %5306 = vmatmul.bf16.gmra.mxu0 %v5093
    %v5307 = vpop.f32.mrf.mxu0
    %v5308 = vadd.f32 %v5025, %v5307
    %v5309 = vpop.f32.mrf.mxu0
    %v5310 = vadd.f32 %v5025, %v5309
    %5311 = vmatmul.bf16.gmra.mxu0 %v5094
    %v5312 = vpop.f32.mrf.mxu0
    %v5313 = vadd.f32 %v5025, %v5312
    %v5314 = vpop.f32.mrf.mxu0
    %v5315 = vadd.f32 %v5025, %v5314
    %5316 = vmatmul.bf16.gmra.mxu0 %v5095
    %v5317 = vpop.f32.mrf.mxu0
    %v5318 = vadd.f32 %v5025, %v5317
    %v5319 = vpop.f32.mrf.mxu0
    %v5320 = vadd.f32 %v5025, %v5319
    %5321 = vmatmul.bf16.gmra.mxu0 %v5096
    %v5322 = vpop.f32.mrf.mxu0
    %v5323 = vadd.f32 %v5025, %v5322
    %v5324 = vpop.f32.mrf.mxu0
    %v5325 = vadd.f32 %v5025, %v5324
    %5326 = vmatmul.bf16.gmra.mxu0 %v5097
    %v5327 = vpop.f32.mrf.mxu0
    %v5328 = vadd.f32 %v5025, %v5327
    %v5329 = vpop.f32.mrf.mxu0
    %v5330 = vadd.f32 %v5025, %v5329
    %5331 = vmatmul.bf16.gmra.mxu0 %v5098
    %v5332 = vpop.f32.mrf.mxu0
    %v5333 = vadd.f32 %v5025, %v5332
    %v5334 = vpop.f32.mrf.mxu0
    %v5335 = vadd.f32 %v5025, %v5334
    %5336 = vmatmul.bf16.gmra.mxu0 %v5099
    %v5337 = vpop.f32.mrf.mxu0
    %v5338 = vadd.f32 %v5025, %v5337
    %v5339 = vpop.f32.mrf.mxu0
    %v5340 = vadd.f32 %v5025, %v5339
    %5341 = vmatmul.bf16.gmra.mxu0 %v5100
    %v5342 = vpop.f32.mrf.mxu0
    %v5343 = vadd.f32 %v5025, %v5342
    %v5344 = vpop.f32.mrf.mxu0
    %v5345 = vadd.f32 %v5025, %v5344
    %5346 = vmatmul.bf16.gmra.mxu0 %v5101
    %v5347 = vpop.f32.mrf.mxu0
    %v5348 = vadd.f32 %v5025, %v5347
    %v5349 = vpop.f32.mrf.mxu0
    %v5350 = vadd.f32 %v5025, %v5349
    %5351 = vmatmul.bf16.gmra.mxu0 %v5102
    %v5352 = vpop.f32.mrf.mxu0
    %v5353 = vadd.f32 %v5025, %v5352
    %v5354 = vpop.f32.mrf.mxu0
    %v5355 = vadd.f32 %v5025, %v5354
    %5356 = vmatmul.bf16.gmra.mxu0 %v5103
    %v5357 = vpop.f32.mrf.mxu0
    %v5358 = vadd.f32 %v5025, %v5357
    %v5359 = vpop.f32.mrf.mxu0
    %v5360 = vadd.f32 %v5025, %v5359
    %5361 = vmatmul.bf16.gmra.mxu0 %v5104
    %v5362 = vpop.f32.mrf.mxu0
    %v5363 = vadd.f32 %v5025, %v5362
    %v5364 = vpop.f32.mrf.mxu0
    %v5365 = vadd.f32 %v5025, %v5364
    %5366 = vmatmul.bf16.gmra.mxu0 %v5105
    %v5367 = vpop.f32.mrf.mxu0
    %v5368 = vadd.f32 %v5025, %v5367
    %v5369 = vpop.f32.mrf.mxu0
    %v5370 = vadd.f32 %v5025, %v5369
    %5371 = vmatmul.bf16.gmra.mxu0 %v5106
    %v5372 = vpop.f32.mrf.mxu0
    %v5373 = vadd.f32 %v5025, %v5372
    %v5374 = vpop.f32.mrf.mxu0
    %v5375 = vadd.f32 %v5025, %v5374
    %5376 = vmatmul.bf16.gmra.mxu0 %v5107
    %v5377 = vpop.f32.mrf.mxu0
    %v5378 = vadd.f32 %v5025, %v5377
    %v5379 = vpop.f32.mrf.mxu0
    %v5380 = vadd.f32 %v5025, %v5379
    %5381 = vdwg.mxu0
    %5382 = vst [vmem:[#allocation6] sm:$0xff] %v5214
    %5383 = vst [vmem:[#allocation6 + $0x8] sm:$0xff] %v5303
    %5384 = vst [vmem:[#allocation6 + $0x10] sm:$0xff] %v5216
    %5385 = vst [vmem:[#allocation6 + $0x18] sm:$0xff] %v5305
    %5386 = vst [vmem:[#allocation6 + $0x20] sm:$0xff] %v5219
    %5387 = vst [vmem:[#allocation6 + $0x28] sm:$0xff] %v5308
    %5388 = vst [vmem:[#allocation6 + $0x30] sm:$0xff] %v5221
    %5389 = vst [vmem:[#allocation6 + $0x38] sm:$0xff] %v5310
    %5390 = vst [vmem:[#allocation6 + $0x40] sm:$0xff] %v5224
    %5391 = vst [vmem:[#allocation6 + $0x48] sm:$0xff] %v5313
    %5392 = vst [vmem:[#allocation6 + $0x50] sm:$0xff] %v5226
    %5393 = vst [vmem:[#allocation6 + $0x58] sm:$0xff] %v5315
    %5394 = vst [vmem:[#allocation6 + $0x60] sm:$0xff] %v5229
    %5395 = vst [vmem:[#allocation6 + $0x68] sm:$0xff] %v5318
    %5396 = vst [vmem:[#allocation6 + $0x70] sm:$0xff] %v5231
    %5397 = vst [vmem:[#allocation6 + $0x78] sm:$0xff] %v5320
    %5398 = vst [vmem:[#allocation6 + $0x80] sm:$0xff] %v5234
    %5399 = vst [vmem:[#allocation6 + $0x88] sm:$0xff] %v5323
    %5400 = vst [vmem:[#allocation6 + $0x90] sm:$0xff] %v5236
    %5401 = vst [vmem:[#allocation6 + $0x98] sm:$0xff] %v5325
    %5402 = vst [vmem:[#allocation6 + $0xa0] sm:$0xff] %v5239
    %5403 = vst [vmem:[#allocation6 + $0xa8] sm:$0xff] %v5328
    %5404 = vst [vmem:[#allocation6 + $0xb0] sm:$0xff] %v5241
    %5405 = vst [vmem:[#allocation6 + $0xb8] sm:$0xff] %v5330
    %5406 = vst [vmem:[#allocation6 + $0xc0] sm:$0xff] %v5244
    %5407 = vst [vmem:[#allocation6 + $0xc8] sm:$0xff] %v5333
    %5408 = vst [vmem:[#allocation6 + $0xd0] sm:$0xff] %v5246
    %5409 = vst [vmem:[#allocation6 + $0xd8] sm:$0xff] %v5335
    %5410 = vst [vmem:[#allocation6 + $0xe0] sm:$0xff] %v5249
    %5411 = vst [vmem:[#allocation6 + $0xe8] sm:$0xff] %v5338
    %5412 = vst [vmem:[#allocation6 + $0xf0] sm:$0xff] %v5251
    %5413 = vst [vmem:[#allocation6 + $0xf8] sm:$0xff] %v5340
    %5414 = vst [vmem:[#allocation6 + $0x100] sm:$0xff] %v5254
    %5415 = vst [vmem:[#allocation6 + $0x108] sm:$0xff] %v5343
    %5416 = vst [vmem:[#allocation6 + $0x110] sm:$0xff] %v5256
    %5417 = vst [vmem:[#allocation6 + $0x118] sm:$0xff] %v5345
    %5418 = vst [vmem:[#allocation6 + $0x120] sm:$0xff] %v5259
    %5419 = vst [vmem:[#allocation6 + $0x128] sm:$0xff] %v5348
    %5420 = vst [vmem:[#allocation6 + $0x130] sm:$0xff] %v5261
    %5421 = vst [vmem:[#allocation6 + $0x138] sm:$0xff] %v5350
    %5422 = vst [vmem:[#allocation6 + $0x140] sm:$0xff] %v5264
    %5423 = vst [vmem:[#allocation6 + $0x148] sm:$0xff] %v5353
    %5424 = vst [vmem:[#allocation6 + $0x150] sm:$0xff] %v5266
    %5425 = vst [vmem:[#allocation6 + $0x158] sm:$0xff] %v5355
    %5426 = vst [vmem:[#allocation6 + $0x160] sm:$0xff] %v5269
    %5427 = vst [vmem:[#allocation6 + $0x168] sm:$0xff] %v5358
    %5428 = vst [vmem:[#allocation6 + $0x170] sm:$0xff] %v5271
    %5429 = vst [vmem:[#allocation6 + $0x178] sm:$0xff] %v5360
    %5430 = vst [vmem:[#allocation6 + $0x180] sm:$0xff] %v5274
    %5431 = vst [vmem:[#allocation6 + $0x188] sm:$0xff] %v5363
    %5432 = vst [vmem:[#allocation6 + $0x190] sm:$0xff] %v5276
    %5433 = vst [vmem:[#allocation6 + $0x198] sm:$0xff] %v5365
    %5434 = vst [vmem:[#allocation6 + $0x1a0] sm:$0xff] %v5279
    %5435 = vst [vmem:[#allocation6 + $0x1a8] sm:$0xff] %v5368
    %5436 = vst [vmem:[#allocation6 + $0x1b0] sm:$0xff] %v5281
    %5437 = vst [vmem:[#allocation6 + $0x1b8] sm:$0xff] %v5370
    %5438 = vst [vmem:[#allocation6 + $0x1c0] sm:$0xff] %v5284
    %5439 = vst [vmem:[#allocation6 + $0x1c8] sm:$0xff] %v5373
    %5440 = vst [vmem:[#allocation6 + $0x1d0] sm:$0xff] %v5286
    %5441 = vst [vmem:[#allocation6 + $0x1d8] sm:$0xff] %v5375
    %5442 = vst [vmem:[#allocation6 + $0x1e0] sm:$0xff] %v5289
    %5443 = vst [vmem:[#allocation6 + $0x1e8] sm:$0xff] %v5378
    %5444 = vst [vmem:[#allocation6 + $0x1f0] sm:$0xff] %v5291
    %5445 = vst [vmem:[#allocation6 + $0x1f8] sm:$0xff] %v5380
    // Predicated region
    $region34: #{tpu_custom_call.1} parent=1 // pred_check
      _
    $region35: #{tpu_custom_call.1} parent=1 // pred_check_branch
      %5447 = sbr.rel (0) target = $region37
    $region36: #{tpu_custom_call.1} parent=1 // pred_region
      %5449 = vsyncadd [#allocation5], 0
      %s5450 = sshll.u32 [#allocation6], 4
      %s5451 = int_to_ptr.vmem [resolvable:$true] %s5450
      %s5452 = sshll.u32 %s6, 4
      %s5453 = int_to_ptr.hbm [resolvable:$true] %s5452
      %5458 = dma.vmem_to_hbm [thread:$0]  %s5451, 8192, %s5453, [#allocation5], 256, 256, 16
    $region37: #{tpu_custom_call.1} parent=1 // pred_fallthru
      _
    // Predicated region
    $region38: #{tpu_custom_call.1} parent=1 // pred_check
      _
    $region39: #{tpu_custom_call.1} parent=1 // pred_check_branch
      %5460 = sbr.rel (0) target = $region41
    $region40: #{tpu_custom_call.1} parent=1 // pred_region
      %5462 = dma.done [#allocation5], 8192
    $region41: #{tpu_custom_call.1} parent=1 // pred_fallthru
      _
    %5463 = vsyncpa [#allocation4], 1
    %5464 = vsyncpa [#allocation5], 1

</llo_original>
